<compile_context>
chip_gen: v6e
topology: v6e:2x2x1
jax: 0.10.0
libtpu: 0.0.40
codegen_flags: <defaults>
</compile_context>

<pallas_src>
import functools

import jax
import jax.numpy as jnp
from jax import lax
from jax.experimental import pallas as pl
from jax.experimental.pallas import tpu as pltpu

KS1, KS2, KS3 = 16, 32, 16
TN = 128  # lane tile (all Cout <= 64 here, padded once at init to 128)


def _round_up(x, m):
    return (x + m - 1) // m * m


@functools.lru_cache(maxsize=None)
def _num_m_blocks():
    """2 M-blocks on megacore chips (v7x / v5p / v4), 1 on single-TC (v5e/v6e)."""
    try:
        kind = jax.devices()[0].device_kind.lower()
    except Exception:
        return 1
    return 2 if any(s in kind for s in ("v7", "7x", "v5p", "v4")) else 1


def _tiling(M):
    """Return (tm, Mp): full-M tile on single-TC chips, exactly 2 blocks on megacore."""
    nb = _num_m_blocks()
    if nb > 1 and M >= 16 * nb and M % (16 * nb) == 0:
        return M // nb, M
    tm = _round_up(M, 16)          # bf16 A operand: sublane pack is 16
    return tm, tm


# ---------------------------------------------------------------------------
# Pallas kernel: single-shot matmul + fused (bias, residual, activation)
# ---------------------------------------------------------------------------
def _mm_epilogue_kernel(a_ref, b_ref, bias_ref, *rest, act, has_res):
    if has_res:
        r_ref, o_ref = rest
    else:
        (o_ref,) = rest

    # bf16 operands, f32 accumulation on the MXU; full (unpadded) K in one block.
    y = jnp.dot(a_ref[...], b_ref[...], preferred_element_type=jnp.float32)
    y = y + bias_ref[0:1, :]                         # folded BatchNorm bias
    if has_res:
        y = y + r_ref[...].astype(jnp.float32)       # exact f32 residual add
    if act == "relu":
        y = jnp.maximum(y, 0.0)
    elif act == "hardtanh":
        y = jnp.clip(y, -1.0, 1.0)
    o_ref[...] = y.astype(o_ref.dtype)


def matmul_fused(a, b_p, bias_p, residual=None, act="none", out_dtype=jnp.float32):
    """Padded (Mp, Np) result of act((a @ b) + bias [+ residual]).

    a: (M, K) bf16, K unpadded (full-dim block => no pad copy, no zero K rows);
    b_p: (K, Np) bf16 BN-folded weights; bias_p: (8, Np) f32 (row 0 = bias);
    residual: (M, cols<=Np) f32 or already-padded (Mp, Np) f32.
    """
    M, K = a.shape
    Kb, Np = b_p.shape
    assert K == Kb
    tm, Mp = _tiling(M)
    if Mp != M:
        a = jnp.pad(a, ((0, Mp - M), (0, 0)))

    inputs = [a, b_p, bias_p]
    in_specs = [
        pl.BlockSpec((tm, K), lambda i: (i, 0)),
        pl.BlockSpec((K, Np), lambda i: (0, 0)),
        pl.BlockSpec((8, Np), lambda i: (0, 0)),
    ]
    has_res = residual is not None
    if has_res:
        r = residual.astype(jnp.float32)
        if r.shape != (Mp, Np):
            r = jnp.pad(r, ((0, Mp - r.shape[0]), (0, Np - r.shape[1])))
        inputs.append(r)
        in_specs.append(pl.BlockSpec((tm, Np), lambda i: (i, 0)))

    return pl.pallas_call(
        functools.partial(_mm_epilogue_kernel, act=act, has_res=has_res),
        out_shape=jax.ShapeDtypeStruct((Mp, Np), out_dtype),
        grid_spec=pltpu.PrefetchScalarGridSpec(
            num_scalar_prefetch=0,
            grid=(Mp // tm,),
            in_specs=in_specs,
            out_specs=pl.BlockSpec((tm, Np), lambda i: (i, 0)),
        ),
        compiler_params=pltpu.CompilerParams(
            dimension_semantics=("parallel",)),
    )(*inputs)


# ---------------------------------------------------------------------------
# Conv = im2col (one fused XLA patches op, bf16) + Pallas fused matmul
# ---------------------------------------------------------------------------
def _im2col(x, kh, kw, stride, padding):
    """NHWC -> (N*OH*OW, C*kh*kw). Feature order is channel-major then (kh,kw),
    matching the weight reshape in _fold_conv."""
    N, H, W, C = x.shape
    patches = lax.conv_general_dilated_patches(
        x, filter_shape=(kh, kw), window_strides=(stride, stride),
        padding=((padding, padding), (padding, padding)),
        dimension_numbers=("NHWC", "HWIO", "NHWC"))
    OH = (H + 2 * padding - kh) // stride + 1
    OW = (W + 2 * padding - kw) // stride + 1
    return patches.reshape(N * OH * OW, C * kh * kw), OH, OW


def conv_bn_act(x, cp, kh, kw, stride, padding, cout,
                residual=None, act="none", out_dtype=jnp.bfloat16):
    """x: NHWC (f32 or bf16). Returns (NHWC out, padded 2-D out (Mp, Np))."""
    N = x.shape[0]
    a, OH, OW = _im2col(x.astype(jnp.bfloat16), kh, kw, stride, padding)
    y_p = matmul_fused(a, cp["b"], cp["sb"], residual=residual, act=act,
                       out_dtype=out_dtype)
    y = y_p[:N * OH * OW, :cout].reshape(N, OH, OW, cout)
    return y, y_p


# --------------------------- pooling glue (XLA) -----------------------------
def maxpool_3x3_s2_p1(x):  # NHWC, -inf padding == PyTorch MaxPool2d(3,2,1)
    return lax.reduce_window(x, -jnp.inf, lax.max,
                             (1, 3, 3, 1), (1, 2, 2, 1),
                             padding=((0, 0), (1, 1), (1, 1), (0, 0)))


def maxpool_2x2(x):  # NHWC
    N, H, W, C = x.shape
    return x.reshape(N, H // 2, 2, W // 2, 2, C).max(axis=(2, 4))


# ------------------------------ parameters ---------------------------------
def _bn_stats(key, c, eps=1e-5):
    k1, k2, k3, k4 = jax.random.split(key, 4)
    gamma = 1.0 + 0.1 * jax.random.normal(k1, (c,), jnp.float32)
    beta = 0.1 * jax.random.normal(k2, (c,), jnp.float32)
    mean = 0.1 * jax.random.normal(k3, (c,), jnp.float32)
    var = 1.0 + 0.1 * jax.random.uniform(k4, (c,), jnp.float32)
    return gamma, beta, mean, var, eps


def _fold_conv(key, cout, cin, kh, kw, has_bias):
    """Random conv + BN; BN scale folded into the weights, stored (K, Np) bf16."""
    kw_, kb_, kbn = jax.random.split(key, 3)
    fan_in = cin * kh * kw
    w = jax.random.normal(kw_, (cout, cin, kh, kw), jnp.float32) / jnp.sqrt(fan_in)
    conv_b = (0.01 * jax.random.normal(kb_, (cout,), jnp.float32)
              if has_bias else jnp.zeros((cout,), jnp.float32))
    gamma, beta, mean, var, eps = _bn_stats(kbn, cout)

    scale = gamma * lax.rsqrt(var + eps)
    bias = (conv_b - mean) * scale + beta

    K = cin * kh * kw
    Np = _round_up(cout, TN)
    w2d = (w * scale[:, None, None, None]).reshape(cout, K)          # (Cout, K)
    b_p = jnp.zeros((K, Np), jnp.bfloat16).at[:, :cout].set(
        jnp.transpose(w2d).astype(jnp.bfloat16))                     # K unpadded
    sb = jnp.zeros((8, Np), jnp.float32).at[0, :cout].set(bias)      # bias only
    return {"b": b_p, "sb": sb}


def init_params(key):
    keys = iter(jax.random.split(key, 16))
    p = {}
    # resnet18 stem (children [:2] -> conv1 7x7/s2/p3 no-bias + bn1, no relu)
    p["conv1"] = _fold_conv(next(keys), 64, 3, 7, 7, has_bias=False)
    # children [3:5] -> maxpool + layer1 (2 BasicBlocks, 64->64)
    p["layer1"] = [
        {"c1": _fold_conv(next(keys), 64, 64, 3, 3, has_bias=False),
         "c2": _fold_conv(next(keys), 64, 64, 3, 3, has_bias=False)}
        for _ in range(2)
    ]
    # encoders (conv has bias)
    p["e1"] = _fold_conv(next(keys), KS1, 64, 3, 3, has_bias=True)
    p["e2"] = _fold_conv(next(keys), KS2, KS1, 3, 3, has_bias=True)
    p["e3a"] = _fold_conv(next(keys), KS3, KS2, 3, 3, has_bias=True)
    p["e3b"] = _fold_conv(next(keys), 1, KS3, 3, 3, has_bias=True)
    return p


# ------------------------------- forward -----------------------------------
def forward(p, x_nchw):
    x = jnp.transpose(x_nchw, (0, 2, 3, 1)).astype(jnp.float32)   # -> NHWC

    # res18_1: conv1 + bn1 (no relu: relu is children()[2], which is dropped).
    # f32 output: it is the residual source for layer1 block 1.
    out, _ = conv_bn_act(x, p["conv1"], 7, 7, 2, 3, 64,
                         act="none", out_dtype=jnp.float32)
    # res18_2: maxpool(3,2,1) + layer1
    out = maxpool_3x3_s2_p1(out)                       # NHWC f32 [N,16,16,64]
    N, H, W, _ = out.shape
    res2d = out.reshape(N * H * W, 64)                 # f32 residual, block 1

    # TODO(synk): fuse each BasicBlock's two 3x3 convs into one pallas_call
    # (in-VMEM im2col); kept as two launches here for lowering robustness.
    for blk in p["layer1"]:
        h, _ = conv_bn_act(out, blk["c1"], 3, 3, 1, 1, 64,
                           act="relu", out_dtype=jnp.bfloat16)
        out, res_p = conv_bn_act(h, blk["c2"], 3, 3, 1, 1, 64,
                                 residual=res2d, act="relu",
                                 out_dtype=jnp.float32)
        res2d = res_p                                  # padded f32, reused as-is
    out1 = out                                         # NHWC f32 [N,16,16,64]

    # encoder1: conv->bn->maxpool(2)->hardtanh  (hardtanh fused pre-pool)
    h, _ = conv_bn_act(out1, p["e1"], 3, 3, 1, 1, KS1, act="hardtanh")
    h = maxpool_2x2(h)
    # encoder2
    h, _ = conv_bn_act(h, p["e2"], 3, 3, 1, 1, KS2, act="hardtanh")
    h = maxpool_2x2(h)
    # encoder3: conv-bn-hardtanh, conv-bn-hardtanh
    h, _ = conv_bn_act(h, p["e3a"], 3, 3, 1, 1, KS3, act="hardtanh")
    h, _ = conv_bn_act(h, p["e3b"], 3, 3, 1, 1, 1, act="hardtanh")   # [N,4,4,1]

    # upSample1 (nearest x4) + AvgPool2d(16,1) on the resulting 16x16 map is
    # exactly the global mean of the 4x4 map (nearest upsample preserves the
    # mean), so skip the 16x expansion and the dedicated pooling kernel.
    pred = jnp.transpose(
        jnp.mean(h.astype(jnp.float32), axis=(1, 2), keepdims=True), (0, 3, 1, 2))

    out1_nchw = jnp.transpose(out1, (0, 3, 1, 2))      # NCHW [N, 64, 16, 16]
    return pred, out1_nchw


if __name__ == "__main__":
    root = jax.random.PRNGKey(0)
    k_params, k_x = jax.random.split(root)
    params = init_params(k_params)

    # Input: NCHW [2, 3, 64, 64] (3-channel image for the resnet stem; 64x64
    # keeps the pipeline consistent with the hard-coded 16x16 avg pool).
    x = jax.random.normal(k_x, (2, 3, 64, 64), jnp.float32)

    pred, out1 = jax.jit(forward)(params, x)
    pred, out1 = jax.block_until_ready((pred, out1))

    assert pred.shape == (2, 1, 1, 1), pred.shape
    assert out1.shape == (2, 64, 16, 16), out1.shape
    assert bool(jnp.all(jnp.isfinite(pred))) and bool(jnp.all(jnp.isfinite(out1)))
    print("KERNEL_OK")
</pallas_src>

<mosaic_0001>
module attributes {stable_mosaic.version = 11 : i64} {
  func.func @_mm_epilogue_kernel(%arg0: i32, %arg1: memref<2048x147xbf16, #tpu.memory_space<vmem>>, %arg2: memref<147x128xbf16, #tpu.memory_space<vmem>>, %arg3: memref<8x128xf32, #tpu.memory_space<vmem>>, %arg4: memref<2048x128xf32, #tpu.memory_space<vmem>>) attributes {dimension_semantics = [#tpu.dimension_semantics<parallel>], iteration_bounds = array<i64: 1>, scalar_prefetch = 0 : i64, scratch_operands = 0 : i64, tpu.core_type = #tpu.core_type<tc>, window_params = [{transform_indices = @transform_0, window_bounds = array<i64: 2048, 147>}, {pipeline_mode = #tpu.pipeline_mode<synchronous>, transform_indices = @transform_1, window_bounds = array<i64: 147, 128>}, {pipeline_mode = #tpu.pipeline_mode<synchronous>, transform_indices = @transform_2, window_bounds = array<i64: 8, 128>}, {transform_indices = @transform_3, window_bounds = array<i64: 2048, 128>}]} {
    %c0 = arith.constant 0 : index
    %c0_0 = arith.constant 0 : index
    %0 = vector.load %arg1[%c0, %c0_0] : memref<2048x147xbf16, #tpu.memory_space<vmem>>, vector<2048x147xbf16>
    %c0_1 = arith.constant 0 : index
    %c0_2 = arith.constant 0 : index
    %1 = vector.load %arg2[%c0_1, %c0_2] : memref<147x128xbf16, #tpu.memory_space<vmem>>, vector<147x128xbf16>
    %cst = arith.constant dense<0.000000e+00> : vector<2048x128xf32>
    %2 = tpu.matmul %0, %1, %cst {dimension_numbers = #tpu.dot_dimension_numbers<[1], [0], [0], [1], [0, 0, 1, 1], [], []>} : vector<2048x147xbf16>, vector<147x128xbf16>, vector<2048x128xf32> -> vector<2048x128xf32>
    %c0_3 = arith.constant 0 : index
    %c0_4 = arith.constant 0 : index
    %3 = vector.load %arg3[%c0_3, %c0_4] : memref<8x128xf32, #tpu.memory_space<vmem>>, vector<1x128xf32>
    %4 = vector.broadcast %3 : vector<1x128xf32> to vector<2048x128xf32>
    %5 = arith.addf %2, %4 : vector<2048x128xf32>
    %c0_5 = arith.constant 0 : index
    %c0_6 = arith.constant 0 : index
    %6 = vector.load %arg4[%c0_5, %c0_6] : memref<2048x128xf32, #tpu.memory_space<vmem>>, vector<2048x128xf32>
    tpu.vector_store %arg4[%c0_5, %c0_6], %5 {strides = array<i32>} : memref<2048x128xf32, #tpu.memory_space<vmem>>, vector<2048x128xf32>,
    return
  }
  func.func @transform_0(%arg0: i32) -> (i32, i32) {
    %c0_i32 = arith.constant 0 : i32
    %c0_i32_0 = arith.constant 0 : i32
    return %arg0, %c0_i32 : i32, i32
  }
  func.func @transform_1(%arg0: i32) -> (i32, i32) {
    %c0_i32 = arith.constant 0 : i32
    %c0_i32_0 = arith.constant 0 : i32
    %c0_i32_1 = arith.constant 0 : i32
    return %c0_i32, %c0_i32_0 : i32, i32
  }
  func.func @transform_2(%arg0: i32) -> (i32, i32) {
    %c0_i32 = arith.constant 0 : i32
    %c0_i32_0 = arith.constant 0 : i32
    %c0_i32_1 = arith.constant 0 : i32
    return %c0_i32, %c0_i32_0 : i32, i32
  }
  func.func @transform_3(%arg0: i32) -> (i32, i32) {
    %c0_i32 = arith.constant 0 : i32
    %c0_i32_0 = arith.constant 0 : i32
    return %arg0, %c0_i32 : i32, i32
  }
}

module attributes {stable_mosaic.version = 11 : i64} {
  func.func @_mm_epilogue_kernel(%arg0: i32, %arg1: memref<512x576xbf16, #tpu.memory_space<vmem>>, %arg2: memref<576x128xbf16, #tpu.memory_space<vmem>>, %arg3: memref<8x128xf32, #tpu.memory_space<vmem>>, %arg4: memref<512x128xbf16, #tpu.memory_space<vmem>>) attributes {dimension_semantics = [#tpu.dimension_semantics<parallel>], iteration_bounds = array<i64: 1>, scalar_prefetch = 0 : i64, scratch_operands = 0 : i64, tpu.core_type = #tpu.core_type<tc>, window_params = [{transform_indices = @transform_0, window_bounds = array<i64: 512, 576>}, {pipeline_mode = #tpu.pipeline_mode<synchronous>, transform_indices = @transform_1, window_bounds = array<i64: 576, 128>}, {pipeline_mode = #tpu.pipeline_mode<synchronous>, transform_indices = @transform_2, window_bounds = array<i64: 8, 128>}, {transform_indices = @transform_3, window_bounds = array<i64: 512, 128>}]} {
    %c0 = arith.constant 0 : index
    %c0_0 = arith.constant 0 : index
    %0 = vector.load %arg1[%c0, %c0_0] : memref<512x576xbf16, #tpu.memory_space<vmem>>, vector<512x576xbf16>
    %c0_1 = arith.constant 0 : index
    %c0_2 = arith.constant 0 : index
    %1 = vector.load %arg2[%c0_1, %c0_2] : memref<576x128xbf16, #tpu.memory_space<vmem>>, vector<576x128xbf16>
    %cst = arith.constant dense<0.000000e+00> : vector<512x128xf32>
    %2 = tpu.matmul %0, %1, %cst {dimension_numbers = #tpu.dot_dimension_numbers<[1], [0], [0], [1], [0, 0, 1, 1], [], []>} : vector<512x576xbf16>, vector<576x128xbf16>, vector<512x128xf32> -> vector<512x128xf32>
    %c0_3 = arith.constant 0 : index
    %c0_4 = arith.constant 0 : index
    %3 = vector.load %arg3[%c0_3, %c0_4] : memref<8x128xf32, #tpu.memory_space<vmem>>, vector<1x128xf32>
    %4 = vector.broadcast %3 : vector<1x128xf32> to vector<512x128xf32>
    %5 = arith.addf %2, %4 : vector<512x128xf32>
    %cst_5 = arith.constant 0.000000e+00 : f32
    %6 = vector.broadcast %cst_5 : f32 to vector<512x128xf32>
    %7 = arith.maximumf %5, %6 : vector<512x128xf32>
    %8 = arith.truncf %7 : vector<512x128xf32> to vector<512x128xbf16>
    %c0_6 = arith.constant 0 : index
    %c0_7 = arith.constant 0 : index
    %9 = vector.load %arg4[%c0_6, %c0_7] : memref<512x128xbf16, #tpu.memory_space<vmem>>, vector<512x128xbf16>
    tpu.vector_store %arg4[%c0_6, %c0_7], %8 {strides = array<i32>} : memref<512x128xbf16, #tpu.memory_space<vmem>>, vector<512x128xbf16>,
    return
  }
  func.func @transform_0(%arg0: i32) -> (i32, i32) {
    %c0_i32 = arith.constant 0 : i32
    %c0_i32_0 = arith.constant 0 : i32
    return %arg0, %c0_i32 : i32, i32
  }
  func.func @transform_1(%arg0: i32) -> (i32, i32) {
    %c0_i32 = arith.constant 0 : i32
    %c0_i32_0 = arith.constant 0 : i32
    %c0_i32_1 = arith.constant 0 : i32
    return %c0_i32, %c0_i32_0 : i32, i32
  }
  func.func @transform_2(%arg0: i32) -> (i32, i32) {
    %c0_i32 = arith.constant 0 : i32
    %c0_i32_0 = arith.constant 0 : i32
    %c0_i32_1 = arith.constant 0 : i32
    return %c0_i32, %c0_i32_0 : i32, i32
  }
  func.func @transform_3(%arg0: i32) -> (i32, i32) {
    %c0_i32 = arith.constant 0 : i32
    %c0_i32_0 = arith.constant 0 : i32
    return %arg0, %c0_i32 : i32, i32
  }
}

module attributes {stable_mosaic.version = 11 : i64} {
  func.func @_mm_epilogue_kernel(%arg0: i32, %arg1: memref<512x576xbf16, #tpu.memory_space<vmem>>, %arg2: memref<576x128xbf16, #tpu.memory_space<vmem>>, %arg3: memref<8x128xf32, #tpu.memory_space<vmem>>, %arg4: memref<512x128xf32, #tpu.memory_space<vmem>>, %arg5: memref<512x128xf32, #tpu.memory_space<vmem>>) attributes {dimension_semantics = [#tpu.dimension_semantics<parallel>], iteration_bounds = array<i64: 1>, scalar_prefetch = 0 : i64, scratch_operands = 0 : i64, tpu.core_type = #tpu.core_type<tc>, window_params = [{transform_indices = @transform_0, window_bounds = array<i64: 512, 576>}, {pipeline_mode = #tpu.pipeline_mode<synchronous>, transform_indices = @transform_1, window_bounds = array<i64: 576, 128>}, {pipeline_mode = #tpu.pipeline_mode<synchronous>, transform_indices = @transform_2, window_bounds = array<i64: 8, 128>}, {transform_indices = @transform_3, window_bounds = array<i64: 512, 128>}, {transform_indices = @transform_4, window_bounds = array<i64: 512, 128>}]} {
    %c0 = arith.constant 0 : index
    %c0_0 = arith.constant 0 : index
    %0 = vector.load %arg1[%c0, %c0_0] : memref<512x576xbf16, #tpu.memory_space<vmem>>, vector<512x576xbf16>
    %c0_1 = arith.constant 0 : index
    %c0_2 = arith.constant 0 : index
    %1 = vector.load %arg2[%c0_1, %c0_2] : memref<576x128xbf16, #tpu.memory_space<vmem>>, vector<576x128xbf16>
    %cst = arith.constant dense<0.000000e+00> : vector<512x128xf32>
    %2 = tpu.matmul %0, %1, %cst {dimension_numbers = #tpu.dot_dimension_numbers<[1], [0], [0], [1], [0, 0, 1, 1], [], []>} : vector<512x576xbf16>, vector<576x128xbf16>, vector<512x128xf32> -> vector<512x128xf32>
    %c0_3 = arith.constant 0 : index
    %c0_4 = arith.constant 0 : index
    %3 = vector.load %arg3[%c0_3, %c0_4] : memref<8x128xf32, #tpu.memory_space<vmem>>, vector<1x128xf32>
    %4 = vector.broadcast %3 : vector<1x128xf32> to vector<512x128xf32>
    %5 = arith.addf %2, %4 : vector<512x128xf32>
    %c0_5 = arith.constant 0 : index
    %c0_6 = arith.constant 0 : index
    %6 = vector.load %arg4[%c0_5, %c0_6] : memref<512x128xf32, #tpu.memory_space<vmem>>, vector<512x128xf32>
    %7 = arith.addf %5, %6 : vector<512x128xf32>
    %cst_7 = arith.constant 0.000000e+00 : f32
    %8 = vector.broadcast %cst_7 : f32 to vector<512x128xf32>
    %9 = arith.maximumf %7, %8 : vector<512x128xf32>
    %c0_8 = arith.constant 0 : index
    %c0_9 = arith.constant 0 : index
    %10 = vector.load %arg5[%c0_8, %c0_9] : memref<512x128xf32, #tpu.memory_space<vmem>>, vector<512x128xf32>
    tpu.vector_store %arg5[%c0_8, %c0_9], %9 {strides = array<i32>} : memref<512x128xf32, #tpu.memory_space<vmem>>, vector<512x128xf32>,
    return
  }
  func.func @transform_0(%arg0: i32) -> (i32, i32) {
    %c0_i32 = arith.constant 0 : i32
    %c0_i32_0 = arith.constant 0 : i32
    return %arg0, %c0_i32 : i32, i32
  }
  func.func @transform_1(%arg0: i32) -> (i32, i32) {
    %c0_i32 = arith.constant 0 : i32
    %c0_i32_0 = arith.constant 0 : i32
    %c0_i32_1 = arith.constant 0 : i32
    return %c0_i32, %c0_i32_0 : i32, i32
  }
  func.func @transform_2(%arg0: i32) -> (i32, i32) {
    %c0_i32 = arith.constant 0 : i32
    %c0_i32_0 = arith.constant 0 : i32
    %c0_i32_1 = arith.constant 0 : i32
    return %c0_i32, %c0_i32_0 : i32, i32
  }
  func.func @transform_3(%arg0: i32) -> (i32, i32) {
    %c0_i32 = arith.constant 0 : i32
    %c0_i32_0 = arith.constant 0 : i32
    return %arg0, %c0_i32 : i32, i32
  }
  func.func @transform_4(%arg0: i32) -> (i32, i32) {
    %c0_i32 = arith.constant 0 : i32
    %c0_i32_0 = arith.constant 0 : i32
    return %arg0, %c0_i32 : i32, i32
  }
}

module attributes {stable_mosaic.version = 11 : i64} {
  func.func @_mm_epilogue_kernel(%arg0: i32, %arg1: memref<512x576xbf16, #tpu.memory_space<vmem>>, %arg2: memref<576x128xbf16, #tpu.memory_space<vmem>>, %arg3: memref<8x128xf32, #tpu.memory_space<vmem>>, %arg4: memref<512x128xbf16, #tpu.memory_space<vmem>>) attributes {dimension_semantics = [#tpu.dimension_semantics<parallel>], iteration_bounds = array<i64: 1>, scalar_prefetch = 0 : i64, scratch_operands = 0 : i64, tpu.core_type = #tpu.core_type<tc>, window_params = [{transform_indices = @transform_0, window_bounds = array<i64: 512, 576>}, {pipeline_mode = #tpu.pipeline_mode<synchronous>, transform_indices = @transform_1, window_bounds = array<i64: 576, 128>}, {pipeline_mode = #tpu.pipeline_mode<synchronous>, transform_indices = @transform_2, window_bounds = array<i64: 8, 128>}, {transform_indices = @transform_3, window_bounds = array<i64: 512, 128>}]} {
    %c0 = arith.constant 0 : index
    %c0_0 = arith.constant 0 : index
    %0 = vector.load %arg1[%c0, %c0_0] : memref<512x576xbf16, #tpu.memory_space<vmem>>, vector<512x576xbf16>
    %c0_1 = arith.constant 0 : index
    %c0_2 = arith.constant 0 : index
    %1 = vector.load %arg2[%c0_1, %c0_2] : memref<576x128xbf16, #tpu.memory_space<vmem>>, vector<576x128xbf16>
    %cst = arith.constant dense<0.000000e+00> : vector<512x128xf32>
    %2 = tpu.matmul %0, %1, %cst {dimension_numbers = #tpu.dot_dimension_numbers<[1], [0], [0], [1], [0, 0, 1, 1], [], []>} : vector<512x576xbf16>, vector<576x128xbf16>, vector<512x128xf32> -> vector<512x128xf32>
    %c0_3 = arith.constant 0 : index
    %c0_4 = arith.constant 0 : index
    %3 = vector.load %arg3[%c0_3, %c0_4] : memref<8x128xf32, #tpu.memory_space<vmem>>, vector<1x128xf32>
    %4 = vector.broadcast %3 : vector<1x128xf32> to vector<512x128xf32>
    %5 = arith.addf %2, %4 : vector<512x128xf32>
    %cst_5 = arith.constant -1.000000e+00 : f32
    %cst_6 = arith.constant 1.000000e+00 : f32
    %6 = vector.broadcast %cst_5 : f32 to vector<512x128xf32>
    %7 = arith.maximumf %6, %5 : vector<512x128xf32>
    %8 = vector.broadcast %cst_6 : f32 to vector<512x128xf32>
    %9 = arith.minimumf %8, %7 : vector<512x128xf32>
    %10 = arith.truncf %9 : vector<512x128xf32> to vector<512x128xbf16>
    %c0_7 = arith.constant 0 : index
    %c0_8 = arith.constant 0 : index
    %11 = vector.load %arg4[%c0_7, %c0_8] : memref<512x128xbf16, #tpu.memory_space<vmem>>, vector<512x128xbf16>
    tpu.vector_store %arg4[%c0_7, %c0_8], %10 {strides = array<i32>} : memref<512x128xbf16, #tpu.memory_space<vmem>>, vector<512x128xbf16>,
    return
  }
  func.func @transform_0(%arg0: i32) -> (i32, i32) {
    %c0_i32 = arith.constant 0 : i32
    %c0_i32_0 = arith.constant 0 : i32
    return %arg0, %c0_i32 : i32, i32
  }
  func.func @transform_1(%arg0: i32) -> (i32, i32) {
    %c0_i32 = arith.constant 0 : i32
    %c0_i32_0 = arith.constant 0 : i32
    %c0_i32_1 = arith.constant 0 : i32
    return %c0_i32, %c0_i32_0 : i32, i32
  }
  func.func @transform_2(%arg0: i32) -> (i32, i32) {
    %c0_i32 = arith.constant 0 : i32
    %c0_i32_0 = arith.constant 0 : i32
    %c0_i32_1 = arith.constant 0 : i32
    return %c0_i32, %c0_i32_0 : i32, i32
  }
  func.func @transform_3(%arg0: i32) -> (i32, i32) {
    %c0_i32 = arith.constant 0 : i32
    %c0_i32_0 = arith.constant 0 : i32
    return %arg0, %c0_i32 : i32, i32
  }
}

module attributes {stable_mosaic.version = 11 : i64} {
  func.func @_mm_epilogue_kernel(%arg0: i32, %arg1: memref<128x144xbf16, #tpu.memory_space<vmem>>, %arg2: memref<144x128xbf16, #tpu.memory_space<vmem>>, %arg3: memref<8x128xf32, #tpu.memory_space<vmem>>, %arg4: memref<128x128xbf16, #tpu.memory_space<vmem>>) attributes {dimension_semantics = [#tpu.dimension_semantics<parallel>], iteration_bounds = array<i64: 1>, scalar_prefetch = 0 : i64, scratch_operands = 0 : i64, tpu.core_type = #tpu.core_type<tc>, window_params = [{transform_indices = @transform_0, window_bounds = array<i64: 128, 144>}, {pipeline_mode = #tpu.pipeline_mode<synchronous>, transform_indices = @transform_1, window_bounds = array<i64: 144, 128>}, {pipeline_mode = #tpu.pipeline_mode<synchronous>, transform_indices = @transform_2, window_bounds = array<i64: 8, 128>}, {transform_indices = @transform_3, window_bounds = array<i64: 128, 128>}]} {
    %c0 = arith.constant 0 : index
    %c0_0 = arith.constant 0 : index
    %0 = vector.load %arg1[%c0, %c0_0] : memref<128x144xbf16, #tpu.memory_space<vmem>>, vector<128x144xbf16>
    %c0_1 = arith.constant 0 : index
    %c0_2 = arith.constant 0 : index
    %1 = vector.load %arg2[%c0_1, %c0_2] : memref<144x128xbf16, #tpu.memory_space<vmem>>, vector<144x128xbf16>
    %cst = arith.constant dense<0.000000e+00> : vector<128x128xf32>
    %2 = tpu.matmul %0, %1, %cst {dimension_numbers = #tpu.dot_dimension_numbers<[1], [0], [0], [1], [0, 0, 1, 1], [], []>} : vector<128x144xbf16>, vector<144x128xbf16>, vector<128x128xf32> -> vector<128x128xf32>
    %c0_3 = arith.constant 0 : index
    %c0_4 = arith.constant 0 : index
    %3 = vector.load %arg3[%c0_3, %c0_4] : memref<8x128xf32, #tpu.memory_space<vmem>>, vector<1x128xf32>
    %4 = vector.broadcast %3 : vector<1x128xf32> to vector<128x128xf32>
    %5 = arith.addf %2, %4 : vector<128x128xf32>
    %cst_5 = arith.constant -1.000000e+00 : f32
    %cst_6 = arith.constant 1.000000e+00 : f32
    %6 = vector.broadcast %cst_5 : f32 to vector<128x128xf32>
    %7 = arith.maximumf %6, %5 : vector<128x128xf32>
    %8 = vector.broadcast %cst_6 : f32 to vector<128x128xf32>
    %9 = arith.minimumf %8, %7 : vector<128x128xf32>
    %10 = arith.truncf %9 : vector<128x128xf32> to vector<128x128xbf16>
    %c0_7 = arith.constant 0 : index
    %c0_8 = arith.constant 0 : index
    %11 = vector.load %arg4[%c0_7, %c0_8] : memref<128x128xbf16, #tpu.memory_space<vmem>>, vector<128x128xbf16>
    tpu.vector_store %arg4[%c0_7, %c0_8], %10 {strides = array<i32>} : memref<128x128xbf16, #tpu.memory_space<vmem>>, vector<128x128xbf16>,
    return
  }
  func.func @transform_0(%arg0: i32) -> (i32, i32) {
    %c0_i32 = arith.constant 0 : i32
    %c0_i32_0 = arith.constant 0 : i32
    return %arg0, %c0_i32 : i32, i32
  }
  func.func @transform_1(%arg0: i32) -> (i32, i32) {
    %c0_i32 = arith.constant 0 : i32
    %c0_i32_0 = arith.constant 0 : i32
    %c0_i32_1 = arith.constant 0 : i32
    return %c0_i32, %c0_i32_0 : i32, i32
  }
  func.func @transform_2(%arg0: i32) -> (i32, i32) {
    %c0_i32 = arith.constant 0 : i32
    %c0_i32_0 = arith.constant 0 : i32
    %c0_i32_1 = arith.constant 0 : i32
    return %c0_i32, %c0_i32_0 : i32, i32
  }
  func.func @transform_3(%arg0: i32) -> (i32, i32) {
    %c0_i32 = arith.constant 0 : i32
    %c0_i32_0 = arith.constant 0 : i32
    return %arg0, %c0_i32 : i32, i32
  }
}

module attributes {stable_mosaic.version = 11 : i64} {
  func.func @_mm_epilogue_kernel(%arg0: i32, %arg1: memref<32x288xbf16, #tpu.memory_space<vmem>>, %arg2: memref<288x128xbf16, #tpu.memory_space<vmem>>, %arg3: memref<8x128xf32, #tpu.memory_space<vmem>>, %arg4: memref<32x128xbf16, #tpu.memory_space<vmem>>) attributes {dimension_semantics = [#tpu.dimension_semantics<parallel>], iteration_bounds = array<i64: 1>, scalar_prefetch = 0 : i64, scratch_operands = 0 : i64, tpu.core_type = #tpu.core_type<tc>, window_params = [{transform_indices = @transform_0, window_bounds = array<i64: 32, 288>}, {pipeline_mode = #tpu.pipeline_mode<synchronous>, transform_indices = @transform_1, window_bounds = array<i64: 288, 128>}, {pipeline_mode = #tpu.pipeline_mode<synchronous>, transform_indices = @transform_2, window_bounds = array<i64: 8, 128>}, {transform_indices = @transform_3, window_bounds = array<i64: 32, 128>}]} {
    %c0 = arith.constant 0 : index
    %c0_0 = arith.constant 0 : index
    %0 = vector.load %arg1[%c0, %c0_0] : memref<32x288xbf16, #tpu.memory_space<vmem>>, vector<32x288xbf16>
    %c0_1 = arith.constant 0 : index
    %c0_2 = arith.constant 0 : index
    %1 = vector.load %arg2[%c0_1, %c0_2] : memref<288x128xbf16, #tpu.memory_space<vmem>>, vector<288x128xbf16>
    %cst = arith.constant dense<0.000000e+00> : vector<32x128xf32>
    %2 = tpu.matmul %0, %1, %cst {dimension_numbers = #tpu.dot_dimension_numbers<[1], [0], [0], [1], [0, 0, 1, 1], [], []>} : vector<32x288xbf16>, vector<288x128xbf16>, vector<32x128xf32> -> vector<32x128xf32>
    %c0_3 = arith.constant 0 : index
    %c0_4 = arith.constant 0 : index
    %3 = vector.load %arg3[%c0_3, %c0_4] : memref<8x128xf32, #tpu.memory_space<vmem>>, vector<1x128xf32>
    %4 = vector.broadcast %3 : vector<1x128xf32> to vector<32x128xf32>
    %5 = arith.addf %2, %4 : vector<32x128xf32>
    %cst_5 = arith.constant -1.000000e+00 : f32
    %cst_6 = arith.constant 1.000000e+00 : f32
    %6 = vector.broadcast %cst_5 : f32 to vector<32x128xf32>
    %7 = arith.maximumf %6, %5 : vector<32x128xf32>
    %8 = vector.broadcast %cst_6 : f32 to vector<32x128xf32>
    %9 = arith.minimumf %8, %7 : vector<32x128xf32>
    %10 = arith.truncf %9 : vector<32x128xf32> to vector<32x128xbf16>
    %c0_7 = arith.constant 0 : index
    %c0_8 = arith.constant 0 : index
    %11 = vector.load %arg4[%c0_7, %c0_8] : memref<32x128xbf16, #tpu.memory_space<vmem>>, vector<32x128xbf16>
    tpu.vector_store %arg4[%c0_7, %c0_8], %10 {strides = array<i32>} : memref<32x128xbf16, #tpu.memory_space<vmem>>, vector<32x128xbf16>,
    return
  }
  func.func @transform_0(%arg0: i32) -> (i32, i32) {
    %c0_i32 = arith.constant 0 : i32
    %c0_i32_0 = arith.constant 0 : i32
    return %arg0, %c0_i32 : i32, i32
  }
  func.func @transform_1(%arg0: i32) -> (i32, i32) {
    %c0_i32 = arith.constant 0 : i32
    %c0_i32_0 = arith.constant 0 : i32
    %c0_i32_1 = arith.constant 0 : i32
    return %c0_i32, %c0_i32_0 : i32, i32
  }
  func.func @transform_2(%arg0: i32) -> (i32, i32) {
    %c0_i32 = arith.constant 0 : i32
    %c0_i32_0 = arith.constant 0 : i32
    %c0_i32_1 = arith.constant 0 : i32
    return %c0_i32, %c0_i32_0 : i32, i32
  }
  func.func @transform_3(%arg0: i32) -> (i32, i32) {
    %c0_i32 = arith.constant 0 : i32
    %c0_i32_0 = arith.constant 0 : i32
    return %arg0, %c0_i32 : i32, i32
  }
}

module attributes {stable_mosaic.version = 11 : i64} {
  func.func @_mm_epilogue_kernel(%arg0: i32, %arg1: memref<32x144xbf16, #tpu.memory_space<vmem>>, %arg2: memref<144x128xbf16, #tpu.memory_space<vmem>>, %arg3: memref<8x128xf32, #tpu.memory_space<vmem>>, %arg4: memref<32x128xbf16, #tpu.memory_space<vmem>>) attributes {dimension_semantics = [#tpu.dimension_semantics<parallel>], iteration_bounds = array<i64: 1>, scalar_prefetch = 0 : i64, scratch_operands = 0 : i64, tpu.core_type = #tpu.core_type<tc>, window_params = [{transform_indices = @transform_0, window_bounds = array<i64: 32, 144>}, {pipeline_mode = #tpu.pipeline_mode<synchronous>, transform_indices = @transform_1, window_bounds = array<i64: 144, 128>}, {pipeline_mode = #tpu.pipeline_mode<synchronous>, transform_indices = @transform_2, window_bounds = array<i64: 8, 128>}, {transform_indices = @transform_3, window_bounds = array<i64: 32, 128>}]} {
    %c0 = arith.constant 0 : index
    %c0_0 = arith.constant 0 : index
    %0 = vector.load %arg1[%c0, %c0_0] : memref<32x144xbf16, #tpu.memory_space<vmem>>, vector<32x144xbf16>
    %c0_1 = arith.constant 0 : index
    %c0_2 = arith.constant 0 : index
    %1 = vector.load %arg2[%c0_1, %c0_2] : memref<144x128xbf16, #tpu.memory_space<vmem>>, vector<144x128xbf16>
    %cst = arith.constant dense<0.000000e+00> : vector<32x128xf32>
    %2 = tpu.matmul %0, %1, %cst {dimension_numbers = #tpu.dot_dimension_numbers<[1], [0], [0], [1], [0, 0, 1, 1], [], []>} : vector<32x144xbf16>, vector<144x128xbf16>, vector<32x128xf32> -> vector<32x128xf32>
    %c0_3 = arith.constant 0 : index
    %c0_4 = arith.constant 0 : index
    %3 = vector.load %arg3[%c0_3, %c0_4] : memref<8x128xf32, #tpu.memory_space<vmem>>, vector<1x128xf32>
    %4 = vector.broadcast %3 : vector<1x128xf32> to vector<32x128xf32>
    %5 = arith.addf %2, %4 : vector<32x128xf32>
    %cst_5 = arith.constant -1.000000e+00 : f32
    %cst_6 = arith.constant 1.000000e+00 : f32
    %6 = vector.broadcast %cst_5 : f32 to vector<32x128xf32>
    %7 = arith.maximumf %6, %5 : vector<32x128xf32>
    %8 = vector.broadcast %cst_6 : f32 to vector<32x128xf32>
    %9 = arith.minimumf %8, %7 : vector<32x128xf32>
    %10 = arith.truncf %9 : vector<32x128xf32> to vector<32x128xbf16>
    %c0_7 = arith.constant 0 : index
    %c0_8 = arith.constant 0 : index
    %11 = vector.load %arg4[%c0_7, %c0_8] : memref<32x128xbf16, #tpu.memory_space<vmem>>, vector<32x128xbf16>
    tpu.vector_store %arg4[%c0_7, %c0_8], %10 {strides = array<i32>} : memref<32x128xbf16, #tpu.memory_space<vmem>>, vector<32x128xbf16>,
    return
  }
  func.func @transform_0(%arg0: i32) -> (i32, i32) {
    %c0_i32 = arith.constant 0 : i32
    %c0_i32_0 = arith.constant 0 : i32
    return %arg0, %c0_i32 : i32, i32
  }
  func.func @transform_1(%arg0: i32) -> (i32, i32) {
    %c0_i32 = arith.constant 0 : i32
    %c0_i32_0 = arith.constant 0 : i32
    %c0_i32_1 = arith.constant 0 : i32
    return %c0_i32, %c0_i32_0 : i32, i32
  }
  func.func @transform_2(%arg0: i32) -> (i32, i32) {
    %c0_i32 = arith.constant 0 : i32
    %c0_i32_0 = arith.constant 0 : i32
    %c0_i32_1 = arith.constant 0 : i32
    return %c0_i32, %c0_i32_0 : i32, i32
  }
  func.func @transform_3(%arg0: i32) -> (i32, i32) {
    %c0_i32 = arith.constant 0 : i32
    %c0_i32_0 = arith.constant 0 : i32
    return %arg0, %c0_i32 : i32, i32
  }
}

</mosaic_0001>

<llo_original>
// kernel: forward.9
$region0: #{forward.9}
  #allocation0 [shape = 'u32[]', space=smem, size = 0x4, offset = 0x4, fixed_abs, tag = 'smem constant byte address 0x4 - core index']
  #allocation1 [shape = 'u32[144,128]{1,0:T(1,128)}', space=vmem, size = 0x12000, scoped, tag = 'internal scratch']
  %s0 = inlined_call_operand.vmem [shape: bf16[2048,147], index: 0, kind: input, shape index: {}]
  %s1 = inlined_call_operand.vmem [shape: bf16[147,128], index: 1, kind: input, shape index: {}]
  %s2 = inlined_call_operand.vmem [shape: f32[8,128], index: 2, kind: input, shape index: {}]
  %s3 = inlined_call_operand.vmem [shape: f32[2048,128], index: 3, kind: output, shape index: {}]
  %s4 = sld [smem:[#allocation0]]
  $region22: #{forward.9} parent=0
    _
  %s6 = ssub.s32 1, %s4
  %s7 = scalar_select 0, %s6, %s4
  // Predicated region
  $region2: #{forward.9} parent=0 // pred_check
    _
  $region3: #{forward.9} parent=0 // pred_check_branch
    %9 = sbr.rel (0) target = $region5
  $region4: #{forward.9} parent=0 // pred_region
    _
  $region5: #{forward.9} parent=0 // pred_fallthru
    _
  // Predicated region
  $region6: #{forward.9} parent=0 // pred_check
    _
  $region7: #{forward.9} parent=0 // pred_check_branch
    %11 = sbr.rel (0) target = $region9
  $region8: #{forward.9} parent=0 // pred_region
    _
  $region9: #{forward.9} parent=0 // pred_fallthru
    _
  // Predicated region
  $region10: #{forward.9} parent=0 // pred_check
    _
  $region11: #{forward.9} parent=0 // pred_check_branch
    %13 = sbr.rel (0) target = $region13
  $region12: #{forward.9} parent=0 // pred_region
    _
  $region13: #{forward.9} parent=0 // pred_fallthru
    _
  %v15 = vld [vmem:[%s0] sm:$0xff]
  %v16 = vld [vmem:[%s0 + $0x8] sm:$0xff]
  %v17 = vld [vmem:[%s0 + $0x10] sm:$0xff]
  %v18 = vld [vmem:[%s0 + $0x18] sm:$0xff]
  %v19 = vld [vmem:[%s0 + $0x20] sm:$0xff]
  %v20 = vld [vmem:[%s0 + $0x28] sm:$0xff]
  %v21 = vld [vmem:[%s0 + $0x30] sm:$0xff]
  %v22 = vld [vmem:[%s0 + $0x38] sm:$0xff]
  %v23 = vld [vmem:[%s0 + $0x40] sm:$0xff]
  %v24 = vld [vmem:[%s0 + $0x48] sm:$0xff]
  %v25 = vld [vmem:[%s0 + $0x50] sm:$0xff]
  %v26 = vld [vmem:[%s0 + $0x58] sm:$0xff]
  %v27 = vld [vmem:[%s0 + $0x60] sm:$0xff]
  %v28 = vld [vmem:[%s0 + $0x68] sm:$0xff]
  %v29 = vld [vmem:[%s0 + $0x70] sm:$0xff]
  %v30 = vld [vmem:[%s0 + $0x78] sm:$0xff]
  %v31 = vld [vmem:[%s0 + $0x80] sm:$0xff]
  %v32 = vld [vmem:[%s0 + $0x88] sm:$0xff]
  %v33 = vld [vmem:[%s0 + $0x90] sm:$0xff]
  %v34 = vld [vmem:[%s0 + $0x98] sm:$0xff]
  %v35 = vld [vmem:[%s0 + $0xa0] sm:$0xff]
  %v36 = vld [vmem:[%s0 + $0xa8] sm:$0xff]
  %v37 = vld [vmem:[%s0 + $0xb0] sm:$0xff]
  %v38 = vld [vmem:[%s0 + $0xb8] sm:$0xff]
  %v39 = vld [vmem:[%s0 + $0xc0] sm:$0xff]
  %v40 = vld [vmem:[%s0 + $0xc8] sm:$0xff]
  %v41 = vld [vmem:[%s0 + $0xd0] sm:$0xff]
  %v42 = vld [vmem:[%s0 + $0xd8] sm:$0xff]
  %v43 = vld [vmem:[%s0 + $0xe0] sm:$0xff]
  %v44 = vld [vmem:[%s0 + $0xe8] sm:$0xff]
  %v45 = vld [vmem:[%s0 + $0xf0] sm:$0xff]
  %v46 = vld [vmem:[%s0 + $0xf8] sm:$0xff]
  %v47 = vld [vmem:[%s0 + $0x100] sm:$0xff]
  %v48 = vld [vmem:[%s0 + $0x108] sm:$0xff]
  %v49 = vld [vmem:[%s0 + $0x110] sm:$0xff]
  %v50 = vld [vmem:[%s0 + $0x118] sm:$0xff]
  %v51 = vld [vmem:[%s0 + $0x120] sm:$0xff]
  %v52 = vld [vmem:[%s0 + $0x128] sm:$0xff]
  %v53 = vld [vmem:[%s0 + $0x130] sm:$0xff]
  %v54 = vld [vmem:[%s0 + $0x138] sm:$0xff]
  %v55 = vld [vmem:[%s0 + $0x140] sm:$0xff]
  %v56 = vld [vmem:[%s0 + $0x148] sm:$0xff]
  %v57 = vld [vmem:[%s0 + $0x150] sm:$0xff]
  %v58 = vld [vmem:[%s0 + $0x158] sm:$0xff]
  %v59 = vld [vmem:[%s0 + $0x160] sm:$0xff]
  %v60 = vld [vmem:[%s0 + $0x168] sm:$0xff]
  %v61 = vld [vmem:[%s0 + $0x170] sm:$0xff]
  %v62 = vld [vmem:[%s0 + $0x178] sm:$0xff]
  %v63 = vld [vmem:[%s0 + $0x180] sm:$0xff]
  %v64 = vld [vmem:[%s0 + $0x188] sm:$0xff]
  %v65 = vld [vmem:[%s0 + $0x190] sm:$0xff]
  %v66 = vld [vmem:[%s0 + $0x198] sm:$0xff]
  %v67 = vld [vmem:[%s0 + $0x1a0] sm:$0xff]
  %v68 = vld [vmem:[%s0 + $0x1a8] sm:$0xff]
  %v69 = vld [vmem:[%s0 + $0x1b0] sm:$0xff]
  %v70 = vld [vmem:[%s0 + $0x1b8] sm:$0xff]
  %v71 = vld [vmem:[%s0 + $0x1c0] sm:$0xff]
  %v72 = vld [vmem:[%s0 + $0x1c8] sm:$0xff]
  %v73 = vld [vmem:[%s0 + $0x1d0] sm:$0xff]
  %v74 = vld [vmem:[%s0 + $0x1d8] sm:$0xff]
  %v75 = vld [vmem:[%s0 + $0x1e0] sm:$0xff]
  %v76 = vld [vmem:[%s0 + $0x1e8] sm:$0xff]
  %v77 = vld [vmem:[%s0 + $0x1f0] sm:$0xff]
  %v78 = vld [vmem:[%s0 + $0x1f8] sm:$0xff]
  %v79 = vld [vmem:[%s0 + $0x200] sm:$0xff]
  %v80 = vld [vmem:[%s0 + $0x208] sm:$0xff]
  %v81 = vld [vmem:[%s0 + $0x210] sm:$0xff]
  %v82 = vld [vmem:[%s0 + $0x218] sm:$0xff]
  %v83 = vld [vmem:[%s0 + $0x220] sm:$0xff]
  %v84 = vld [vmem:[%s0 + $0x228] sm:$0xff]
  %v85 = vld [vmem:[%s0 + $0x230] sm:$0xff]
  %v86 = vld [vmem:[%s0 + $0x238] sm:$0xff]
  %v87 = vld [vmem:[%s0 + $0x240] sm:$0xff]
  %v88 = vld [vmem:[%s0 + $0x248] sm:$0xff]
  %v89 = vld [vmem:[%s0 + $0x250] sm:$0xff]
  %v90 = vld [vmem:[%s0 + $0x258] sm:$0xff]
  %v91 = vld [vmem:[%s0 + $0x260] sm:$0xff]
  %v92 = vld [vmem:[%s0 + $0x268] sm:$0xff]
  %v93 = vld [vmem:[%s0 + $0x270] sm:$0xff]
  %v94 = vld [vmem:[%s0 + $0x278] sm:$0xff]
  %v95 = vld [vmem:[%s0 + $0x280] sm:$0xff]
  %v96 = vld [vmem:[%s0 + $0x288] sm:$0xff]
  %v97 = vld [vmem:[%s0 + $0x290] sm:$0xff]
  %v98 = vld [vmem:[%s0 + $0x298] sm:$0xff]
  %v99 = vld [vmem:[%s0 + $0x2a0] sm:$0xff]
  %v100 = vld [vmem:[%s0 + $0x2a8] sm:$0xff]
  %v101 = vld [vmem:[%s0 + $0x2b0] sm:$0xff]
  %v102 = vld [vmem:[%s0 + $0x2b8] sm:$0xff]
  %v103 = vld [vmem:[%s0 + $0x2c0] sm:$0xff]
  %v104 = vld [vmem:[%s0 + $0x2c8] sm:$0xff]
  %v105 = vld [vmem:[%s0 + $0x2d0] sm:$0xff]
  %v106 = vld [vmem:[%s0 + $0x2d8] sm:$0xff]
  %v107 = vld [vmem:[%s0 + $0x2e0] sm:$0xff]
  %v108 = vld [vmem:[%s0 + $0x2e8] sm:$0xff]
  %v109 = vld [vmem:[%s0 + $0x2f0] sm:$0xff]
  %v110 = vld [vmem:[%s0 + $0x2f8] sm:$0xff]
  %v111 = vld [vmem:[%s0 + $0x300] sm:$0xff]
  %v112 = vld [vmem:[%s0 + $0x308] sm:$0xff]
  %v113 = vld [vmem:[%s0 + $0x310] sm:$0xff]
  %v114 = vld [vmem:[%s0 + $0x318] sm:$0xff]
  %v115 = vld [vmem:[%s0 + $0x320] sm:$0xff]
  %v116 = vld [vmem:[%s0 + $0x328] sm:$0xff]
  %v117 = vld [vmem:[%s0 + $0x330] sm:$0xff]
  %v118 = vld [vmem:[%s0 + $0x338] sm:$0xff]
  %v119 = vld [vmem:[%s0 + $0x340] sm:$0xff]
  %v120 = vld [vmem:[%s0 + $0x348] sm:$0xff]
  %v121 = vld [vmem:[%s0 + $0x350] sm:$0xff]
  %v122 = vld [vmem:[%s0 + $0x358] sm:$0xff]
  %v123 = vld [vmem:[%s0 + $0x360] sm:$0xff]
  %v124 = vld [vmem:[%s0 + $0x368] sm:$0xff]
  %v125 = vld [vmem:[%s0 + $0x370] sm:$0xff]
  %v126 = vld [vmem:[%s0 + $0x378] sm:$0xff]
  %v127 = vld [vmem:[%s0 + $0x380] sm:$0xff]
  %v128 = vld [vmem:[%s0 + $0x388] sm:$0xff]
  %v129 = vld [vmem:[%s0 + $0x390] sm:$0xff]
  %v130 = vld [vmem:[%s0 + $0x398] sm:$0xff]
  %v131 = vld [vmem:[%s0 + $0x3a0] sm:$0xff]
  %v132 = vld [vmem:[%s0 + $0x3a8] sm:$0xff]
  %v133 = vld [vmem:[%s0 + $0x3b0] sm:$0xff]
  %v134 = vld [vmem:[%s0 + $0x3b8] sm:$0xff]
  %v135 = vld [vmem:[%s0 + $0x3c0] sm:$0xff]
  %v136 = vld [vmem:[%s0 + $0x3c8] sm:$0xff]
  %v137 = vld [vmem:[%s0 + $0x3d0] sm:$0xff]
  %v138 = vld [vmem:[%s0 + $0x3d8] sm:$0xff]
  %v139 = vld [vmem:[%s0 + $0x3e0] sm:$0xff]
  %v140 = vld [vmem:[%s0 + $0x3e8] sm:$0xff]
  %v141 = vld [vmem:[%s0 + $0x3f0] sm:$0xff]
  %v142 = vld [vmem:[%s0 + $0x3f8] sm:$0xff]
  %v143 = vld [vmem:[%s0 + $0x400] sm:$0xff]
  %v144 = vld [vmem:[%s0 + $0x408] sm:$0xff]
  %v145 = vld [vmem:[%s0 + $0x410] sm:$0xff]
  %v146 = vld [vmem:[%s0 + $0x418] sm:$0xff]
  %v147 = vld [vmem:[%s0 + $0x420] sm:$0xff]
  %v148 = vld [vmem:[%s0 + $0x428] sm:$0xff]
  %v149 = vld [vmem:[%s0 + $0x430] sm:$0xff]
  %v150 = vld [vmem:[%s0 + $0x438] sm:$0xff]
  %v151 = vld [vmem:[%s0 + $0x440] sm:$0xff]
  %v152 = vld [vmem:[%s0 + $0x448] sm:$0xff]
  %v153 = vld [vmem:[%s0 + $0x450] sm:$0xff]
  %v154 = vld [vmem:[%s0 + $0x458] sm:$0xff]
  %v155 = vld [vmem:[%s0 + $0x460] sm:$0xff]
  %v156 = vld [vmem:[%s0 + $0x468] sm:$0xff]
  %v157 = vld [vmem:[%s0 + $0x470] sm:$0xff]
  %v158 = vld [vmem:[%s0 + $0x478] sm:$0xff]
  %v159 = vld [vmem:[%s0 + $0x480] sm:$0xff]
  %v160 = vld [vmem:[%s0 + $0x488] sm:$0xff]
  %v161 = vld [vmem:[%s0 + $0x490] sm:$0xff]
  %v162 = vld [vmem:[%s0 + $0x498] sm:$0xff]
  %v163 = vld [vmem:[%s0 + $0x4a0] sm:$0xff]
  %v164 = vld [vmem:[%s0 + $0x4a8] sm:$0xff]
  %v165 = vld [vmem:[%s0 + $0x4b0] sm:$0xff]
  %v166 = vld [vmem:[%s0 + $0x4b8] sm:$0xff]
  %v167 = vld [vmem:[%s0 + $0x4c0] sm:$0xff]
  %v168 = vld [vmem:[%s0 + $0x4c8] sm:$0xff]
  %v169 = vld [vmem:[%s0 + $0x4d0] sm:$0xff]
  %v170 = vld [vmem:[%s0 + $0x4d8] sm:$0xff]
  %v171 = vld [vmem:[%s0 + $0x4e0] sm:$0xff]
  %v172 = vld [vmem:[%s0 + $0x4e8] sm:$0xff]
  %v173 = vld [vmem:[%s0 + $0x4f0] sm:$0xff]
  %v174 = vld [vmem:[%s0 + $0x4f8] sm:$0xff]
  %v175 = vld [vmem:[%s0 + $0x500] sm:$0xff]
  %v176 = vld [vmem:[%s0 + $0x508] sm:$0xff]
  %v177 = vld [vmem:[%s0 + $0x510] sm:$0xff]
  %v178 = vld [vmem:[%s0 + $0x518] sm:$0xff]
  %v179 = vld [vmem:[%s0 + $0x520] sm:$0xff]
  %v180 = vld [vmem:[%s0 + $0x528] sm:$0xff]
  %v181 = vld [vmem:[%s0 + $0x530] sm:$0xff]
  %v182 = vld [vmem:[%s0 + $0x538] sm:$0xff]
  %v183 = vld [vmem:[%s0 + $0x540] sm:$0xff]
  %v184 = vld [vmem:[%s0 + $0x548] sm:$0xff]
  %v185 = vld [vmem:[%s0 + $0x550] sm:$0xff]
  %v186 = vld [vmem:[%s0 + $0x558] sm:$0xff]
  %v187 = vld [vmem:[%s0 + $0x560] sm:$0xff]
  %v188 = vld [vmem:[%s0 + $0x568] sm:$0xff]
  %v189 = vld [vmem:[%s0 + $0x570] sm:$0xff]
  %v190 = vld [vmem:[%s0 + $0x578] sm:$0xff]
  %v191 = vld [vmem:[%s0 + $0x580] sm:$0xff]
  %v192 = vld [vmem:[%s0 + $0x588] sm:$0xff]
  %v193 = vld [vmem:[%s0 + $0x590] sm:$0xff]
  %v194 = vld [vmem:[%s0 + $0x598] sm:$0xff]
  %v195 = vld [vmem:[%s0 + $0x5a0] sm:$0xff]
  %v196 = vld [vmem:[%s0 + $0x5a8] sm:$0xff]
  %v197 = vld [vmem:[%s0 + $0x5b0] sm:$0xff]
  %v198 = vld [vmem:[%s0 + $0x5b8] sm:$0xff]
  %v199 = vld [vmem:[%s0 + $0x5c0] sm:$0xff]
  %v200 = vld [vmem:[%s0 + $0x5c8] sm:$0xff]
  %v201 = vld [vmem:[%s0 + $0x5d0] sm:$0xff]
  %v202 = vld [vmem:[%s0 + $0x5d8] sm:$0xff]
  %v203 = vld [vmem:[%s0 + $0x5e0] sm:$0xff]
  %v204 = vld [vmem:[%s0 + $0x5e8] sm:$0xff]
  %v205 = vld [vmem:[%s0 + $0x5f0] sm:$0xff]
  %v206 = vld [vmem:[%s0 + $0x5f8] sm:$0xff]
  %v207 = vld [vmem:[%s0 + $0x600] sm:$0xff]
  %v208 = vld [vmem:[%s0 + $0x608] sm:$0xff]
  %v209 = vld [vmem:[%s0 + $0x610] sm:$0xff]
  %v210 = vld [vmem:[%s0 + $0x618] sm:$0xff]
  %v211 = vld [vmem:[%s0 + $0x620] sm:$0xff]
  %v212 = vld [vmem:[%s0 + $0x628] sm:$0xff]
  %v213 = vld [vmem:[%s0 + $0x630] sm:$0xff]
  %v214 = vld [vmem:[%s0 + $0x638] sm:$0xff]
  %v215 = vld [vmem:[%s0 + $0x640] sm:$0xff]
  %v216 = vld [vmem:[%s0 + $0x648] sm:$0xff]
  %v217 = vld [vmem:[%s0 + $0x650] sm:$0xff]
  %v218 = vld [vmem:[%s0 + $0x658] sm:$0xff]
  %v219 = vld [vmem:[%s0 + $0x660] sm:$0xff]
  %v220 = vld [vmem:[%s0 + $0x668] sm:$0xff]
  %v221 = vld [vmem:[%s0 + $0x670] sm:$0xff]
  %v222 = vld [vmem:[%s0 + $0x678] sm:$0xff]
  %v223 = vld [vmem:[%s0 + $0x680] sm:$0xff]
  %v224 = vld [vmem:[%s0 + $0x688] sm:$0xff]
  %v225 = vld [vmem:[%s0 + $0x690] sm:$0xff]
  %v226 = vld [vmem:[%s0 + $0x698] sm:$0xff]
  %v227 = vld [vmem:[%s0 + $0x6a0] sm:$0xff]
  %v228 = vld [vmem:[%s0 + $0x6a8] sm:$0xff]
  %v229 = vld [vmem:[%s0 + $0x6b0] sm:$0xff]
  %v230 = vld [vmem:[%s0 + $0x6b8] sm:$0xff]
  %v231 = vld [vmem:[%s0 + $0x6c0] sm:$0xff]
  %v232 = vld [vmem:[%s0 + $0x6c8] sm:$0xff]
  %v233 = vld [vmem:[%s0 + $0x6d0] sm:$0xff]
  %v234 = vld [vmem:[%s0 + $0x6d8] sm:$0xff]
  %v235 = vld [vmem:[%s0 + $0x6e0] sm:$0xff]
  %v236 = vld [vmem:[%s0 + $0x6e8] sm:$0xff]
  %v237 = vld [vmem:[%s0 + $0x6f0] sm:$0xff]
  %v238 = vld [vmem:[%s0 + $0x6f8] sm:$0xff]
  %v239 = vld [vmem:[%s0 + $0x700] sm:$0xff]
  %v240 = vld [vmem:[%s0 + $0x708] sm:$0xff]
  %v241 = vld [vmem:[%s0 + $0x710] sm:$0xff]
  %v242 = vld [vmem:[%s0 + $0x718] sm:$0xff]
  %v243 = vld [vmem:[%s0 + $0x720] sm:$0xff]
  %v244 = vld [vmem:[%s0 + $0x728] sm:$0xff]
  %v245 = vld [vmem:[%s0 + $0x730] sm:$0xff]
  %v246 = vld [vmem:[%s0 + $0x738] sm:$0xff]
  %v247 = vld [vmem:[%s0 + $0x740] sm:$0xff]
  %v248 = vld [vmem:[%s0 + $0x748] sm:$0xff]
  %v249 = vld [vmem:[%s0 + $0x750] sm:$0xff]
  %v250 = vld [vmem:[%s0 + $0x758] sm:$0xff]
  %v251 = vld [vmem:[%s0 + $0x760] sm:$0xff]
  %v252 = vld [vmem:[%s0 + $0x768] sm:$0xff]
  %v253 = vld [vmem:[%s0 + $0x770] sm:$0xff]
  %v254 = vld [vmem:[%s0 + $0x778] sm:$0xff]
  %v255 = vld [vmem:[%s0 + $0x780] sm:$0xff]
  %v256 = vld [vmem:[%s0 + $0x788] sm:$0xff]
  %v257 = vld [vmem:[%s0 + $0x790] sm:$0xff]
  %v258 = vld [vmem:[%s0 + $0x798] sm:$0xff]
  %v259 = vld [vmem:[%s0 + $0x7a0] sm:$0xff]
  %v260 = vld [vmem:[%s0 + $0x7a8] sm:$0xff]
  %v261 = vld [vmem:[%s0 + $0x7b0] sm:$0xff]
  %v262 = vld [vmem:[%s0 + $0x7b8] sm:$0xff]
  %v263 = vld [vmem:[%s0 + $0x7c0] sm:$0xff]
  %v264 = vld [vmem:[%s0 + $0x7c8] sm:$0xff]
  %v265 = vld [vmem:[%s0 + $0x7d0] sm:$0xff]
  %v266 = vld [vmem:[%s0 + $0x7d8] sm:$0xff]
  %v267 = vld [vmem:[%s0 + $0x7e0] sm:$0xff]
  %v268 = vld [vmem:[%s0 + $0x7e8] sm:$0xff]
  %v269 = vld [vmem:[%s0 + $0x7f0] sm:$0xff]
  %v270 = vld [vmem:[%s0 + $0x7f8] sm:$0xff]
  %v271 = vld [vmem:[%s1] sm:$0xf]
  %v272 = vld [vmem:[%s1 + $0x4] sm:$0xf]
  %v273 = vld [vmem:[%s1 + $0x8] sm:$0xf]
  %v274 = vld [vmem:[%s1 + $0xc] sm:$0xf]
  %v275 = vld [vmem:[%s1 + $0x10] sm:$0xf]
  %v276 = vld [vmem:[%s1 + $0x14] sm:$0xf]
  %v277 = vld [vmem:[%s1 + $0x18] sm:$0xf]
  %v278 = vld [vmem:[%s1 + $0x1c] sm:$0xf]
  %v279 = vld [vmem:[%s1 + $0x20] sm:$0xf]
  %v280 = vld [vmem:[%s1 + $0x24] sm:$0xf]
  %v281 = vld [vmem:[%s1 + $0x28] sm:$0xf]
  %v282 = vld [vmem:[%s1 + $0x2c] sm:$0xf]
  %v283 = vld [vmem:[%s1 + $0x30] sm:$0xf]
  %v284 = vld [vmem:[%s1 + $0x34] sm:$0xf]
  %v285 = vld [vmem:[%s1 + $0x38] sm:$0xf]
  %v286 = vld [vmem:[%s1 + $0x3c] sm:$0xf]
  %v287 = vld [vmem:[%s1 + $0x40] sm:$0xf]
  %v288 = vld [vmem:[%s1 + $0x44] sm:$0xf]
  %v289 = vld [vmem:[%s1 + $0x48] sm:$0x3]
  %v290 = vld [vmem:[%s2] sm:$0x1]
  %v291 = vlaneseq
  %v292 = vshrl.u32 %v291, 7
  %v293 = vsub.s32 0, %v292
  %v294 = vrot.slane %v290, %v293
  %v551 = vunpack.c.l.b16 %v15
  %v552 = vunpack.c.h.b16 %v15
  %v553 = vunpack.c.l.b16 %v16
  %v554 = vunpack.c.h.b16 %v16
  %v555 = vunpack.c.l.b16 %v17
  %v556 = vunpack.c.h.b16 %v17
  %v557 = vunpack.c.l.b16 %v18
  %v558 = vunpack.c.h.b16 %v18
  %v559 = vunpack.c.l.b16 %v19
  %v560 = vunpack.c.h.b16 %v19
  %v561 = vunpack.c.l.b16 %v20
  %v562 = vunpack.c.h.b16 %v20
  %v563 = vunpack.c.l.b16 %v21
  %v564 = vunpack.c.h.b16 %v21
  %v565 = vunpack.c.l.b16 %v22
  %v566 = vunpack.c.h.b16 %v22
  %v567 = vunpack.c.l.b16 %v23
  %v568 = vunpack.c.h.b16 %v23
  %v569 = vunpack.c.l.b16 %v24
  %v570 = vunpack.c.h.b16 %v24
  %v571 = vunpack.c.l.b16 %v25
  %v572 = vunpack.c.h.b16 %v25
  %v573 = vunpack.c.l.b16 %v26
  %v574 = vunpack.c.h.b16 %v26
  %v575 = vunpack.c.l.b16 %v27
  %v576 = vunpack.c.h.b16 %v27
  %v577 = vunpack.c.l.b16 %v28
  %v578 = vunpack.c.h.b16 %v28
  %v579 = vunpack.c.l.b16 %v29
  %v580 = vunpack.c.h.b16 %v29
  %v581 = vunpack.c.l.b16 %v30
  %v582 = vunpack.c.h.b16 %v30
  %v583 = vunpack.c.l.b16 %v31
  %v584 = vunpack.c.h.b16 %v31
  %v585 = vunpack.c.l.b16 %v32
  %v586 = vunpack.c.h.b16 %v32
  %v587 = vunpack.c.l.b16 %v33
  %v588 = vunpack.c.h.b16 %v33
  %v589 = vunpack.c.l.b16 %v34
  %v590 = vunpack.c.h.b16 %v34
  %v591 = vunpack.c.l.b16 %v35
  %v592 = vunpack.c.h.b16 %v35
  %v593 = vunpack.c.l.b16 %v36
  %v594 = vunpack.c.h.b16 %v36
  %v595 = vunpack.c.l.b16 %v37
  %v596 = vunpack.c.h.b16 %v37
  %v597 = vunpack.c.l.b16 %v38
  %v598 = vunpack.c.h.b16 %v38
  %v599 = vunpack.c.l.b16 %v39
  %v600 = vunpack.c.h.b16 %v39
  %v601 = vunpack.c.l.b16 %v40
  %v602 = vunpack.c.h.b16 %v40
  %v603 = vunpack.c.l.b16 %v41
  %v604 = vunpack.c.h.b16 %v41
  %v605 = vunpack.c.l.b16 %v42
  %v606 = vunpack.c.h.b16 %v42
  %v607 = vunpack.c.l.b16 %v43
  %v608 = vunpack.c.h.b16 %v43
  %v609 = vunpack.c.l.b16 %v44
  %v610 = vunpack.c.h.b16 %v44
  %v611 = vunpack.c.l.b16 %v45
  %v612 = vunpack.c.h.b16 %v45
  %v613 = vunpack.c.l.b16 %v46
  %v614 = vunpack.c.h.b16 %v46
  %v615 = vunpack.c.l.b16 %v47
  %v616 = vunpack.c.h.b16 %v47
  %v617 = vunpack.c.l.b16 %v48
  %v618 = vunpack.c.h.b16 %v48
  %v619 = vunpack.c.l.b16 %v49
  %v620 = vunpack.c.h.b16 %v49
  %v621 = vunpack.c.l.b16 %v50
  %v622 = vunpack.c.h.b16 %v50
  %v623 = vunpack.c.l.b16 %v51
  %v624 = vunpack.c.h.b16 %v51
  %v625 = vunpack.c.l.b16 %v52
  %v626 = vunpack.c.h.b16 %v52
  %v627 = vunpack.c.l.b16 %v53
  %v628 = vunpack.c.h.b16 %v53
  %v629 = vunpack.c.l.b16 %v54
  %v630 = vunpack.c.h.b16 %v54
  %v631 = vunpack.c.l.b16 %v55
  %v632 = vunpack.c.h.b16 %v55
  %v633 = vunpack.c.l.b16 %v56
  %v634 = vunpack.c.h.b16 %v56
  %v635 = vunpack.c.l.b16 %v57
  %v636 = vunpack.c.h.b16 %v57
  %v637 = vunpack.c.l.b16 %v58
  %v638 = vunpack.c.h.b16 %v58
  %v639 = vunpack.c.l.b16 %v59
  %v640 = vunpack.c.h.b16 %v59
  %v641 = vunpack.c.l.b16 %v60
  %v642 = vunpack.c.h.b16 %v60
  %v643 = vunpack.c.l.b16 %v61
  %v644 = vunpack.c.h.b16 %v61
  %v645 = vunpack.c.l.b16 %v62
  %v646 = vunpack.c.h.b16 %v62
  %v647 = vunpack.c.l.b16 %v63
  %v648 = vunpack.c.h.b16 %v63
  %v649 = vunpack.c.l.b16 %v64
  %v650 = vunpack.c.h.b16 %v64
  %v651 = vunpack.c.l.b16 %v65
  %v652 = vunpack.c.h.b16 %v65
  %v653 = vunpack.c.l.b16 %v66
  %v654 = vunpack.c.h.b16 %v66
  %v655 = vunpack.c.l.b16 %v67
  %v656 = vunpack.c.h.b16 %v67
  %v657 = vunpack.c.l.b16 %v68
  %v658 = vunpack.c.h.b16 %v68
  %v659 = vunpack.c.l.b16 %v69
  %v660 = vunpack.c.h.b16 %v69
  %v661 = vunpack.c.l.b16 %v70
  %v662 = vunpack.c.h.b16 %v70
  %v663 = vunpack.c.l.b16 %v71
  %v664 = vunpack.c.h.b16 %v71
  %v665 = vunpack.c.l.b16 %v72
  %v666 = vunpack.c.h.b16 %v72
  %v667 = vunpack.c.l.b16 %v73
  %v668 = vunpack.c.h.b16 %v73
  %v669 = vunpack.c.l.b16 %v74
  %v670 = vunpack.c.h.b16 %v74
  %v671 = vunpack.c.l.b16 %v75
  %v672 = vunpack.c.h.b16 %v75
  %v673 = vunpack.c.l.b16 %v76
  %v674 = vunpack.c.h.b16 %v76
  %v675 = vunpack.c.l.b16 %v77
  %v676 = vunpack.c.h.b16 %v77
  %v677 = vunpack.c.l.b16 %v78
  %v678 = vunpack.c.h.b16 %v78
  %v679 = vunpack.c.l.b16 %v79
  %v680 = vunpack.c.h.b16 %v79
  %v681 = vunpack.c.l.b16 %v80
  %v682 = vunpack.c.h.b16 %v80
  %v683 = vunpack.c.l.b16 %v81
  %v684 = vunpack.c.h.b16 %v81
  %v685 = vunpack.c.l.b16 %v82
  %v686 = vunpack.c.h.b16 %v82
  %v687 = vunpack.c.l.b16 %v83
  %v688 = vunpack.c.h.b16 %v83
  %v689 = vunpack.c.l.b16 %v84
  %v690 = vunpack.c.h.b16 %v84
  %v691 = vunpack.c.l.b16 %v85
  %v692 = vunpack.c.h.b16 %v85
  %v693 = vunpack.c.l.b16 %v86
  %v694 = vunpack.c.h.b16 %v86
  %v695 = vunpack.c.l.b16 %v87
  %v696 = vunpack.c.h.b16 %v87
  %v697 = vunpack.c.l.b16 %v88
  %v698 = vunpack.c.h.b16 %v88
  %v699 = vunpack.c.l.b16 %v89
  %v700 = vunpack.c.h.b16 %v89
  %v701 = vunpack.c.l.b16 %v90
  %v702 = vunpack.c.h.b16 %v90
  %v703 = vunpack.c.l.b16 %v91
  %v704 = vunpack.c.h.b16 %v91
  %v705 = vunpack.c.l.b16 %v92
  %v706 = vunpack.c.h.b16 %v92
  %v707 = vunpack.c.l.b16 %v93
  %v708 = vunpack.c.h.b16 %v93
  %v709 = vunpack.c.l.b16 %v94
  %v710 = vunpack.c.h.b16 %v94
  %v711 = vunpack.c.l.b16 %v95
  %v712 = vunpack.c.h.b16 %v95
  %v713 = vunpack.c.l.b16 %v96
  %v714 = vunpack.c.h.b16 %v96
  %v715 = vunpack.c.l.b16 %v97
  %v716 = vunpack.c.h.b16 %v97
  %v717 = vunpack.c.l.b16 %v98
  %v718 = vunpack.c.h.b16 %v98
  %v719 = vunpack.c.l.b16 %v99
  %v720 = vunpack.c.h.b16 %v99
  %v721 = vunpack.c.l.b16 %v100
  %v722 = vunpack.c.h.b16 %v100
  %v723 = vunpack.c.l.b16 %v101
  %v724 = vunpack.c.h.b16 %v101
  %v725 = vunpack.c.l.b16 %v102
  %v726 = vunpack.c.h.b16 %v102
  %v727 = vunpack.c.l.b16 %v103
  %v728 = vunpack.c.h.b16 %v103
  %v729 = vunpack.c.l.b16 %v104
  %v730 = vunpack.c.h.b16 %v104
  %v731 = vunpack.c.l.b16 %v105
  %v732 = vunpack.c.h.b16 %v105
  %v733 = vunpack.c.l.b16 %v106
  %v734 = vunpack.c.h.b16 %v106
  %v735 = vunpack.c.l.b16 %v107
  %v736 = vunpack.c.h.b16 %v107
  %v737 = vunpack.c.l.b16 %v108
  %v738 = vunpack.c.h.b16 %v108
  %v739 = vunpack.c.l.b16 %v109
  %v740 = vunpack.c.h.b16 %v109
  %v741 = vunpack.c.l.b16 %v110
  %v742 = vunpack.c.h.b16 %v110
  %v743 = vunpack.c.l.b16 %v111
  %v744 = vunpack.c.h.b16 %v111
  %v745 = vunpack.c.l.b16 %v112
  %v746 = vunpack.c.h.b16 %v112
  %v747 = vunpack.c.l.b16 %v113
  %v748 = vunpack.c.h.b16 %v113
  %v749 = vunpack.c.l.b16 %v114
  %v750 = vunpack.c.h.b16 %v114
  %v751 = vunpack.c.l.b16 %v115
  %v752 = vunpack.c.h.b16 %v115
  %v753 = vunpack.c.l.b16 %v116
  %v754 = vunpack.c.h.b16 %v116
  %v755 = vunpack.c.l.b16 %v117
  %v756 = vunpack.c.h.b16 %v117
  %v757 = vunpack.c.l.b16 %v118
  %v758 = vunpack.c.h.b16 %v118
  %v759 = vunpack.c.l.b16 %v119
  %v760 = vunpack.c.h.b16 %v119
  %v761 = vunpack.c.l.b16 %v120
  %v762 = vunpack.c.h.b16 %v120
  %v763 = vunpack.c.l.b16 %v121
  %v764 = vunpack.c.h.b16 %v121
  %v765 = vunpack.c.l.b16 %v122
  %v766 = vunpack.c.h.b16 %v122
  %v767 = vunpack.c.l.b16 %v123
  %v768 = vunpack.c.h.b16 %v123
  %v769 = vunpack.c.l.b16 %v124
  %v770 = vunpack.c.h.b16 %v124
  %v771 = vunpack.c.l.b16 %v125
  %v772 = vunpack.c.h.b16 %v125
  %v773 = vunpack.c.l.b16 %v126
  %v774 = vunpack.c.h.b16 %v126
  %v775 = vunpack.c.l.b16 %v127
  %v776 = vunpack.c.h.b16 %v127
  %v777 = vunpack.c.l.b16 %v128
  %v778 = vunpack.c.h.b16 %v128
  %v779 = vunpack.c.l.b16 %v129
  %v780 = vunpack.c.h.b16 %v129
  %v781 = vunpack.c.l.b16 %v130
  %v782 = vunpack.c.h.b16 %v130
  %v783 = vunpack.c.l.b16 %v131
  %v784 = vunpack.c.h.b16 %v131
  %v785 = vunpack.c.l.b16 %v132
  %v786 = vunpack.c.h.b16 %v132
  %v787 = vunpack.c.l.b16 %v133
  %v788 = vunpack.c.h.b16 %v133
  %v789 = vunpack.c.l.b16 %v134
  %v790 = vunpack.c.h.b16 %v134
  %v791 = vunpack.c.l.b16 %v135
  %v792 = vunpack.c.h.b16 %v135
  %v793 = vunpack.c.l.b16 %v136
  %v794 = vunpack.c.h.b16 %v136
  %v795 = vunpack.c.l.b16 %v137
  %v796 = vunpack.c.h.b16 %v137
  %v797 = vunpack.c.l.b16 %v138
  %v798 = vunpack.c.h.b16 %v138
  %v799 = vunpack.c.l.b16 %v139
  %v800 = vunpack.c.h.b16 %v139
  %v801 = vunpack.c.l.b16 %v140
  %v802 = vunpack.c.h.b16 %v140
  %v803 = vunpack.c.l.b16 %v141
  %v804 = vunpack.c.h.b16 %v141
  %v805 = vunpack.c.l.b16 %v142
  %v806 = vunpack.c.h.b16 %v142
  %v807 = vunpack.c.l.b16 %v143
  %v808 = vunpack.c.h.b16 %v143
  %v809 = vunpack.c.l.b16 %v144
  %v810 = vunpack.c.h.b16 %v144
  %v811 = vunpack.c.l.b16 %v145
  %v812 = vunpack.c.h.b16 %v145
  %v813 = vunpack.c.l.b16 %v146
  %v814 = vunpack.c.h.b16 %v146
  %v815 = vunpack.c.l.b16 %v147
  %v816 = vunpack.c.h.b16 %v147
  %v817 = vunpack.c.l.b16 %v148
  %v818 = vunpack.c.h.b16 %v148
  %v819 = vunpack.c.l.b16 %v149
  %v820 = vunpack.c.h.b16 %v149
  %v821 = vunpack.c.l.b16 %v150
  %v822 = vunpack.c.h.b16 %v150
  %v823 = vunpack.c.l.b16 %v151
  %v824 = vunpack.c.h.b16 %v151
  %v825 = vunpack.c.l.b16 %v152
  %v826 = vunpack.c.h.b16 %v152
  %v827 = vunpack.c.l.b16 %v153
  %v828 = vunpack.c.h.b16 %v153
  %v829 = vunpack.c.l.b16 %v154
  %v830 = vunpack.c.h.b16 %v154
  %v831 = vunpack.c.l.b16 %v155
  %v832 = vunpack.c.h.b16 %v155
  %v833 = vunpack.c.l.b16 %v156
  %v834 = vunpack.c.h.b16 %v156
  %v835 = vunpack.c.l.b16 %v157
  %v836 = vunpack.c.h.b16 %v157
  %v837 = vunpack.c.l.b16 %v158
  %v838 = vunpack.c.h.b16 %v158
  %v839 = vunpack.c.l.b16 %v159
  %v840 = vunpack.c.h.b16 %v159
  %v841 = vunpack.c.l.b16 %v160
  %v842 = vunpack.c.h.b16 %v160
  %v843 = vunpack.c.l.b16 %v161
  %v844 = vunpack.c.h.b16 %v161
  %v845 = vunpack.c.l.b16 %v162
  %v846 = vunpack.c.h.b16 %v162
  %v847 = vunpack.c.l.b16 %v163
  %v848 = vunpack.c.h.b16 %v163
  %v849 = vunpack.c.l.b16 %v164
  %v850 = vunpack.c.h.b16 %v164
  %v851 = vunpack.c.l.b16 %v165
  %v852 = vunpack.c.h.b16 %v165
  %v853 = vunpack.c.l.b16 %v166
  %v854 = vunpack.c.h.b16 %v166
  %v855 = vunpack.c.l.b16 %v167
  %v856 = vunpack.c.h.b16 %v167
  %v857 = vunpack.c.l.b16 %v168
  %v858 = vunpack.c.h.b16 %v168
  %v859 = vunpack.c.l.b16 %v169
  %v860 = vunpack.c.h.b16 %v169
  %v861 = vunpack.c.l.b16 %v170
  %v862 = vunpack.c.h.b16 %v170
  %v863 = vunpack.c.l.b16 %v171
  %v864 = vunpack.c.h.b16 %v171
  %v865 = vunpack.c.l.b16 %v172
  %v866 = vunpack.c.h.b16 %v172
  %v867 = vunpack.c.l.b16 %v173
  %v868 = vunpack.c.h.b16 %v173
  %v869 = vunpack.c.l.b16 %v174
  %v870 = vunpack.c.h.b16 %v174
  %v871 = vunpack.c.l.b16 %v175
  %v872 = vunpack.c.h.b16 %v175
  %v873 = vunpack.c.l.b16 %v176
  %v874 = vunpack.c.h.b16 %v176
  %v875 = vunpack.c.l.b16 %v177
  %v876 = vunpack.c.h.b16 %v177
  %v877 = vunpack.c.l.b16 %v178
  %v878 = vunpack.c.h.b16 %v178
  %v879 = vunpack.c.l.b16 %v179
  %v880 = vunpack.c.h.b16 %v179
  %v881 = vunpack.c.l.b16 %v180
  %v882 = vunpack.c.h.b16 %v180
  %v883 = vunpack.c.l.b16 %v181
  %v884 = vunpack.c.h.b16 %v181
  %v885 = vunpack.c.l.b16 %v182
  %v886 = vunpack.c.h.b16 %v182
  %v887 = vunpack.c.l.b16 %v183
  %v888 = vunpack.c.h.b16 %v183
  %v889 = vunpack.c.l.b16 %v184
  %v890 = vunpack.c.h.b16 %v184
  %v891 = vunpack.c.l.b16 %v185
  %v892 = vunpack.c.h.b16 %v185
  %v893 = vunpack.c.l.b16 %v186
  %v894 = vunpack.c.h.b16 %v186
  %v895 = vunpack.c.l.b16 %v187
  %v896 = vunpack.c.h.b16 %v187
  %v897 = vunpack.c.l.b16 %v188
  %v898 = vunpack.c.h.b16 %v188
  %v899 = vunpack.c.l.b16 %v189
  %v900 = vunpack.c.h.b16 %v189
  %v901 = vunpack.c.l.b16 %v190
  %v902 = vunpack.c.h.b16 %v190
  %v903 = vunpack.c.l.b16 %v191
  %v904 = vunpack.c.h.b16 %v191
  %v905 = vunpack.c.l.b16 %v192
  %v906 = vunpack.c.h.b16 %v192
  %v907 = vunpack.c.l.b16 %v193
  %v908 = vunpack.c.h.b16 %v193
  %v909 = vunpack.c.l.b16 %v194
  %v910 = vunpack.c.h.b16 %v194
  %v911 = vunpack.c.l.b16 %v195
  %v912 = vunpack.c.h.b16 %v195
  %v913 = vunpack.c.l.b16 %v196
  %v914 = vunpack.c.h.b16 %v196
  %v915 = vunpack.c.l.b16 %v197
  %v916 = vunpack.c.h.b16 %v197
  %v917 = vunpack.c.l.b16 %v198
  %v918 = vunpack.c.h.b16 %v198
  %v919 = vunpack.c.l.b16 %v199
  %v920 = vunpack.c.h.b16 %v199
  %v921 = vunpack.c.l.b16 %v200
  %v922 = vunpack.c.h.b16 %v200
  %v923 = vunpack.c.l.b16 %v201
  %v924 = vunpack.c.h.b16 %v201
  %v925 = vunpack.c.l.b16 %v202
  %v926 = vunpack.c.h.b16 %v202
  %v927 = vunpack.c.l.b16 %v203
  %v928 = vunpack.c.h.b16 %v203
  %v929 = vunpack.c.l.b16 %v204
  %v930 = vunpack.c.h.b16 %v204
  %v931 = vunpack.c.l.b16 %v205
  %v932 = vunpack.c.h.b16 %v205
  %v933 = vunpack.c.l.b16 %v206
  %v934 = vunpack.c.h.b16 %v206
  %v935 = vunpack.c.l.b16 %v207
  %v936 = vunpack.c.h.b16 %v207
  %v937 = vunpack.c.l.b16 %v208
  %v938 = vunpack.c.h.b16 %v208
  %v939 = vunpack.c.l.b16 %v209
  %v940 = vunpack.c.h.b16 %v209
  %v941 = vunpack.c.l.b16 %v210
  %v942 = vunpack.c.h.b16 %v210
  %v943 = vunpack.c.l.b16 %v211
  %v944 = vunpack.c.h.b16 %v211
  %v945 = vunpack.c.l.b16 %v212
  %v946 = vunpack.c.h.b16 %v212
  %v947 = vunpack.c.l.b16 %v213
  %v948 = vunpack.c.h.b16 %v213
  %v949 = vunpack.c.l.b16 %v214
  %v950 = vunpack.c.h.b16 %v214
  %v951 = vunpack.c.l.b16 %v215
  %v952 = vunpack.c.h.b16 %v215
  %v953 = vunpack.c.l.b16 %v216
  %v954 = vunpack.c.h.b16 %v216
  %v955 = vunpack.c.l.b16 %v217
  %v956 = vunpack.c.h.b16 %v217
  %v957 = vunpack.c.l.b16 %v218
  %v958 = vunpack.c.h.b16 %v218
  %v959 = vunpack.c.l.b16 %v219
  %v960 = vunpack.c.h.b16 %v219
  %v961 = vunpack.c.l.b16 %v220
  %v962 = vunpack.c.h.b16 %v220
  %v963 = vunpack.c.l.b16 %v221
  %v964 = vunpack.c.h.b16 %v221
  %v965 = vunpack.c.l.b16 %v222
  %v966 = vunpack.c.h.b16 %v222
  %v967 = vunpack.c.l.b16 %v223
  %v968 = vunpack.c.h.b16 %v223
  %v969 = vunpack.c.l.b16 %v224
  %v970 = vunpack.c.h.b16 %v224
  %v971 = vunpack.c.l.b16 %v225
  %v972 = vunpack.c.h.b16 %v225
  %v973 = vunpack.c.l.b16 %v226
  %v974 = vunpack.c.h.b16 %v226
  %v975 = vunpack.c.l.b16 %v227
  %v976 = vunpack.c.h.b16 %v227
  %v977 = vunpack.c.l.b16 %v228
  %v978 = vunpack.c.h.b16 %v228
  %v979 = vunpack.c.l.b16 %v229
  %v980 = vunpack.c.h.b16 %v229
  %v981 = vunpack.c.l.b16 %v230
  %v982 = vunpack.c.h.b16 %v230
  %v983 = vunpack.c.l.b16 %v231
  %v984 = vunpack.c.h.b16 %v231
  %v985 = vunpack.c.l.b16 %v232
  %v986 = vunpack.c.h.b16 %v232
  %v987 = vunpack.c.l.b16 %v233
  %v988 = vunpack.c.h.b16 %v233
  %v989 = vunpack.c.l.b16 %v234
  %v990 = vunpack.c.h.b16 %v234
  %v991 = vunpack.c.l.b16 %v235
  %v992 = vunpack.c.h.b16 %v235
  %v993 = vunpack.c.l.b16 %v236
  %v994 = vunpack.c.h.b16 %v236
  %v995 = vunpack.c.l.b16 %v237
  %v996 = vunpack.c.h.b16 %v237
  %v997 = vunpack.c.l.b16 %v238
  %v998 = vunpack.c.h.b16 %v238
  %v999 = vunpack.c.l.b16 %v239
  %v1000 = vunpack.c.h.b16 %v239
  %v1001 = vunpack.c.l.b16 %v240
  %v1002 = vunpack.c.h.b16 %v240
  %v1003 = vunpack.c.l.b16 %v241
  %v1004 = vunpack.c.h.b16 %v241
  %v1005 = vunpack.c.l.b16 %v242
  %v1006 = vunpack.c.h.b16 %v242
  %v1007 = vunpack.c.l.b16 %v243
  %v1008 = vunpack.c.h.b16 %v243
  %v1009 = vunpack.c.l.b16 %v244
  %v1010 = vunpack.c.h.b16 %v244
  %v1011 = vunpack.c.l.b16 %v245
  %v1012 = vunpack.c.h.b16 %v245
  %v1013 = vunpack.c.l.b16 %v246
  %v1014 = vunpack.c.h.b16 %v246
  %v1015 = vunpack.c.l.b16 %v247
  %v1016 = vunpack.c.h.b16 %v247
  %v1017 = vunpack.c.l.b16 %v248
  %v1018 = vunpack.c.h.b16 %v248
  %v1019 = vunpack.c.l.b16 %v249
  %v1020 = vunpack.c.h.b16 %v249
  %v1021 = vunpack.c.l.b16 %v250
  %v1022 = vunpack.c.h.b16 %v250
  %v1023 = vunpack.c.l.b16 %v251
  %v1024 = vunpack.c.h.b16 %v251
  %v1025 = vunpack.c.l.b16 %v252
  %v1026 = vunpack.c.h.b16 %v252
  %v1027 = vunpack.c.l.b16 %v253
  %v1028 = vunpack.c.h.b16 %v253
  %v1029 = vunpack.c.l.b16 %v254
  %v1030 = vunpack.c.h.b16 %v254
  %v1031 = vunpack.c.l.b16 %v255
  %v1032 = vunpack.c.h.b16 %v255
  %v1033 = vunpack.c.l.b16 %v256
  %v1034 = vunpack.c.h.b16 %v256
  %v1035 = vunpack.c.l.b16 %v257
  %v1036 = vunpack.c.h.b16 %v257
  %v1037 = vunpack.c.l.b16 %v258
  %v1038 = vunpack.c.h.b16 %v258
  %v1039 = vunpack.c.l.b16 %v259
  %v1040 = vunpack.c.h.b16 %v259
  %v1041 = vunpack.c.l.b16 %v260
  %v1042 = vunpack.c.h.b16 %v260
  %v1043 = vunpack.c.l.b16 %v261
  %v1044 = vunpack.c.h.b16 %v261
  %v1045 = vunpack.c.l.b16 %v262
  %v1046 = vunpack.c.h.b16 %v262
  %v1047 = vunpack.c.l.b16 %v263
  %v1048 = vunpack.c.h.b16 %v263
  %v1049 = vunpack.c.l.b16 %v264
  %v1050 = vunpack.c.h.b16 %v264
  %v1051 = vunpack.c.l.b16 %v265
  %v1052 = vunpack.c.h.b16 %v265
  %v1053 = vunpack.c.l.b16 %v266
  %v1054 = vunpack.c.h.b16 %v266
  %v1055 = vunpack.c.l.b16 %v267
  %v1056 = vunpack.c.h.b16 %v267
  %v1057 = vunpack.c.l.b16 %v268
  %v1058 = vunpack.c.h.b16 %v268
  %v1059 = vunpack.c.l.b16 %v269
  %v1060 = vunpack.c.h.b16 %v269
  %v1061 = vunpack.c.l.b16 %v270
  %v1062 = vunpack.c.h.b16 %v270
  %v1063 = vpack.c.b16 %v553, %v551
  %v1064 = vpack.c.b16 %v554, %v552
  %v1065 = vpack.c.b16 %v557, %v555
  %v1066 = vpack.c.b16 %v558, %v556
  %v1067 = vpack.c.b16 %v561, %v559
  %v1068 = vpack.c.b16 %v562, %v560
  %v1069 = vpack.c.b16 %v565, %v563
  %v1070 = vpack.c.b16 %v566, %v564
  %v1071 = vpack.c.b16 %v569, %v567
  %v1072 = vpack.c.b16 %v570, %v568
  %v1073 = vpack.c.b16 %v573, %v571
  %v1074 = vpack.c.b16 %v574, %v572
  %v1075 = vpack.c.b16 %v577, %v575
  %v1076 = vpack.c.b16 %v578, %v576
  %v1077 = vpack.c.b16 %v581, %v579
  %v1078 = vpack.c.b16 %v582, %v580
  %v1079 = vpack.c.b16 %v585, %v583
  %v1080 = vpack.c.b16 %v586, %v584
  %v1081 = vpack.c.b16 %v589, %v587
  %v1082 = vpack.c.b16 %v590, %v588
  %v1083 = vpack.c.b16 %v593, %v591
  %v1084 = vpack.c.b16 %v594, %v592
  %v1085 = vpack.c.b16 %v597, %v595
  %v1086 = vpack.c.b16 %v598, %v596
  %v1087 = vpack.c.b16 %v601, %v599
  %v1088 = vpack.c.b16 %v602, %v600
  %v1089 = vpack.c.b16 %v605, %v603
  %v1090 = vpack.c.b16 %v606, %v604
  %v1091 = vpack.c.b16 %v609, %v607
  %v1092 = vpack.c.b16 %v610, %v608
  %v1093 = vpack.c.b16 %v613, %v611
  %v1094 = vpack.c.b16 %v614, %v612
  %v1095 = vpack.c.b16 %v617, %v615
  %v1096 = vpack.c.b16 %v618, %v616
  %v1097 = vpack.c.b16 %v621, %v619
  %v1098 = vpack.c.b16 %v622, %v620
  %v1099 = vpack.c.b16 %v625, %v623
  %v1100 = vpack.c.b16 %v626, %v624
  %v1101 = vpack.c.b16 %v629, %v627
  %v1102 = vpack.c.b16 %v630, %v628
  %v1103 = vpack.c.b16 %v633, %v631
  %v1104 = vpack.c.b16 %v634, %v632
  %v1105 = vpack.c.b16 %v637, %v635
  %v1106 = vpack.c.b16 %v638, %v636
  %v1107 = vpack.c.b16 %v641, %v639
  %v1108 = vpack.c.b16 %v642, %v640
  %v1109 = vpack.c.b16 %v645, %v643
  %v1110 = vpack.c.b16 %v646, %v644
  %v1111 = vpack.c.b16 %v649, %v647
  %v1112 = vpack.c.b16 %v650, %v648
  %v1113 = vpack.c.b16 %v653, %v651
  %v1114 = vpack.c.b16 %v654, %v652
  %v1115 = vpack.c.b16 %v657, %v655
  %v1116 = vpack.c.b16 %v658, %v656
  %v1117 = vpack.c.b16 %v661, %v659
  %v1118 = vpack.c.b16 %v662, %v660
  %v1119 = vpack.c.b16 %v665, %v663
  %v1120 = vpack.c.b16 %v666, %v664
  %v1121 = vpack.c.b16 %v669, %v667
  %v1122 = vpack.c.b16 %v670, %v668
  %v1123 = vpack.c.b16 %v673, %v671
  %v1124 = vpack.c.b16 %v674, %v672
  %v1125 = vpack.c.b16 %v677, %v675
  %v1126 = vpack.c.b16 %v678, %v676
  %v1127 = vpack.c.b16 %v681, %v679
  %v1128 = vpack.c.b16 %v682, %v680
  %v1129 = vpack.c.b16 %v685, %v683
  %v1130 = vpack.c.b16 %v686, %v684
  %v1131 = vpack.c.b16 %v689, %v687
  %v1132 = vpack.c.b16 %v690, %v688
  %v1133 = vpack.c.b16 %v693, %v691
  %v1134 = vpack.c.b16 %v694, %v692
  %v1135 = vpack.c.b16 %v697, %v695
  %v1136 = vpack.c.b16 %v698, %v696
  %v1137 = vpack.c.b16 %v701, %v699
  %v1138 = vpack.c.b16 %v702, %v700
  %v1139 = vpack.c.b16 %v705, %v703
  %v1140 = vpack.c.b16 %v706, %v704
  %v1141 = vpack.c.b16 %v709, %v707
  %v1142 = vpack.c.b16 %v710, %v708
  %v1143 = vpack.c.b16 %v713, %v711
  %v1144 = vpack.c.b16 %v714, %v712
  %v1145 = vpack.c.b16 %v717, %v715
  %v1146 = vpack.c.b16 %v718, %v716
  %v1147 = vpack.c.b16 %v721, %v719
  %v1148 = vpack.c.b16 %v722, %v720
  %v1149 = vpack.c.b16 %v725, %v723
  %v1150 = vpack.c.b16 %v726, %v724
  %v1151 = vpack.c.b16 %v729, %v727
  %v1152 = vpack.c.b16 %v730, %v728
  %v1153 = vpack.c.b16 %v733, %v731
  %v1154 = vpack.c.b16 %v734, %v732
  %v1155 = vpack.c.b16 %v737, %v735
  %v1156 = vpack.c.b16 %v738, %v736
  %v1157 = vpack.c.b16 %v741, %v739
  %v1158 = vpack.c.b16 %v742, %v740
  %v1159 = vpack.c.b16 %v745, %v743
  %v1160 = vpack.c.b16 %v746, %v744
  %v1161 = vpack.c.b16 %v749, %v747
  %v1162 = vpack.c.b16 %v750, %v748
  %v1163 = vpack.c.b16 %v753, %v751
  %v1164 = vpack.c.b16 %v754, %v752
  %v1165 = vpack.c.b16 %v757, %v755
  %v1166 = vpack.c.b16 %v758, %v756
  %v1167 = vpack.c.b16 %v761, %v759
  %v1168 = vpack.c.b16 %v762, %v760
  %v1169 = vpack.c.b16 %v765, %v763
  %v1170 = vpack.c.b16 %v766, %v764
  %v1171 = vpack.c.b16 %v769, %v767
  %v1172 = vpack.c.b16 %v770, %v768
  %v1173 = vpack.c.b16 %v773, %v771
  %v1174 = vpack.c.b16 %v774, %v772
  %v1175 = vpack.c.b16 %v777, %v775
  %v1176 = vpack.c.b16 %v778, %v776
  %v1177 = vpack.c.b16 %v781, %v779
  %v1178 = vpack.c.b16 %v782, %v780
  %v1179 = vpack.c.b16 %v785, %v783
  %v1180 = vpack.c.b16 %v786, %v784
  %v1181 = vpack.c.b16 %v789, %v787
  %v1182 = vpack.c.b16 %v790, %v788
  %v1183 = vpack.c.b16 %v793, %v791
  %v1184 = vpack.c.b16 %v794, %v792
  %v1185 = vpack.c.b16 %v797, %v795
  %v1186 = vpack.c.b16 %v798, %v796
  %v1187 = vpack.c.b16 %v801, %v799
  %v1188 = vpack.c.b16 %v802, %v800
  %v1189 = vpack.c.b16 %v805, %v803
  %v1190 = vpack.c.b16 %v806, %v804
  %v1191 = vpack.c.b16 %v809, %v807
  %v1192 = vpack.c.b16 %v810, %v808
  %v1193 = vpack.c.b16 %v813, %v811
  %v1194 = vpack.c.b16 %v814, %v812
  %v1195 = vpack.c.b16 %v817, %v815
  %v1196 = vpack.c.b16 %v818, %v816
  %v1197 = vpack.c.b16 %v821, %v819
  %v1198 = vpack.c.b16 %v822, %v820
  %v1199 = vpack.c.b16 %v825, %v823
  %v1200 = vpack.c.b16 %v826, %v824
  %v1201 = vpack.c.b16 %v829, %v827
  %v1202 = vpack.c.b16 %v830, %v828
  %v1203 = vpack.c.b16 %v833, %v831
  %v1204 = vpack.c.b16 %v834, %v832
  %v1205 = vpack.c.b16 %v837, %v835
  %v1206 = vpack.c.b16 %v838, %v836
  %v1207 = vpack.c.b16 %v841, %v839
  %v1208 = vpack.c.b16 %v842, %v840
  %v1209 = vpack.c.b16 %v845, %v843
  %v1210 = vpack.c.b16 %v846, %v844
  %v1211 = vpack.c.b16 %v849, %v847
  %v1212 = vpack.c.b16 %v850, %v848
  %v1213 = vpack.c.b16 %v853, %v851
  %v1214 = vpack.c.b16 %v854, %v852
  %v1215 = vpack.c.b16 %v857, %v855
  %v1216 = vpack.c.b16 %v858, %v856
  %v1217 = vpack.c.b16 %v861, %v859
  %v1218 = vpack.c.b16 %v862, %v860
  %v1219 = vpack.c.b16 %v865, %v863
  %v1220 = vpack.c.b16 %v866, %v864
  %v1221 = vpack.c.b16 %v869, %v867
  %v1222 = vpack.c.b16 %v870, %v868
  %v1223 = vpack.c.b16 %v873, %v871
  %v1224 = vpack.c.b16 %v874, %v872
  %v1225 = vpack.c.b16 %v877, %v875
  %v1226 = vpack.c.b16 %v878, %v876
  %v1227 = vpack.c.b16 %v881, %v879
  %v1228 = vpack.c.b16 %v882, %v880
  %v1229 = vpack.c.b16 %v885, %v883
  %v1230 = vpack.c.b16 %v886, %v884
  %v1231 = vpack.c.b16 %v889, %v887
  %v1232 = vpack.c.b16 %v890, %v888
  %v1233 = vpack.c.b16 %v893, %v891
  %v1234 = vpack.c.b16 %v894, %v892
  %v1235 = vpack.c.b16 %v897, %v895
  %v1236 = vpack.c.b16 %v898, %v896
  %v1237 = vpack.c.b16 %v901, %v899
  %v1238 = vpack.c.b16 %v902, %v900
  %v1239 = vpack.c.b16 %v905, %v903
  %v1240 = vpack.c.b16 %v906, %v904
  %v1241 = vpack.c.b16 %v909, %v907
  %v1242 = vpack.c.b16 %v910, %v908
  %v1243 = vpack.c.b16 %v913, %v911
  %v1244 = vpack.c.b16 %v914, %v912
  %v1245 = vpack.c.b16 %v917, %v915
  %v1246 = vpack.c.b16 %v918, %v916
  %v1247 = vpack.c.b16 %v921, %v919
  %v1248 = vpack.c.b16 %v922, %v920
  %v1249 = vpack.c.b16 %v925, %v923
  %v1250 = vpack.c.b16 %v926, %v924
  %v1251 = vpack.c.b16 %v929, %v927
  %v1252 = vpack.c.b16 %v930, %v928
  %v1253 = vpack.c.b16 %v933, %v931
  %v1254 = vpack.c.b16 %v934, %v932
  %v1255 = vpack.c.b16 %v937, %v935
  %v1256 = vpack.c.b16 %v938, %v936
  %v1257 = vpack.c.b16 %v941, %v939
  %v1258 = vpack.c.b16 %v942, %v940
  %v1259 = vpack.c.b16 %v945, %v943
  %v1260 = vpack.c.b16 %v946, %v944
  %v1261 = vpack.c.b16 %v949, %v947
  %v1262 = vpack.c.b16 %v950, %v948
  %v1263 = vpack.c.b16 %v953, %v951
  %v1264 = vpack.c.b16 %v954, %v952
  %v1265 = vpack.c.b16 %v957, %v955
  %v1266 = vpack.c.b16 %v958, %v956
  %v1267 = vpack.c.b16 %v961, %v959
  %v1268 = vpack.c.b16 %v962, %v960
  %v1269 = vpack.c.b16 %v965, %v963
  %v1270 = vpack.c.b16 %v966, %v964
  %v1271 = vpack.c.b16 %v969, %v967
  %v1272 = vpack.c.b16 %v970, %v968
  %v1273 = vpack.c.b16 %v973, %v971
  %v1274 = vpack.c.b16 %v974, %v972
  %v1275 = vpack.c.b16 %v977, %v975
  %v1276 = vpack.c.b16 %v978, %v976
  %v1277 = vpack.c.b16 %v981, %v979
  %v1278 = vpack.c.b16 %v982, %v980
  %v1279 = vpack.c.b16 %v985, %v983
  %v1280 = vpack.c.b16 %v986, %v984
  %v1281 = vpack.c.b16 %v989, %v987
  %v1282 = vpack.c.b16 %v990, %v988
  %v1283 = vpack.c.b16 %v993, %v991
  %v1284 = vpack.c.b16 %v994, %v992
  %v1285 = vpack.c.b16 %v997, %v995
  %v1286 = vpack.c.b16 %v998, %v996
  %v1287 = vpack.c.b16 %v1001, %v999
  %v1288 = vpack.c.b16 %v1002, %v1000
  %v1289 = vpack.c.b16 %v1005, %v1003
  %v1290 = vpack.c.b16 %v1006, %v1004
  %v1291 = vpack.c.b16 %v1009, %v1007
  %v1292 = vpack.c.b16 %v1010, %v1008
  %v1293 = vpack.c.b16 %v1013, %v1011
  %v1294 = vpack.c.b16 %v1014, %v1012
  %v1295 = vpack.c.b16 %v1017, %v1015
  %v1296 = vpack.c.b16 %v1018, %v1016
  %v1297 = vpack.c.b16 %v1021, %v1019
  %v1298 = vpack.c.b16 %v1022, %v1020
  %v1299 = vpack.c.b16 %v1025, %v1023
  %v1300 = vpack.c.b16 %v1026, %v1024
  %v1301 = vpack.c.b16 %v1029, %v1027
  %v1302 = vpack.c.b16 %v1030, %v1028
  %v1303 = vpack.c.b16 %v1033, %v1031
  %v1304 = vpack.c.b16 %v1034, %v1032
  %v1305 = vpack.c.b16 %v1037, %v1035
  %v1306 = vpack.c.b16 %v1038, %v1036
  %v1307 = vpack.c.b16 %v1041, %v1039
  %v1308 = vpack.c.b16 %v1042, %v1040
  %v1309 = vpack.c.b16 %v1045, %v1043
  %v1310 = vpack.c.b16 %v1046, %v1044
  %v1311 = vpack.c.b16 %v1049, %v1047
  %v1312 = vpack.c.b16 %v1050, %v1048
  %v1313 = vpack.c.b16 %v1053, %v1051
  %v1314 = vpack.c.b16 %v1054, %v1052
  %v1315 = vpack.c.b16 %v1057, %v1055
  %v1316 = vpack.c.b16 %v1058, %v1056
  %v1317 = vpack.c.b16 %v1061, %v1059
  %v1318 = vpack.c.b16 %v1062, %v1060
  %v1466 = vunpack.c.l.b16 %v271
  %v1467 = vunpack.c.l.b16 %v272
  %v1468 = vunpack.c.l.b16 %v273
  %v1469 = vunpack.c.l.b16 %v274
  %v1470 = vunpack.c.l.b16 %v275
  %v1471 = vunpack.c.l.b16 %v276
  %v1472 = vunpack.c.l.b16 %v277
  %v1473 = vunpack.c.l.b16 %v278
  %v1474 = vunpack.c.l.b16 %v279
  %v1475 = vunpack.c.l.b16 %v280
  %v1476 = vunpack.c.l.b16 %v281
  %v1477 = vunpack.c.l.b16 %v282
  %v1478 = vunpack.c.l.b16 %v283
  %v1479 = vunpack.c.l.b16 %v284
  %v1480 = vunpack.c.l.b16 %v285
  %v1481 = vunpack.c.l.b16 %v286
  %v1482 = vunpack.c.l.b16 %v287
  %v1483 = vunpack.c.l.b16 %v288
  %v1484 = vunpack.c.l.b16 %v289
  %v1485 = vpack.c.b16 %v1467, %v1466
  %v1486 = vpack.c.b16 %v1469, %v1468
  %v1487 = vpack.c.b16 %v1471, %v1470
  %v1488 = vpack.c.b16 %v1473, %v1472
  %v1489 = vpack.c.b16 %v1475, %v1474
  %v1490 = vpack.c.b16 %v1477, %v1476
  %v1491 = vpack.c.b16 %v1479, %v1478
  %v1492 = vpack.c.b16 %v1481, %v1480
  %v1493 = vpack.c.b16 %v1483, %v1482
  %v1494 = vpack.c.b16 %v1484, %v1484
  %vm1504 = vcmask 154624
  %v1506 = vsel %vm1504, %v1064, 0
  %v1509 = vsel %vm1504, %v1066, 0
  %v1512 = vsel %vm1504, %v1068, 0
  %v1515 = vsel %vm1504, %v1070, 0
  %v1518 = vsel %vm1504, %v1072, 0
  %v1521 = vsel %vm1504, %v1074, 0
  %v1524 = vsel %vm1504, %v1076, 0
  %v1527 = vsel %vm1504, %v1078, 0
  %v1530 = vsel %vm1504, %v1080, 0
  %v1533 = vsel %vm1504, %v1082, 0
  %v1536 = vsel %vm1504, %v1084, 0
  %v1539 = vsel %vm1504, %v1086, 0
  %v1542 = vsel %vm1504, %v1088, 0
  %v1545 = vsel %vm1504, %v1090, 0
  %v1548 = vsel %vm1504, %v1092, 0
  %v1551 = vsel %vm1504, %v1094, 0
  %v1554 = vsel %vm1504, %v1096, 0
  %v1557 = vsel %vm1504, %v1098, 0
  %v1560 = vsel %vm1504, %v1100, 0
  %v1563 = vsel %vm1504, %v1102, 0
  %v1566 = vsel %vm1504, %v1104, 0
  %v1569 = vsel %vm1504, %v1106, 0
  %v1572 = vsel %vm1504, %v1108, 0
  %v1575 = vsel %vm1504, %v1110, 0
  %v1578 = vsel %vm1504, %v1112, 0
  %v1581 = vsel %vm1504, %v1114, 0
  %v1584 = vsel %vm1504, %v1116, 0
  %v1587 = vsel %vm1504, %v1118, 0
  %v1590 = vsel %vm1504, %v1120, 0
  %v1593 = vsel %vm1504, %v1122, 0
  %v1596 = vsel %vm1504, %v1124, 0
  %v1599 = vsel %vm1504, %v1126, 0
  %v1602 = vsel %vm1504, %v1128, 0
  %v1605 = vsel %vm1504, %v1130, 0
  %v1608 = vsel %vm1504, %v1132, 0
  %v1611 = vsel %vm1504, %v1134, 0
  %v1614 = vsel %vm1504, %v1136, 0
  %v1617 = vsel %vm1504, %v1138, 0
  %v1620 = vsel %vm1504, %v1140, 0
  %v1623 = vsel %vm1504, %v1142, 0
  %v1626 = vsel %vm1504, %v1144, 0
  %v1629 = vsel %vm1504, %v1146, 0
  %v1632 = vsel %vm1504, %v1148, 0
  %v1635 = vsel %vm1504, %v1150, 0
  %v1638 = vsel %vm1504, %v1152, 0
  %v1641 = vsel %vm1504, %v1154, 0
  %v1644 = vsel %vm1504, %v1156, 0
  %v1647 = vsel %vm1504, %v1158, 0
  %v1650 = vsel %vm1504, %v1160, 0
  %v1653 = vsel %vm1504, %v1162, 0
  %v1656 = vsel %vm1504, %v1164, 0
  %v1659 = vsel %vm1504, %v1166, 0
  %v1662 = vsel %vm1504, %v1168, 0
  %v1665 = vsel %vm1504, %v1170, 0
  %v1668 = vsel %vm1504, %v1172, 0
  %v1671 = vsel %vm1504, %v1174, 0
  %v1674 = vsel %vm1504, %v1176, 0
  %v1677 = vsel %vm1504, %v1178, 0
  %v1680 = vsel %vm1504, %v1180, 0
  %v1683 = vsel %vm1504, %v1182, 0
  %v1686 = vsel %vm1504, %v1184, 0
  %v1689 = vsel %vm1504, %v1186, 0
  %v1692 = vsel %vm1504, %v1188, 0
  %v1695 = vsel %vm1504, %v1190, 0
  %v1698 = vsel %vm1504, %v1192, 0
  %v1701 = vsel %vm1504, %v1194, 0
  %v1704 = vsel %vm1504, %v1196, 0
  %v1707 = vsel %vm1504, %v1198, 0
  %v1710 = vsel %vm1504, %v1200, 0
  %v1713 = vsel %vm1504, %v1202, 0
  %v1716 = vsel %vm1504, %v1204, 0
  %v1719 = vsel %vm1504, %v1206, 0
  %v1722 = vsel %vm1504, %v1208, 0
  %v1725 = vsel %vm1504, %v1210, 0
  %v1728 = vsel %vm1504, %v1212, 0
  %v1731 = vsel %vm1504, %v1214, 0
  %v1734 = vsel %vm1504, %v1216, 0
  %v1737 = vsel %vm1504, %v1218, 0
  %v1740 = vsel %vm1504, %v1220, 0
  %v1743 = vsel %vm1504, %v1222, 0
  %v1746 = vsel %vm1504, %v1224, 0
  %v1749 = vsel %vm1504, %v1226, 0
  %v1752 = vsel %vm1504, %v1228, 0
  %v1755 = vsel %vm1504, %v1230, 0
  %v1758 = vsel %vm1504, %v1232, 0
  %v1761 = vsel %vm1504, %v1234, 0
  %v1764 = vsel %vm1504, %v1236, 0
  %v1767 = vsel %vm1504, %v1238, 0
  %v1770 = vsel %vm1504, %v1240, 0
  %v1773 = vsel %vm1504, %v1242, 0
  %v1776 = vsel %vm1504, %v1244, 0
  %v1779 = vsel %vm1504, %v1246, 0
  %v1782 = vsel %vm1504, %v1248, 0
  %v1785 = vsel %vm1504, %v1250, 0
  %v1788 = vsel %vm1504, %v1252, 0
  %v1791 = vsel %vm1504, %v1254, 0
  %v1794 = vsel %vm1504, %v1256, 0
  %v1797 = vsel %vm1504, %v1258, 0
  %v1800 = vsel %vm1504, %v1260, 0
  %v1803 = vsel %vm1504, %v1262, 0
  %v1806 = vsel %vm1504, %v1264, 0
  %v1809 = vsel %vm1504, %v1266, 0
  %v1812 = vsel %vm1504, %v1268, 0
  %v1815 = vsel %vm1504, %v1270, 0
  %v1818 = vsel %vm1504, %v1272, 0
  %v1821 = vsel %vm1504, %v1274, 0
  %v1824 = vsel %vm1504, %v1276, 0
  %v1827 = vsel %vm1504, %v1278, 0
  %v1830 = vsel %vm1504, %v1280, 0
  %v1833 = vsel %vm1504, %v1282, 0
  %v1836 = vsel %vm1504, %v1284, 0
  %v1839 = vsel %vm1504, %v1286, 0
  %v1842 = vsel %vm1504, %v1288, 0
  %v1845 = vsel %vm1504, %v1290, 0
  %v1848 = vsel %vm1504, %v1292, 0
  %v1851 = vsel %vm1504, %v1294, 0
  %v1854 = vsel %vm1504, %v1296, 0
  %v1857 = vsel %vm1504, %v1298, 0
  %v1860 = vsel %vm1504, %v1300, 0
  %v1863 = vsel %vm1504, %v1302, 0
  %v1866 = vsel %vm1504, %v1304, 0
  %v1869 = vsel %vm1504, %v1306, 0
  %v1872 = vsel %vm1504, %v1308, 0
  %v1875 = vsel %vm1504, %v1310, 0
  %v1878 = vsel %vm1504, %v1312, 0
  %v1881 = vsel %vm1504, %v1314, 0
  %v1884 = vsel %vm1504, %v1316, 0
  %v1887 = vsel %vm1504, %v1318, 0
  %vm1889 = vcmask 1040384
  %vm1890 = vcmask 1041408
  %v1891 = vsel %vm1889, 4294967295, 65535
  %v1892 = vsel %vm1890, %v1891, 0
  %v1894 = vand.u32 %v1494, %v1892
  %1896 = vmatprep.subr.bf16.mxu0 0
  %1897 = vmatpush1.bf16.msra.mxu0 %v1492
  %1898 = vmatprep.subr.bf16.mxu0 0
  %1899 = vmatpush1.bf16.msra.mxu0 %v1491
  %1900 = vmatprep.subr.bf16.mxu0 0
  %1901 = vmatpush1.bf16.msra.mxu0 %v1490
  %1902 = vmatprep.subr.bf16.mxu0 0
  %1903 = vmatpush1.bf16.msra.mxu0 %v1489
  %1904 = vmatprep.subr.bf16.mxu0 0
  %1905 = vmatpush1.bf16.msra.mxu0 %v1488
  %1906 = vmatprep.subr.bf16.mxu0 0
  %1907 = vmatpush1.bf16.msra.mxu0 %v1487
  %1908 = vmatprep.subr.bf16.mxu0 0
  %1909 = vmatpush1.bf16.msra.mxu0 %v1486
  %1910 = vmatprep.subr.bf16.mxu0 0
  %1911 = vmatpush1.bf16.msra.mxu0 %v1485
  %1912 = vmatprep.subr.bf16.mxu0 0
  %1913 = vmatpush2.bf16.msra.mxu0 0
  %1914 = vmatprep.subr.bf16.mxu0 0
  %1915 = vmatpush2.bf16.msra.mxu0 0
  %1916 = vmatprep.subr.bf16.mxu0 0
  %1917 = vmatpush2.bf16.msra.mxu0 0
  %1918 = vmatprep.subr.bf16.mxu0 0
  %1919 = vmatpush2.bf16.msra.mxu0 0
  %1920 = vmatprep.subr.bf16.mxu0 0
  %1921 = vmatpush2.bf16.msra.mxu0 0
  %1922 = vmatprep.subr.bf16.mxu0 0
  %1923 = vmatpush2.bf16.msra.mxu0 0
  %1924 = vmatprep.subr.bf16.mxu0 0
  %1925 = vmatpush2.bf16.msra.mxu0 %v1894
  %1926 = vmatprep.subr.bf16.mxu0 0
  %1927 = vmatpush2.bf16.msra.mxu0 %v1493
  %1928 = vmatprep.mubr.bf16.mxu0 %v1506
  %1929 = vmatmul.mubr.bf16.gmra.mxu0 %v1063
  %v1930 = vpop.f32.mrf.mxu0
  %v1931 = vadd.f32 %v294, %v1930
  %v1932 = vpop.f32.mrf.mxu0
  %v1933 = vpop.f32.mrf.mxu0
  %v1934 = vadd.f32 %v294, %v1933
  %v1935 = vpop.f32.mrf.mxu0
  %1936 = vmatprep.mubr.bf16.mxu0 %v1509
  %1937 = vmatmul.mubr.bf16.gmra.mxu0 %v1065
  %v1938 = vpop.f32.mrf.mxu0
  %v1939 = vadd.f32 %v294, %v1938
  %v1940 = vpop.f32.mrf.mxu0
  %v1941 = vpop.f32.mrf.mxu0
  %v1942 = vadd.f32 %v294, %v1941
  %v1943 = vpop.f32.mrf.mxu0
  %1944 = vmatprep.mubr.bf16.mxu0 %v1512
  %1945 = vmatmul.mubr.bf16.gmra.mxu0 %v1067
  %v1946 = vpop.f32.mrf.mxu0
  %v1947 = vadd.f32 %v294, %v1946
  %v1948 = vpop.f32.mrf.mxu0
  %v1949 = vpop.f32.mrf.mxu0
  %v1950 = vadd.f32 %v294, %v1949
  %v1951 = vpop.f32.mrf.mxu0
  %1952 = vmatprep.mubr.bf16.mxu0 %v1515
  %1953 = vmatmul.mubr.bf16.gmra.mxu0 %v1069
  %v1954 = vpop.f32.mrf.mxu0
  %v1955 = vadd.f32 %v294, %v1954
  %v1956 = vpop.f32.mrf.mxu0
  %v1957 = vpop.f32.mrf.mxu0
  %v1958 = vadd.f32 %v294, %v1957
  %v1959 = vpop.f32.mrf.mxu0
  %1960 = vmatprep.mubr.bf16.mxu0 %v1518
  %1961 = vmatmul.mubr.bf16.gmra.mxu0 %v1071
  %v1962 = vpop.f32.mrf.mxu0
  %v1963 = vadd.f32 %v294, %v1962
  %v1964 = vpop.f32.mrf.mxu0
  %v1965 = vpop.f32.mrf.mxu0
  %v1966 = vadd.f32 %v294, %v1965
  %v1967 = vpop.f32.mrf.mxu0
  %1968 = vmatprep.mubr.bf16.mxu0 %v1521
  %1969 = vmatmul.mubr.bf16.gmra.mxu0 %v1073
  %v1970 = vpop.f32.mrf.mxu0
  %v1971 = vadd.f32 %v294, %v1970
  %v1972 = vpop.f32.mrf.mxu0
  %v1973 = vpop.f32.mrf.mxu0
  %v1974 = vadd.f32 %v294, %v1973
  %v1975 = vpop.f32.mrf.mxu0
  %1976 = vmatprep.mubr.bf16.mxu0 %v1524
  %1977 = vmatmul.mubr.bf16.gmra.mxu0 %v1075
  %v1978 = vpop.f32.mrf.mxu0
  %v1979 = vadd.f32 %v294, %v1978
  %v1980 = vpop.f32.mrf.mxu0
  %v1981 = vpop.f32.mrf.mxu0
  %v1982 = vadd.f32 %v294, %v1981
  %v1983 = vpop.f32.mrf.mxu0
  %1984 = vmatprep.mubr.bf16.mxu0 %v1527
  %1985 = vmatmul.mubr.bf16.gmra.mxu0 %v1077
  %v1986 = vpop.f32.mrf.mxu0
  %v1987 = vadd.f32 %v294, %v1986
  %v1988 = vpop.f32.mrf.mxu0
  %v1989 = vpop.f32.mrf.mxu0
  %v1990 = vadd.f32 %v294, %v1989
  %v1991 = vpop.f32.mrf.mxu0
  %1992 = vmatprep.mubr.bf16.mxu0 %v1530
  %1993 = vmatmul.mubr.bf16.gmra.mxu0 %v1079
  %v1994 = vpop.f32.mrf.mxu0
  %v1995 = vadd.f32 %v294, %v1994
  %v1996 = vpop.f32.mrf.mxu0
  %v1997 = vpop.f32.mrf.mxu0
  %v1998 = vadd.f32 %v294, %v1997
  %v1999 = vpop.f32.mrf.mxu0
  %2000 = vmatprep.mubr.bf16.mxu0 %v1533
  %2001 = vmatmul.mubr.bf16.gmra.mxu0 %v1081
  %v2002 = vpop.f32.mrf.mxu0
  %v2003 = vadd.f32 %v294, %v2002
  %v2004 = vpop.f32.mrf.mxu0
  %v2005 = vpop.f32.mrf.mxu0
  %v2006 = vadd.f32 %v294, %v2005
  %v2007 = vpop.f32.mrf.mxu0
  %2008 = vmatprep.mubr.bf16.mxu0 %v1536
  %2009 = vmatmul.mubr.bf16.gmra.mxu0 %v1083
  %v2010 = vpop.f32.mrf.mxu0
  %v2011 = vadd.f32 %v294, %v2010
  %v2012 = vpop.f32.mrf.mxu0
  %v2013 = vpop.f32.mrf.mxu0
  %v2014 = vadd.f32 %v294, %v2013
  %v2015 = vpop.f32.mrf.mxu0
  %2016 = vmatprep.mubr.bf16.mxu0 %v1539
  %2017 = vmatmul.mubr.bf16.gmra.mxu0 %v1085
  %v2018 = vpop.f32.mrf.mxu0
  %v2019 = vadd.f32 %v294, %v2018
  %v2020 = vpop.f32.mrf.mxu0
  %v2021 = vpop.f32.mrf.mxu0
  %v2022 = vadd.f32 %v294, %v2021
  %v2023 = vpop.f32.mrf.mxu0
  %2024 = vmatprep.mubr.bf16.mxu0 %v1542
  %2025 = vmatmul.mubr.bf16.gmra.mxu0 %v1087
  %v2026 = vpop.f32.mrf.mxu0
  %v2027 = vadd.f32 %v294, %v2026
  %v2028 = vpop.f32.mrf.mxu0
  %v2029 = vpop.f32.mrf.mxu0
  %v2030 = vadd.f32 %v294, %v2029
  %v2031 = vpop.f32.mrf.mxu0
  %2032 = vmatprep.mubr.bf16.mxu0 %v1545
  %2033 = vmatmul.mubr.bf16.gmra.mxu0 %v1089
  %v2034 = vpop.f32.mrf.mxu0
  %v2035 = vadd.f32 %v294, %v2034
  %v2036 = vpop.f32.mrf.mxu0
  %v2037 = vpop.f32.mrf.mxu0
  %v2038 = vadd.f32 %v294, %v2037
  %v2039 = vpop.f32.mrf.mxu0
  %2040 = vmatprep.mubr.bf16.mxu0 %v1548
  %2041 = vmatmul.mubr.bf16.gmra.mxu0 %v1091
  %v2042 = vpop.f32.mrf.mxu0
  %v2043 = vadd.f32 %v294, %v2042
  %v2044 = vpop.f32.mrf.mxu0
  %v2045 = vpop.f32.mrf.mxu0
  %v2046 = vadd.f32 %v294, %v2045
  %v2047 = vpop.f32.mrf.mxu0
  %2048 = vmatprep.mubr.bf16.mxu0 %v1551
  %2049 = vmatmul.mubr.bf16.gmra.mxu0 %v1093
  %v2050 = vpop.f32.mrf.mxu0
  %v2051 = vadd.f32 %v294, %v2050
  %v2052 = vpop.f32.mrf.mxu0
  %v2053 = vpop.f32.mrf.mxu0
  %v2054 = vadd.f32 %v294, %v2053
  %v2055 = vpop.f32.mrf.mxu0
  %2056 = vmatprep.mubr.bf16.mxu0 %v1554
  %2057 = vmatmul.mubr.bf16.gmra.mxu0 %v1095
  %v2058 = vpop.f32.mrf.mxu0
  %v2059 = vadd.f32 %v294, %v2058
  %v2060 = vpop.f32.mrf.mxu0
  %v2061 = vpop.f32.mrf.mxu0
  %v2062 = vadd.f32 %v294, %v2061
  %v2063 = vpop.f32.mrf.mxu0
  %2064 = vmatprep.mubr.bf16.mxu0 %v1557
  %2065 = vmatmul.mubr.bf16.gmra.mxu0 %v1097
  %v2066 = vpop.f32.mrf.mxu0
  %v2067 = vadd.f32 %v294, %v2066
  %v2068 = vpop.f32.mrf.mxu0
  %v2069 = vpop.f32.mrf.mxu0
  %v2070 = vadd.f32 %v294, %v2069
  %v2071 = vpop.f32.mrf.mxu0
  %2072 = vmatprep.mubr.bf16.mxu0 %v1560
  %2073 = vmatmul.mubr.bf16.gmra.mxu0 %v1099
  %v2074 = vpop.f32.mrf.mxu0
  %v2075 = vadd.f32 %v294, %v2074
  %v2076 = vpop.f32.mrf.mxu0
  %v2077 = vpop.f32.mrf.mxu0
  %v2078 = vadd.f32 %v294, %v2077
  %v2079 = vpop.f32.mrf.mxu0
  %2080 = vmatprep.mubr.bf16.mxu0 %v1563
  %2081 = vmatmul.mubr.bf16.gmra.mxu0 %v1101
  %v2082 = vpop.f32.mrf.mxu0
  %v2083 = vadd.f32 %v294, %v2082
  %v2084 = vpop.f32.mrf.mxu0
  %v2085 = vpop.f32.mrf.mxu0
  %v2086 = vadd.f32 %v294, %v2085
  %v2087 = vpop.f32.mrf.mxu0
  %2088 = vmatprep.mubr.bf16.mxu0 %v1566
  %2089 = vmatmul.mubr.bf16.gmra.mxu0 %v1103
  %v2090 = vpop.f32.mrf.mxu0
  %v2091 = vadd.f32 %v294, %v2090
  %v2092 = vpop.f32.mrf.mxu0
  %v2093 = vpop.f32.mrf.mxu0
  %v2094 = vadd.f32 %v294, %v2093
  %v2095 = vpop.f32.mrf.mxu0
  %2096 = vmatprep.mubr.bf16.mxu0 %v1569
  %2097 = vmatmul.mubr.bf16.gmra.mxu0 %v1105
  %v2098 = vpop.f32.mrf.mxu0
  %v2099 = vadd.f32 %v294, %v2098
  %v2100 = vpop.f32.mrf.mxu0
  %v2101 = vpop.f32.mrf.mxu0
  %v2102 = vadd.f32 %v294, %v2101
  %v2103 = vpop.f32.mrf.mxu0
  %2104 = vmatprep.mubr.bf16.mxu0 %v1572
  %2105 = vmatmul.mubr.bf16.gmra.mxu0 %v1107
  %v2106 = vpop.f32.mrf.mxu0
  %v2107 = vadd.f32 %v294, %v2106
  %v2108 = vpop.f32.mrf.mxu0
  %v2109 = vpop.f32.mrf.mxu0
  %v2110 = vadd.f32 %v294, %v2109
  %v2111 = vpop.f32.mrf.mxu0
  %2112 = vmatprep.mubr.bf16.mxu0 %v1575
  %2113 = vmatmul.mubr.bf16.gmra.mxu0 %v1109
  %v2114 = vpop.f32.mrf.mxu0
  %v2115 = vadd.f32 %v294, %v2114
  %v2116 = vpop.f32.mrf.mxu0
  %v2117 = vpop.f32.mrf.mxu0
  %v2118 = vadd.f32 %v294, %v2117
  %v2119 = vpop.f32.mrf.mxu0
  %2120 = vmatprep.mubr.bf16.mxu0 %v1578
  %2121 = vmatmul.mubr.bf16.gmra.mxu0 %v1111
  %v2122 = vpop.f32.mrf.mxu0
  %v2123 = vadd.f32 %v294, %v2122
  %v2124 = vpop.f32.mrf.mxu0
  %v2125 = vpop.f32.mrf.mxu0
  %v2126 = vadd.f32 %v294, %v2125
  %v2127 = vpop.f32.mrf.mxu0
  %2128 = vmatprep.mubr.bf16.mxu0 %v1581
  %2129 = vmatmul.mubr.bf16.gmra.mxu0 %v1113
  %v2130 = vpop.f32.mrf.mxu0
  %v2131 = vadd.f32 %v294, %v2130
  %v2132 = vpop.f32.mrf.mxu0
  %v2133 = vpop.f32.mrf.mxu0
  %v2134 = vadd.f32 %v294, %v2133
  %v2135 = vpop.f32.mrf.mxu0
  %2136 = vmatprep.mubr.bf16.mxu0 %v1584
  %2137 = vmatmul.mubr.bf16.gmra.mxu0 %v1115
  %v2138 = vpop.f32.mrf.mxu0
  %v2139 = vadd.f32 %v294, %v2138
  %v2140 = vpop.f32.mrf.mxu0
  %v2141 = vpop.f32.mrf.mxu0
  %v2142 = vadd.f32 %v294, %v2141
  %v2143 = vpop.f32.mrf.mxu0
  %2144 = vmatprep.mubr.bf16.mxu0 %v1587
  %2145 = vmatmul.mubr.bf16.gmra.mxu0 %v1117
  %v2146 = vpop.f32.mrf.mxu0
  %v2147 = vadd.f32 %v294, %v2146
  %v2148 = vpop.f32.mrf.mxu0
  %v2149 = vpop.f32.mrf.mxu0
  %v2150 = vadd.f32 %v294, %v2149
  %v2151 = vpop.f32.mrf.mxu0
  %2152 = vmatprep.mubr.bf16.mxu0 %v1590
  %2153 = vmatmul.mubr.bf16.gmra.mxu0 %v1119
  %v2154 = vpop.f32.mrf.mxu0
  %v2155 = vadd.f32 %v294, %v2154
  %v2156 = vpop.f32.mrf.mxu0
  %v2157 = vpop.f32.mrf.mxu0
  %v2158 = vadd.f32 %v294, %v2157
  %v2159 = vpop.f32.mrf.mxu0
  %2160 = vmatprep.mubr.bf16.mxu0 %v1593
  %2161 = vmatmul.mubr.bf16.gmra.mxu0 %v1121
  %v2162 = vpop.f32.mrf.mxu0
  %v2163 = vadd.f32 %v294, %v2162
  %v2164 = vpop.f32.mrf.mxu0
  %v2165 = vpop.f32.mrf.mxu0
  %v2166 = vadd.f32 %v294, %v2165
  %v2167 = vpop.f32.mrf.mxu0
  %2168 = vmatprep.mubr.bf16.mxu0 %v1596
  %2169 = vmatmul.mubr.bf16.gmra.mxu0 %v1123
  %v2170 = vpop.f32.mrf.mxu0
  %v2171 = vadd.f32 %v294, %v2170
  %v2172 = vpop.f32.mrf.mxu0
  %v2173 = vpop.f32.mrf.mxu0
  %v2174 = vadd.f32 %v294, %v2173
  %v2175 = vpop.f32.mrf.mxu0
  %2176 = vmatprep.mubr.bf16.mxu0 %v1599
  %2177 = vmatmul.mubr.bf16.gmra.mxu0 %v1125
  %v2178 = vpop.f32.mrf.mxu0
  %v2179 = vadd.f32 %v294, %v2178
  %v2180 = vpop.f32.mrf.mxu0
  %v2181 = vpop.f32.mrf.mxu0
  %v2182 = vadd.f32 %v294, %v2181
  %v2183 = vpop.f32.mrf.mxu0
  %2184 = vmatprep.mubr.bf16.mxu0 %v1602
  %2185 = vmatmul.mubr.bf16.gmra.mxu0 %v1127
  %v2186 = vpop.f32.mrf.mxu0
  %v2187 = vadd.f32 %v294, %v2186
  %v2188 = vpop.f32.mrf.mxu0
  %v2189 = vpop.f32.mrf.mxu0
  %v2190 = vadd.f32 %v294, %v2189
  %v2191 = vpop.f32.mrf.mxu0
  %2192 = vmatprep.mubr.bf16.mxu0 %v1605
  %2193 = vmatmul.mubr.bf16.gmra.mxu0 %v1129
  %v2194 = vpop.f32.mrf.mxu0
  %v2195 = vadd.f32 %v294, %v2194
  %v2196 = vpop.f32.mrf.mxu0
  %v2197 = vpop.f32.mrf.mxu0
  %v2198 = vadd.f32 %v294, %v2197
  %v2199 = vpop.f32.mrf.mxu0
  %2200 = vmatprep.mubr.bf16.mxu0 %v1608
  %2201 = vmatmul.mubr.bf16.gmra.mxu0 %v1131
  %v2202 = vpop.f32.mrf.mxu0
  %v2203 = vadd.f32 %v294, %v2202
  %v2204 = vpop.f32.mrf.mxu0
  %v2205 = vpop.f32.mrf.mxu0
  %v2206 = vadd.f32 %v294, %v2205
  %v2207 = vpop.f32.mrf.mxu0
  %2208 = vmatprep.mubr.bf16.mxu0 %v1611
  %2209 = vmatmul.mubr.bf16.gmra.mxu0 %v1133
  %v2210 = vpop.f32.mrf.mxu0
  %v2211 = vadd.f32 %v294, %v2210
  %v2212 = vpop.f32.mrf.mxu0
  %v2213 = vpop.f32.mrf.mxu0
  %v2214 = vadd.f32 %v294, %v2213
  %v2215 = vpop.f32.mrf.mxu0
  %2216 = vmatprep.mubr.bf16.mxu0 %v1614
  %2217 = vmatmul.mubr.bf16.gmra.mxu0 %v1135
  %v2218 = vpop.f32.mrf.mxu0
  %v2219 = vadd.f32 %v294, %v2218
  %v2220 = vpop.f32.mrf.mxu0
  %v2221 = vpop.f32.mrf.mxu0
  %v2222 = vadd.f32 %v294, %v2221
  %v2223 = vpop.f32.mrf.mxu0
  %2224 = vmatprep.mubr.bf16.mxu0 %v1617
  %2225 = vmatmul.mubr.bf16.gmra.mxu0 %v1137
  %v2226 = vpop.f32.mrf.mxu0
  %v2227 = vadd.f32 %v294, %v2226
  %v2228 = vpop.f32.mrf.mxu0
  %v2229 = vpop.f32.mrf.mxu0
  %v2230 = vadd.f32 %v294, %v2229
  %v2231 = vpop.f32.mrf.mxu0
  %2232 = vmatprep.mubr.bf16.mxu0 %v1620
  %2233 = vmatmul.mubr.bf16.gmra.mxu0 %v1139
  %v2234 = vpop.f32.mrf.mxu0
  %v2235 = vadd.f32 %v294, %v2234
  %v2236 = vpop.f32.mrf.mxu0
  %v2237 = vpop.f32.mrf.mxu0
  %v2238 = vadd.f32 %v294, %v2237
  %v2239 = vpop.f32.mrf.mxu0
  %2240 = vmatprep.mubr.bf16.mxu0 %v1623
  %2241 = vmatmul.mubr.bf16.gmra.mxu0 %v1141
  %v2242 = vpop.f32.mrf.mxu0
  %v2243 = vadd.f32 %v294, %v2242
  %v2244 = vpop.f32.mrf.mxu0
  %v2245 = vpop.f32.mrf.mxu0
  %v2246 = vadd.f32 %v294, %v2245
  %v2247 = vpop.f32.mrf.mxu0
  %2248 = vmatprep.mubr.bf16.mxu0 %v1626
  %2249 = vmatmul.mubr.bf16.gmra.mxu0 %v1143
  %v2250 = vpop.f32.mrf.mxu0
  %v2251 = vadd.f32 %v294, %v2250
  %v2252 = vpop.f32.mrf.mxu0
  %v2253 = vpop.f32.mrf.mxu0
  %v2254 = vadd.f32 %v294, %v2253
  %v2255 = vpop.f32.mrf.mxu0
  %2256 = vmatprep.mubr.bf16.mxu0 %v1629
  %2257 = vmatmul.mubr.bf16.gmra.mxu0 %v1145
  %v2258 = vpop.f32.mrf.mxu0
  %v2259 = vadd.f32 %v294, %v2258
  %v2260 = vpop.f32.mrf.mxu0
  %v2261 = vpop.f32.mrf.mxu0
  %v2262 = vadd.f32 %v294, %v2261
  %v2263 = vpop.f32.mrf.mxu0
  %2264 = vmatprep.mubr.bf16.mxu0 %v1632
  %2265 = vmatmul.mubr.bf16.gmra.mxu0 %v1147
  %v2266 = vpop.f32.mrf.mxu0
  %v2267 = vadd.f32 %v294, %v2266
  %v2268 = vpop.f32.mrf.mxu0
  %v2269 = vpop.f32.mrf.mxu0
  %v2270 = vadd.f32 %v294, %v2269
  %v2271 = vpop.f32.mrf.mxu0
  %2272 = vmatprep.mubr.bf16.mxu0 %v1635
  %2273 = vmatmul.mubr.bf16.gmra.mxu0 %v1149
  %v2274 = vpop.f32.mrf.mxu0
  %v2275 = vadd.f32 %v294, %v2274
  %v2276 = vpop.f32.mrf.mxu0
  %v2277 = vpop.f32.mrf.mxu0
  %v2278 = vadd.f32 %v294, %v2277
  %v2279 = vpop.f32.mrf.mxu0
  %2280 = vmatprep.mubr.bf16.mxu0 %v1638
  %2281 = vmatmul.mubr.bf16.gmra.mxu0 %v1151
  %v2282 = vpop.f32.mrf.mxu0
  %v2283 = vadd.f32 %v294, %v2282
  %v2284 = vpop.f32.mrf.mxu0
  %v2285 = vpop.f32.mrf.mxu0
  %v2286 = vadd.f32 %v294, %v2285
  %v2287 = vpop.f32.mrf.mxu0
  %2288 = vmatprep.mubr.bf16.mxu0 %v1641
  %2289 = vmatmul.mubr.bf16.gmra.mxu0 %v1153
  %v2290 = vpop.f32.mrf.mxu0
  %v2291 = vadd.f32 %v294, %v2290
  %v2292 = vpop.f32.mrf.mxu0
  %v2293 = vpop.f32.mrf.mxu0
  %v2294 = vadd.f32 %v294, %v2293
  %v2295 = vpop.f32.mrf.mxu0
  %2296 = vmatprep.mubr.bf16.mxu0 %v1644
  %2297 = vmatmul.mubr.bf16.gmra.mxu0 %v1155
  %v2298 = vpop.f32.mrf.mxu0
  %v2299 = vadd.f32 %v294, %v2298
  %v2300 = vpop.f32.mrf.mxu0
  %v2301 = vpop.f32.mrf.mxu0
  %v2302 = vadd.f32 %v294, %v2301
  %v2303 = vpop.f32.mrf.mxu0
  %2304 = vmatprep.mubr.bf16.mxu0 %v1647
  %2305 = vmatmul.mubr.bf16.gmra.mxu0 %v1157
  %v2306 = vpop.f32.mrf.mxu0
  %v2307 = vadd.f32 %v294, %v2306
  %v2308 = vpop.f32.mrf.mxu0
  %v2309 = vpop.f32.mrf.mxu0
  %v2310 = vadd.f32 %v294, %v2309
  %v2311 = vpop.f32.mrf.mxu0
  %2312 = vmatprep.mubr.bf16.mxu0 %v1650
  %2313 = vmatmul.mubr.bf16.gmra.mxu0 %v1159
  %v2314 = vpop.f32.mrf.mxu0
  %v2315 = vadd.f32 %v294, %v2314
  %v2316 = vpop.f32.mrf.mxu0
  %v2317 = vpop.f32.mrf.mxu0
  %v2318 = vadd.f32 %v294, %v2317
  %v2319 = vpop.f32.mrf.mxu0
  %2320 = vmatprep.mubr.bf16.mxu0 %v1653
  %2321 = vmatmul.mubr.bf16.gmra.mxu0 %v1161
  %v2322 = vpop.f32.mrf.mxu0
  %v2323 = vadd.f32 %v294, %v2322
  %v2324 = vpop.f32.mrf.mxu0
  %v2325 = vpop.f32.mrf.mxu0
  %v2326 = vadd.f32 %v294, %v2325
  %v2327 = vpop.f32.mrf.mxu0
  %2328 = vmatprep.mubr.bf16.mxu0 %v1656
  %2329 = vmatmul.mubr.bf16.gmra.mxu0 %v1163
  %v2330 = vpop.f32.mrf.mxu0
  %v2331 = vadd.f32 %v294, %v2330
  %v2332 = vpop.f32.mrf.mxu0
  %v2333 = vpop.f32.mrf.mxu0
  %v2334 = vadd.f32 %v294, %v2333
  %v2335 = vpop.f32.mrf.mxu0
  %2336 = vmatprep.mubr.bf16.mxu0 %v1659
  %2337 = vmatmul.mubr.bf16.gmra.mxu0 %v1165
  %v2338 = vpop.f32.mrf.mxu0
  %v2339 = vadd.f32 %v294, %v2338
  %v2340 = vpop.f32.mrf.mxu0
  %v2341 = vpop.f32.mrf.mxu0
  %v2342 = vadd.f32 %v294, %v2341
  %v2343 = vpop.f32.mrf.mxu0
  %2344 = vmatprep.mubr.bf16.mxu0 %v1662
  %2345 = vmatmul.mubr.bf16.gmra.mxu0 %v1167
  %v2346 = vpop.f32.mrf.mxu0
  %v2347 = vadd.f32 %v294, %v2346
  %v2348 = vpop.f32.mrf.mxu0
  %v2349 = vpop.f32.mrf.mxu0
  %v2350 = vadd.f32 %v294, %v2349
  %v2351 = vpop.f32.mrf.mxu0
  %2352 = vmatprep.mubr.bf16.mxu0 %v1665
  %2353 = vmatmul.mubr.bf16.gmra.mxu0 %v1169
  %v2354 = vpop.f32.mrf.mxu0
  %v2355 = vadd.f32 %v294, %v2354
  %v2356 = vpop.f32.mrf.mxu0
  %v2357 = vpop.f32.mrf.mxu0
  %v2358 = vadd.f32 %v294, %v2357
  %v2359 = vpop.f32.mrf.mxu0
  %2360 = vmatprep.mubr.bf16.mxu0 %v1668
  %2361 = vmatmul.mubr.bf16.gmra.mxu0 %v1171
  %v2362 = vpop.f32.mrf.mxu0
  %v2363 = vadd.f32 %v294, %v2362
  %v2364 = vpop.f32.mrf.mxu0
  %v2365 = vpop.f32.mrf.mxu0
  %v2366 = vadd.f32 %v294, %v2365
  %v2367 = vpop.f32.mrf.mxu0
  %2368 = vmatprep.mubr.bf16.mxu0 %v1671
  %2369 = vmatmul.mubr.bf16.gmra.mxu0 %v1173
  %v2370 = vpop.f32.mrf.mxu0
  %v2371 = vadd.f32 %v294, %v2370
  %v2372 = vpop.f32.mrf.mxu0
  %v2373 = vpop.f32.mrf.mxu0
  %v2374 = vadd.f32 %v294, %v2373
  %v2375 = vpop.f32.mrf.mxu0
  %2376 = vmatprep.mubr.bf16.mxu0 %v1674
  %2377 = vmatmul.mubr.bf16.gmra.mxu0 %v1175
  %v2378 = vpop.f32.mrf.mxu0
  %v2379 = vadd.f32 %v294, %v2378
  %v2380 = vpop.f32.mrf.mxu0
  %v2381 = vpop.f32.mrf.mxu0
  %v2382 = vadd.f32 %v294, %v2381
  %v2383 = vpop.f32.mrf.mxu0
  %2384 = vmatprep.mubr.bf16.mxu0 %v1677
  %2385 = vmatmul.mubr.bf16.gmra.mxu0 %v1177
  %v2386 = vpop.f32.mrf.mxu0
  %v2387 = vadd.f32 %v294, %v2386
  %v2388 = vpop.f32.mrf.mxu0
  %v2389 = vpop.f32.mrf.mxu0
  %v2390 = vadd.f32 %v294, %v2389
  %v2391 = vpop.f32.mrf.mxu0
  %2392 = vmatprep.mubr.bf16.mxu0 %v1680
  %2393 = vmatmul.mubr.bf16.gmra.mxu0 %v1179
  %v2394 = vpop.f32.mrf.mxu0
  %v2395 = vadd.f32 %v294, %v2394
  %v2396 = vpop.f32.mrf.mxu0
  %v2397 = vpop.f32.mrf.mxu0
  %v2398 = vadd.f32 %v294, %v2397
  %v2399 = vpop.f32.mrf.mxu0
  %2400 = vmatprep.mubr.bf16.mxu0 %v1683
  %2401 = vmatmul.mubr.bf16.gmra.mxu0 %v1181
  %v2402 = vpop.f32.mrf.mxu0
  %v2403 = vadd.f32 %v294, %v2402
  %v2404 = vpop.f32.mrf.mxu0
  %v2405 = vpop.f32.mrf.mxu0
  %v2406 = vadd.f32 %v294, %v2405
  %v2407 = vpop.f32.mrf.mxu0
  %2408 = vmatprep.mubr.bf16.mxu0 %v1686
  %2409 = vmatmul.mubr.bf16.gmra.mxu0 %v1183
  %v2410 = vpop.f32.mrf.mxu0
  %v2411 = vadd.f32 %v294, %v2410
  %v2412 = vpop.f32.mrf.mxu0
  %v2413 = vpop.f32.mrf.mxu0
  %v2414 = vadd.f32 %v294, %v2413
  %v2415 = vpop.f32.mrf.mxu0
  %2416 = vmatprep.mubr.bf16.mxu0 %v1689
  %2417 = vmatmul.mubr.bf16.gmra.mxu0 %v1185
  %v2418 = vpop.f32.mrf.mxu0
  %v2419 = vadd.f32 %v294, %v2418
  %v2420 = vpop.f32.mrf.mxu0
  %v2421 = vpop.f32.mrf.mxu0
  %v2422 = vadd.f32 %v294, %v2421
  %v2423 = vpop.f32.mrf.mxu0
  %2424 = vmatprep.mubr.bf16.mxu0 %v1692
  %2425 = vmatmul.mubr.bf16.gmra.mxu0 %v1187
  %v2426 = vpop.f32.mrf.mxu0
  %v2427 = vadd.f32 %v294, %v2426
  %v2428 = vpop.f32.mrf.mxu0
  %v2429 = vpop.f32.mrf.mxu0
  %v2430 = vadd.f32 %v294, %v2429
  %v2431 = vpop.f32.mrf.mxu0
  %2432 = vmatprep.mubr.bf16.mxu0 %v1695
  %2433 = vmatmul.mubr.bf16.gmra.mxu0 %v1189
  %v2434 = vpop.f32.mrf.mxu0
  %v2435 = vadd.f32 %v294, %v2434
  %v2436 = vpop.f32.mrf.mxu0
  %v2437 = vpop.f32.mrf.mxu0
  %v2438 = vadd.f32 %v294, %v2437
  %v2439 = vpop.f32.mrf.mxu0
  %2440 = vmatprep.mubr.bf16.mxu0 %v1698
  %2441 = vmatmul.mubr.bf16.gmra.mxu0 %v1191
  %v2442 = vpop.f32.mrf.mxu0
  %v2443 = vadd.f32 %v294, %v2442
  %v2444 = vpop.f32.mrf.mxu0
  %v2445 = vpop.f32.mrf.mxu0
  %v2446 = vadd.f32 %v294, %v2445
  %v2447 = vpop.f32.mrf.mxu0
  %2448 = vmatprep.mubr.bf16.mxu0 %v1701
  %2449 = vmatmul.mubr.bf16.gmra.mxu0 %v1193
  %v2450 = vpop.f32.mrf.mxu0
  %v2451 = vadd.f32 %v294, %v2450
  %v2452 = vpop.f32.mrf.mxu0
  %v2453 = vpop.f32.mrf.mxu0
  %v2454 = vadd.f32 %v294, %v2453
  %v2455 = vpop.f32.mrf.mxu0
  %2456 = vmatprep.mubr.bf16.mxu0 %v1704
  %2457 = vmatmul.mubr.bf16.gmra.mxu0 %v1195
  %v2458 = vpop.f32.mrf.mxu0
  %v2459 = vadd.f32 %v294, %v2458
  %v2460 = vpop.f32.mrf.mxu0
  %v2461 = vpop.f32.mrf.mxu0
  %v2462 = vadd.f32 %v294, %v2461
  %v2463 = vpop.f32.mrf.mxu0
  %2464 = vmatprep.mubr.bf16.mxu0 %v1707
  %2465 = vmatmul.mubr.bf16.gmra.mxu0 %v1197
  %v2466 = vpop.f32.mrf.mxu0
  %v2467 = vadd.f32 %v294, %v2466
  %v2468 = vpop.f32.mrf.mxu0
  %v2469 = vpop.f32.mrf.mxu0
  %v2470 = vadd.f32 %v294, %v2469
  %v2471 = vpop.f32.mrf.mxu0
  %2472 = vmatprep.mubr.bf16.mxu0 %v1710
  %2473 = vmatmul.mubr.bf16.gmra.mxu0 %v1199
  %v2474 = vpop.f32.mrf.mxu0
  %v2475 = vadd.f32 %v294, %v2474
  %v2476 = vpop.f32.mrf.mxu0
  %v2477 = vpop.f32.mrf.mxu0
  %v2478 = vadd.f32 %v294, %v2477
  %v2479 = vpop.f32.mrf.mxu0
  %2480 = vmatprep.mubr.bf16.mxu0 %v1713
  %2481 = vmatmul.mubr.bf16.gmra.mxu0 %v1201
  %v2482 = vpop.f32.mrf.mxu0
  %v2483 = vadd.f32 %v294, %v2482
  %v2484 = vpop.f32.mrf.mxu0
  %v2485 = vpop.f32.mrf.mxu0
  %v2486 = vadd.f32 %v294, %v2485
  %v2487 = vpop.f32.mrf.mxu0
  %2488 = vmatprep.mubr.bf16.mxu0 %v1716
  %2489 = vmatmul.mubr.bf16.gmra.mxu0 %v1203
  %v2490 = vpop.f32.mrf.mxu0
  %v2491 = vadd.f32 %v294, %v2490
  %v2492 = vpop.f32.mrf.mxu0
  %v2493 = vpop.f32.mrf.mxu0
  %v2494 = vadd.f32 %v294, %v2493
  %v2495 = vpop.f32.mrf.mxu0
  %2496 = vmatprep.mubr.bf16.mxu0 %v1719
  %2497 = vmatmul.mubr.bf16.gmra.mxu0 %v1205
  %v2498 = vpop.f32.mrf.mxu0
  %v2499 = vadd.f32 %v294, %v2498
  %v2500 = vpop.f32.mrf.mxu0
  %v2501 = vpop.f32.mrf.mxu0
  %v2502 = vadd.f32 %v294, %v2501
  %v2503 = vpop.f32.mrf.mxu0
  %2504 = vmatprep.mubr.bf16.mxu0 %v1722
  %2505 = vmatmul.mubr.bf16.gmra.mxu0 %v1207
  %v2506 = vpop.f32.mrf.mxu0
  %v2507 = vadd.f32 %v294, %v2506
  %v2508 = vpop.f32.mrf.mxu0
  %v2509 = vpop.f32.mrf.mxu0
  %v2510 = vadd.f32 %v294, %v2509
  %v2511 = vpop.f32.mrf.mxu0
  %2512 = vmatprep.mubr.bf16.mxu0 %v1725
  %2513 = vmatmul.mubr.bf16.gmra.mxu0 %v1209
  %v2514 = vpop.f32.mrf.mxu0
  %v2515 = vadd.f32 %v294, %v2514
  %v2516 = vpop.f32.mrf.mxu0
  %v2517 = vpop.f32.mrf.mxu0
  %v2518 = vadd.f32 %v294, %v2517
  %v2519 = vpop.f32.mrf.mxu0
  %2520 = vmatprep.mubr.bf16.mxu0 %v1728
  %2521 = vmatmul.mubr.bf16.gmra.mxu0 %v1211
  %v2522 = vpop.f32.mrf.mxu0
  %v2523 = vadd.f32 %v294, %v2522
  %v2524 = vpop.f32.mrf.mxu0
  %v2525 = vpop.f32.mrf.mxu0
  %v2526 = vadd.f32 %v294, %v2525
  %v2527 = vpop.f32.mrf.mxu0
  %2528 = vmatprep.mubr.bf16.mxu0 %v1731
  %2529 = vmatmul.mubr.bf16.gmra.mxu0 %v1213
  %v2530 = vpop.f32.mrf.mxu0
  %v2531 = vadd.f32 %v294, %v2530
  %v2532 = vpop.f32.mrf.mxu0
  %v2533 = vpop.f32.mrf.mxu0
  %v2534 = vadd.f32 %v294, %v2533
  %v2535 = vpop.f32.mrf.mxu0
  %2536 = vmatprep.mubr.bf16.mxu0 %v1734
  %2537 = vmatmul.mubr.bf16.gmra.mxu0 %v1215
  %v2538 = vpop.f32.mrf.mxu0
  %v2539 = vadd.f32 %v294, %v2538
  %v2540 = vpop.f32.mrf.mxu0
  %v2541 = vpop.f32.mrf.mxu0
  %v2542 = vadd.f32 %v294, %v2541
  %v2543 = vpop.f32.mrf.mxu0
  %2544 = vmatprep.mubr.bf16.mxu0 %v1737
  %2545 = vmatmul.mubr.bf16.gmra.mxu0 %v1217
  %v2546 = vpop.f32.mrf.mxu0
  %v2547 = vadd.f32 %v294, %v2546
  %v2548 = vpop.f32.mrf.mxu0
  %v2549 = vpop.f32.mrf.mxu0
  %v2550 = vadd.f32 %v294, %v2549
  %v2551 = vpop.f32.mrf.mxu0
  %2552 = vmatprep.mubr.bf16.mxu0 %v1740
  %2553 = vmatmul.mubr.bf16.gmra.mxu0 %v1219
  %v2554 = vpop.f32.mrf.mxu0
  %v2555 = vadd.f32 %v294, %v2554
  %v2556 = vpop.f32.mrf.mxu0
  %v2557 = vpop.f32.mrf.mxu0
  %v2558 = vadd.f32 %v294, %v2557
  %v2559 = vpop.f32.mrf.mxu0
  %2560 = vmatprep.mubr.bf16.mxu0 %v1743
  %2561 = vmatmul.mubr.bf16.gmra.mxu0 %v1221
  %v2562 = vpop.f32.mrf.mxu0
  %v2563 = vadd.f32 %v294, %v2562
  %v2564 = vpop.f32.mrf.mxu0
  %v2565 = vpop.f32.mrf.mxu0
  %v2566 = vadd.f32 %v294, %v2565
  %v2567 = vpop.f32.mrf.mxu0
  %2568 = vmatprep.mubr.bf16.mxu0 %v1746
  %2569 = vmatmul.mubr.bf16.gmra.mxu0 %v1223
  %v2570 = vpop.f32.mrf.mxu0
  %v2571 = vadd.f32 %v294, %v2570
  %v2572 = vpop.f32.mrf.mxu0
  %v2573 = vpop.f32.mrf.mxu0
  %v2574 = vadd.f32 %v294, %v2573
  %v2575 = vpop.f32.mrf.mxu0
  %2576 = vmatprep.mubr.bf16.mxu0 %v1749
  %2577 = vmatmul.mubr.bf16.gmra.mxu0 %v1225
  %v2578 = vpop.f32.mrf.mxu0
  %v2579 = vadd.f32 %v294, %v2578
  %v2580 = vpop.f32.mrf.mxu0
  %v2581 = vpop.f32.mrf.mxu0
  %v2582 = vadd.f32 %v294, %v2581
  %v2583 = vpop.f32.mrf.mxu0
  %2584 = vmatprep.mubr.bf16.mxu0 %v1752
  %2585 = vmatmul.mubr.bf16.gmra.mxu0 %v1227
  %v2586 = vpop.f32.mrf.mxu0
  %v2587 = vadd.f32 %v294, %v2586
  %v2588 = vpop.f32.mrf.mxu0
  %v2589 = vpop.f32.mrf.mxu0
  %v2590 = vadd.f32 %v294, %v2589
  %v2591 = vpop.f32.mrf.mxu0
  %2592 = vmatprep.mubr.bf16.mxu0 %v1755
  %2593 = vmatmul.mubr.bf16.gmra.mxu0 %v1229
  %v2594 = vpop.f32.mrf.mxu0
  %v2595 = vadd.f32 %v294, %v2594
  %v2596 = vpop.f32.mrf.mxu0
  %v2597 = vpop.f32.mrf.mxu0
  %v2598 = vadd.f32 %v294, %v2597
  %v2599 = vpop.f32.mrf.mxu0
  %2600 = vmatprep.mubr.bf16.mxu0 %v1758
  %2601 = vmatmul.mubr.bf16.gmra.mxu0 %v1231
  %v2602 = vpop.f32.mrf.mxu0
  %v2603 = vadd.f32 %v294, %v2602
  %v2604 = vpop.f32.mrf.mxu0
  %v2605 = vpop.f32.mrf.mxu0
  %v2606 = vadd.f32 %v294, %v2605
  %v2607 = vpop.f32.mrf.mxu0
  %2608 = vmatprep.mubr.bf16.mxu0 %v1761
  %2609 = vmatmul.mubr.bf16.gmra.mxu0 %v1233
  %v2610 = vpop.f32.mrf.mxu0
  %v2611 = vadd.f32 %v294, %v2610
  %v2612 = vpop.f32.mrf.mxu0
  %v2613 = vpop.f32.mrf.mxu0
  %v2614 = vadd.f32 %v294, %v2613
  %v2615 = vpop.f32.mrf.mxu0
  %2616 = vmatprep.mubr.bf16.mxu0 %v1764
  %2617 = vmatmul.mubr.bf16.gmra.mxu0 %v1235
  %v2618 = vpop.f32.mrf.mxu0
  %v2619 = vadd.f32 %v294, %v2618
  %v2620 = vpop.f32.mrf.mxu0
  %v2621 = vpop.f32.mrf.mxu0
  %v2622 = vadd.f32 %v294, %v2621
  %v2623 = vpop.f32.mrf.mxu0
  %2624 = vmatprep.mubr.bf16.mxu0 %v1767
  %2625 = vmatmul.mubr.bf16.gmra.mxu0 %v1237
  %v2626 = vpop.f32.mrf.mxu0
  %v2627 = vadd.f32 %v294, %v2626
  %v2628 = vpop.f32.mrf.mxu0
  %v2629 = vpop.f32.mrf.mxu0
  %v2630 = vadd.f32 %v294, %v2629
  %v2631 = vpop.f32.mrf.mxu0
  %2632 = vmatprep.mubr.bf16.mxu0 %v1770
  %2633 = vmatmul.mubr.bf16.gmra.mxu0 %v1239
  %v2634 = vpop.f32.mrf.mxu0
  %v2635 = vadd.f32 %v294, %v2634
  %v2636 = vpop.f32.mrf.mxu0
  %v2637 = vpop.f32.mrf.mxu0
  %v2638 = vadd.f32 %v294, %v2637
  %v2639 = vpop.f32.mrf.mxu0
  %2640 = vmatprep.mubr.bf16.mxu0 %v1773
  %2641 = vmatmul.mubr.bf16.gmra.mxu0 %v1241
  %v2642 = vpop.f32.mrf.mxu0
  %v2643 = vadd.f32 %v294, %v2642
  %v2644 = vpop.f32.mrf.mxu0
  %v2645 = vpop.f32.mrf.mxu0
  %v2646 = vadd.f32 %v294, %v2645
  %v2647 = vpop.f32.mrf.mxu0
  %2648 = vmatprep.mubr.bf16.mxu0 %v1776
  %2649 = vmatmul.mubr.bf16.gmra.mxu0 %v1243
  %v2650 = vpop.f32.mrf.mxu0
  %v2651 = vadd.f32 %v294, %v2650
  %v2652 = vpop.f32.mrf.mxu0
  %v2653 = vpop.f32.mrf.mxu0
  %v2654 = vadd.f32 %v294, %v2653
  %v2655 = vpop.f32.mrf.mxu0
  %2656 = vmatprep.mubr.bf16.mxu0 %v1779
  %2657 = vmatmul.mubr.bf16.gmra.mxu0 %v1245
  %v2658 = vpop.f32.mrf.mxu0
  %v2659 = vadd.f32 %v294, %v2658
  %v2660 = vpop.f32.mrf.mxu0
  %v2661 = vpop.f32.mrf.mxu0
  %v2662 = vadd.f32 %v294, %v2661
  %v2663 = vpop.f32.mrf.mxu0
  %2664 = vmatprep.mubr.bf16.mxu0 %v1782
  %2665 = vmatmul.mubr.bf16.gmra.mxu0 %v1247
  %v2666 = vpop.f32.mrf.mxu0
  %v2667 = vadd.f32 %v294, %v2666
  %v2668 = vpop.f32.mrf.mxu0
  %v2669 = vpop.f32.mrf.mxu0
  %v2670 = vadd.f32 %v294, %v2669
  %v2671 = vpop.f32.mrf.mxu0
  %2672 = vmatprep.mubr.bf16.mxu0 %v1785
  %2673 = vmatmul.mubr.bf16.gmra.mxu0 %v1249
  %v2674 = vpop.f32.mrf.mxu0
  %v2675 = vadd.f32 %v294, %v2674
  %v2676 = vpop.f32.mrf.mxu0
  %v2677 = vpop.f32.mrf.mxu0
  %v2678 = vadd.f32 %v294, %v2677
  %v2679 = vpop.f32.mrf.mxu0
  %2680 = vmatprep.mubr.bf16.mxu0 %v1788
  %2681 = vmatmul.mubr.bf16.gmra.mxu0 %v1251
  %v2682 = vpop.f32.mrf.mxu0
  %v2683 = vadd.f32 %v294, %v2682
  %v2684 = vpop.f32.mrf.mxu0
  %v2685 = vpop.f32.mrf.mxu0
  %v2686 = vadd.f32 %v294, %v2685
  %v2687 = vpop.f32.mrf.mxu0
  %2688 = vmatprep.mubr.bf16.mxu0 %v1791
  %2689 = vmatmul.mubr.bf16.gmra.mxu0 %v1253
  %v2690 = vpop.f32.mrf.mxu0
  %v2691 = vadd.f32 %v294, %v2690
  %v2692 = vpop.f32.mrf.mxu0
  %v2693 = vpop.f32.mrf.mxu0
  %v2694 = vadd.f32 %v294, %v2693
  %v2695 = vpop.f32.mrf.mxu0
  %2696 = vmatprep.mubr.bf16.mxu0 %v1794
  %2697 = vmatmul.mubr.bf16.gmra.mxu0 %v1255
  %v2698 = vpop.f32.mrf.mxu0
  %v2699 = vadd.f32 %v294, %v2698
  %v2700 = vpop.f32.mrf.mxu0
  %v2701 = vpop.f32.mrf.mxu0
  %v2702 = vadd.f32 %v294, %v2701
  %v2703 = vpop.f32.mrf.mxu0
  %2704 = vmatprep.mubr.bf16.mxu0 %v1797
  %2705 = vmatmul.mubr.bf16.gmra.mxu0 %v1257
  %v2706 = vpop.f32.mrf.mxu0
  %v2707 = vadd.f32 %v294, %v2706
  %v2708 = vpop.f32.mrf.mxu0
  %v2709 = vpop.f32.mrf.mxu0
  %v2710 = vadd.f32 %v294, %v2709
  %v2711 = vpop.f32.mrf.mxu0
  %2712 = vmatprep.mubr.bf16.mxu0 %v1800
  %2713 = vmatmul.mubr.bf16.gmra.mxu0 %v1259
  %v2714 = vpop.f32.mrf.mxu0
  %v2715 = vadd.f32 %v294, %v2714
  %v2716 = vpop.f32.mrf.mxu0
  %v2717 = vpop.f32.mrf.mxu0
  %v2718 = vadd.f32 %v294, %v2717
  %v2719 = vpop.f32.mrf.mxu0
  %2720 = vmatprep.mubr.bf16.mxu0 %v1803
  %2721 = vmatmul.mubr.bf16.gmra.mxu0 %v1261
  %v2722 = vpop.f32.mrf.mxu0
  %v2723 = vadd.f32 %v294, %v2722
  %v2724 = vpop.f32.mrf.mxu0
  %v2725 = vpop.f32.mrf.mxu0
  %v2726 = vadd.f32 %v294, %v2725
  %v2727 = vpop.f32.mrf.mxu0
  %2728 = vmatprep.mubr.bf16.mxu0 %v1806
  %2729 = vmatmul.mubr.bf16.gmra.mxu0 %v1263
  %v2730 = vpop.f32.mrf.mxu0
  %v2731 = vadd.f32 %v294, %v2730
  %v2732 = vpop.f32.mrf.mxu0
  %v2733 = vpop.f32.mrf.mxu0
  %v2734 = vadd.f32 %v294, %v2733
  %v2735 = vpop.f32.mrf.mxu0
  %2736 = vmatprep.mubr.bf16.mxu0 %v1809
  %2737 = vmatmul.mubr.bf16.gmra.mxu0 %v1265
  %v2738 = vpop.f32.mrf.mxu0
  %v2739 = vadd.f32 %v294, %v2738
  %v2740 = vpop.f32.mrf.mxu0
  %v2741 = vpop.f32.mrf.mxu0
  %v2742 = vadd.f32 %v294, %v2741
  %v2743 = vpop.f32.mrf.mxu0
  %2744 = vmatprep.mubr.bf16.mxu0 %v1812
  %2745 = vmatmul.mubr.bf16.gmra.mxu0 %v1267
  %v2746 = vpop.f32.mrf.mxu0
  %v2747 = vadd.f32 %v294, %v2746
  %v2748 = vpop.f32.mrf.mxu0
  %v2749 = vpop.f32.mrf.mxu0
  %v2750 = vadd.f32 %v294, %v2749
  %v2751 = vpop.f32.mrf.mxu0
  %2752 = vmatprep.mubr.bf16.mxu0 %v1815
  %2753 = vmatmul.mubr.bf16.gmra.mxu0 %v1269
  %v2754 = vpop.f32.mrf.mxu0
  %v2755 = vadd.f32 %v294, %v2754
  %v2756 = vpop.f32.mrf.mxu0
  %v2757 = vpop.f32.mrf.mxu0
  %v2758 = vadd.f32 %v294, %v2757
  %v2759 = vpop.f32.mrf.mxu0
  %2760 = vmatprep.mubr.bf16.mxu0 %v1818
  %2761 = vmatmul.mubr.bf16.gmra.mxu0 %v1271
  %v2762 = vpop.f32.mrf.mxu0
  %v2763 = vadd.f32 %v294, %v2762
  %v2764 = vpop.f32.mrf.mxu0
  %v2765 = vpop.f32.mrf.mxu0
  %v2766 = vadd.f32 %v294, %v2765
  %v2767 = vpop.f32.mrf.mxu0
  %2768 = vmatprep.mubr.bf16.mxu0 %v1821
  %2769 = vmatmul.mubr.bf16.gmra.mxu0 %v1273
  %v2770 = vpop.f32.mrf.mxu0
  %v2771 = vadd.f32 %v294, %v2770
  %v2772 = vpop.f32.mrf.mxu0
  %v2773 = vpop.f32.mrf.mxu0
  %v2774 = vadd.f32 %v294, %v2773
  %v2775 = vpop.f32.mrf.mxu0
  %2776 = vmatprep.mubr.bf16.mxu0 %v1824
  %2777 = vmatmul.mubr.bf16.gmra.mxu0 %v1275
  %v2778 = vpop.f32.mrf.mxu0
  %v2779 = vadd.f32 %v294, %v2778
  %v2780 = vpop.f32.mrf.mxu0
  %v2781 = vpop.f32.mrf.mxu0
  %v2782 = vadd.f32 %v294, %v2781
  %v2783 = vpop.f32.mrf.mxu0
  %2784 = vmatprep.mubr.bf16.mxu0 %v1827
  %2785 = vmatmul.mubr.bf16.gmra.mxu0 %v1277
  %v2786 = vpop.f32.mrf.mxu0
  %v2787 = vadd.f32 %v294, %v2786
  %v2788 = vpop.f32.mrf.mxu0
  %v2789 = vpop.f32.mrf.mxu0
  %v2790 = vadd.f32 %v294, %v2789
  %v2791 = vpop.f32.mrf.mxu0
  %2792 = vmatprep.mubr.bf16.mxu0 %v1830
  %2793 = vmatmul.mubr.bf16.gmra.mxu0 %v1279
  %v2794 = vpop.f32.mrf.mxu0
  %v2795 = vadd.f32 %v294, %v2794
  %v2796 = vpop.f32.mrf.mxu0
  %v2797 = vpop.f32.mrf.mxu0
  %v2798 = vadd.f32 %v294, %v2797
  %v2799 = vpop.f32.mrf.mxu0
  %2800 = vmatprep.mubr.bf16.mxu0 %v1833
  %2801 = vmatmul.mubr.bf16.gmra.mxu0 %v1281
  %v2802 = vpop.f32.mrf.mxu0
  %v2803 = vadd.f32 %v294, %v2802
  %v2804 = vpop.f32.mrf.mxu0
  %v2805 = vpop.f32.mrf.mxu0
  %v2806 = vadd.f32 %v294, %v2805
  %v2807 = vpop.f32.mrf.mxu0
  %2808 = vmatprep.mubr.bf16.mxu0 %v1836
  %2809 = vmatmul.mubr.bf16.gmra.mxu0 %v1283
  %v2810 = vpop.f32.mrf.mxu0
  %v2811 = vadd.f32 %v294, %v2810
  %v2812 = vpop.f32.mrf.mxu0
  %v2813 = vpop.f32.mrf.mxu0
  %v2814 = vadd.f32 %v294, %v2813
  %v2815 = vpop.f32.mrf.mxu0
  %2816 = vmatprep.mubr.bf16.mxu0 %v1839
  %2817 = vmatmul.mubr.bf16.gmra.mxu0 %v1285
  %v2818 = vpop.f32.mrf.mxu0
  %v2819 = vadd.f32 %v294, %v2818
  %v2820 = vpop.f32.mrf.mxu0
  %v2821 = vpop.f32.mrf.mxu0
  %v2822 = vadd.f32 %v294, %v2821
  %v2823 = vpop.f32.mrf.mxu0
  %2824 = vmatprep.mubr.bf16.mxu0 %v1842
  %2825 = vmatmul.mubr.bf16.gmra.mxu0 %v1287
  %v2826 = vpop.f32.mrf.mxu0
  %v2827 = vadd.f32 %v294, %v2826
  %v2828 = vpop.f32.mrf.mxu0
  %v2829 = vpop.f32.mrf.mxu0
  %v2830 = vadd.f32 %v294, %v2829
  %v2831 = vpop.f32.mrf.mxu0
  %2832 = vmatprep.mubr.bf16.mxu0 %v1845
  %2833 = vmatmul.mubr.bf16.gmra.mxu0 %v1289
  %v2834 = vpop.f32.mrf.mxu0
  %v2835 = vadd.f32 %v294, %v2834
  %v2836 = vpop.f32.mrf.mxu0
  %v2837 = vpop.f32.mrf.mxu0
  %v2838 = vadd.f32 %v294, %v2837
  %v2839 = vpop.f32.mrf.mxu0
  %2840 = vmatprep.mubr.bf16.mxu0 %v1848
  %2841 = vmatmul.mubr.bf16.gmra.mxu0 %v1291
  %v2842 = vpop.f32.mrf.mxu0
  %v2843 = vadd.f32 %v294, %v2842
  %v2844 = vpop.f32.mrf.mxu0
  %v2845 = vpop.f32.mrf.mxu0
  %v2846 = vadd.f32 %v294, %v2845
  %v2847 = vpop.f32.mrf.mxu0
  %2848 = vmatprep.mubr.bf16.mxu0 %v1851
  %2849 = vmatmul.mubr.bf16.gmra.mxu0 %v1293
  %v2850 = vpop.f32.mrf.mxu0
  %v2851 = vadd.f32 %v294, %v2850
  %v2852 = vpop.f32.mrf.mxu0
  %v2853 = vpop.f32.mrf.mxu0
  %v2854 = vadd.f32 %v294, %v2853
  %v2855 = vpop.f32.mrf.mxu0
  %2856 = vmatprep.mubr.bf16.mxu0 %v1854
  %2857 = vmatmul.mubr.bf16.gmra.mxu0 %v1295
  %v2858 = vpop.f32.mrf.mxu0
  %v2859 = vadd.f32 %v294, %v2858
  %v2860 = vpop.f32.mrf.mxu0
  %v2861 = vpop.f32.mrf.mxu0
  %v2862 = vadd.f32 %v294, %v2861
  %v2863 = vpop.f32.mrf.mxu0
  %2864 = vmatprep.mubr.bf16.mxu0 %v1857
  %2865 = vmatmul.mubr.bf16.gmra.mxu0 %v1297
  %v2866 = vpop.f32.mrf.mxu0
  %v2867 = vadd.f32 %v294, %v2866
  %v2868 = vpop.f32.mrf.mxu0
  %v2869 = vpop.f32.mrf.mxu0
  %v2870 = vadd.f32 %v294, %v2869
  %v2871 = vpop.f32.mrf.mxu0
  %2872 = vmatprep.mubr.bf16.mxu0 %v1860
  %2873 = vmatmul.mubr.bf16.gmra.mxu0 %v1299
  %v2874 = vpop.f32.mrf.mxu0
  %v2875 = vadd.f32 %v294, %v2874
  %v2876 = vpop.f32.mrf.mxu0
  %v2877 = vpop.f32.mrf.mxu0
  %v2878 = vadd.f32 %v294, %v2877
  %v2879 = vpop.f32.mrf.mxu0
  %2880 = vmatprep.mubr.bf16.mxu0 %v1863
  %2881 = vmatmul.mubr.bf16.gmra.mxu0 %v1301
  %v2882 = vpop.f32.mrf.mxu0
  %v2883 = vadd.f32 %v294, %v2882
  %v2884 = vpop.f32.mrf.mxu0
  %v2885 = vpop.f32.mrf.mxu0
  %v2886 = vadd.f32 %v294, %v2885
  %v2887 = vpop.f32.mrf.mxu0
  %2888 = vmatprep.mubr.bf16.mxu0 %v1866
  %2889 = vmatmul.mubr.bf16.gmra.mxu0 %v1303
  %v2890 = vpop.f32.mrf.mxu0
  %v2891 = vadd.f32 %v294, %v2890
  %v2892 = vpop.f32.mrf.mxu0
  %v2893 = vpop.f32.mrf.mxu0
  %v2894 = vadd.f32 %v294, %v2893
  %v2895 = vpop.f32.mrf.mxu0
  %2896 = vmatprep.mubr.bf16.mxu0 %v1869
  %2897 = vmatmul.mubr.bf16.gmra.mxu0 %v1305
  %v2898 = vpop.f32.mrf.mxu0
  %v2899 = vadd.f32 %v294, %v2898
  %v2900 = vpop.f32.mrf.mxu0
  %v2901 = vpop.f32.mrf.mxu0
  %v2902 = vadd.f32 %v294, %v2901
  %v2903 = vpop.f32.mrf.mxu0
  %2904 = vmatprep.mubr.bf16.mxu0 %v1872
  %2905 = vmatmul.mubr.bf16.gmra.mxu0 %v1307
  %v2906 = vpop.f32.mrf.mxu0
  %v2907 = vadd.f32 %v294, %v2906
  %v2908 = vpop.f32.mrf.mxu0
  %v2909 = vpop.f32.mrf.mxu0
  %v2910 = vadd.f32 %v294, %v2909
  %v2911 = vpop.f32.mrf.mxu0
  %2912 = vmatprep.mubr.bf16.mxu0 %v1875
  %2913 = vmatmul.mubr.bf16.gmra.mxu0 %v1309
  %v2914 = vpop.f32.mrf.mxu0
  %v2915 = vadd.f32 %v294, %v2914
  %v2916 = vpop.f32.mrf.mxu0
  %v2917 = vpop.f32.mrf.mxu0
  %v2918 = vadd.f32 %v294, %v2917
  %v2919 = vpop.f32.mrf.mxu0
  %2920 = vmatprep.mubr.bf16.mxu0 %v1878
  %2921 = vmatmul.mubr.bf16.gmra.mxu0 %v1311
  %v2922 = vpop.f32.mrf.mxu0
  %v2923 = vadd.f32 %v294, %v2922
  %v2924 = vpop.f32.mrf.mxu0
  %v2925 = vpop.f32.mrf.mxu0
  %v2926 = vadd.f32 %v294, %v2925
  %v2927 = vpop.f32.mrf.mxu0
  %2928 = vmatprep.mubr.bf16.mxu0 %v1881
  %2929 = vmatmul.mubr.bf16.gmra.mxu0 %v1313
  %v2930 = vpop.f32.mrf.mxu0
  %v2931 = vadd.f32 %v294, %v2930
  %v2932 = vpop.f32.mrf.mxu0
  %v2933 = vpop.f32.mrf.mxu0
  %v2934 = vadd.f32 %v294, %v2933
  %v2935 = vpop.f32.mrf.mxu0
  %2936 = vmatprep.mubr.bf16.mxu0 %v1884
  %2937 = vmatmul.mubr.bf16.gmra.mxu0 %v1315
  %v2938 = vpop.f32.mrf.mxu0
  %v2939 = vadd.f32 %v294, %v2938
  %v2940 = vpop.f32.mrf.mxu0
  %v2941 = vpop.f32.mrf.mxu0
  %v2942 = vadd.f32 %v294, %v2941
  %v2943 = vpop.f32.mrf.mxu0
  %2944 = vmatprep.mubr.bf16.mxu0 %v1887
  %2945 = vmatmul.mubr.bf16.gmra.mxu0 %v1317
  %v2946 = vpop.f32.mrf.mxu0
  %v2947 = vadd.f32 %v294, %v2946
  %v2948 = vpop.f32.mrf.mxu0
  %v2949 = vpop.f32.mrf.mxu0
  %v2950 = vadd.f32 %v294, %v2949
  %v2951 = vpop.f32.mrf.mxu0
  %2952 = vdwg.mxu0
  %2953 = vst [vmem:[%s3] sm:$0xff] %v1931
  %2954 = vst [vmem:[%s3 + $0x8] sm:$0xff] %v1934
  %2955 = vst [vmem:[%s3 + $0x10] sm:$0xff] %v1939
  %2956 = vst [vmem:[%s3 + $0x18] sm:$0xff] %v1942
  %2957 = vst [vmem:[%s3 + $0x20] sm:$0xff] %v1947
  %2958 = vst [vmem:[%s3 + $0x28] sm:$0xff] %v1950
  %2959 = vst [vmem:[%s3 + $0x30] sm:$0xff] %v1955
  %2960 = vst [vmem:[%s3 + $0x38] sm:$0xff] %v1958
  %2961 = vst [vmem:[%s3 + $0x40] sm:$0xff] %v1963
  %2962 = vst [vmem:[%s3 + $0x48] sm:$0xff] %v1966
  %2963 = vst [vmem:[%s3 + $0x50] sm:$0xff] %v1971
  %2964 = vst [vmem:[%s3 + $0x58] sm:$0xff] %v1974
  %2965 = vst [vmem:[%s3 + $0x60] sm:$0xff] %v1979
  %2966 = vst [vmem:[%s3 + $0x68] sm:$0xff] %v1982
  %2967 = vst [vmem:[%s3 + $0x70] sm:$0xff] %v1987
  %2968 = vst [vmem:[%s3 + $0x78] sm:$0xff] %v1990
  %2969 = vst [vmem:[%s3 + $0x80] sm:$0xff] %v1995
  %2970 = vst [vmem:[%s3 + $0x88] sm:$0xff] %v1998
  %2971 = vst [vmem:[%s3 + $0x90] sm:$0xff] %v2003
  %2972 = vst [vmem:[%s3 + $0x98] sm:$0xff] %v2006
  %2973 = vst [vmem:[%s3 + $0xa0] sm:$0xff] %v2011
  %2974 = vst [vmem:[%s3 + $0xa8] sm:$0xff] %v2014
  %2975 = vst [vmem:[%s3 + $0xb0] sm:$0xff] %v2019
  %2976 = vst [vmem:[%s3 + $0xb8] sm:$0xff] %v2022
  %2977 = vst [vmem:[%s3 + $0xc0] sm:$0xff] %v2027
  %2978 = vst [vmem:[%s3 + $0xc8] sm:$0xff] %v2030
  %2979 = vst [vmem:[%s3 + $0xd0] sm:$0xff] %v2035
  %2980 = vst [vmem:[%s3 + $0xd8] sm:$0xff] %v2038
  %2981 = vst [vmem:[%s3 + $0xe0] sm:$0xff] %v2043
  %2982 = vst [vmem:[%s3 + $0xe8] sm:$0xff] %v2046
  %2983 = vst [vmem:[%s3 + $0xf0] sm:$0xff] %v2051
  %2984 = vst [vmem:[%s3 + $0xf8] sm:$0xff] %v2054
  %2985 = vst [vmem:[%s3 + $0x100] sm:$0xff] %v2059
  %2986 = vst [vmem:[%s3 + $0x108] sm:$0xff] %v2062
  %2987 = vst [vmem:[%s3 + $0x110] sm:$0xff] %v2067
  %2988 = vst [vmem:[%s3 + $0x118] sm:$0xff] %v2070
  %2989 = vst [vmem:[%s3 + $0x120] sm:$0xff] %v2075
  %2990 = vst [vmem:[%s3 + $0x128] sm:$0xff] %v2078
  %2991 = vst [vmem:[%s3 + $0x130] sm:$0xff] %v2083
  %2992 = vst [vmem:[%s3 + $0x138] sm:$0xff] %v2086
  %2993 = vst [vmem:[%s3 + $0x140] sm:$0xff] %v2091
  %2994 = vst [vmem:[%s3 + $0x148] sm:$0xff] %v2094
  %2995 = vst [vmem:[%s3 + $0x150] sm:$0xff] %v2099
  %2996 = vst [vmem:[%s3 + $0x158] sm:$0xff] %v2102
  %2997 = vst [vmem:[%s3 + $0x160] sm:$0xff] %v2107
  %2998 = vst [vmem:[%s3 + $0x168] sm:$0xff] %v2110
  %2999 = vst [vmem:[%s3 + $0x170] sm:$0xff] %v2115
  %3000 = vst [vmem:[%s3 + $0x178] sm:$0xff] %v2118
  %3001 = vst [vmem:[%s3 + $0x180] sm:$0xff] %v2123
  %3002 = vst [vmem:[%s3 + $0x188] sm:$0xff] %v2126
  %3003 = vst [vmem:[%s3 + $0x190] sm:$0xff] %v2131
  %3004 = vst [vmem:[%s3 + $0x198] sm:$0xff] %v2134
  %3005 = vst [vmem:[%s3 + $0x1a0] sm:$0xff] %v2139
  %3006 = vst [vmem:[%s3 + $0x1a8] sm:$0xff] %v2142
  %3007 = vst [vmem:[%s3 + $0x1b0] sm:$0xff] %v2147
  %3008 = vst [vmem:[%s3 + $0x1b8] sm:$0xff] %v2150
  %3009 = vst [vmem:[%s3 + $0x1c0] sm:$0xff] %v2155
  %3010 = vst [vmem:[%s3 + $0x1c8] sm:$0xff] %v2158
  %3011 = vst [vmem:[%s3 + $0x1d0] sm:$0xff] %v2163
  %3012 = vst [vmem:[%s3 + $0x1d8] sm:$0xff] %v2166
  %3013 = vst [vmem:[%s3 + $0x1e0] sm:$0xff] %v2171
  %3014 = vst [vmem:[%s3 + $0x1e8] sm:$0xff] %v2174
  %3015 = vst [vmem:[%s3 + $0x1f0] sm:$0xff] %v2179
  %3016 = vst [vmem:[%s3 + $0x1f8] sm:$0xff] %v2182
  %3017 = vst [vmem:[%s3 + $0x200] sm:$0xff] %v2187
  %3018 = vst [vmem:[%s3 + $0x208] sm:$0xff] %v2190
  %3019 = vst [vmem:[%s3 + $0x210] sm:$0xff] %v2195
  %3020 = vst [vmem:[%s3 + $0x218] sm:$0xff] %v2198
  %3021 = vst [vmem:[%s3 + $0x220] sm:$0xff] %v2203
  %3022 = vst [vmem:[%s3 + $0x228] sm:$0xff] %v2206
  %3023 = vst [vmem:[%s3 + $0x230] sm:$0xff] %v2211
  %3024 = vst [vmem:[%s3 + $0x238] sm:$0xff] %v2214
  %3025 = vst [vmem:[%s3 + $0x240] sm:$0xff] %v2219
  %3026 = vst [vmem:[%s3 + $0x248] sm:$0xff] %v2222
  %3027 = vst [vmem:[%s3 + $0x250] sm:$0xff] %v2227
  %3028 = vst [vmem:[%s3 + $0x258] sm:$0xff] %v2230
  %3029 = vst [vmem:[%s3 + $0x260] sm:$0xff] %v2235
  %3030 = vst [vmem:[%s3 + $0x268] sm:$0xff] %v2238
  %3031 = vst [vmem:[%s3 + $0x270] sm:$0xff] %v2243
  %3032 = vst [vmem:[%s3 + $0x278] sm:$0xff] %v2246
  %3033 = vst [vmem:[%s3 + $0x280] sm:$0xff] %v2251
  %3034 = vst [vmem:[%s3 + $0x288] sm:$0xff] %v2254
  %3035 = vst [vmem:[%s3 + $0x290] sm:$0xff] %v2259
  %3036 = vst [vmem:[%s3 + $0x298] sm:$0xff] %v2262
  %3037 = vst [vmem:[%s3 + $0x2a0] sm:$0xff] %v2267
  %3038 = vst [vmem:[%s3 + $0x2a8] sm:$0xff] %v2270
  %3039 = vst [vmem:[%s3 + $0x2b0] sm:$0xff] %v2275
  %3040 = vst [vmem:[%s3 + $0x2b8] sm:$0xff] %v2278
  %3041 = vst [vmem:[%s3 + $0x2c0] sm:$0xff] %v2283
  %3042 = vst [vmem:[%s3 + $0x2c8] sm:$0xff] %v2286
  %3043 = vst [vmem:[%s3 + $0x2d0] sm:$0xff] %v2291
  %3044 = vst [vmem:[%s3 + $0x2d8] sm:$0xff] %v2294
  %3045 = vst [vmem:[%s3 + $0x2e0] sm:$0xff] %v2299
  %3046 = vst [vmem:[%s3 + $0x2e8] sm:$0xff] %v2302
  %3047 = vst [vmem:[%s3 + $0x2f0] sm:$0xff] %v2307
  %3048 = vst [vmem:[%s3 + $0x2f8] sm:$0xff] %v2310
  %3049 = vst [vmem:[%s3 + $0x300] sm:$0xff] %v2315
  %3050 = vst [vmem:[%s3 + $0x308] sm:$0xff] %v2318
  %3051 = vst [vmem:[%s3 + $0x310] sm:$0xff] %v2323
  %3052 = vst [vmem:[%s3 + $0x318] sm:$0xff] %v2326
  %3053 = vst [vmem:[%s3 + $0x320] sm:$0xff] %v2331
  %3054 = vst [vmem:[%s3 + $0x328] sm:$0xff] %v2334
  %3055 = vst [vmem:[%s3 + $0x330] sm:$0xff] %v2339
  %3056 = vst [vmem:[%s3 + $0x338] sm:$0xff] %v2342
  %3057 = vst [vmem:[%s3 + $0x340] sm:$0xff] %v2347
  %3058 = vst [vmem:[%s3 + $0x348] sm:$0xff] %v2350
  %3059 = vst [vmem:[%s3 + $0x350] sm:$0xff] %v2355
  %3060 = vst [vmem:[%s3 + $0x358] sm:$0xff] %v2358
  %3061 = vst [vmem:[%s3 + $0x360] sm:$0xff] %v2363
  %3062 = vst [vmem:[%s3 + $0x368] sm:$0xff] %v2366
  %3063 = vst [vmem:[%s3 + $0x370] sm:$0xff] %v2371
  %3064 = vst [vmem:[%s3 + $0x378] sm:$0xff] %v2374
  %3065 = vst [vmem:[%s3 + $0x380] sm:$0xff] %v2379
  %3066 = vst [vmem:[%s3 + $0x388] sm:$0xff] %v2382
  %3067 = vst [vmem:[%s3 + $0x390] sm:$0xff] %v2387
  %3068 = vst [vmem:[%s3 + $0x398] sm:$0xff] %v2390
  %3069 = vst [vmem:[%s3 + $0x3a0] sm:$0xff] %v2395
  %3070 = vst [vmem:[%s3 + $0x3a8] sm:$0xff] %v2398
  %3071 = vst [vmem:[%s3 + $0x3b0] sm:$0xff] %v2403
  %3072 = vst [vmem:[%s3 + $0x3b8] sm:$0xff] %v2406
  %3073 = vst [vmem:[%s3 + $0x3c0] sm:$0xff] %v2411
  %3074 = vst [vmem:[%s3 + $0x3c8] sm:$0xff] %v2414
  %3075 = vst [vmem:[%s3 + $0x3d0] sm:$0xff] %v2419
  %3076 = vst [vmem:[%s3 + $0x3d8] sm:$0xff] %v2422
  %3077 = vst [vmem:[%s3 + $0x3e0] sm:$0xff] %v2427
  %3078 = vst [vmem:[%s3 + $0x3e8] sm:$0xff] %v2430
  %3079 = vst [vmem:[%s3 + $0x3f0] sm:$0xff] %v2435
  %3080 = vst [vmem:[%s3 + $0x3f8] sm:$0xff] %v2438
  %3081 = vst [vmem:[%s3 + $0x400] sm:$0xff] %v2443
  %3082 = vst [vmem:[%s3 + $0x408] sm:$0xff] %v2446
  %3083 = vst [vmem:[%s3 + $0x410] sm:$0xff] %v2451
  %3084 = vst [vmem:[%s3 + $0x418] sm:$0xff] %v2454
  %3085 = vst [vmem:[%s3 + $0x420] sm:$0xff] %v2459
  %3086 = vst [vmem:[%s3 + $0x428] sm:$0xff] %v2462
  %3087 = vst [vmem:[%s3 + $0x430] sm:$0xff] %v2467
  %3088 = vst [vmem:[%s3 + $0x438] sm:$0xff] %v2470
  %3089 = vst [vmem:[%s3 + $0x440] sm:$0xff] %v2475
  %3090 = vst [vmem:[%s3 + $0x448] sm:$0xff] %v2478
  %3091 = vst [vmem:[%s3 + $0x450] sm:$0xff] %v2483
  %3092 = vst [vmem:[%s3 + $0x458] sm:$0xff] %v2486
  %3093 = vst [vmem:[%s3 + $0x460] sm:$0xff] %v2491
  %3094 = vst [vmem:[%s3 + $0x468] sm:$0xff] %v2494
  %3095 = vst [vmem:[%s3 + $0x470] sm:$0xff] %v2499
  %3096 = vst [vmem:[%s3 + $0x478] sm:$0xff] %v2502
  %3097 = vst [vmem:[%s3 + $0x480] sm:$0xff] %v2507
  %3098 = vst [vmem:[%s3 + $0x488] sm:$0xff] %v2510
  %3099 = vst [vmem:[%s3 + $0x490] sm:$0xff] %v2515
  %3100 = vst [vmem:[%s3 + $0x498] sm:$0xff] %v2518
  %3101 = vst [vmem:[%s3 + $0x4a0] sm:$0xff] %v2523
  %3102 = vst [vmem:[%s3 + $0x4a8] sm:$0xff] %v2526
  %3103 = vst [vmem:[%s3 + $0x4b0] sm:$0xff] %v2531
  %3104 = vst [vmem:[%s3 + $0x4b8] sm:$0xff] %v2534
  %3105 = vst [vmem:[%s3 + $0x4c0] sm:$0xff] %v2539
  %3106 = vst [vmem:[%s3 + $0x4c8] sm:$0xff] %v2542
  %3107 = vst [vmem:[%s3 + $0x4d0] sm:$0xff] %v2547
  %3108 = vst [vmem:[%s3 + $0x4d8] sm:$0xff] %v2550
  %3109 = vst [vmem:[%s3 + $0x4e0] sm:$0xff] %v2555
  %3110 = vst [vmem:[%s3 + $0x4e8] sm:$0xff] %v2558
  %3111 = vst [vmem:[%s3 + $0x4f0] sm:$0xff] %v2563
  %3112 = vst [vmem:[%s3 + $0x4f8] sm:$0xff] %v2566
  %3113 = vst [vmem:[%s3 + $0x500] sm:$0xff] %v2571
  %3114 = vst [vmem:[%s3 + $0x508] sm:$0xff] %v2574
  %3115 = vst [vmem:[%s3 + $0x510] sm:$0xff] %v2579
  %3116 = vst [vmem:[%s3 + $0x518] sm:$0xff] %v2582
  %3117 = vst [vmem:[%s3 + $0x520] sm:$0xff] %v2587
  %3118 = vst [vmem:[%s3 + $0x528] sm:$0xff] %v2590
  %3119 = vst [vmem:[%s3 + $0x530] sm:$0xff] %v2595
  %3120 = vst [vmem:[%s3 + $0x538] sm:$0xff] %v2598
  %3121 = vst [vmem:[%s3 + $0x540] sm:$0xff] %v2603
  %3122 = vst [vmem:[%s3 + $0x548] sm:$0xff] %v2606
  %3123 = vst [vmem:[%s3 + $0x550] sm:$0xff] %v2611
  %3124 = vst [vmem:[%s3 + $0x558] sm:$0xff] %v2614
  %3125 = vst [vmem:[%s3 + $0x560] sm:$0xff] %v2619
  %3126 = vst [vmem:[%s3 + $0x568] sm:$0xff] %v2622
  %3127 = vst [vmem:[%s3 + $0x570] sm:$0xff] %v2627
  %3128 = vst [vmem:[%s3 + $0x578] sm:$0xff] %v2630
  %3129 = vst [vmem:[%s3 + $0x580] sm:$0xff] %v2635
  %3130 = vst [vmem:[%s3 + $0x588] sm:$0xff] %v2638
  %3131 = vst [vmem:[%s3 + $0x590] sm:$0xff] %v2643
  %3132 = vst [vmem:[%s3 + $0x598] sm:$0xff] %v2646
  %3133 = vst [vmem:[%s3 + $0x5a0] sm:$0xff] %v2651
  %3134 = vst [vmem:[%s3 + $0x5a8] sm:$0xff] %v2654
  %3135 = vst [vmem:[%s3 + $0x5b0] sm:$0xff] %v2659
  %3136 = vst [vmem:[%s3 + $0x5b8] sm:$0xff] %v2662
  %3137 = vst [vmem:[%s3 + $0x5c0] sm:$0xff] %v2667
  %3138 = vst [vmem:[%s3 + $0x5c8] sm:$0xff] %v2670
  %3139 = vst [vmem:[%s3 + $0x5d0] sm:$0xff] %v2675
  %3140 = vst [vmem:[%s3 + $0x5d8] sm:$0xff] %v2678
  %3141 = vst [vmem:[%s3 + $0x5e0] sm:$0xff] %v2683
  %3142 = vst [vmem:[%s3 + $0x5e8] sm:$0xff] %v2686
  %3143 = vst [vmem:[%s3 + $0x5f0] sm:$0xff] %v2691
  %3144 = vst [vmem:[%s3 + $0x5f8] sm:$0xff] %v2694
  %3145 = vst [vmem:[%s3 + $0x600] sm:$0xff] %v2699
  %3146 = vst [vmem:[%s3 + $0x608] sm:$0xff] %v2702
  %3147 = vst [vmem:[%s3 + $0x610] sm:$0xff] %v2707
  %3148 = vst [vmem:[%s3 + $0x618] sm:$0xff] %v2710
  %3149 = vst [vmem:[%s3 + $0x620] sm:$0xff] %v2715
  %3150 = vst [vmem:[%s3 + $0x628] sm:$0xff] %v2718
  %3151 = vst [vmem:[%s3 + $0x630] sm:$0xff] %v2723
  %3152 = vst [vmem:[%s3 + $0x638] sm:$0xff] %v2726
  %3153 = vst [vmem:[%s3 + $0x640] sm:$0xff] %v2731
  %3154 = vst [vmem:[%s3 + $0x648] sm:$0xff] %v2734
  %3155 = vst [vmem:[%s3 + $0x650] sm:$0xff] %v2739
  %3156 = vst [vmem:[%s3 + $0x658] sm:$0xff] %v2742
  %3157 = vst [vmem:[%s3 + $0x660] sm:$0xff] %v2747
  %3158 = vst [vmem:[%s3 + $0x668] sm:$0xff] %v2750
  %3159 = vst [vmem:[%s3 + $0x670] sm:$0xff] %v2755
  %3160 = vst [vmem:[%s3 + $0x678] sm:$0xff] %v2758
  %3161 = vst [vmem:[%s3 + $0x680] sm:$0xff] %v2763
  %3162 = vst [vmem:[%s3 + $0x688] sm:$0xff] %v2766
  %3163 = vst [vmem:[%s3 + $0x690] sm:$0xff] %v2771
  %3164 = vst [vmem:[%s3 + $0x698] sm:$0xff] %v2774
  %3165 = vst [vmem:[%s3 + $0x6a0] sm:$0xff] %v2779
  %3166 = vst [vmem:[%s3 + $0x6a8] sm:$0xff] %v2782
  %3167 = vst [vmem:[%s3 + $0x6b0] sm:$0xff] %v2787
  %3168 = vst [vmem:[%s3 + $0x6b8] sm:$0xff] %v2790
  %3169 = vst [vmem:[%s3 + $0x6c0] sm:$0xff] %v2795
  %3170 = vst [vmem:[%s3 + $0x6c8] sm:$0xff] %v2798
  %3171 = vst [vmem:[%s3 + $0x6d0] sm:$0xff] %v2803
  %3172 = vst [vmem:[%s3 + $0x6d8] sm:$0xff] %v2806
  %3173 = vst [vmem:[%s3 + $0x6e0] sm:$0xff] %v2811
  %3174 = vst [vmem:[%s3 + $0x6e8] sm:$0xff] %v2814
  %3175 = vst [vmem:[%s3 + $0x6f0] sm:$0xff] %v2819
  %3176 = vst [vmem:[%s3 + $0x6f8] sm:$0xff] %v2822
  %3177 = vst [vmem:[%s3 + $0x700] sm:$0xff] %v2827
  %3178 = vst [vmem:[%s3 + $0x708] sm:$0xff] %v2830
  %3179 = vst [vmem:[%s3 + $0x710] sm:$0xff] %v2835
  %3180 = vst [vmem:[%s3 + $0x718] sm:$0xff] %v2838
  %3181 = vst [vmem:[%s3 + $0x720] sm:$0xff] %v2843
  %3182 = vst [vmem:[%s3 + $0x728] sm:$0xff] %v2846
  %3183 = vst [vmem:[%s3 + $0x730] sm:$0xff] %v2851
  %3184 = vst [vmem:[%s3 + $0x738] sm:$0xff] %v2854
  %3185 = vst [vmem:[%s3 + $0x740] sm:$0xff] %v2859
  %3186 = vst [vmem:[%s3 + $0x748] sm:$0xff] %v2862
  %3187 = vst [vmem:[%s3 + $0x750] sm:$0xff] %v2867
  %3188 = vst [vmem:[%s3 + $0x758] sm:$0xff] %v2870
  %3189 = vst [vmem:[%s3 + $0x760] sm:$0xff] %v2875
  %3190 = vst [vmem:[%s3 + $0x768] sm:$0xff] %v2878
  %3191 = vst [vmem:[%s3 + $0x770] sm:$0xff] %v2883
  %3192 = vst [vmem:[%s3 + $0x778] sm:$0xff] %v2886
  %3193 = vst [vmem:[%s3 + $0x780] sm:$0xff] %v2891
  %3194 = vst [vmem:[%s3 + $0x788] sm:$0xff] %v2894
  %3195 = vst [vmem:[%s3 + $0x790] sm:$0xff] %v2899
  %3196 = vst [vmem:[%s3 + $0x798] sm:$0xff] %v2902
  %3197 = vst [vmem:[%s3 + $0x7a0] sm:$0xff] %v2907
  %3198 = vst [vmem:[%s3 + $0x7a8] sm:$0xff] %v2910
  %3199 = vst [vmem:[%s3 + $0x7b0] sm:$0xff] %v2915
  %3200 = vst [vmem:[%s3 + $0x7b8] sm:$0xff] %v2918
  %3201 = vst [vmem:[%s3 + $0x7c0] sm:$0xff] %v2923
  %3202 = vst [vmem:[%s3 + $0x7c8] sm:$0xff] %v2926
  %3203 = vst [vmem:[%s3 + $0x7d0] sm:$0xff] %v2931
  %3204 = vst [vmem:[%s3 + $0x7d8] sm:$0xff] %v2934
  %3205 = vst [vmem:[%s3 + $0x7e0] sm:$0xff] %v2939
  %3206 = vst [vmem:[%s3 + $0x7e8] sm:$0xff] %v2942
  %3207 = vst [vmem:[%s3 + $0x7f0] sm:$0xff] %v2947
  %3208 = vst [vmem:[%s3 + $0x7f8] sm:$0xff] %v2950
  // Predicated region
  $region14: #{forward.9} parent=0 // pred_check
    _
  $region15: #{forward.9} parent=0 // pred_check_branch
    %3210 = sbr.rel (0) target = $region17
  $region16: #{forward.9} parent=0 // pred_region
    _
  $region17: #{forward.9} parent=0 // pred_fallthru
    _
  // Predicated region
  $region18: #{forward.9} parent=0 // pred_check
    _
  $region19: #{forward.9} parent=0 // pred_check_branch
    %3212 = sbr.rel (0) target = $region21
  $region20: #{forward.9} parent=0 // pred_region
    _
  $region21: #{forward.9} parent=0 // pred_fallthru
    _

// kernel: forward.10
$region0: #{forward.10}
  #allocation0 [shape = 'u32[]', space=smem, size = 0x4, offset = 0x4, fixed_abs, tag = 'smem constant byte address 0x4 - core index']
  #allocation1 [shape = 'u32[144,128]{1,0:T(1,128)}', space=vmem, size = 0x12000, scoped, tag = 'internal scratch']
  %s0 = inlined_call_operand.vmem [shape: bf16[512,576], index: 0, kind: input, shape index: {}]
  %s1 = inlined_call_operand.vmem [shape: bf16[576,128], index: 1, kind: input, shape index: {}]
  %s2 = inlined_call_operand.vmem [shape: f32[8,128], index: 2, kind: input, shape index: {}]
  %s3 = inlined_call_operand.vmem [shape: bf16[512,128], index: 3, kind: output, shape index: {}]
  %s4 = sld [smem:[#allocation0]]
  $region22: #{forward.10} parent=0
    _
  %s6 = ssub.s32 1, %s4
  %s7 = scalar_select 0, %s6, %s4
  // Predicated region
  $region2: #{forward.10} parent=0 // pred_check
    _
  $region3: #{forward.10} parent=0 // pred_check_branch
    %9 = sbr.rel (0) target = $region5
  $region4: #{forward.10} parent=0 // pred_region
    _
  $region5: #{forward.10} parent=0 // pred_fallthru
    _
  // Predicated region
  $region6: #{forward.10} parent=0 // pred_check
    _
  $region7: #{forward.10} parent=0 // pred_check_branch
    %11 = sbr.rel (0) target = $region9
  $region8: #{forward.10} parent=0 // pred_region
    _
  $region9: #{forward.10} parent=0 // pred_fallthru
    _
  // Predicated region
  $region10: #{forward.10} parent=0 // pred_check
    _
  $region11: #{forward.10} parent=0 // pred_check_branch
    %13 = sbr.rel (0) target = $region13
  $region12: #{forward.10} parent=0 // pred_region
    _
  $region13: #{forward.10} parent=0 // pred_fallthru
    _
  %v15 = vld [vmem:[%s0] sm:$0xff]
  %v16 = vld [vmem:[%s0 + $0x8] sm:$0xff]
  %v17 = vld [vmem:[%s0 + $0x10] sm:$0xf]
  %v18 = vld [vmem:[%s0 + $0x14] sm:$0xff]
  %v19 = vld [vmem:[%s0 + $0x1c] sm:$0xff]
  %v20 = vld [vmem:[%s0 + $0x24] sm:$0xf]
  %v21 = vld [vmem:[%s0 + $0x28] sm:$0xff]
  %v22 = vld [vmem:[%s0 + $0x30] sm:$0xff]
  %v23 = vld [vmem:[%s0 + $0x38] sm:$0xf]
  %v24 = vld [vmem:[%s0 + $0x3c] sm:$0xff]
  %v25 = vld [vmem:[%s0 + $0x44] sm:$0xff]
  %v26 = vld [vmem:[%s0 + $0x4c] sm:$0xf]
  %v27 = vld [vmem:[%s0 + $0x50] sm:$0xff]
  %v28 = vld [vmem:[%s0 + $0x58] sm:$0xff]
  %v29 = vld [vmem:[%s0 + $0x60] sm:$0xf]
  %v30 = vld [vmem:[%s0 + $0x64] sm:$0xff]
  %v31 = vld [vmem:[%s0 + $0x6c] sm:$0xff]
  %v32 = vld [vmem:[%s0 + $0x74] sm:$0xf]
  %v33 = vld [vmem:[%s0 + $0x78] sm:$0xff]
  %v34 = vld [vmem:[%s0 + $0x80] sm:$0xff]
  %v35 = vld [vmem:[%s0 + $0x88] sm:$0xf]
  %v36 = vld [vmem:[%s0 + $0x8c] sm:$0xff]
  %v37 = vld [vmem:[%s0 + $0x94] sm:$0xff]
  %v38 = vld [vmem:[%s0 + $0x9c] sm:$0xf]
  %v39 = vld [vmem:[%s0 + $0xa0] sm:$0xff]
  %v40 = vld [vmem:[%s0 + $0xa8] sm:$0xff]
  %v41 = vld [vmem:[%s0 + $0xb0] sm:$0xf]
  %v42 = vld [vmem:[%s0 + $0xb4] sm:$0xff]
  %v43 = vld [vmem:[%s0 + $0xbc] sm:$0xff]
  %v44 = vld [vmem:[%s0 + $0xc4] sm:$0xf]
  %v45 = vld [vmem:[%s0 + $0xc8] sm:$0xff]
  %v46 = vld [vmem:[%s0 + $0xd0] sm:$0xff]
  %v47 = vld [vmem:[%s0 + $0xd8] sm:$0xf]
  %v48 = vld [vmem:[%s0 + $0xdc] sm:$0xff]
  %v49 = vld [vmem:[%s0 + $0xe4] sm:$0xff]
  %v50 = vld [vmem:[%s0 + $0xec] sm:$0xf]
  %v51 = vld [vmem:[%s0 + $0xf0] sm:$0xff]
  %v52 = vld [vmem:[%s0 + $0xf8] sm:$0xff]
  %v53 = vld [vmem:[%s0 + $0x100] sm:$0xf]
  %v54 = vld [vmem:[%s0 + $0x104] sm:$0xff]
  %v55 = vld [vmem:[%s0 + $0x10c] sm:$0xff]
  %v56 = vld [vmem:[%s0 + $0x114] sm:$0xf]
  %v57 = vld [vmem:[%s0 + $0x118] sm:$0xff]
  %v58 = vld [vmem:[%s0 + $0x120] sm:$0xff]
  %v59 = vld [vmem:[%s0 + $0x128] sm:$0xf]
  %v60 = vld [vmem:[%s0 + $0x12c] sm:$0xff]
  %v61 = vld [vmem:[%s0 + $0x134] sm:$0xff]
  %v62 = vld [vmem:[%s0 + $0x13c] sm:$0xf]
  %v63 = vld [vmem:[%s0 + $0x140] sm:$0xff]
  %v64 = vld [vmem:[%s0 + $0x148] sm:$0xff]
  %v65 = vld [vmem:[%s0 + $0x150] sm:$0xf]
  %v66 = vld [vmem:[%s0 + $0x154] sm:$0xff]
  %v67 = vld [vmem:[%s0 + $0x15c] sm:$0xff]
  %v68 = vld [vmem:[%s0 + $0x164] sm:$0xf]
  %v69 = vld [vmem:[%s0 + $0x168] sm:$0xff]
  %v70 = vld [vmem:[%s0 + $0x170] sm:$0xff]
  %v71 = vld [vmem:[%s0 + $0x178] sm:$0xf]
  %v72 = vld [vmem:[%s0 + $0x17c] sm:$0xff]
  %v73 = vld [vmem:[%s0 + $0x184] sm:$0xff]
  %v74 = vld [vmem:[%s0 + $0x18c] sm:$0xf]
  %v75 = vld [vmem:[%s0 + $0x190] sm:$0xff]
  %v76 = vld [vmem:[%s0 + $0x198] sm:$0xff]
  %v77 = vld [vmem:[%s0 + $0x1a0] sm:$0xf]
  %v78 = vld [vmem:[%s0 + $0x1a4] sm:$0xff]
  %v79 = vld [vmem:[%s0 + $0x1ac] sm:$0xff]
  %v80 = vld [vmem:[%s0 + $0x1b4] sm:$0xf]
  %v81 = vld [vmem:[%s0 + $0x1b8] sm:$0xff]
  %v82 = vld [vmem:[%s0 + $0x1c0] sm:$0xff]
  %v83 = vld [vmem:[%s0 + $0x1c8] sm:$0xf]
  %v84 = vld [vmem:[%s0 + $0x1cc] sm:$0xff]
  %v85 = vld [vmem:[%s0 + $0x1d4] sm:$0xff]
  %v86 = vld [vmem:[%s0 + $0x1dc] sm:$0xf]
  %v87 = vld [vmem:[%s0 + $0x1e0] sm:$0xff]
  %v88 = vld [vmem:[%s0 + $0x1e8] sm:$0xff]
  %v89 = vld [vmem:[%s0 + $0x1f0] sm:$0xf]
  %v90 = vld [vmem:[%s0 + $0x1f4] sm:$0xff]
  %v91 = vld [vmem:[%s0 + $0x1fc] sm:$0xff]
  %v92 = vld [vmem:[%s0 + $0x204] sm:$0xf]
  %v93 = vld [vmem:[%s0 + $0x208] sm:$0xff]
  %v94 = vld [vmem:[%s0 + $0x210] sm:$0xff]
  %v95 = vld [vmem:[%s0 + $0x218] sm:$0xf]
  %v96 = vld [vmem:[%s0 + $0x21c] sm:$0xff]
  %v97 = vld [vmem:[%s0 + $0x224] sm:$0xff]
  %v98 = vld [vmem:[%s0 + $0x22c] sm:$0xf]
  %v99 = vld [vmem:[%s0 + $0x230] sm:$0xff]
  %v100 = vld [vmem:[%s0 + $0x238] sm:$0xff]
  %v101 = vld [vmem:[%s0 + $0x240] sm:$0xf]
  %v102 = vld [vmem:[%s0 + $0x244] sm:$0xff]
  %v103 = vld [vmem:[%s0 + $0x24c] sm:$0xff]
  %v104 = vld [vmem:[%s0 + $0x254] sm:$0xf]
  %v105 = vld [vmem:[%s0 + $0x258] sm:$0xff]
  %v106 = vld [vmem:[%s0 + $0x260] sm:$0xff]
  %v107 = vld [vmem:[%s0 + $0x268] sm:$0xf]
  %v108 = vld [vmem:[%s0 + $0x26c] sm:$0xff]
  %v109 = vld [vmem:[%s0 + $0x274] sm:$0xff]
  %v110 = vld [vmem:[%s0 + $0x27c] sm:$0xf]
  %v111 = vld [vmem:[%s0 + $0x280] sm:$0xff]
  %v112 = vld [vmem:[%s0 + $0x288] sm:$0xff]
  %v113 = vld [vmem:[%s0 + $0x290] sm:$0xf]
  %v114 = vld [vmem:[%s0 + $0x294] sm:$0xff]
  %v115 = vld [vmem:[%s0 + $0x29c] sm:$0xff]
  %v116 = vld [vmem:[%s0 + $0x2a4] sm:$0xf]
  %v117 = vld [vmem:[%s0 + $0x2a8] sm:$0xff]
  %v118 = vld [vmem:[%s0 + $0x2b0] sm:$0xff]
  %v119 = vld [vmem:[%s0 + $0x2b8] sm:$0xf]
  %v120 = vld [vmem:[%s0 + $0x2bc] sm:$0xff]
  %v121 = vld [vmem:[%s0 + $0x2c4] sm:$0xff]
  %v122 = vld [vmem:[%s0 + $0x2cc] sm:$0xf]
  %v123 = vld [vmem:[%s0 + $0x2d0] sm:$0xff]
  %v124 = vld [vmem:[%s0 + $0x2d8] sm:$0xff]
  %v125 = vld [vmem:[%s0 + $0x2e0] sm:$0xf]
  %v126 = vld [vmem:[%s0 + $0x2e4] sm:$0xff]
  %v127 = vld [vmem:[%s0 + $0x2ec] sm:$0xff]
  %v128 = vld [vmem:[%s0 + $0x2f4] sm:$0xf]
  %v129 = vld [vmem:[%s0 + $0x2f8] sm:$0xff]
  %v130 = vld [vmem:[%s0 + $0x300] sm:$0xff]
  %v131 = vld [vmem:[%s0 + $0x308] sm:$0xf]
  %v132 = vld [vmem:[%s0 + $0x30c] sm:$0xff]
  %v133 = vld [vmem:[%s0 + $0x314] sm:$0xff]
  %v134 = vld [vmem:[%s0 + $0x31c] sm:$0xf]
  %v135 = vld [vmem:[%s0 + $0x320] sm:$0xff]
  %v136 = vld [vmem:[%s0 + $0x328] sm:$0xff]
  %v137 = vld [vmem:[%s0 + $0x330] sm:$0xf]
  %v138 = vld [vmem:[%s0 + $0x334] sm:$0xff]
  %v139 = vld [vmem:[%s0 + $0x33c] sm:$0xff]
  %v140 = vld [vmem:[%s0 + $0x344] sm:$0xf]
  %v141 = vld [vmem:[%s0 + $0x348] sm:$0xff]
  %v142 = vld [vmem:[%s0 + $0x350] sm:$0xff]
  %v143 = vld [vmem:[%s0 + $0x358] sm:$0xf]
  %v144 = vld [vmem:[%s0 + $0x35c] sm:$0xff]
  %v145 = vld [vmem:[%s0 + $0x364] sm:$0xff]
  %v146 = vld [vmem:[%s0 + $0x36c] sm:$0xf]
  %v147 = vld [vmem:[%s0 + $0x370] sm:$0xff]
  %v148 = vld [vmem:[%s0 + $0x378] sm:$0xff]
  %v149 = vld [vmem:[%s0 + $0x380] sm:$0xf]
  %v150 = vld [vmem:[%s0 + $0x384] sm:$0xff]
  %v151 = vld [vmem:[%s0 + $0x38c] sm:$0xff]
  %v152 = vld [vmem:[%s0 + $0x394] sm:$0xf]
  %v153 = vld [vmem:[%s0 + $0x398] sm:$0xff]
  %v154 = vld [vmem:[%s0 + $0x3a0] sm:$0xff]
  %v155 = vld [vmem:[%s0 + $0x3a8] sm:$0xf]
  %v156 = vld [vmem:[%s0 + $0x3ac] sm:$0xff]
  %v157 = vld [vmem:[%s0 + $0x3b4] sm:$0xff]
  %v158 = vld [vmem:[%s0 + $0x3bc] sm:$0xf]
  %v159 = vld [vmem:[%s0 + $0x3c0] sm:$0xff]
  %v160 = vld [vmem:[%s0 + $0x3c8] sm:$0xff]
  %v161 = vld [vmem:[%s0 + $0x3d0] sm:$0xf]
  %v162 = vld [vmem:[%s0 + $0x3d4] sm:$0xff]
  %v163 = vld [vmem:[%s0 + $0x3dc] sm:$0xff]
  %v164 = vld [vmem:[%s0 + $0x3e4] sm:$0xf]
  %v165 = vld [vmem:[%s0 + $0x3e8] sm:$0xff]
  %v166 = vld [vmem:[%s0 + $0x3f0] sm:$0xff]
  %v167 = vld [vmem:[%s0 + $0x3f8] sm:$0xf]
  %v168 = vld [vmem:[%s0 + $0x3fc] sm:$0xff]
  %v169 = vld [vmem:[%s0 + $0x404] sm:$0xff]
  %v170 = vld [vmem:[%s0 + $0x40c] sm:$0xf]
  %v171 = vld [vmem:[%s0 + $0x410] sm:$0xff]
  %v172 = vld [vmem:[%s0 + $0x418] sm:$0xff]
  %v173 = vld [vmem:[%s0 + $0x420] sm:$0xf]
  %v174 = vld [vmem:[%s0 + $0x424] sm:$0xff]
  %v175 = vld [vmem:[%s0 + $0x42c] sm:$0xff]
  %v176 = vld [vmem:[%s0 + $0x434] sm:$0xf]
  %v177 = vld [vmem:[%s0 + $0x438] sm:$0xff]
  %v178 = vld [vmem:[%s0 + $0x440] sm:$0xff]
  %v179 = vld [vmem:[%s0 + $0x448] sm:$0xf]
  %v180 = vld [vmem:[%s0 + $0x44c] sm:$0xff]
  %v181 = vld [vmem:[%s0 + $0x454] sm:$0xff]
  %v182 = vld [vmem:[%s0 + $0x45c] sm:$0xf]
  %v183 = vld [vmem:[%s0 + $0x460] sm:$0xff]
  %v184 = vld [vmem:[%s0 + $0x468] sm:$0xff]
  %v185 = vld [vmem:[%s0 + $0x470] sm:$0xf]
  %v186 = vld [vmem:[%s0 + $0x474] sm:$0xff]
  %v187 = vld [vmem:[%s0 + $0x47c] sm:$0xff]
  %v188 = vld [vmem:[%s0 + $0x484] sm:$0xf]
  %v189 = vld [vmem:[%s0 + $0x488] sm:$0xff]
  %v190 = vld [vmem:[%s0 + $0x490] sm:$0xff]
  %v191 = vld [vmem:[%s0 + $0x498] sm:$0xf]
  %v192 = vld [vmem:[%s0 + $0x49c] sm:$0xff]
  %v193 = vld [vmem:[%s0 + $0x4a4] sm:$0xff]
  %v194 = vld [vmem:[%s0 + $0x4ac] sm:$0xf]
  %v195 = vld [vmem:[%s0 + $0x4b0] sm:$0xff]
  %v196 = vld [vmem:[%s0 + $0x4b8] sm:$0xff]
  %v197 = vld [vmem:[%s0 + $0x4c0] sm:$0xf]
  %v198 = vld [vmem:[%s0 + $0x4c4] sm:$0xff]
  %v199 = vld [vmem:[%s0 + $0x4cc] sm:$0xff]
  %v200 = vld [vmem:[%s0 + $0x4d4] sm:$0xf]
  %v201 = vld [vmem:[%s0 + $0x4d8] sm:$0xff]
  %v202 = vld [vmem:[%s0 + $0x4e0] sm:$0xff]
  %v203 = vld [vmem:[%s0 + $0x4e8] sm:$0xf]
  %v204 = vld [vmem:[%s0 + $0x4ec] sm:$0xff]
  %v205 = vld [vmem:[%s0 + $0x4f4] sm:$0xff]
  %v206 = vld [vmem:[%s0 + $0x4fc] sm:$0xf]
  %v207 = vld [vmem:[%s1] sm:$0xf]
  %v208 = vld [vmem:[%s1 + $0x4] sm:$0xf]
  %v209 = vld [vmem:[%s1 + $0x8] sm:$0xf]
  %v210 = vld [vmem:[%s1 + $0xc] sm:$0xf]
  %v211 = vld [vmem:[%s1 + $0x10] sm:$0xf]
  %v212 = vld [vmem:[%s1 + $0x14] sm:$0xf]
  %v213 = vld [vmem:[%s1 + $0x18] sm:$0xf]
  %v214 = vld [vmem:[%s1 + $0x1c] sm:$0xf]
  %v215 = vld [vmem:[%s1 + $0x20] sm:$0xf]
  %v216 = vld [vmem:[%s1 + $0x24] sm:$0xf]
  %v217 = vld [vmem:[%s1 + $0x28] sm:$0xf]
  %v218 = vld [vmem:[%s1 + $0x2c] sm:$0xf]
  %v219 = vld [vmem:[%s1 + $0x30] sm:$0xf]
  %v220 = vld [vmem:[%s1 + $0x34] sm:$0xf]
  %v221 = vld [vmem:[%s1 + $0x38] sm:$0xf]
  %v222 = vld [vmem:[%s1 + $0x3c] sm:$0xf]
  %v223 = vld [vmem:[%s1 + $0x40] sm:$0xf]
  %v224 = vld [vmem:[%s1 + $0x44] sm:$0xf]
  %v225 = vld [vmem:[%s1 + $0x48] sm:$0xf]
  %v226 = vld [vmem:[%s1 + $0x4c] sm:$0xf]
  %v227 = vld [vmem:[%s1 + $0x50] sm:$0xf]
  %v228 = vld [vmem:[%s1 + $0x54] sm:$0xf]
  %v229 = vld [vmem:[%s1 + $0x58] sm:$0xf]
  %v230 = vld [vmem:[%s1 + $0x5c] sm:$0xf]
  %v231 = vld [vmem:[%s1 + $0x60] sm:$0xf]
  %v232 = vld [vmem:[%s1 + $0x64] sm:$0xf]
  %v233 = vld [vmem:[%s1 + $0x68] sm:$0xf]
  %v234 = vld [vmem:[%s1 + $0x6c] sm:$0xf]
  %v235 = vld [vmem:[%s1 + $0x70] sm:$0xf]
  %v236 = vld [vmem:[%s1 + $0x74] sm:$0xf]
  %v237 = vld [vmem:[%s1 + $0x78] sm:$0xf]
  %v238 = vld [vmem:[%s1 + $0x7c] sm:$0xf]
  %v239 = vld [vmem:[%s1 + $0x80] sm:$0xf]
  %v240 = vld [vmem:[%s1 + $0x84] sm:$0xf]
  %v241 = vld [vmem:[%s1 + $0x88] sm:$0xf]
  %v242 = vld [vmem:[%s1 + $0x8c] sm:$0xf]
  %v243 = vld [vmem:[%s1 + $0x90] sm:$0xf]
  %v244 = vld [vmem:[%s1 + $0x94] sm:$0xf]
  %v245 = vld [vmem:[%s1 + $0x98] sm:$0xf]
  %v246 = vld [vmem:[%s1 + $0x9c] sm:$0xf]
  %v247 = vld [vmem:[%s1 + $0xa0] sm:$0xf]
  %v248 = vld [vmem:[%s1 + $0xa4] sm:$0xf]
  %v249 = vld [vmem:[%s1 + $0xa8] sm:$0xf]
  %v250 = vld [vmem:[%s1 + $0xac] sm:$0xf]
  %v251 = vld [vmem:[%s1 + $0xb0] sm:$0xf]
  %v252 = vld [vmem:[%s1 + $0xb4] sm:$0xf]
  %v253 = vld [vmem:[%s1 + $0xb8] sm:$0xf]
  %v254 = vld [vmem:[%s1 + $0xbc] sm:$0xf]
  %v255 = vld [vmem:[%s1 + $0xc0] sm:$0xf]
  %v256 = vld [vmem:[%s1 + $0xc4] sm:$0xf]
  %v257 = vld [vmem:[%s1 + $0xc8] sm:$0xf]
  %v258 = vld [vmem:[%s1 + $0xcc] sm:$0xf]
  %v259 = vld [vmem:[%s1 + $0xd0] sm:$0xf]
  %v260 = vld [vmem:[%s1 + $0xd4] sm:$0xf]
  %v261 = vld [vmem:[%s1 + $0xd8] sm:$0xf]
  %v262 = vld [vmem:[%s1 + $0xdc] sm:$0xf]
  %v263 = vld [vmem:[%s1 + $0xe0] sm:$0xf]
  %v264 = vld [vmem:[%s1 + $0xe4] sm:$0xf]
  %v265 = vld [vmem:[%s1 + $0xe8] sm:$0xf]
  %v266 = vld [vmem:[%s1 + $0xec] sm:$0xf]
  %v267 = vld [vmem:[%s1 + $0xf0] sm:$0xf]
  %v268 = vld [vmem:[%s1 + $0xf4] sm:$0xf]
  %v269 = vld [vmem:[%s1 + $0xf8] sm:$0xf]
  %v270 = vld [vmem:[%s1 + $0xfc] sm:$0xf]
  %v271 = vld [vmem:[%s1 + $0x100] sm:$0xf]
  %v272 = vld [vmem:[%s1 + $0x104] sm:$0xf]
  %v273 = vld [vmem:[%s1 + $0x108] sm:$0xf]
  %v274 = vld [vmem:[%s1 + $0x10c] sm:$0xf]
  %v275 = vld [vmem:[%s1 + $0x110] sm:$0xf]
  %v276 = vld [vmem:[%s1 + $0x114] sm:$0xf]
  %v277 = vld [vmem:[%s1 + $0x118] sm:$0xf]
  %v278 = vld [vmem:[%s1 + $0x11c] sm:$0xf]
  %v279 = vld [vmem:[%s2] sm:$0x1]
  %v280 = vlaneseq
  %v281 = vshrl.u32 %v280, 7
  %v282 = vsub.s32 0, %v281
  %v283 = vrot.slane %v279, %v282
  %v476 = vunpack.c.l.b16 %v15
  %v477 = vunpack.c.h.b16 %v15
  %v478 = vunpack.c.l.b16 %v16
  %v479 = vunpack.c.h.b16 %v16
  %v480 = vunpack.c.l.b16 %v17
  %v481 = vunpack.c.l.b16 %v18
  %v482 = vunpack.c.h.b16 %v18
  %v483 = vunpack.c.l.b16 %v19
  %v484 = vunpack.c.h.b16 %v19
  %v485 = vunpack.c.l.b16 %v20
  %v486 = vunpack.c.l.b16 %v21
  %v487 = vunpack.c.h.b16 %v21
  %v488 = vunpack.c.l.b16 %v22
  %v489 = vunpack.c.h.b16 %v22
  %v490 = vunpack.c.l.b16 %v23
  %v491 = vunpack.c.l.b16 %v24
  %v492 = vunpack.c.h.b16 %v24
  %v493 = vunpack.c.l.b16 %v25
  %v494 = vunpack.c.h.b16 %v25
  %v495 = vunpack.c.l.b16 %v26
  %v496 = vunpack.c.l.b16 %v27
  %v497 = vunpack.c.h.b16 %v27
  %v498 = vunpack.c.l.b16 %v28
  %v499 = vunpack.c.h.b16 %v28
  %v500 = vunpack.c.l.b16 %v29
  %v501 = vunpack.c.l.b16 %v30
  %v502 = vunpack.c.h.b16 %v30
  %v503 = vunpack.c.l.b16 %v31
  %v504 = vunpack.c.h.b16 %v31
  %v505 = vunpack.c.l.b16 %v32
  %v506 = vunpack.c.l.b16 %v33
  %v507 = vunpack.c.h.b16 %v33
  %v508 = vunpack.c.l.b16 %v34
  %v509 = vunpack.c.h.b16 %v34
  %v510 = vunpack.c.l.b16 %v35
  %v511 = vunpack.c.l.b16 %v36
  %v512 = vunpack.c.h.b16 %v36
  %v513 = vunpack.c.l.b16 %v37
  %v514 = vunpack.c.h.b16 %v37
  %v515 = vunpack.c.l.b16 %v38
  %v516 = vunpack.c.l.b16 %v39
  %v517 = vunpack.c.h.b16 %v39
  %v518 = vunpack.c.l.b16 %v40
  %v519 = vunpack.c.h.b16 %v40
  %v520 = vunpack.c.l.b16 %v41
  %v521 = vunpack.c.l.b16 %v42
  %v522 = vunpack.c.h.b16 %v42
  %v523 = vunpack.c.l.b16 %v43
  %v524 = vunpack.c.h.b16 %v43
  %v525 = vunpack.c.l.b16 %v44
  %v526 = vunpack.c.l.b16 %v45
  %v527 = vunpack.c.h.b16 %v45
  %v528 = vunpack.c.l.b16 %v46
  %v529 = vunpack.c.h.b16 %v46
  %v530 = vunpack.c.l.b16 %v47
  %v531 = vunpack.c.l.b16 %v48
  %v532 = vunpack.c.h.b16 %v48
  %v533 = vunpack.c.l.b16 %v49
  %v534 = vunpack.c.h.b16 %v49
  %v535 = vunpack.c.l.b16 %v50
  %v536 = vunpack.c.l.b16 %v51
  %v537 = vunpack.c.h.b16 %v51
  %v538 = vunpack.c.l.b16 %v52
  %v539 = vunpack.c.h.b16 %v52
  %v540 = vunpack.c.l.b16 %v53
  %v541 = vunpack.c.l.b16 %v54
  %v542 = vunpack.c.h.b16 %v54
  %v543 = vunpack.c.l.b16 %v55
  %v544 = vunpack.c.h.b16 %v55
  %v545 = vunpack.c.l.b16 %v56
  %v546 = vunpack.c.l.b16 %v57
  %v547 = vunpack.c.h.b16 %v57
  %v548 = vunpack.c.l.b16 %v58
  %v549 = vunpack.c.h.b16 %v58
  %v550 = vunpack.c.l.b16 %v59
  %v551 = vunpack.c.l.b16 %v60
  %v552 = vunpack.c.h.b16 %v60
  %v553 = vunpack.c.l.b16 %v61
  %v554 = vunpack.c.h.b16 %v61
  %v555 = vunpack.c.l.b16 %v62
  %v556 = vunpack.c.l.b16 %v63
  %v557 = vunpack.c.h.b16 %v63
  %v558 = vunpack.c.l.b16 %v64
  %v559 = vunpack.c.h.b16 %v64
  %v560 = vunpack.c.l.b16 %v65
  %v561 = vunpack.c.l.b16 %v66
  %v562 = vunpack.c.h.b16 %v66
  %v563 = vunpack.c.l.b16 %v67
  %v564 = vunpack.c.h.b16 %v67
  %v565 = vunpack.c.l.b16 %v68
  %v566 = vunpack.c.l.b16 %v69
  %v567 = vunpack.c.h.b16 %v69
  %v568 = vunpack.c.l.b16 %v70
  %v569 = vunpack.c.h.b16 %v70
  %v570 = vunpack.c.l.b16 %v71
  %v571 = vunpack.c.l.b16 %v72
  %v572 = vunpack.c.h.b16 %v72
  %v573 = vunpack.c.l.b16 %v73
  %v574 = vunpack.c.h.b16 %v73
  %v575 = vunpack.c.l.b16 %v74
  %v576 = vunpack.c.l.b16 %v75
  %v577 = vunpack.c.h.b16 %v75
  %v578 = vunpack.c.l.b16 %v76
  %v579 = vunpack.c.h.b16 %v76
  %v580 = vunpack.c.l.b16 %v77
  %v581 = vunpack.c.l.b16 %v78
  %v582 = vunpack.c.h.b16 %v78
  %v583 = vunpack.c.l.b16 %v79
  %v584 = vunpack.c.h.b16 %v79
  %v585 = vunpack.c.l.b16 %v80
  %v586 = vunpack.c.l.b16 %v81
  %v587 = vunpack.c.h.b16 %v81
  %v588 = vunpack.c.l.b16 %v82
  %v589 = vunpack.c.h.b16 %v82
  %v590 = vunpack.c.l.b16 %v83
  %v591 = vunpack.c.l.b16 %v84
  %v592 = vunpack.c.h.b16 %v84
  %v593 = vunpack.c.l.b16 %v85
  %v594 = vunpack.c.h.b16 %v85
  %v595 = vunpack.c.l.b16 %v86
  %v596 = vunpack.c.l.b16 %v87
  %v597 = vunpack.c.h.b16 %v87
  %v598 = vunpack.c.l.b16 %v88
  %v599 = vunpack.c.h.b16 %v88
  %v600 = vunpack.c.l.b16 %v89
  %v601 = vunpack.c.l.b16 %v90
  %v602 = vunpack.c.h.b16 %v90
  %v603 = vunpack.c.l.b16 %v91
  %v604 = vunpack.c.h.b16 %v91
  %v605 = vunpack.c.l.b16 %v92
  %v606 = vunpack.c.l.b16 %v93
  %v607 = vunpack.c.h.b16 %v93
  %v608 = vunpack.c.l.b16 %v94
  %v609 = vunpack.c.h.b16 %v94
  %v610 = vunpack.c.l.b16 %v95
  %v611 = vunpack.c.l.b16 %v96
  %v612 = vunpack.c.h.b16 %v96
  %v613 = vunpack.c.l.b16 %v97
  %v614 = vunpack.c.h.b16 %v97
  %v615 = vunpack.c.l.b16 %v98
  %v616 = vunpack.c.l.b16 %v99
  %v617 = vunpack.c.h.b16 %v99
  %v618 = vunpack.c.l.b16 %v100
  %v619 = vunpack.c.h.b16 %v100
  %v620 = vunpack.c.l.b16 %v101
  %v621 = vunpack.c.l.b16 %v102
  %v622 = vunpack.c.h.b16 %v102
  %v623 = vunpack.c.l.b16 %v103
  %v624 = vunpack.c.h.b16 %v103
  %v625 = vunpack.c.l.b16 %v104
  %v626 = vunpack.c.l.b16 %v105
  %v627 = vunpack.c.h.b16 %v105
  %v628 = vunpack.c.l.b16 %v106
  %v629 = vunpack.c.h.b16 %v106
  %v630 = vunpack.c.l.b16 %v107
  %v631 = vunpack.c.l.b16 %v108
  %v632 = vunpack.c.h.b16 %v108
  %v633 = vunpack.c.l.b16 %v109
  %v634 = vunpack.c.h.b16 %v109
  %v635 = vunpack.c.l.b16 %v110
  %v636 = vunpack.c.l.b16 %v111
  %v637 = vunpack.c.h.b16 %v111
  %v638 = vunpack.c.l.b16 %v112
  %v639 = vunpack.c.h.b16 %v112
  %v640 = vunpack.c.l.b16 %v113
  %v641 = vunpack.c.l.b16 %v114
  %v642 = vunpack.c.h.b16 %v114
  %v643 = vunpack.c.l.b16 %v115
  %v644 = vunpack.c.h.b16 %v115
  %v645 = vunpack.c.l.b16 %v116
  %v646 = vunpack.c.l.b16 %v117
  %v647 = vunpack.c.h.b16 %v117
  %v648 = vunpack.c.l.b16 %v118
  %v649 = vunpack.c.h.b16 %v118
  %v650 = vunpack.c.l.b16 %v119
  %v651 = vunpack.c.l.b16 %v120
  %v652 = vunpack.c.h.b16 %v120
  %v653 = vunpack.c.l.b16 %v121
  %v654 = vunpack.c.h.b16 %v121
  %v655 = vunpack.c.l.b16 %v122
  %v656 = vunpack.c.l.b16 %v123
  %v657 = vunpack.c.h.b16 %v123
  %v658 = vunpack.c.l.b16 %v124
  %v659 = vunpack.c.h.b16 %v124
  %v660 = vunpack.c.l.b16 %v125
  %v661 = vunpack.c.l.b16 %v126
  %v662 = vunpack.c.h.b16 %v126
  %v663 = vunpack.c.l.b16 %v127
  %v664 = vunpack.c.h.b16 %v127
  %v665 = vunpack.c.l.b16 %v128
  %v666 = vunpack.c.l.b16 %v129
  %v667 = vunpack.c.h.b16 %v129
  %v668 = vunpack.c.l.b16 %v130
  %v669 = vunpack.c.h.b16 %v130
  %v670 = vunpack.c.l.b16 %v131
  %v671 = vunpack.c.l.b16 %v132
  %v672 = vunpack.c.h.b16 %v132
  %v673 = vunpack.c.l.b16 %v133
  %v674 = vunpack.c.h.b16 %v133
  %v675 = vunpack.c.l.b16 %v134
  %v676 = vunpack.c.l.b16 %v135
  %v677 = vunpack.c.h.b16 %v135
  %v678 = vunpack.c.l.b16 %v136
  %v679 = vunpack.c.h.b16 %v136
  %v680 = vunpack.c.l.b16 %v137
  %v681 = vunpack.c.l.b16 %v138
  %v682 = vunpack.c.h.b16 %v138
  %v683 = vunpack.c.l.b16 %v139
  %v684 = vunpack.c.h.b16 %v139
  %v685 = vunpack.c.l.b16 %v140
  %v686 = vunpack.c.l.b16 %v141
  %v687 = vunpack.c.h.b16 %v141
  %v688 = vunpack.c.l.b16 %v142
  %v689 = vunpack.c.h.b16 %v142
  %v690 = vunpack.c.l.b16 %v143
  %v691 = vunpack.c.l.b16 %v144
  %v692 = vunpack.c.h.b16 %v144
  %v693 = vunpack.c.l.b16 %v145
  %v694 = vunpack.c.h.b16 %v145
  %v695 = vunpack.c.l.b16 %v146
  %v696 = vunpack.c.l.b16 %v147
  %v697 = vunpack.c.h.b16 %v147
  %v698 = vunpack.c.l.b16 %v148
  %v699 = vunpack.c.h.b16 %v148
  %v700 = vunpack.c.l.b16 %v149
  %v701 = vunpack.c.l.b16 %v150
  %v702 = vunpack.c.h.b16 %v150
  %v703 = vunpack.c.l.b16 %v151
  %v704 = vunpack.c.h.b16 %v151
  %v705 = vunpack.c.l.b16 %v152
  %v706 = vunpack.c.l.b16 %v153
  %v707 = vunpack.c.h.b16 %v153
  %v708 = vunpack.c.l.b16 %v154
  %v709 = vunpack.c.h.b16 %v154
  %v710 = vunpack.c.l.b16 %v155
  %v711 = vunpack.c.l.b16 %v156
  %v712 = vunpack.c.h.b16 %v156
  %v713 = vunpack.c.l.b16 %v157
  %v714 = vunpack.c.h.b16 %v157
  %v715 = vunpack.c.l.b16 %v158
  %v716 = vunpack.c.l.b16 %v159
  %v717 = vunpack.c.h.b16 %v159
  %v718 = vunpack.c.l.b16 %v160
  %v719 = vunpack.c.h.b16 %v160
  %v720 = vunpack.c.l.b16 %v161
  %v721 = vunpack.c.l.b16 %v162
  %v722 = vunpack.c.h.b16 %v162
  %v723 = vunpack.c.l.b16 %v163
  %v724 = vunpack.c.h.b16 %v163
  %v725 = vunpack.c.l.b16 %v164
  %v726 = vunpack.c.l.b16 %v165
  %v727 = vunpack.c.h.b16 %v165
  %v728 = vunpack.c.l.b16 %v166
  %v729 = vunpack.c.h.b16 %v166
  %v730 = vunpack.c.l.b16 %v167
  %v731 = vunpack.c.l.b16 %v168
  %v732 = vunpack.c.h.b16 %v168
  %v733 = vunpack.c.l.b16 %v169
  %v734 = vunpack.c.h.b16 %v169
  %v735 = vunpack.c.l.b16 %v170
  %v736 = vunpack.c.l.b16 %v171
  %v737 = vunpack.c.h.b16 %v171
  %v738 = vunpack.c.l.b16 %v172
  %v739 = vunpack.c.h.b16 %v172
  %v740 = vunpack.c.l.b16 %v173
  %v741 = vunpack.c.l.b16 %v174
  %v742 = vunpack.c.h.b16 %v174
  %v743 = vunpack.c.l.b16 %v175
  %v744 = vunpack.c.h.b16 %v175
  %v745 = vunpack.c.l.b16 %v176
  %v746 = vunpack.c.l.b16 %v177
  %v747 = vunpack.c.h.b16 %v177
  %v748 = vunpack.c.l.b16 %v178
  %v749 = vunpack.c.h.b16 %v178
  %v750 = vunpack.c.l.b16 %v179
  %v751 = vunpack.c.l.b16 %v180
  %v752 = vunpack.c.h.b16 %v180
  %v753 = vunpack.c.l.b16 %v181
  %v754 = vunpack.c.h.b16 %v181
  %v755 = vunpack.c.l.b16 %v182
  %v756 = vunpack.c.l.b16 %v183
  %v757 = vunpack.c.h.b16 %v183
  %v758 = vunpack.c.l.b16 %v184
  %v759 = vunpack.c.h.b16 %v184
  %v760 = vunpack.c.l.b16 %v185
  %v761 = vunpack.c.l.b16 %v186
  %v762 = vunpack.c.h.b16 %v186
  %v763 = vunpack.c.l.b16 %v187
  %v764 = vunpack.c.h.b16 %v187
  %v765 = vunpack.c.l.b16 %v188
  %v766 = vunpack.c.l.b16 %v189
  %v767 = vunpack.c.h.b16 %v189
  %v768 = vunpack.c.l.b16 %v190
  %v769 = vunpack.c.h.b16 %v190
  %v770 = vunpack.c.l.b16 %v191
  %v771 = vunpack.c.l.b16 %v192
  %v772 = vunpack.c.h.b16 %v192
  %v773 = vunpack.c.l.b16 %v193
  %v774 = vunpack.c.h.b16 %v193
  %v775 = vunpack.c.l.b16 %v194
  %v776 = vunpack.c.l.b16 %v195
  %v777 = vunpack.c.h.b16 %v195
  %v778 = vunpack.c.l.b16 %v196
  %v779 = vunpack.c.h.b16 %v196
  %v780 = vunpack.c.l.b16 %v197
  %v781 = vunpack.c.l.b16 %v198
  %v782 = vunpack.c.h.b16 %v198
  %v783 = vunpack.c.l.b16 %v199
  %v784 = vunpack.c.h.b16 %v199
  %v785 = vunpack.c.l.b16 %v200
  %v786 = vunpack.c.l.b16 %v201
  %v787 = vunpack.c.h.b16 %v201
  %v788 = vunpack.c.l.b16 %v202
  %v789 = vunpack.c.h.b16 %v202
  %v790 = vunpack.c.l.b16 %v203
  %v791 = vunpack.c.l.b16 %v204
  %v792 = vunpack.c.h.b16 %v204
  %v793 = vunpack.c.l.b16 %v205
  %v794 = vunpack.c.h.b16 %v205
  %v795 = vunpack.c.l.b16 %v206
  %v796 = vpack.c.b16 %v481, %v476
  %v797 = vpack.c.b16 %v482, %v477
  %v798 = vpack.c.b16 %v483, %v478
  %v799 = vpack.c.b16 %v484, %v479
  %v800 = vpack.c.b16 %v485, %v480
  %v801 = vpack.c.b16 %v491, %v486
  %v802 = vpack.c.b16 %v492, %v487
  %v803 = vpack.c.b16 %v493, %v488
  %v804 = vpack.c.b16 %v494, %v489
  %v805 = vpack.c.b16 %v495, %v490
  %v806 = vpack.c.b16 %v501, %v496
  %v807 = vpack.c.b16 %v502, %v497
  %v808 = vpack.c.b16 %v503, %v498
  %v809 = vpack.c.b16 %v504, %v499
  %v810 = vpack.c.b16 %v505, %v500
  %v811 = vpack.c.b16 %v511, %v506
  %v812 = vpack.c.b16 %v512, %v507
  %v813 = vpack.c.b16 %v513, %v508
  %v814 = vpack.c.b16 %v514, %v509
  %v815 = vpack.c.b16 %v515, %v510
  %v816 = vpack.c.b16 %v521, %v516
  %v817 = vpack.c.b16 %v522, %v517
  %v818 = vpack.c.b16 %v523, %v518
  %v819 = vpack.c.b16 %v524, %v519
  %v820 = vpack.c.b16 %v525, %v520
  %v821 = vpack.c.b16 %v531, %v526
  %v822 = vpack.c.b16 %v532, %v527
  %v823 = vpack.c.b16 %v533, %v528
  %v824 = vpack.c.b16 %v534, %v529
  %v825 = vpack.c.b16 %v535, %v530
  %v826 = vpack.c.b16 %v541, %v536
  %v827 = vpack.c.b16 %v542, %v537
  %v828 = vpack.c.b16 %v543, %v538
  %v829 = vpack.c.b16 %v544, %v539
  %v830 = vpack.c.b16 %v545, %v540
  %v831 = vpack.c.b16 %v551, %v546
  %v832 = vpack.c.b16 %v552, %v547
  %v833 = vpack.c.b16 %v553, %v548
  %v834 = vpack.c.b16 %v554, %v549
  %v835 = vpack.c.b16 %v555, %v550
  %v836 = vpack.c.b16 %v561, %v556
  %v837 = vpack.c.b16 %v562, %v557
  %v838 = vpack.c.b16 %v563, %v558
  %v839 = vpack.c.b16 %v564, %v559
  %v840 = vpack.c.b16 %v565, %v560
  %v841 = vpack.c.b16 %v571, %v566
  %v842 = vpack.c.b16 %v572, %v567
  %v843 = vpack.c.b16 %v573, %v568
  %v844 = vpack.c.b16 %v574, %v569
  %v845 = vpack.c.b16 %v575, %v570
  %v846 = vpack.c.b16 %v581, %v576
  %v847 = vpack.c.b16 %v582, %v577
  %v848 = vpack.c.b16 %v583, %v578
  %v849 = vpack.c.b16 %v584, %v579
  %v850 = vpack.c.b16 %v585, %v580
  %v851 = vpack.c.b16 %v591, %v586
  %v852 = vpack.c.b16 %v592, %v587
  %v853 = vpack.c.b16 %v593, %v588
  %v854 = vpack.c.b16 %v594, %v589
  %v855 = vpack.c.b16 %v595, %v590
  %v856 = vpack.c.b16 %v601, %v596
  %v857 = vpack.c.b16 %v602, %v597
  %v858 = vpack.c.b16 %v603, %v598
  %v859 = vpack.c.b16 %v604, %v599
  %v860 = vpack.c.b16 %v605, %v600
  %v861 = vpack.c.b16 %v611, %v606
  %v862 = vpack.c.b16 %v612, %v607
  %v863 = vpack.c.b16 %v613, %v608
  %v864 = vpack.c.b16 %v614, %v609
  %v865 = vpack.c.b16 %v615, %v610
  %v866 = vpack.c.b16 %v621, %v616
  %v867 = vpack.c.b16 %v622, %v617
  %v868 = vpack.c.b16 %v623, %v618
  %v869 = vpack.c.b16 %v624, %v619
  %v870 = vpack.c.b16 %v625, %v620
  %v871 = vpack.c.b16 %v631, %v626
  %v872 = vpack.c.b16 %v632, %v627
  %v873 = vpack.c.b16 %v633, %v628
  %v874 = vpack.c.b16 %v634, %v629
  %v875 = vpack.c.b16 %v635, %v630
  %v876 = vpack.c.b16 %v641, %v636
  %v877 = vpack.c.b16 %v642, %v637
  %v878 = vpack.c.b16 %v643, %v638
  %v879 = vpack.c.b16 %v644, %v639
  %v880 = vpack.c.b16 %v645, %v640
  %v881 = vpack.c.b16 %v651, %v646
  %v882 = vpack.c.b16 %v652, %v647
  %v883 = vpack.c.b16 %v653, %v648
  %v884 = vpack.c.b16 %v654, %v649
  %v885 = vpack.c.b16 %v655, %v650
  %v886 = vpack.c.b16 %v661, %v656
  %v887 = vpack.c.b16 %v662, %v657
  %v888 = vpack.c.b16 %v663, %v658
  %v889 = vpack.c.b16 %v664, %v659
  %v890 = vpack.c.b16 %v665, %v660
  %v891 = vpack.c.b16 %v671, %v666
  %v892 = vpack.c.b16 %v672, %v667
  %v893 = vpack.c.b16 %v673, %v668
  %v894 = vpack.c.b16 %v674, %v669
  %v895 = vpack.c.b16 %v675, %v670
  %v896 = vpack.c.b16 %v681, %v676
  %v897 = vpack.c.b16 %v682, %v677
  %v898 = vpack.c.b16 %v683, %v678
  %v899 = vpack.c.b16 %v684, %v679
  %v900 = vpack.c.b16 %v685, %v680
  %v901 = vpack.c.b16 %v691, %v686
  %v902 = vpack.c.b16 %v692, %v687
  %v903 = vpack.c.b16 %v693, %v688
  %v904 = vpack.c.b16 %v694, %v689
  %v905 = vpack.c.b16 %v695, %v690
  %v906 = vpack.c.b16 %v701, %v696
  %v907 = vpack.c.b16 %v702, %v697
  %v908 = vpack.c.b16 %v703, %v698
  %v909 = vpack.c.b16 %v704, %v699
  %v910 = vpack.c.b16 %v705, %v700
  %v911 = vpack.c.b16 %v711, %v706
  %v912 = vpack.c.b16 %v712, %v707
  %v913 = vpack.c.b16 %v713, %v708
  %v914 = vpack.c.b16 %v714, %v709
  %v915 = vpack.c.b16 %v715, %v710
  %v916 = vpack.c.b16 %v721, %v716
  %v917 = vpack.c.b16 %v722, %v717
  %v918 = vpack.c.b16 %v723, %v718
  %v919 = vpack.c.b16 %v724, %v719
  %v920 = vpack.c.b16 %v725, %v720
  %v921 = vpack.c.b16 %v731, %v726
  %v922 = vpack.c.b16 %v732, %v727
  %v923 = vpack.c.b16 %v733, %v728
  %v924 = vpack.c.b16 %v734, %v729
  %v925 = vpack.c.b16 %v735, %v730
  %v926 = vpack.c.b16 %v741, %v736
  %v927 = vpack.c.b16 %v742, %v737
  %v928 = vpack.c.b16 %v743, %v738
  %v929 = vpack.c.b16 %v744, %v739
  %v930 = vpack.c.b16 %v745, %v740
  %v931 = vpack.c.b16 %v751, %v746
  %v932 = vpack.c.b16 %v752, %v747
  %v933 = vpack.c.b16 %v753, %v748
  %v934 = vpack.c.b16 %v754, %v749
  %v935 = vpack.c.b16 %v755, %v750
  %v936 = vpack.c.b16 %v761, %v756
  %v937 = vpack.c.b16 %v762, %v757
  %v938 = vpack.c.b16 %v763, %v758
  %v939 = vpack.c.b16 %v764, %v759
  %v940 = vpack.c.b16 %v765, %v760
  %v941 = vpack.c.b16 %v771, %v766
  %v942 = vpack.c.b16 %v772, %v767
  %v943 = vpack.c.b16 %v773, %v768
  %v944 = vpack.c.b16 %v774, %v769
  %v945 = vpack.c.b16 %v775, %v770
  %v946 = vpack.c.b16 %v781, %v776
  %v947 = vpack.c.b16 %v782, %v777
  %v948 = vpack.c.b16 %v783, %v778
  %v949 = vpack.c.b16 %v784, %v779
  %v950 = vpack.c.b16 %v785, %v780
  %v951 = vpack.c.b16 %v791, %v786
  %v952 = vpack.c.b16 %v792, %v787
  %v953 = vpack.c.b16 %v793, %v788
  %v954 = vpack.c.b16 %v794, %v789
  %v955 = vpack.c.b16 %v795, %v790
  %v1156 = vunpack.c.l.b16 %v207
  %v1157 = vunpack.c.l.b16 %v208
  %v1158 = vunpack.c.l.b16 %v209
  %v1159 = vunpack.c.l.b16 %v210
  %v1160 = vunpack.c.l.b16 %v211
  %v1161 = vunpack.c.l.b16 %v212
  %v1162 = vunpack.c.l.b16 %v213
  %v1163 = vunpack.c.l.b16 %v214
  %v1164 = vunpack.c.l.b16 %v215
  %v1165 = vunpack.c.l.b16 %v216
  %v1166 = vunpack.c.l.b16 %v217
  %v1167 = vunpack.c.l.b16 %v218
  %v1168 = vunpack.c.l.b16 %v219
  %v1169 = vunpack.c.l.b16 %v220
  %v1170 = vunpack.c.l.b16 %v221
  %v1171 = vunpack.c.l.b16 %v222
  %v1172 = vunpack.c.l.b16 %v223
  %v1173 = vunpack.c.l.b16 %v224
  %v1174 = vunpack.c.l.b16 %v225
  %v1175 = vunpack.c.l.b16 %v226
  %v1176 = vunpack.c.l.b16 %v227
  %v1177 = vunpack.c.l.b16 %v228
  %v1178 = vunpack.c.l.b16 %v229
  %v1179 = vunpack.c.l.b16 %v230
  %v1180 = vunpack.c.l.b16 %v231
  %v1181 = vunpack.c.l.b16 %v232
  %v1182 = vunpack.c.l.b16 %v233
  %v1183 = vunpack.c.l.b16 %v234
  %v1184 = vunpack.c.l.b16 %v235
  %v1185 = vunpack.c.l.b16 %v236
  %v1186 = vunpack.c.l.b16 %v237
  %v1187 = vunpack.c.l.b16 %v238
  %v1188 = vunpack.c.l.b16 %v239
  %v1189 = vunpack.c.l.b16 %v240
  %v1190 = vunpack.c.l.b16 %v241
  %v1191 = vunpack.c.l.b16 %v242
  %v1192 = vunpack.c.l.b16 %v243
  %v1193 = vunpack.c.l.b16 %v244
  %v1194 = vunpack.c.l.b16 %v245
  %v1195 = vunpack.c.l.b16 %v246
  %v1196 = vunpack.c.l.b16 %v247
  %v1197 = vunpack.c.l.b16 %v248
  %v1198 = vunpack.c.l.b16 %v249
  %v1199 = vunpack.c.l.b16 %v250
  %v1200 = vunpack.c.l.b16 %v251
  %v1201 = vunpack.c.l.b16 %v252
  %v1202 = vunpack.c.l.b16 %v253
  %v1203 = vunpack.c.l.b16 %v254
  %v1204 = vunpack.c.l.b16 %v255
  %v1205 = vunpack.c.l.b16 %v256
  %v1206 = vunpack.c.l.b16 %v257
  %v1207 = vunpack.c.l.b16 %v258
  %v1208 = vunpack.c.l.b16 %v259
  %v1209 = vunpack.c.l.b16 %v260
  %v1210 = vunpack.c.l.b16 %v261
  %v1211 = vunpack.c.l.b16 %v262
  %v1212 = vunpack.c.l.b16 %v263
  %v1213 = vunpack.c.l.b16 %v264
  %v1214 = vunpack.c.l.b16 %v265
  %v1215 = vunpack.c.l.b16 %v266
  %v1216 = vunpack.c.l.b16 %v267
  %v1217 = vunpack.c.l.b16 %v268
  %v1218 = vunpack.c.l.b16 %v269
  %v1219 = vunpack.c.l.b16 %v270
  %v1220 = vunpack.c.l.b16 %v271
  %v1221 = vunpack.c.l.b16 %v272
  %v1222 = vunpack.c.l.b16 %v273
  %v1223 = vunpack.c.l.b16 %v274
  %v1224 = vunpack.c.l.b16 %v275
  %v1225 = vunpack.c.l.b16 %v276
  %v1226 = vunpack.c.l.b16 %v277
  %v1227 = vunpack.c.l.b16 %v278
  %v1228 = vpack.c.b16 %v1157, %v1156
  %v1229 = vpack.c.b16 %v1159, %v1158
  %v1230 = vpack.c.b16 %v1161, %v1160
  %v1231 = vpack.c.b16 %v1163, %v1162
  %v1232 = vpack.c.b16 %v1165, %v1164
  %v1233 = vpack.c.b16 %v1167, %v1166
  %v1234 = vpack.c.b16 %v1169, %v1168
  %v1235 = vpack.c.b16 %v1171, %v1170
  %v1236 = vpack.c.b16 %v1173, %v1172
  %v1237 = vpack.c.b16 %v1175, %v1174
  %v1238 = vpack.c.b16 %v1177, %v1176
  %v1239 = vpack.c.b16 %v1179, %v1178
  %v1240 = vpack.c.b16 %v1181, %v1180
  %v1241 = vpack.c.b16 %v1183, %v1182
  %v1242 = vpack.c.b16 %v1185, %v1184
  %v1243 = vpack.c.b16 %v1187, %v1186
  %v1244 = vpack.c.b16 %v1189, %v1188
  %v1245 = vpack.c.b16 %v1191, %v1190
  %v1246 = vpack.c.b16 %v1193, %v1192
  %v1247 = vpack.c.b16 %v1195, %v1194
  %v1248 = vpack.c.b16 %v1197, %v1196
  %v1249 = vpack.c.b16 %v1199, %v1198
  %v1250 = vpack.c.b16 %v1201, %v1200
  %v1251 = vpack.c.b16 %v1203, %v1202
  %v1252 = vpack.c.b16 %v1205, %v1204
  %v1253 = vpack.c.b16 %v1207, %v1206
  %v1254 = vpack.c.b16 %v1209, %v1208
  %v1255 = vpack.c.b16 %v1211, %v1210
  %v1256 = vpack.c.b16 %v1213, %v1212
  %v1257 = vpack.c.b16 %v1215, %v1214
  %v1258 = vpack.c.b16 %v1217, %v1216
  %v1259 = vpack.c.b16 %v1219, %v1218
  %v1260 = vpack.c.b16 %v1221, %v1220
  %v1261 = vpack.c.b16 %v1223, %v1222
  %v1262 = vpack.c.b16 %v1225, %v1224
  %v1263 = vpack.c.b16 %v1227, %v1226
  %vm1300 = vcmask 523264
  %v1302 = vsel %vm1300, %v800, 0
  %v1305 = vsel %vm1300, %v805, 0
  %v1308 = vsel %vm1300, %v810, 0
  %v1311 = vsel %vm1300, %v815, 0
  %v1314 = vsel %vm1300, %v820, 0
  %v1317 = vsel %vm1300, %v825, 0
  %v1320 = vsel %vm1300, %v830, 0
  %v1323 = vsel %vm1300, %v835, 0
  %v1326 = vsel %vm1300, %v840, 0
  %v1329 = vsel %vm1300, %v845, 0
  %v1332 = vsel %vm1300, %v850, 0
  %v1335 = vsel %vm1300, %v855, 0
  %v1338 = vsel %vm1300, %v860, 0
  %v1341 = vsel %vm1300, %v865, 0
  %v1344 = vsel %vm1300, %v870, 0
  %v1347 = vsel %vm1300, %v875, 0
  %v1350 = vsel %vm1300, %v880, 0
  %v1353 = vsel %vm1300, %v885, 0
  %v1356 = vsel %vm1300, %v890, 0
  %v1359 = vsel %vm1300, %v895, 0
  %v1362 = vsel %vm1300, %v900, 0
  %v1365 = vsel %vm1300, %v905, 0
  %v1368 = vsel %vm1300, %v910, 0
  %v1371 = vsel %vm1300, %v915, 0
  %v1374 = vsel %vm1300, %v920, 0
  %v1377 = vsel %vm1300, %v925, 0
  %v1380 = vsel %vm1300, %v930, 0
  %v1383 = vsel %vm1300, %v935, 0
  %v1386 = vsel %vm1300, %v940, 0
  %v1389 = vsel %vm1300, %v945, 0
  %v1392 = vsel %vm1300, %v950, 0
  %v1395 = vsel %vm1300, %v955, 0
  %1397 = vmatprep.subr.bf16.mxu0 0
  %1398 = vmatpush1.bf16.msra.mxu0 %v1235
  %1399 = vmatprep.subr.bf16.mxu0 0
  %1400 = vmatpush1.bf16.msra.mxu0 %v1234
  %1401 = vmatprep.subr.bf16.mxu0 0
  %1402 = vmatpush1.bf16.msra.mxu0 %v1233
  %1403 = vmatprep.subr.bf16.mxu0 0
  %1404 = vmatpush1.bf16.msra.mxu0 %v1232
  %1405 = vmatprep.subr.bf16.mxu0 0
  %1406 = vmatpush1.bf16.msra.mxu0 %v1231
  %1407 = vmatprep.subr.bf16.mxu0 0
  %1408 = vmatpush1.bf16.msra.mxu0 %v1230
  %1409 = vmatprep.subr.bf16.mxu0 0
  %1410 = vmatpush1.bf16.msra.mxu0 %v1229
  %1411 = vmatprep.subr.bf16.mxu0 0
  %1412 = vmatpush1.bf16.msra.mxu0 %v1228
  %1413 = vmatprep.subr.bf16.mxu0 0
  %1414 = vmatpush2.bf16.msra.mxu0 %v1243
  %1415 = vmatprep.subr.bf16.mxu0 0
  %1416 = vmatpush2.bf16.msra.mxu0 %v1242
  %1417 = vmatprep.subr.bf16.mxu0 0
  %1418 = vmatpush2.bf16.msra.mxu0 %v1241
  %1419 = vmatprep.subr.bf16.mxu0 0
  %1420 = vmatpush2.bf16.msra.mxu0 %v1240
  %1421 = vmatprep.subr.bf16.mxu0 0
  %1422 = vmatpush2.bf16.msra.mxu0 %v1239
  %1423 = vmatprep.subr.bf16.mxu0 0
  %1424 = vmatpush2.bf16.msra.mxu0 %v1238
  %1425 = vmatprep.subr.bf16.mxu0 0
  %1426 = vmatpush2.bf16.msra.mxu0 %v1237
  %1427 = vmatprep.subr.bf16.mxu0 0
  %1428 = vmatpush2.bf16.msra.mxu0 %v1236
  %1429 = vmatprep.mubr.bf16.mxu0 %v797
  %1430 = vmatmul.mubr.bf16.gmra.mxu0 %v796
  %v1431 = vpop.f32.mrf.mxu0
  %v1432 = vadd.f32 %v283, %v1431
  %v1433 = vpop.f32.mrf.mxu0
  %v1434 = vpop.f32.mrf.mxu0
  %v1435 = vadd.f32 %v283, %v1434
  %v1436 = vpop.f32.mrf.mxu0
  %1437 = vmatprep.mubr.bf16.mxu0 %v802
  %1438 = vmatmul.mubr.bf16.gmra.mxu0 %v801
  %v1439 = vpop.f32.mrf.mxu0
  %v1440 = vadd.f32 %v283, %v1439
  %v1441 = vpop.f32.mrf.mxu0
  %v1442 = vpop.f32.mrf.mxu0
  %v1443 = vadd.f32 %v283, %v1442
  %v1444 = vpop.f32.mrf.mxu0
  %1445 = vmatprep.mubr.bf16.mxu0 %v807
  %1446 = vmatmul.mubr.bf16.gmra.mxu0 %v806
  %v1447 = vpop.f32.mrf.mxu0
  %v1448 = vadd.f32 %v283, %v1447
  %v1449 = vpop.f32.mrf.mxu0
  %v1450 = vpop.f32.mrf.mxu0
  %v1451 = vadd.f32 %v283, %v1450
  %v1452 = vpop.f32.mrf.mxu0
  %1453 = vmatprep.mubr.bf16.mxu0 %v812
  %1454 = vmatmul.mubr.bf16.gmra.mxu0 %v811
  %v1455 = vpop.f32.mrf.mxu0
  %v1456 = vadd.f32 %v283, %v1455
  %v1457 = vpop.f32.mrf.mxu0
  %v1458 = vpop.f32.mrf.mxu0
  %v1459 = vadd.f32 %v283, %v1458
  %v1460 = vpop.f32.mrf.mxu0
  %1461 = vmatprep.mubr.bf16.mxu0 %v817
  %1462 = vmatmul.mubr.bf16.gmra.mxu0 %v816
  %v1463 = vpop.f32.mrf.mxu0
  %v1464 = vadd.f32 %v283, %v1463
  %v1465 = vpop.f32.mrf.mxu0
  %v1466 = vpop.f32.mrf.mxu0
  %v1467 = vadd.f32 %v283, %v1466
  %v1468 = vpop.f32.mrf.mxu0
  %1469 = vmatprep.mubr.bf16.mxu0 %v822
  %1470 = vmatmul.mubr.bf16.gmra.mxu0 %v821
  %v1471 = vpop.f32.mrf.mxu0
  %v1472 = vadd.f32 %v283, %v1471
  %v1473 = vpop.f32.mrf.mxu0
  %v1474 = vpop.f32.mrf.mxu0
  %v1475 = vadd.f32 %v283, %v1474
  %v1476 = vpop.f32.mrf.mxu0
  %1477 = vmatprep.mubr.bf16.mxu0 %v827
  %1478 = vmatmul.mubr.bf16.gmra.mxu0 %v826
  %v1479 = vpop.f32.mrf.mxu0
  %v1480 = vadd.f32 %v283, %v1479
  %v1481 = vpop.f32.mrf.mxu0
  %v1482 = vpop.f32.mrf.mxu0
  %v1483 = vadd.f32 %v283, %v1482
  %v1484 = vpop.f32.mrf.mxu0
  %1485 = vmatprep.mubr.bf16.mxu0 %v832
  %1486 = vmatmul.mubr.bf16.gmra.mxu0 %v831
  %v1487 = vpop.f32.mrf.mxu0
  %v1488 = vadd.f32 %v283, %v1487
  %v1489 = vpop.f32.mrf.mxu0
  %v1490 = vpop.f32.mrf.mxu0
  %v1491 = vadd.f32 %v283, %v1490
  %v1492 = vpop.f32.mrf.mxu0
  %1493 = vmatprep.mubr.bf16.mxu0 %v837
  %1494 = vmatmul.mubr.bf16.gmra.mxu0 %v836
  %v1495 = vpop.f32.mrf.mxu0
  %v1496 = vadd.f32 %v283, %v1495
  %v1497 = vpop.f32.mrf.mxu0
  %v1498 = vpop.f32.mrf.mxu0
  %v1499 = vadd.f32 %v283, %v1498
  %v1500 = vpop.f32.mrf.mxu0
  %1501 = vmatprep.mubr.bf16.mxu0 %v842
  %1502 = vmatmul.mubr.bf16.gmra.mxu0 %v841
  %v1503 = vpop.f32.mrf.mxu0
  %v1504 = vadd.f32 %v283, %v1503
  %v1505 = vpop.f32.mrf.mxu0
  %v1506 = vpop.f32.mrf.mxu0
  %v1507 = vadd.f32 %v283, %v1506
  %v1508 = vpop.f32.mrf.mxu0
  %1509 = vmatprep.mubr.bf16.mxu0 %v847
  %1510 = vmatmul.mubr.bf16.gmra.mxu0 %v846
  %v1511 = vpop.f32.mrf.mxu0
  %v1512 = vadd.f32 %v283, %v1511
  %v1513 = vpop.f32.mrf.mxu0
  %v1514 = vpop.f32.mrf.mxu0
  %v1515 = vadd.f32 %v283, %v1514
  %v1516 = vpop.f32.mrf.mxu0
  %1517 = vmatprep.mubr.bf16.mxu0 %v852
  %1518 = vmatmul.mubr.bf16.gmra.mxu0 %v851
  %v1519 = vpop.f32.mrf.mxu0
  %v1520 = vadd.f32 %v283, %v1519
  %v1521 = vpop.f32.mrf.mxu0
  %v1522 = vpop.f32.mrf.mxu0
  %v1523 = vadd.f32 %v283, %v1522
  %v1524 = vpop.f32.mrf.mxu0
  %1525 = vmatprep.mubr.bf16.mxu0 %v857
  %1526 = vmatmul.mubr.bf16.gmra.mxu0 %v856
  %v1527 = vpop.f32.mrf.mxu0
  %v1528 = vadd.f32 %v283, %v1527
  %v1529 = vpop.f32.mrf.mxu0
  %v1530 = vpop.f32.mrf.mxu0
  %v1531 = vadd.f32 %v283, %v1530
  %v1532 = vpop.f32.mrf.mxu0
  %1533 = vmatprep.mubr.bf16.mxu0 %v862
  %1534 = vmatmul.mubr.bf16.gmra.mxu0 %v861
  %v1535 = vpop.f32.mrf.mxu0
  %v1536 = vadd.f32 %v283, %v1535
  %v1537 = vpop.f32.mrf.mxu0
  %v1538 = vpop.f32.mrf.mxu0
  %v1539 = vadd.f32 %v283, %v1538
  %v1540 = vpop.f32.mrf.mxu0
  %1541 = vmatprep.mubr.bf16.mxu0 %v867
  %1542 = vmatmul.mubr.bf16.gmra.mxu0 %v866
  %v1543 = vpop.f32.mrf.mxu0
  %v1544 = vadd.f32 %v283, %v1543
  %v1545 = vpop.f32.mrf.mxu0
  %v1546 = vpop.f32.mrf.mxu0
  %v1547 = vadd.f32 %v283, %v1546
  %v1548 = vpop.f32.mrf.mxu0
  %1549 = vmatprep.mubr.bf16.mxu0 %v872
  %1550 = vmatmul.mubr.bf16.gmra.mxu0 %v871
  %v1551 = vpop.f32.mrf.mxu0
  %v1552 = vadd.f32 %v283, %v1551
  %v1553 = vpop.f32.mrf.mxu0
  %v1554 = vpop.f32.mrf.mxu0
  %v1555 = vadd.f32 %v283, %v1554
  %v1556 = vpop.f32.mrf.mxu0
  %1557 = vmatprep.mubr.bf16.mxu0 %v877
  %1558 = vmatmul.mubr.bf16.gmra.mxu0 %v876
  %v1559 = vpop.f32.mrf.mxu0
  %v1560 = vadd.f32 %v283, %v1559
  %v1561 = vpop.f32.mrf.mxu0
  %v1562 = vpop.f32.mrf.mxu0
  %v1563 = vadd.f32 %v283, %v1562
  %v1564 = vpop.f32.mrf.mxu0
  %1565 = vmatprep.mubr.bf16.mxu0 %v882
  %1566 = vmatmul.mubr.bf16.gmra.mxu0 %v881
  %v1567 = vpop.f32.mrf.mxu0
  %v1568 = vadd.f32 %v283, %v1567
  %v1569 = vpop.f32.mrf.mxu0
  %v1570 = vpop.f32.mrf.mxu0
  %v1571 = vadd.f32 %v283, %v1570
  %v1572 = vpop.f32.mrf.mxu0
  %1573 = vmatprep.mubr.bf16.mxu0 %v887
  %1574 = vmatmul.mubr.bf16.gmra.mxu0 %v886
  %v1575 = vpop.f32.mrf.mxu0
  %v1576 = vadd.f32 %v283, %v1575
  %v1577 = vpop.f32.mrf.mxu0
  %v1578 = vpop.f32.mrf.mxu0
  %v1579 = vadd.f32 %v283, %v1578
  %v1580 = vpop.f32.mrf.mxu0
  %1581 = vmatprep.mubr.bf16.mxu0 %v892
  %1582 = vmatmul.mubr.bf16.gmra.mxu0 %v891
  %v1583 = vpop.f32.mrf.mxu0
  %v1584 = vadd.f32 %v283, %v1583
  %v1585 = vpop.f32.mrf.mxu0
  %v1586 = vpop.f32.mrf.mxu0
  %v1587 = vadd.f32 %v283, %v1586
  %v1588 = vpop.f32.mrf.mxu0
  %1589 = vmatprep.mubr.bf16.mxu0 %v897
  %1590 = vmatmul.mubr.bf16.gmra.mxu0 %v896
  %v1591 = vpop.f32.mrf.mxu0
  %v1592 = vadd.f32 %v283, %v1591
  %v1593 = vpop.f32.mrf.mxu0
  %v1594 = vpop.f32.mrf.mxu0
  %v1595 = vadd.f32 %v283, %v1594
  %v1596 = vpop.f32.mrf.mxu0
  %1597 = vmatprep.mubr.bf16.mxu0 %v902
  %1598 = vmatmul.mubr.bf16.gmra.mxu0 %v901
  %v1599 = vpop.f32.mrf.mxu0
  %v1600 = vadd.f32 %v283, %v1599
  %v1601 = vpop.f32.mrf.mxu0
  %v1602 = vpop.f32.mrf.mxu0
  %v1603 = vadd.f32 %v283, %v1602
  %v1604 = vpop.f32.mrf.mxu0
  %1605 = vmatprep.mubr.bf16.mxu0 %v907
  %1606 = vmatmul.mubr.bf16.gmra.mxu0 %v906
  %v1607 = vpop.f32.mrf.mxu0
  %v1608 = vadd.f32 %v283, %v1607
  %v1609 = vpop.f32.mrf.mxu0
  %v1610 = vpop.f32.mrf.mxu0
  %v1611 = vadd.f32 %v283, %v1610
  %v1612 = vpop.f32.mrf.mxu0
  %1613 = vmatprep.mubr.bf16.mxu0 %v912
  %1614 = vmatmul.mubr.bf16.gmra.mxu0 %v911
  %v1615 = vpop.f32.mrf.mxu0
  %v1616 = vadd.f32 %v283, %v1615
  %v1617 = vpop.f32.mrf.mxu0
  %v1618 = vpop.f32.mrf.mxu0
  %v1619 = vadd.f32 %v283, %v1618
  %v1620 = vpop.f32.mrf.mxu0
  %1621 = vmatprep.mubr.bf16.mxu0 %v917
  %1622 = vmatmul.mubr.bf16.gmra.mxu0 %v916
  %v1623 = vpop.f32.mrf.mxu0
  %v1624 = vadd.f32 %v283, %v1623
  %v1625 = vpop.f32.mrf.mxu0
  %v1626 = vpop.f32.mrf.mxu0
  %v1627 = vadd.f32 %v283, %v1626
  %v1628 = vpop.f32.mrf.mxu0
  %1629 = vmatprep.mubr.bf16.mxu0 %v922
  %1630 = vmatmul.mubr.bf16.gmra.mxu0 %v921
  %v1631 = vpop.f32.mrf.mxu0
  %v1632 = vadd.f32 %v283, %v1631
  %v1633 = vpop.f32.mrf.mxu0
  %v1634 = vpop.f32.mrf.mxu0
  %v1635 = vadd.f32 %v283, %v1634
  %v1636 = vpop.f32.mrf.mxu0
  %1637 = vmatprep.mubr.bf16.mxu0 %v927
  %1638 = vmatmul.mubr.bf16.gmra.mxu0 %v926
  %v1639 = vpop.f32.mrf.mxu0
  %v1640 = vadd.f32 %v283, %v1639
  %v1641 = vpop.f32.mrf.mxu0
  %v1642 = vpop.f32.mrf.mxu0
  %v1643 = vadd.f32 %v283, %v1642
  %v1644 = vpop.f32.mrf.mxu0
  %1645 = vmatprep.mubr.bf16.mxu0 %v932
  %1646 = vmatmul.mubr.bf16.gmra.mxu0 %v931
  %v1647 = vpop.f32.mrf.mxu0
  %v1648 = vadd.f32 %v283, %v1647
  %v1649 = vpop.f32.mrf.mxu0
  %v1650 = vpop.f32.mrf.mxu0
  %v1651 = vadd.f32 %v283, %v1650
  %v1652 = vpop.f32.mrf.mxu0
  %1653 = vmatprep.mubr.bf16.mxu0 %v937
  %1654 = vmatmul.mubr.bf16.gmra.mxu0 %v936
  %v1655 = vpop.f32.mrf.mxu0
  %v1656 = vadd.f32 %v283, %v1655
  %v1657 = vpop.f32.mrf.mxu0
  %v1658 = vpop.f32.mrf.mxu0
  %v1659 = vadd.f32 %v283, %v1658
  %v1660 = vpop.f32.mrf.mxu0
  %1661 = vmatprep.mubr.bf16.mxu0 %v942
  %1662 = vmatmul.mubr.bf16.gmra.mxu0 %v941
  %v1663 = vpop.f32.mrf.mxu0
  %v1664 = vadd.f32 %v283, %v1663
  %v1665 = vpop.f32.mrf.mxu0
  %v1666 = vpop.f32.mrf.mxu0
  %v1667 = vadd.f32 %v283, %v1666
  %v1668 = vpop.f32.mrf.mxu0
  %1669 = vmatprep.mubr.bf16.mxu0 %v947
  %1670 = vmatmul.mubr.bf16.gmra.mxu0 %v946
  %v1671 = vpop.f32.mrf.mxu0
  %v1672 = vadd.f32 %v283, %v1671
  %v1673 = vpop.f32.mrf.mxu0
  %v1674 = vpop.f32.mrf.mxu0
  %v1675 = vadd.f32 %v283, %v1674
  %v1676 = vpop.f32.mrf.mxu0
  %1677 = vmatprep.mubr.bf16.mxu0 %v952
  %1678 = vmatmul.mubr.bf16.gmra.mxu0 %v951
  %v1679 = vpop.f32.mrf.mxu0
  %v1680 = vadd.f32 %v283, %v1679
  %v1681 = vpop.f32.mrf.mxu0
  %v1682 = vpop.f32.mrf.mxu0
  %v1683 = vadd.f32 %v283, %v1682
  %v1684 = vpop.f32.mrf.mxu0
  %1685 = vdwg.mxu0
  %1686 = vmatprep.subr.bf16.mxu0 0
  %1687 = vmatpush1.bf16.msra.mxu0 %v1251
  %1688 = vmatprep.subr.bf16.mxu0 0
  %1689 = vmatpush1.bf16.msra.mxu0 %v1250
  %1690 = vmatprep.subr.bf16.mxu0 0
  %1691 = vmatpush1.bf16.msra.mxu0 %v1249
  %1692 = vmatprep.subr.bf16.mxu0 0
  %1693 = vmatpush1.bf16.msra.mxu0 %v1248
  %1694 = vmatprep.subr.bf16.mxu0 0
  %1695 = vmatpush1.bf16.msra.mxu0 %v1247
  %1696 = vmatprep.subr.bf16.mxu0 0
  %1697 = vmatpush1.bf16.msra.mxu0 %v1246
  %1698 = vmatprep.subr.bf16.mxu0 0
  %1699 = vmatpush1.bf16.msra.mxu0 %v1245
  %1700 = vmatprep.subr.bf16.mxu0 0
  %1701 = vmatpush1.bf16.msra.mxu0 %v1244
  %1702 = vmatprep.subr.bf16.mxu0 0
  %1703 = vmatpush2.bf16.msra.mxu0 %v1259
  %1704 = vmatprep.subr.bf16.mxu0 0
  %1705 = vmatpush2.bf16.msra.mxu0 %v1258
  %1706 = vmatprep.subr.bf16.mxu0 0
  %1707 = vmatpush2.bf16.msra.mxu0 %v1257
  %1708 = vmatprep.subr.bf16.mxu0 0
  %1709 = vmatpush2.bf16.msra.mxu0 %v1256
  %1710 = vmatprep.subr.bf16.mxu0 0
  %1711 = vmatpush2.bf16.msra.mxu0 %v1255
  %1712 = vmatprep.subr.bf16.mxu0 0
  %1713 = vmatpush2.bf16.msra.mxu0 %v1254
  %1714 = vmatprep.subr.bf16.mxu0 0
  %1715 = vmatpush2.bf16.msra.mxu0 %v1253
  %1716 = vmatprep.subr.bf16.mxu0 0
  %1717 = vmatpush2.bf16.msra.mxu0 %v1252
  %1718 = vmatprep.mubr.bf16.mxu0 %v799
  %1719 = vmatmul.mubr.bf16.gmra.mxu0 %v798
  %v1720 = vpop.f32.mrf.mxu0
  %v1721 = vadd.f32 %v1432, %v1720
  %v1722 = vpop.f32.mrf.mxu0
  %v1723 = vpop.f32.mrf.mxu0
  %v1724 = vadd.f32 %v1435, %v1723
  %v1725 = vpop.f32.mrf.mxu0
  %1726 = vmatprep.mubr.bf16.mxu0 %v804
  %1727 = vmatmul.mubr.bf16.gmra.mxu0 %v803
  %v1728 = vpop.f32.mrf.mxu0
  %v1729 = vadd.f32 %v1440, %v1728
  %v1730 = vpop.f32.mrf.mxu0
  %v1731 = vpop.f32.mrf.mxu0
  %v1732 = vadd.f32 %v1443, %v1731
  %v1733 = vpop.f32.mrf.mxu0
  %1734 = vmatprep.mubr.bf16.mxu0 %v809
  %1735 = vmatmul.mubr.bf16.gmra.mxu0 %v808
  %v1736 = vpop.f32.mrf.mxu0
  %v1737 = vadd.f32 %v1448, %v1736
  %v1738 = vpop.f32.mrf.mxu0
  %v1739 = vpop.f32.mrf.mxu0
  %v1740 = vadd.f32 %v1451, %v1739
  %v1741 = vpop.f32.mrf.mxu0
  %1742 = vmatprep.mubr.bf16.mxu0 %v814
  %1743 = vmatmul.mubr.bf16.gmra.mxu0 %v813
  %v1744 = vpop.f32.mrf.mxu0
  %v1745 = vadd.f32 %v1456, %v1744
  %v1746 = vpop.f32.mrf.mxu0
  %v1747 = vpop.f32.mrf.mxu0
  %v1748 = vadd.f32 %v1459, %v1747
  %v1749 = vpop.f32.mrf.mxu0
  %1750 = vmatprep.mubr.bf16.mxu0 %v819
  %1751 = vmatmul.mubr.bf16.gmra.mxu0 %v818
  %v1752 = vpop.f32.mrf.mxu0
  %v1753 = vadd.f32 %v1464, %v1752
  %v1754 = vpop.f32.mrf.mxu0
  %v1755 = vpop.f32.mrf.mxu0
  %v1756 = vadd.f32 %v1467, %v1755
  %v1757 = vpop.f32.mrf.mxu0
  %1758 = vmatprep.mubr.bf16.mxu0 %v824
  %1759 = vmatmul.mubr.bf16.gmra.mxu0 %v823
  %v1760 = vpop.f32.mrf.mxu0
  %v1761 = vadd.f32 %v1472, %v1760
  %v1762 = vpop.f32.mrf.mxu0
  %v1763 = vpop.f32.mrf.mxu0
  %v1764 = vadd.f32 %v1475, %v1763
  %v1765 = vpop.f32.mrf.mxu0
  %1766 = vmatprep.mubr.bf16.mxu0 %v829
  %1767 = vmatmul.mubr.bf16.gmra.mxu0 %v828
  %v1768 = vpop.f32.mrf.mxu0
  %v1769 = vadd.f32 %v1480, %v1768
  %v1770 = vpop.f32.mrf.mxu0
  %v1771 = vpop.f32.mrf.mxu0
  %v1772 = vadd.f32 %v1483, %v1771
  %v1773 = vpop.f32.mrf.mxu0
  %1774 = vmatprep.mubr.bf16.mxu0 %v834
  %1775 = vmatmul.mubr.bf16.gmra.mxu0 %v833
  %v1776 = vpop.f32.mrf.mxu0
  %v1777 = vadd.f32 %v1488, %v1776
  %v1778 = vpop.f32.mrf.mxu0
  %v1779 = vpop.f32.mrf.mxu0
  %v1780 = vadd.f32 %v1491, %v1779
  %v1781 = vpop.f32.mrf.mxu0
  %1782 = vmatprep.mubr.bf16.mxu0 %v839
  %1783 = vmatmul.mubr.bf16.gmra.mxu0 %v838
  %v1784 = vpop.f32.mrf.mxu0
  %v1785 = vadd.f32 %v1496, %v1784
  %v1786 = vpop.f32.mrf.mxu0
  %v1787 = vpop.f32.mrf.mxu0
  %v1788 = vadd.f32 %v1499, %v1787
  %v1789 = vpop.f32.mrf.mxu0
  %1790 = vmatprep.mubr.bf16.mxu0 %v844
  %1791 = vmatmul.mubr.bf16.gmra.mxu0 %v843
  %v1792 = vpop.f32.mrf.mxu0
  %v1793 = vadd.f32 %v1504, %v1792
  %v1794 = vpop.f32.mrf.mxu0
  %v1795 = vpop.f32.mrf.mxu0
  %v1796 = vadd.f32 %v1507, %v1795
  %v1797 = vpop.f32.mrf.mxu0
  %1798 = vmatprep.mubr.bf16.mxu0 %v849
  %1799 = vmatmul.mubr.bf16.gmra.mxu0 %v848
  %v1800 = vpop.f32.mrf.mxu0
  %v1801 = vadd.f32 %v1512, %v1800
  %v1802 = vpop.f32.mrf.mxu0
  %v1803 = vpop.f32.mrf.mxu0
  %v1804 = vadd.f32 %v1515, %v1803
  %v1805 = vpop.f32.mrf.mxu0
  %1806 = vmatprep.mubr.bf16.mxu0 %v854
  %1807 = vmatmul.mubr.bf16.gmra.mxu0 %v853
  %v1808 = vpop.f32.mrf.mxu0
  %v1809 = vadd.f32 %v1520, %v1808
  %v1810 = vpop.f32.mrf.mxu0
  %v1811 = vpop.f32.mrf.mxu0
  %v1812 = vadd.f32 %v1523, %v1811
  %v1813 = vpop.f32.mrf.mxu0
  %1814 = vmatprep.mubr.bf16.mxu0 %v859
  %1815 = vmatmul.mubr.bf16.gmra.mxu0 %v858
  %v1816 = vpop.f32.mrf.mxu0
  %v1817 = vadd.f32 %v1528, %v1816
  %v1818 = vpop.f32.mrf.mxu0
  %v1819 = vpop.f32.mrf.mxu0
  %v1820 = vadd.f32 %v1531, %v1819
  %v1821 = vpop.f32.mrf.mxu0
  %1822 = vmatprep.mubr.bf16.mxu0 %v864
  %1823 = vmatmul.mubr.bf16.gmra.mxu0 %v863
  %v1824 = vpop.f32.mrf.mxu0
  %v1825 = vadd.f32 %v1536, %v1824
  %v1826 = vpop.f32.mrf.mxu0
  %v1827 = vpop.f32.mrf.mxu0
  %v1828 = vadd.f32 %v1539, %v1827
  %v1829 = vpop.f32.mrf.mxu0
  %1830 = vmatprep.mubr.bf16.mxu0 %v869
  %1831 = vmatmul.mubr.bf16.gmra.mxu0 %v868
  %v1832 = vpop.f32.mrf.mxu0
  %v1833 = vadd.f32 %v1544, %v1832
  %v1834 = vpop.f32.mrf.mxu0
  %v1835 = vpop.f32.mrf.mxu0
  %v1836 = vadd.f32 %v1547, %v1835
  %v1837 = vpop.f32.mrf.mxu0
  %1838 = vmatprep.mubr.bf16.mxu0 %v874
  %1839 = vmatmul.mubr.bf16.gmra.mxu0 %v873
  %v1840 = vpop.f32.mrf.mxu0
  %v1841 = vadd.f32 %v1552, %v1840
  %v1842 = vpop.f32.mrf.mxu0
  %v1843 = vpop.f32.mrf.mxu0
  %v1844 = vadd.f32 %v1555, %v1843
  %v1845 = vpop.f32.mrf.mxu0
  %1846 = vmatprep.mubr.bf16.mxu0 %v879
  %1847 = vmatmul.mubr.bf16.gmra.mxu0 %v878
  %v1848 = vpop.f32.mrf.mxu0
  %v1849 = vadd.f32 %v1560, %v1848
  %v1850 = vpop.f32.mrf.mxu0
  %v1851 = vpop.f32.mrf.mxu0
  %v1852 = vadd.f32 %v1563, %v1851
  %v1853 = vpop.f32.mrf.mxu0
  %1854 = vmatprep.mubr.bf16.mxu0 %v884
  %1855 = vmatmul.mubr.bf16.gmra.mxu0 %v883
  %v1856 = vpop.f32.mrf.mxu0
  %v1857 = vadd.f32 %v1568, %v1856
  %v1858 = vpop.f32.mrf.mxu0
  %v1859 = vpop.f32.mrf.mxu0
  %v1860 = vadd.f32 %v1571, %v1859
  %v1861 = vpop.f32.mrf.mxu0
  %1862 = vmatprep.mubr.bf16.mxu0 %v889
  %1863 = vmatmul.mubr.bf16.gmra.mxu0 %v888
  %v1864 = vpop.f32.mrf.mxu0
  %v1865 = vadd.f32 %v1576, %v1864
  %v1866 = vpop.f32.mrf.mxu0
  %v1867 = vpop.f32.mrf.mxu0
  %v1868 = vadd.f32 %v1579, %v1867
  %v1869 = vpop.f32.mrf.mxu0
  %1870 = vmatprep.mubr.bf16.mxu0 %v894
  %1871 = vmatmul.mubr.bf16.gmra.mxu0 %v893
  %v1872 = vpop.f32.mrf.mxu0
  %v1873 = vadd.f32 %v1584, %v1872
  %v1874 = vpop.f32.mrf.mxu0
  %v1875 = vpop.f32.mrf.mxu0
  %v1876 = vadd.f32 %v1587, %v1875
  %v1877 = vpop.f32.mrf.mxu0
  %1878 = vmatprep.mubr.bf16.mxu0 %v899
  %1879 = vmatmul.mubr.bf16.gmra.mxu0 %v898
  %v1880 = vpop.f32.mrf.mxu0
  %v1881 = vadd.f32 %v1592, %v1880
  %v1882 = vpop.f32.mrf.mxu0
  %v1883 = vpop.f32.mrf.mxu0
  %v1884 = vadd.f32 %v1595, %v1883
  %v1885 = vpop.f32.mrf.mxu0
  %1886 = vmatprep.mubr.bf16.mxu0 %v904
  %1887 = vmatmul.mubr.bf16.gmra.mxu0 %v903
  %v1888 = vpop.f32.mrf.mxu0
  %v1889 = vadd.f32 %v1600, %v1888
  %v1890 = vpop.f32.mrf.mxu0
  %v1891 = vpop.f32.mrf.mxu0
  %v1892 = vadd.f32 %v1603, %v1891
  %v1893 = vpop.f32.mrf.mxu0
  %1894 = vmatprep.mubr.bf16.mxu0 %v909
  %1895 = vmatmul.mubr.bf16.gmra.mxu0 %v908
  %v1896 = vpop.f32.mrf.mxu0
  %v1897 = vadd.f32 %v1608, %v1896
  %v1898 = vpop.f32.mrf.mxu0
  %v1899 = vpop.f32.mrf.mxu0
  %v1900 = vadd.f32 %v1611, %v1899
  %v1901 = vpop.f32.mrf.mxu0
  %1902 = vmatprep.mubr.bf16.mxu0 %v914
  %1903 = vmatmul.mubr.bf16.gmra.mxu0 %v913
  %v1904 = vpop.f32.mrf.mxu0
  %v1905 = vadd.f32 %v1616, %v1904
  %v1906 = vpop.f32.mrf.mxu0
  %v1907 = vpop.f32.mrf.mxu0
  %v1908 = vadd.f32 %v1619, %v1907
  %v1909 = vpop.f32.mrf.mxu0
  %1910 = vmatprep.mubr.bf16.mxu0 %v919
  %1911 = vmatmul.mubr.bf16.gmra.mxu0 %v918
  %v1912 = vpop.f32.mrf.mxu0
  %v1913 = vadd.f32 %v1624, %v1912
  %v1914 = vpop.f32.mrf.mxu0
  %v1915 = vpop.f32.mrf.mxu0
  %v1916 = vadd.f32 %v1627, %v1915
  %v1917 = vpop.f32.mrf.mxu0
  %1918 = vmatprep.mubr.bf16.mxu0 %v924
  %1919 = vmatmul.mubr.bf16.gmra.mxu0 %v923
  %v1920 = vpop.f32.mrf.mxu0
  %v1921 = vadd.f32 %v1632, %v1920
  %v1922 = vpop.f32.mrf.mxu0
  %v1923 = vpop.f32.mrf.mxu0
  %v1924 = vadd.f32 %v1635, %v1923
  %v1925 = vpop.f32.mrf.mxu0
  %1926 = vmatprep.mubr.bf16.mxu0 %v929
  %1927 = vmatmul.mubr.bf16.gmra.mxu0 %v928
  %v1928 = vpop.f32.mrf.mxu0
  %v1929 = vadd.f32 %v1640, %v1928
  %v1930 = vpop.f32.mrf.mxu0
  %v1931 = vpop.f32.mrf.mxu0
  %v1932 = vadd.f32 %v1643, %v1931
  %v1933 = vpop.f32.mrf.mxu0
  %1934 = vmatprep.mubr.bf16.mxu0 %v934
  %1935 = vmatmul.mubr.bf16.gmra.mxu0 %v933
  %v1936 = vpop.f32.mrf.mxu0
  %v1937 = vadd.f32 %v1648, %v1936
  %v1938 = vpop.f32.mrf.mxu0
  %v1939 = vpop.f32.mrf.mxu0
  %v1940 = vadd.f32 %v1651, %v1939
  %v1941 = vpop.f32.mrf.mxu0
  %1942 = vmatprep.mubr.bf16.mxu0 %v939
  %1943 = vmatmul.mubr.bf16.gmra.mxu0 %v938
  %v1944 = vpop.f32.mrf.mxu0
  %v1945 = vadd.f32 %v1656, %v1944
  %v1946 = vpop.f32.mrf.mxu0
  %v1947 = vpop.f32.mrf.mxu0
  %v1948 = vadd.f32 %v1659, %v1947
  %v1949 = vpop.f32.mrf.mxu0
  %1950 = vmatprep.mubr.bf16.mxu0 %v944
  %1951 = vmatmul.mubr.bf16.gmra.mxu0 %v943
  %v1952 = vpop.f32.mrf.mxu0
  %v1953 = vadd.f32 %v1664, %v1952
  %v1954 = vpop.f32.mrf.mxu0
  %v1955 = vpop.f32.mrf.mxu0
  %v1956 = vadd.f32 %v1667, %v1955
  %v1957 = vpop.f32.mrf.mxu0
  %1958 = vmatprep.mubr.bf16.mxu0 %v949
  %1959 = vmatmul.mubr.bf16.gmra.mxu0 %v948
  %v1960 = vpop.f32.mrf.mxu0
  %v1961 = vadd.f32 %v1672, %v1960
  %v1962 = vpop.f32.mrf.mxu0
  %v1963 = vpop.f32.mrf.mxu0
  %v1964 = vadd.f32 %v1675, %v1963
  %v1965 = vpop.f32.mrf.mxu0
  %1966 = vmatprep.mubr.bf16.mxu0 %v954
  %1967 = vmatmul.mubr.bf16.gmra.mxu0 %v953
  %v1968 = vpop.f32.mrf.mxu0
  %v1969 = vadd.f32 %v1680, %v1968
  %v1970 = vpop.f32.mrf.mxu0
  %v1971 = vpop.f32.mrf.mxu0
  %v1972 = vadd.f32 %v1683, %v1971
  %v1973 = vpop.f32.mrf.mxu0
  %1974 = vdwg.mxu0
  %1975 = vmatprep.subr.bf16.mxu0 0
  %1976 = vmatpush1.bf16.msra.mxu0 0
  %1977 = vmatprep.subr.bf16.mxu0 0
  %1978 = vmatpush1.bf16.msra.mxu0 0
  %1979 = vmatprep.subr.bf16.mxu0 0
  %1980 = vmatpush1.bf16.msra.mxu0 0
  %1981 = vmatprep.subr.bf16.mxu0 0
  %1982 = vmatpush1.bf16.msra.mxu0 0
  %1983 = vmatprep.subr.bf16.mxu0 0
  %1984 = vmatpush1.bf16.msra.mxu0 %v1263
  %1985 = vmatprep.subr.bf16.mxu0 0
  %1986 = vmatpush1.bf16.msra.mxu0 %v1262
  %1987 = vmatprep.subr.bf16.mxu0 0
  %1988 = vmatpush1.bf16.msra.mxu0 %v1261
  %1989 = vmatprep.subr.bf16.mxu0 0
  %1990 = vmatpush1.bf16.msra.mxu0 %v1260
  %1991 = vmatprep.subr.bf16.mxu0 0
  %1992 = vmatpush2.bf16.msra.mxu0 0
  %1993 = vmatprep.subr.bf16.mxu0 0
  %1994 = vmatpush2.bf16.msra.mxu0 0
  %1995 = vmatprep.subr.bf16.mxu0 0
  %1996 = vmatpush2.bf16.msra.mxu0 0
  %1997 = vmatprep.subr.bf16.mxu0 0
  %1998 = vmatpush2.bf16.msra.mxu0 0
  %1999 = vmatprep.subr.bf16.mxu0 0
  %2000 = vmatpush2.bf16.msra.mxu0 0
  %2001 = vmatprep.subr.bf16.mxu0 0
  %2002 = vmatpush2.bf16.msra.mxu0 0
  %2003 = vmatprep.subr.bf16.mxu0 0
  %2004 = vmatpush2.bf16.msra.mxu0 0
  %2005 = vmatprep.subr.bf16.mxu0 0
  %2006 = vmatpush2.bf16.msra.mxu0 0
  %2007 = vmatprep.mubr.bf16.mxu0 0
  %2008 = vmatmul.mubr.bf16.gmra.mxu0 %v1302
  %v2009 = vpop.f32.mrf.mxu0
  %v2010 = vadd.f32 %v1721, %v2009
  %v2011 = vpop.f32.mrf.mxu0
  %v2012 = vpop.f32.mrf.mxu0
  %v2013 = vadd.f32 %v1724, %v2012
  %v2014 = vpop.f32.mrf.mxu0
  %2015 = vmatprep.mubr.bf16.mxu0 0
  %2016 = vmatmul.mubr.bf16.gmra.mxu0 %v1305
  %v2017 = vpop.f32.mrf.mxu0
  %v2018 = vadd.f32 %v1729, %v2017
  %v2019 = vpop.f32.mrf.mxu0
  %v2020 = vpop.f32.mrf.mxu0
  %v2021 = vadd.f32 %v1732, %v2020
  %v2022 = vpop.f32.mrf.mxu0
  %2023 = vmatprep.mubr.bf16.mxu0 0
  %2024 = vmatmul.mubr.bf16.gmra.mxu0 %v1308
  %v2025 = vpop.f32.mrf.mxu0
  %v2026 = vadd.f32 %v1737, %v2025
  %v2027 = vpop.f32.mrf.mxu0
  %v2028 = vpop.f32.mrf.mxu0
  %v2029 = vadd.f32 %v1740, %v2028
  %v2030 = vpop.f32.mrf.mxu0
  %2031 = vmatprep.mubr.bf16.mxu0 0
  %2032 = vmatmul.mubr.bf16.gmra.mxu0 %v1311
  %v2033 = vpop.f32.mrf.mxu0
  %v2034 = vadd.f32 %v1745, %v2033
  %v2035 = vpop.f32.mrf.mxu0
  %v2036 = vpop.f32.mrf.mxu0
  %v2037 = vadd.f32 %v1748, %v2036
  %v2038 = vpop.f32.mrf.mxu0
  %2039 = vmatprep.mubr.bf16.mxu0 0
  %2040 = vmatmul.mubr.bf16.gmra.mxu0 %v1314
  %v2041 = vpop.f32.mrf.mxu0
  %v2042 = vadd.f32 %v1753, %v2041
  %v2043 = vpop.f32.mrf.mxu0
  %v2044 = vpop.f32.mrf.mxu0
  %v2045 = vadd.f32 %v1756, %v2044
  %v2046 = vpop.f32.mrf.mxu0
  %2047 = vmatprep.mubr.bf16.mxu0 0
  %2048 = vmatmul.mubr.bf16.gmra.mxu0 %v1317
  %v2049 = vpop.f32.mrf.mxu0
  %v2050 = vadd.f32 %v1761, %v2049
  %v2051 = vpop.f32.mrf.mxu0
  %v2052 = vpop.f32.mrf.mxu0
  %v2053 = vadd.f32 %v1764, %v2052
  %v2054 = vpop.f32.mrf.mxu0
  %2055 = vmatprep.mubr.bf16.mxu0 0
  %2056 = vmatmul.mubr.bf16.gmra.mxu0 %v1320
  %v2057 = vpop.f32.mrf.mxu0
  %v2058 = vadd.f32 %v1769, %v2057
  %v2059 = vpop.f32.mrf.mxu0
  %v2060 = vpop.f32.mrf.mxu0
  %v2061 = vadd.f32 %v1772, %v2060
  %v2062 = vpop.f32.mrf.mxu0
  %2063 = vmatprep.mubr.bf16.mxu0 0
  %2064 = vmatmul.mubr.bf16.gmra.mxu0 %v1323
  %v2065 = vpop.f32.mrf.mxu0
  %v2066 = vadd.f32 %v1777, %v2065
  %v2067 = vpop.f32.mrf.mxu0
  %v2068 = vpop.f32.mrf.mxu0
  %v2069 = vadd.f32 %v1780, %v2068
  %v2070 = vpop.f32.mrf.mxu0
  %2071 = vmatprep.mubr.bf16.mxu0 0
  %2072 = vmatmul.mubr.bf16.gmra.mxu0 %v1326
  %v2073 = vpop.f32.mrf.mxu0
  %v2074 = vadd.f32 %v1785, %v2073
  %v2075 = vpop.f32.mrf.mxu0
  %v2076 = vpop.f32.mrf.mxu0
  %v2077 = vadd.f32 %v1788, %v2076
  %v2078 = vpop.f32.mrf.mxu0
  %2079 = vmatprep.mubr.bf16.mxu0 0
  %2080 = vmatmul.mubr.bf16.gmra.mxu0 %v1329
  %v2081 = vpop.f32.mrf.mxu0
  %v2082 = vadd.f32 %v1793, %v2081
  %v2083 = vpop.f32.mrf.mxu0
  %v2084 = vpop.f32.mrf.mxu0
  %v2085 = vadd.f32 %v1796, %v2084
  %v2086 = vpop.f32.mrf.mxu0
  %2087 = vmatprep.mubr.bf16.mxu0 0
  %2088 = vmatmul.mubr.bf16.gmra.mxu0 %v1332
  %v2089 = vpop.f32.mrf.mxu0
  %v2090 = vadd.f32 %v1801, %v2089
  %v2091 = vpop.f32.mrf.mxu0
  %v2092 = vpop.f32.mrf.mxu0
  %v2093 = vadd.f32 %v1804, %v2092
  %v2094 = vpop.f32.mrf.mxu0
  %2095 = vmatprep.mubr.bf16.mxu0 0
  %2096 = vmatmul.mubr.bf16.gmra.mxu0 %v1335
  %v2097 = vpop.f32.mrf.mxu0
  %v2098 = vadd.f32 %v1809, %v2097
  %v2099 = vpop.f32.mrf.mxu0
  %v2100 = vpop.f32.mrf.mxu0
  %v2101 = vadd.f32 %v1812, %v2100
  %v2102 = vpop.f32.mrf.mxu0
  %2103 = vmatprep.mubr.bf16.mxu0 0
  %2104 = vmatmul.mubr.bf16.gmra.mxu0 %v1338
  %v2105 = vpop.f32.mrf.mxu0
  %v2106 = vadd.f32 %v1817, %v2105
  %v2107 = vpop.f32.mrf.mxu0
  %v2108 = vpop.f32.mrf.mxu0
  %v2109 = vadd.f32 %v1820, %v2108
  %v2110 = vpop.f32.mrf.mxu0
  %2111 = vmatprep.mubr.bf16.mxu0 0
  %2112 = vmatmul.mubr.bf16.gmra.mxu0 %v1341
  %v2113 = vpop.f32.mrf.mxu0
  %v2114 = vadd.f32 %v1825, %v2113
  %v2115 = vpop.f32.mrf.mxu0
  %v2116 = vpop.f32.mrf.mxu0
  %v2117 = vadd.f32 %v1828, %v2116
  %v2118 = vpop.f32.mrf.mxu0
  %2119 = vmatprep.mubr.bf16.mxu0 0
  %2120 = vmatmul.mubr.bf16.gmra.mxu0 %v1344
  %v2121 = vpop.f32.mrf.mxu0
  %v2122 = vadd.f32 %v1833, %v2121
  %v2123 = vpop.f32.mrf.mxu0
  %v2124 = vpop.f32.mrf.mxu0
  %v2125 = vadd.f32 %v1836, %v2124
  %v2126 = vpop.f32.mrf.mxu0
  %2127 = vmatprep.mubr.bf16.mxu0 0
  %2128 = vmatmul.mubr.bf16.gmra.mxu0 %v1347
  %v2129 = vpop.f32.mrf.mxu0
  %v2130 = vadd.f32 %v1841, %v2129
  %v2131 = vpop.f32.mrf.mxu0
  %v2132 = vpop.f32.mrf.mxu0
  %v2133 = vadd.f32 %v1844, %v2132
  %v2134 = vpop.f32.mrf.mxu0
  %2135 = vmatprep.mubr.bf16.mxu0 0
  %2136 = vmatmul.mubr.bf16.gmra.mxu0 %v1350
  %v2137 = vpop.f32.mrf.mxu0
  %v2138 = vadd.f32 %v1849, %v2137
  %v2139 = vpop.f32.mrf.mxu0
  %v2140 = vpop.f32.mrf.mxu0
  %v2141 = vadd.f32 %v1852, %v2140
  %v2142 = vpop.f32.mrf.mxu0
  %2143 = vmatprep.mubr.bf16.mxu0 0
  %2144 = vmatmul.mubr.bf16.gmra.mxu0 %v1353
  %v2145 = vpop.f32.mrf.mxu0
  %v2146 = vadd.f32 %v1857, %v2145
  %v2147 = vpop.f32.mrf.mxu0
  %v2148 = vpop.f32.mrf.mxu0
  %v2149 = vadd.f32 %v1860, %v2148
  %v2150 = vpop.f32.mrf.mxu0
  %2151 = vmatprep.mubr.bf16.mxu0 0
  %2152 = vmatmul.mubr.bf16.gmra.mxu0 %v1356
  %v2153 = vpop.f32.mrf.mxu0
  %v2154 = vadd.f32 %v1865, %v2153
  %v2155 = vpop.f32.mrf.mxu0
  %v2156 = vpop.f32.mrf.mxu0
  %v2157 = vadd.f32 %v1868, %v2156
  %v2158 = vpop.f32.mrf.mxu0
  %2159 = vmatprep.mubr.bf16.mxu0 0
  %2160 = vmatmul.mubr.bf16.gmra.mxu0 %v1359
  %v2161 = vpop.f32.mrf.mxu0
  %v2162 = vadd.f32 %v1873, %v2161
  %v2163 = vpop.f32.mrf.mxu0
  %v2164 = vpop.f32.mrf.mxu0
  %v2165 = vadd.f32 %v1876, %v2164
  %v2166 = vpop.f32.mrf.mxu0
  %2167 = vmatprep.mubr.bf16.mxu0 0
  %2168 = vmatmul.mubr.bf16.gmra.mxu0 %v1362
  %v2169 = vpop.f32.mrf.mxu0
  %v2170 = vadd.f32 %v1881, %v2169
  %v2171 = vpop.f32.mrf.mxu0
  %v2172 = vpop.f32.mrf.mxu0
  %v2173 = vadd.f32 %v1884, %v2172
  %v2174 = vpop.f32.mrf.mxu0
  %2175 = vmatprep.mubr.bf16.mxu0 0
  %2176 = vmatmul.mubr.bf16.gmra.mxu0 %v1365
  %v2177 = vpop.f32.mrf.mxu0
  %v2178 = vadd.f32 %v1889, %v2177
  %v2179 = vpop.f32.mrf.mxu0
  %v2180 = vpop.f32.mrf.mxu0
  %v2181 = vadd.f32 %v1892, %v2180
  %v2182 = vpop.f32.mrf.mxu0
  %2183 = vmatprep.mubr.bf16.mxu0 0
  %2184 = vmatmul.mubr.bf16.gmra.mxu0 %v1368
  %v2185 = vpop.f32.mrf.mxu0
  %v2186 = vadd.f32 %v1897, %v2185
  %v2187 = vpop.f32.mrf.mxu0
  %v2188 = vpop.f32.mrf.mxu0
  %v2189 = vadd.f32 %v1900, %v2188
  %v2190 = vpop.f32.mrf.mxu0
  %2191 = vmatprep.mubr.bf16.mxu0 0
  %2192 = vmatmul.mubr.bf16.gmra.mxu0 %v1371
  %v2193 = vpop.f32.mrf.mxu0
  %v2194 = vadd.f32 %v1905, %v2193
  %v2195 = vpop.f32.mrf.mxu0
  %v2196 = vpop.f32.mrf.mxu0
  %v2197 = vadd.f32 %v1908, %v2196
  %v2198 = vpop.f32.mrf.mxu0
  %2199 = vmatprep.mubr.bf16.mxu0 0
  %2200 = vmatmul.mubr.bf16.gmra.mxu0 %v1374
  %v2201 = vpop.f32.mrf.mxu0
  %v2202 = vadd.f32 %v1913, %v2201
  %v2203 = vpop.f32.mrf.mxu0
  %v2204 = vpop.f32.mrf.mxu0
  %v2205 = vadd.f32 %v1916, %v2204
  %v2206 = vpop.f32.mrf.mxu0
  %2207 = vmatprep.mubr.bf16.mxu0 0
  %2208 = vmatmul.mubr.bf16.gmra.mxu0 %v1377
  %v2209 = vpop.f32.mrf.mxu0
  %v2210 = vadd.f32 %v1921, %v2209
  %v2211 = vpop.f32.mrf.mxu0
  %v2212 = vpop.f32.mrf.mxu0
  %v2213 = vadd.f32 %v1924, %v2212
  %v2214 = vpop.f32.mrf.mxu0
  %2215 = vmatprep.mubr.bf16.mxu0 0
  %2216 = vmatmul.mubr.bf16.gmra.mxu0 %v1380
  %v2217 = vpop.f32.mrf.mxu0
  %v2218 = vadd.f32 %v1929, %v2217
  %v2219 = vpop.f32.mrf.mxu0
  %v2220 = vpop.f32.mrf.mxu0
  %v2221 = vadd.f32 %v1932, %v2220
  %v2222 = vpop.f32.mrf.mxu0
  %2223 = vmatprep.mubr.bf16.mxu0 0
  %2224 = vmatmul.mubr.bf16.gmra.mxu0 %v1383
  %v2225 = vpop.f32.mrf.mxu0
  %v2226 = vadd.f32 %v1937, %v2225
  %v2227 = vpop.f32.mrf.mxu0
  %v2228 = vpop.f32.mrf.mxu0
  %v2229 = vadd.f32 %v1940, %v2228
  %v2230 = vpop.f32.mrf.mxu0
  %2231 = vmatprep.mubr.bf16.mxu0 0
  %2232 = vmatmul.mubr.bf16.gmra.mxu0 %v1386
  %v2233 = vpop.f32.mrf.mxu0
  %v2234 = vadd.f32 %v1945, %v2233
  %v2235 = vpop.f32.mrf.mxu0
  %v2236 = vpop.f32.mrf.mxu0
  %v2237 = vadd.f32 %v1948, %v2236
  %v2238 = vpop.f32.mrf.mxu0
  %2239 = vmatprep.mubr.bf16.mxu0 0
  %2240 = vmatmul.mubr.bf16.gmra.mxu0 %v1389
  %v2241 = vpop.f32.mrf.mxu0
  %v2242 = vadd.f32 %v1953, %v2241
  %v2243 = vpop.f32.mrf.mxu0
  %v2244 = vpop.f32.mrf.mxu0
  %v2245 = vadd.f32 %v1956, %v2244
  %v2246 = vpop.f32.mrf.mxu0
  %2247 = vmatprep.mubr.bf16.mxu0 0
  %2248 = vmatmul.mubr.bf16.gmra.mxu0 %v1392
  %v2249 = vpop.f32.mrf.mxu0
  %v2250 = vadd.f32 %v1961, %v2249
  %v2251 = vpop.f32.mrf.mxu0
  %v2252 = vpop.f32.mrf.mxu0
  %v2253 = vadd.f32 %v1964, %v2252
  %v2254 = vpop.f32.mrf.mxu0
  %2255 = vmatprep.mubr.bf16.mxu0 0
  %2256 = vmatmul.mubr.bf16.gmra.mxu0 %v1395
  %v2257 = vpop.f32.mrf.mxu0
  %v2258 = vadd.f32 %v1969, %v2257
  %v2259 = vpop.f32.mrf.mxu0
  %v2260 = vpop.f32.mrf.mxu0
  %v2261 = vadd.f32 %v1972, %v2260
  %v2262 = vpop.f32.mrf.mxu0
  %2263 = vdwg.mxu0
  %v2264 = vmax.f32 %v2010, 0.0
  %v2265 = vmax.f32 %v2013, 0.0
  %v2266 = vmax.f32 %v2018, 0.0
  %v2267 = vmax.f32 %v2021, 0.0
  %v2268 = vmax.f32 %v2026, 0.0
  %v2269 = vmax.f32 %v2029, 0.0
  %v2270 = vmax.f32 %v2034, 0.0
  %v2271 = vmax.f32 %v2037, 0.0
  %v2272 = vmax.f32 %v2042, 0.0
  %v2273 = vmax.f32 %v2045, 0.0
  %v2274 = vmax.f32 %v2050, 0.0
  %v2275 = vmax.f32 %v2053, 0.0
  %v2276 = vmax.f32 %v2058, 0.0
  %v2277 = vmax.f32 %v2061, 0.0
  %v2278 = vmax.f32 %v2066, 0.0
  %v2279 = vmax.f32 %v2069, 0.0
  %v2280 = vmax.f32 %v2074, 0.0
  %v2281 = vmax.f32 %v2077, 0.0
  %v2282 = vmax.f32 %v2082, 0.0
  %v2283 = vmax.f32 %v2085, 0.0
  %v2284 = vmax.f32 %v2090, 0.0
  %v2285 = vmax.f32 %v2093, 0.0
  %v2286 = vmax.f32 %v2098, 0.0
  %v2287 = vmax.f32 %v2101, 0.0
  %v2288 = vmax.f32 %v2106, 0.0
  %v2289 = vmax.f32 %v2109, 0.0
  %v2290 = vmax.f32 %v2114, 0.0
  %v2291 = vmax.f32 %v2117, 0.0
  %v2292 = vmax.f32 %v2122, 0.0
  %v2293 = vmax.f32 %v2125, 0.0
  %v2294 = vmax.f32 %v2130, 0.0
  %v2295 = vmax.f32 %v2133, 0.0
  %v2296 = vmax.f32 %v2138, 0.0
  %v2297 = vmax.f32 %v2141, 0.0
  %v2298 = vmax.f32 %v2146, 0.0
  %v2299 = vmax.f32 %v2149, 0.0
  %v2300 = vmax.f32 %v2154, 0.0
  %v2301 = vmax.f32 %v2157, 0.0
  %v2302 = vmax.f32 %v2162, 0.0
  %v2303 = vmax.f32 %v2165, 0.0
  %v2304 = vmax.f32 %v2170, 0.0
  %v2305 = vmax.f32 %v2173, 0.0
  %v2306 = vmax.f32 %v2178, 0.0
  %v2307 = vmax.f32 %v2181, 0.0
  %v2308 = vmax.f32 %v2186, 0.0
  %v2309 = vmax.f32 %v2189, 0.0
  %v2310 = vmax.f32 %v2194, 0.0
  %v2311 = vmax.f32 %v2197, 0.0
  %v2312 = vmax.f32 %v2202, 0.0
  %v2313 = vmax.f32 %v2205, 0.0
  %v2314 = vmax.f32 %v2210, 0.0
  %v2315 = vmax.f32 %v2213, 0.0
  %v2316 = vmax.f32 %v2218, 0.0
  %v2317 = vmax.f32 %v2221, 0.0
  %v2318 = vmax.f32 %v2226, 0.0
  %v2319 = vmax.f32 %v2229, 0.0
  %v2320 = vmax.f32 %v2234, 0.0
  %v2321 = vmax.f32 %v2237, 0.0
  %v2322 = vmax.f32 %v2242, 0.0
  %v2323 = vmax.f32 %v2245, 0.0
  %v2324 = vmax.f32 %v2250, 0.0
  %v2325 = vmax.f32 %v2253, 0.0
  %v2326 = vmax.f32 %v2258, 0.0
  %v2327 = vmax.f32 %v2261, 0.0
  %v2328 = vpack.c.bf16 %v2265, %v2264
  %v2329 = vpack.c.bf16 %v2267, %v2266
  %v2330 = vpack.c.bf16 %v2269, %v2268
  %v2331 = vpack.c.bf16 %v2271, %v2270
  %v2332 = vpack.c.bf16 %v2273, %v2272
  %v2333 = vpack.c.bf16 %v2275, %v2274
  %v2334 = vpack.c.bf16 %v2277, %v2276
  %v2335 = vpack.c.bf16 %v2279, %v2278
  %v2336 = vpack.c.bf16 %v2281, %v2280
  %v2337 = vpack.c.bf16 %v2283, %v2282
  %v2338 = vpack.c.bf16 %v2285, %v2284
  %v2339 = vpack.c.bf16 %v2287, %v2286
  %v2340 = vpack.c.bf16 %v2289, %v2288
  %v2341 = vpack.c.bf16 %v2291, %v2290
  %v2342 = vpack.c.bf16 %v2293, %v2292
  %v2343 = vpack.c.bf16 %v2295, %v2294
  %v2344 = vpack.c.bf16 %v2297, %v2296
  %v2345 = vpack.c.bf16 %v2299, %v2298
  %v2346 = vpack.c.bf16 %v2301, %v2300
  %v2347 = vpack.c.bf16 %v2303, %v2302
  %v2348 = vpack.c.bf16 %v2305, %v2304
  %v2349 = vpack.c.bf16 %v2307, %v2306
  %v2350 = vpack.c.bf16 %v2309, %v2308
  %v2351 = vpack.c.bf16 %v2311, %v2310
  %v2352 = vpack.c.bf16 %v2313, %v2312
  %v2353 = vpack.c.bf16 %v2315, %v2314
  %v2354 = vpack.c.bf16 %v2317, %v2316
  %v2355 = vpack.c.bf16 %v2319, %v2318
  %v2356 = vpack.c.bf16 %v2321, %v2320
  %v2357 = vpack.c.bf16 %v2323, %v2322
  %v2358 = vpack.c.bf16 %v2325, %v2324
  %v2359 = vpack.c.bf16 %v2327, %v2326
  %v2392 = vunpack.c.l.b16 %v2328
  %v2393 = vunpack.c.h.b16 %v2328
  %v2394 = vunpack.c.l.b16 %v2329
  %v2395 = vunpack.c.h.b16 %v2329
  %v2396 = vunpack.c.l.b16 %v2330
  %v2397 = vunpack.c.h.b16 %v2330
  %v2398 = vunpack.c.l.b16 %v2331
  %v2399 = vunpack.c.h.b16 %v2331
  %v2400 = vunpack.c.l.b16 %v2332
  %v2401 = vunpack.c.h.b16 %v2332
  %v2402 = vunpack.c.l.b16 %v2333
  %v2403 = vunpack.c.h.b16 %v2333
  %v2404 = vunpack.c.l.b16 %v2334
  %v2405 = vunpack.c.h.b16 %v2334
  %v2406 = vunpack.c.l.b16 %v2335
  %v2407 = vunpack.c.h.b16 %v2335
  %v2408 = vunpack.c.l.b16 %v2336
  %v2409 = vunpack.c.h.b16 %v2336
  %v2410 = vunpack.c.l.b16 %v2337
  %v2411 = vunpack.c.h.b16 %v2337
  %v2412 = vunpack.c.l.b16 %v2338
  %v2413 = vunpack.c.h.b16 %v2338
  %v2414 = vunpack.c.l.b16 %v2339
  %v2415 = vunpack.c.h.b16 %v2339
  %v2416 = vunpack.c.l.b16 %v2340
  %v2417 = vunpack.c.h.b16 %v2340
  %v2418 = vunpack.c.l.b16 %v2341
  %v2419 = vunpack.c.h.b16 %v2341
  %v2420 = vunpack.c.l.b16 %v2342
  %v2421 = vunpack.c.h.b16 %v2342
  %v2422 = vunpack.c.l.b16 %v2343
  %v2423 = vunpack.c.h.b16 %v2343
  %v2424 = vunpack.c.l.b16 %v2344
  %v2425 = vunpack.c.h.b16 %v2344
  %v2426 = vunpack.c.l.b16 %v2345
  %v2427 = vunpack.c.h.b16 %v2345
  %v2428 = vunpack.c.l.b16 %v2346
  %v2429 = vunpack.c.h.b16 %v2346
  %v2430 = vunpack.c.l.b16 %v2347
  %v2431 = vunpack.c.h.b16 %v2347
  %v2432 = vunpack.c.l.b16 %v2348
  %v2433 = vunpack.c.h.b16 %v2348
  %v2434 = vunpack.c.l.b16 %v2349
  %v2435 = vunpack.c.h.b16 %v2349
  %v2436 = vunpack.c.l.b16 %v2350
  %v2437 = vunpack.c.h.b16 %v2350
  %v2438 = vunpack.c.l.b16 %v2351
  %v2439 = vunpack.c.h.b16 %v2351
  %v2440 = vunpack.c.l.b16 %v2352
  %v2441 = vunpack.c.h.b16 %v2352
  %v2442 = vunpack.c.l.b16 %v2353
  %v2443 = vunpack.c.h.b16 %v2353
  %v2444 = vunpack.c.l.b16 %v2354
  %v2445 = vunpack.c.h.b16 %v2354
  %v2446 = vunpack.c.l.b16 %v2355
  %v2447 = vunpack.c.h.b16 %v2355
  %v2448 = vunpack.c.l.b16 %v2356
  %v2449 = vunpack.c.h.b16 %v2356
  %v2450 = vunpack.c.l.b16 %v2357
  %v2451 = vunpack.c.h.b16 %v2357
  %v2452 = vunpack.c.l.b16 %v2358
  %v2453 = vunpack.c.h.b16 %v2358
  %v2454 = vunpack.c.l.b16 %v2359
  %v2455 = vunpack.c.h.b16 %v2359
  %v2456 = vpack.c.b16 %v2392, %v2392
  %v2457 = vpack.c.b16 %v2393, %v2393
  %v2458 = vpack.c.b16 %v2394, %v2394
  %v2459 = vpack.c.b16 %v2395, %v2395
  %v2460 = vpack.c.b16 %v2396, %v2396
  %v2461 = vpack.c.b16 %v2397, %v2397
  %v2462 = vpack.c.b16 %v2398, %v2398
  %v2463 = vpack.c.b16 %v2399, %v2399
  %v2464 = vpack.c.b16 %v2400, %v2400
  %v2465 = vpack.c.b16 %v2401, %v2401
  %v2466 = vpack.c.b16 %v2402, %v2402
  %v2467 = vpack.c.b16 %v2403, %v2403
  %v2468 = vpack.c.b16 %v2404, %v2404
  %v2469 = vpack.c.b16 %v2405, %v2405
  %v2470 = vpack.c.b16 %v2406, %v2406
  %v2471 = vpack.c.b16 %v2407, %v2407
  %v2472 = vpack.c.b16 %v2408, %v2408
  %v2473 = vpack.c.b16 %v2409, %v2409
  %v2474 = vpack.c.b16 %v2410, %v2410
  %v2475 = vpack.c.b16 %v2411, %v2411
  %v2476 = vpack.c.b16 %v2412, %v2412
  %v2477 = vpack.c.b16 %v2413, %v2413
  %v2478 = vpack.c.b16 %v2414, %v2414
  %v2479 = vpack.c.b16 %v2415, %v2415
  %v2480 = vpack.c.b16 %v2416, %v2416
  %v2481 = vpack.c.b16 %v2417, %v2417
  %v2482 = vpack.c.b16 %v2418, %v2418
  %v2483 = vpack.c.b16 %v2419, %v2419
  %v2484 = vpack.c.b16 %v2420, %v2420
  %v2485 = vpack.c.b16 %v2421, %v2421
  %v2486 = vpack.c.b16 %v2422, %v2422
  %v2487 = vpack.c.b16 %v2423, %v2423
  %v2488 = vpack.c.b16 %v2424, %v2424
  %v2489 = vpack.c.b16 %v2425, %v2425
  %v2490 = vpack.c.b16 %v2426, %v2426
  %v2491 = vpack.c.b16 %v2427, %v2427
  %v2492 = vpack.c.b16 %v2428, %v2428
  %v2493 = vpack.c.b16 %v2429, %v2429
  %v2494 = vpack.c.b16 %v2430, %v2430
  %v2495 = vpack.c.b16 %v2431, %v2431
  %v2496 = vpack.c.b16 %v2432, %v2432
  %v2497 = vpack.c.b16 %v2433, %v2433
  %v2498 = vpack.c.b16 %v2434, %v2434
  %v2499 = vpack.c.b16 %v2435, %v2435
  %v2500 = vpack.c.b16 %v2436, %v2436
  %v2501 = vpack.c.b16 %v2437, %v2437
  %v2502 = vpack.c.b16 %v2438, %v2438
  %v2503 = vpack.c.b16 %v2439, %v2439
  %v2504 = vpack.c.b16 %v2440, %v2440
  %v2505 = vpack.c.b16 %v2441, %v2441
  %v2506 = vpack.c.b16 %v2442, %v2442
  %v2507 = vpack.c.b16 %v2443, %v2443
  %v2508 = vpack.c.b16 %v2444, %v2444
  %v2509 = vpack.c.b16 %v2445, %v2445
  %v2510 = vpack.c.b16 %v2446, %v2446
  %v2511 = vpack.c.b16 %v2447, %v2447
  %v2512 = vpack.c.b16 %v2448, %v2448
  %v2513 = vpack.c.b16 %v2449, %v2449
  %v2514 = vpack.c.b16 %v2450, %v2450
  %v2515 = vpack.c.b16 %v2451, %v2451
  %v2516 = vpack.c.b16 %v2452, %v2452
  %v2517 = vpack.c.b16 %v2453, %v2453
  %v2518 = vpack.c.b16 %v2454, %v2454
  %v2519 = vpack.c.b16 %v2455, %v2455
  %2584 = vst [vmem:[%s3] sm:$0xf] %v2456
  %2585 = vst [vmem:[%s3 + $0x4] sm:$0xf] %v2457
  %2586 = vst [vmem:[%s3 + $0x8] sm:$0xf] %v2458
  %2587 = vst [vmem:[%s3 + $0xc] sm:$0xf] %v2459
  %2588 = vst [vmem:[%s3 + $0x10] sm:$0xf] %v2460
  %2589 = vst [vmem:[%s3 + $0x14] sm:$0xf] %v2461
  %2590 = vst [vmem:[%s3 + $0x18] sm:$0xf] %v2462
  %2591 = vst [vmem:[%s3 + $0x1c] sm:$0xf] %v2463
  %2592 = vst [vmem:[%s3 + $0x20] sm:$0xf] %v2464
  %2593 = vst [vmem:[%s3 + $0x24] sm:$0xf] %v2465
  %2594 = vst [vmem:[%s3 + $0x28] sm:$0xf] %v2466
  %2595 = vst [vmem:[%s3 + $0x2c] sm:$0xf] %v2467
  %2596 = vst [vmem:[%s3 + $0x30] sm:$0xf] %v2468
  %2597 = vst [vmem:[%s3 + $0x34] sm:$0xf] %v2469
  %2598 = vst [vmem:[%s3 + $0x38] sm:$0xf] %v2470
  %2599 = vst [vmem:[%s3 + $0x3c] sm:$0xf] %v2471
  %2600 = vst [vmem:[%s3 + $0x40] sm:$0xf] %v2472
  %2601 = vst [vmem:[%s3 + $0x44] sm:$0xf] %v2473
  %2602 = vst [vmem:[%s3 + $0x48] sm:$0xf] %v2474
  %2603 = vst [vmem:[%s3 + $0x4c] sm:$0xf] %v2475
  %2604 = vst [vmem:[%s3 + $0x50] sm:$0xf] %v2476
  %2605 = vst [vmem:[%s3 + $0x54] sm:$0xf] %v2477
  %2606 = vst [vmem:[%s3 + $0x58] sm:$0xf] %v2478
  %2607 = vst [vmem:[%s3 + $0x5c] sm:$0xf] %v2479
  %2608 = vst [vmem:[%s3 + $0x60] sm:$0xf] %v2480
  %2609 = vst [vmem:[%s3 + $0x64] sm:$0xf] %v2481
  %2610 = vst [vmem:[%s3 + $0x68] sm:$0xf] %v2482
  %2611 = vst [vmem:[%s3 + $0x6c] sm:$0xf] %v2483
  %2612 = vst [vmem:[%s3 + $0x70] sm:$0xf] %v2484
  %2613 = vst [vmem:[%s3 + $0x74] sm:$0xf] %v2485
  %2614 = vst [vmem:[%s3 + $0x78] sm:$0xf] %v2486
  %2615 = vst [vmem:[%s3 + $0x7c] sm:$0xf] %v2487
  %2616 = vst [vmem:[%s3 + $0x80] sm:$0xf] %v2488
  %2617 = vst [vmem:[%s3 + $0x84] sm:$0xf] %v2489
  %2618 = vst [vmem:[%s3 + $0x88] sm:$0xf] %v2490
  %2619 = vst [vmem:[%s3 + $0x8c] sm:$0xf] %v2491
  %2620 = vst [vmem:[%s3 + $0x90] sm:$0xf] %v2492
  %2621 = vst [vmem:[%s3 + $0x94] sm:$0xf] %v2493
  %2622 = vst [vmem:[%s3 + $0x98] sm:$0xf] %v2494
  %2623 = vst [vmem:[%s3 + $0x9c] sm:$0xf] %v2495
  %2624 = vst [vmem:[%s3 + $0xa0] sm:$0xf] %v2496
  %2625 = vst [vmem:[%s3 + $0xa4] sm:$0xf] %v2497
  %2626 = vst [vmem:[%s3 + $0xa8] sm:$0xf] %v2498
  %2627 = vst [vmem:[%s3 + $0xac] sm:$0xf] %v2499
  %2628 = vst [vmem:[%s3 + $0xb0] sm:$0xf] %v2500
  %2629 = vst [vmem:[%s3 + $0xb4] sm:$0xf] %v2501
  %2630 = vst [vmem:[%s3 + $0xb8] sm:$0xf] %v2502
  %2631 = vst [vmem:[%s3 + $0xbc] sm:$0xf] %v2503
  %2632 = vst [vmem:[%s3 + $0xc0] sm:$0xf] %v2504
  %2633 = vst [vmem:[%s3 + $0xc4] sm:$0xf] %v2505
  %2634 = vst [vmem:[%s3 + $0xc8] sm:$0xf] %v2506
  %2635 = vst [vmem:[%s3 + $0xcc] sm:$0xf] %v2507
  %2636 = vst [vmem:[%s3 + $0xd0] sm:$0xf] %v2508
  %2637 = vst [vmem:[%s3 + $0xd4] sm:$0xf] %v2509
  %2638 = vst [vmem:[%s3 + $0xd8] sm:$0xf] %v2510
  %2639 = vst [vmem:[%s3 + $0xdc] sm:$0xf] %v2511
  %2640 = vst [vmem:[%s3 + $0xe0] sm:$0xf] %v2512
  %2641 = vst [vmem:[%s3 + $0xe4] sm:$0xf] %v2513
  %2642 = vst [vmem:[%s3 + $0xe8] sm:$0xf] %v2514
  %2643 = vst [vmem:[%s3 + $0xec] sm:$0xf] %v2515
  %2644 = vst [vmem:[%s3 + $0xf0] sm:$0xf] %v2516
  %2645 = vst [vmem:[%s3 + $0xf4] sm:$0xf] %v2517
  %2646 = vst [vmem:[%s3 + $0xf8] sm:$0xf] %v2518
  %2647 = vst [vmem:[%s3 + $0xfc] sm:$0xf] %v2519
  // Predicated region
  $region14: #{forward.10} parent=0 // pred_check
    _
  $region15: #{forward.10} parent=0 // pred_check_branch
    %2649 = sbr.rel (0) target = $region17
  $region16: #{forward.10} parent=0 // pred_region
    _
  $region17: #{forward.10} parent=0 // pred_fallthru
    _
  // Predicated region
  $region18: #{forward.10} parent=0 // pred_check
    _
  $region19: #{forward.10} parent=0 // pred_check_branch
    %2651 = sbr.rel (0) target = $region21
  $region20: #{forward.10} parent=0 // pred_region
    _
  $region21: #{forward.10} parent=0 // pred_fallthru
    _

// kernel: forward.11
$region0: #{forward.11}
  #allocation0 [shape = 'u32[]', space=smem, size = 0x4, offset = 0x4, fixed_abs, tag = 'smem constant byte address 0x4 - core index']
  #allocation1 [shape = 'u32[144,128]{1,0:T(1,128)}', space=vmem, size = 0x12000, scoped, tag = 'internal scratch']
  %s0 = inlined_call_operand.vmem [shape: bf16[512,576], index: 0, kind: input, shape index: {}]
  %s1 = inlined_call_operand.vmem [shape: bf16[576,128], index: 1, kind: input, shape index: {}]
  %s2 = inlined_call_operand.vmem [shape: f32[8,128], index: 2, kind: input, shape index: {}]
  %s3 = inlined_call_operand.vmem [shape: f32[512,128], index: 3, kind: input, shape index: {}]
  %s4 = inlined_call_operand.vmem [shape: f32[512,128], index: 4, kind: output, shape index: {}]
  %s5 = sld [smem:[#allocation0]]
  $region26: #{forward.11} parent=0
    _
  %s7 = ssub.s32 1, %s5
  %s8 = scalar_select 0, %s7, %s5
  // Predicated region
  $region2: #{forward.11} parent=0 // pred_check
    _
  $region3: #{forward.11} parent=0 // pred_check_branch
    %10 = sbr.rel (0) target = $region5
  $region4: #{forward.11} parent=0 // pred_region
    _
  $region5: #{forward.11} parent=0 // pred_fallthru
    _
  // Predicated region
  $region6: #{forward.11} parent=0 // pred_check
    _
  $region7: #{forward.11} parent=0 // pred_check_branch
    %12 = sbr.rel (0) target = $region9
  $region8: #{forward.11} parent=0 // pred_region
    _
  $region9: #{forward.11} parent=0 // pred_fallthru
    _
  // Predicated region
  $region10: #{forward.11} parent=0 // pred_check
    _
  $region11: #{forward.11} parent=0 // pred_check_branch
    %14 = sbr.rel (0) target = $region13
  $region12: #{forward.11} parent=0 // pred_region
    _
  $region13: #{forward.11} parent=0 // pred_fallthru
    _
  // Predicated region
  $region14: #{forward.11} parent=0 // pred_check
    _
  $region15: #{forward.11} parent=0 // pred_check_branch
    %16 = sbr.rel (0) target = $region17
  $region16: #{forward.11} parent=0 // pred_region
    _
  $region17: #{forward.11} parent=0 // pred_fallthru
    _
  %v18 = vld [vmem:[%s0] sm:$0xff]
  %v19 = vld [vmem:[%s0 + $0x8] sm:$0xff]
  %v20 = vld [vmem:[%s0 + $0x10] sm:$0xf]
  %v21 = vld [vmem:[%s0 + $0x14] sm:$0xff]
  %v22 = vld [vmem:[%s0 + $0x1c] sm:$0xff]
  %v23 = vld [vmem:[%s0 + $0x24] sm:$0xf]
  %v24 = vld [vmem:[%s0 + $0x28] sm:$0xff]
  %v25 = vld [vmem:[%s0 + $0x30] sm:$0xff]
  %v26 = vld [vmem:[%s0 + $0x38] sm:$0xf]
  %v27 = vld [vmem:[%s0 + $0x3c] sm:$0xff]
  %v28 = vld [vmem:[%s0 + $0x44] sm:$0xff]
  %v29 = vld [vmem:[%s0 + $0x4c] sm:$0xf]
  %v30 = vld [vmem:[%s0 + $0x50] sm:$0xff]
  %v31 = vld [vmem:[%s0 + $0x58] sm:$0xff]
  %v32 = vld [vmem:[%s0 + $0x60] sm:$0xf]
  %v33 = vld [vmem:[%s0 + $0x64] sm:$0xff]
  %v34 = vld [vmem:[%s0 + $0x6c] sm:$0xff]
  %v35 = vld [vmem:[%s0 + $0x74] sm:$0xf]
  %v36 = vld [vmem:[%s0 + $0x78] sm:$0xff]
  %v37 = vld [vmem:[%s0 + $0x80] sm:$0xff]
  %v38 = vld [vmem:[%s0 + $0x88] sm:$0xf]
  %v39 = vld [vmem:[%s0 + $0x8c] sm:$0xff]
  %v40 = vld [vmem:[%s0 + $0x94] sm:$0xff]
  %v41 = vld [vmem:[%s0 + $0x9c] sm:$0xf]
  %v42 = vld [vmem:[%s0 + $0xa0] sm:$0xff]
  %v43 = vld [vmem:[%s0 + $0xa8] sm:$0xff]
  %v44 = vld [vmem:[%s0 + $0xb0] sm:$0xf]
  %v45 = vld [vmem:[%s0 + $0xb4] sm:$0xff]
  %v46 = vld [vmem:[%s0 + $0xbc] sm:$0xff]
  %v47 = vld [vmem:[%s0 + $0xc4] sm:$0xf]
  %v48 = vld [vmem:[%s0 + $0xc8] sm:$0xff]
  %v49 = vld [vmem:[%s0 + $0xd0] sm:$0xff]
  %v50 = vld [vmem:[%s0 + $0xd8] sm:$0xf]
  %v51 = vld [vmem:[%s0 + $0xdc] sm:$0xff]
  %v52 = vld [vmem:[%s0 + $0xe4] sm:$0xff]
  %v53 = vld [vmem:[%s0 + $0xec] sm:$0xf]
  %v54 = vld [vmem:[%s0 + $0xf0] sm:$0xff]
  %v55 = vld [vmem:[%s0 + $0xf8] sm:$0xff]
  %v56 = vld [vmem:[%s0 + $0x100] sm:$0xf]
  %v57 = vld [vmem:[%s0 + $0x104] sm:$0xff]
  %v58 = vld [vmem:[%s0 + $0x10c] sm:$0xff]
  %v59 = vld [vmem:[%s0 + $0x114] sm:$0xf]
  %v60 = vld [vmem:[%s0 + $0x118] sm:$0xff]
  %v61 = vld [vmem:[%s0 + $0x120] sm:$0xff]
  %v62 = vld [vmem:[%s0 + $0x128] sm:$0xf]
  %v63 = vld [vmem:[%s0 + $0x12c] sm:$0xff]
  %v64 = vld [vmem:[%s0 + $0x134] sm:$0xff]
  %v65 = vld [vmem:[%s0 + $0x13c] sm:$0xf]
  %v66 = vld [vmem:[%s0 + $0x140] sm:$0xff]
  %v67 = vld [vmem:[%s0 + $0x148] sm:$0xff]
  %v68 = vld [vmem:[%s0 + $0x150] sm:$0xf]
  %v69 = vld [vmem:[%s0 + $0x154] sm:$0xff]
  %v70 = vld [vmem:[%s0 + $0x15c] sm:$0xff]
  %v71 = vld [vmem:[%s0 + $0x164] sm:$0xf]
  %v72 = vld [vmem:[%s0 + $0x168] sm:$0xff]
  %v73 = vld [vmem:[%s0 + $0x170] sm:$0xff]
  %v74 = vld [vmem:[%s0 + $0x178] sm:$0xf]
  %v75 = vld [vmem:[%s0 + $0x17c] sm:$0xff]
  %v76 = vld [vmem:[%s0 + $0x184] sm:$0xff]
  %v77 = vld [vmem:[%s0 + $0x18c] sm:$0xf]
  %v78 = vld [vmem:[%s0 + $0x190] sm:$0xff]
  %v79 = vld [vmem:[%s0 + $0x198] sm:$0xff]
  %v80 = vld [vmem:[%s0 + $0x1a0] sm:$0xf]
  %v81 = vld [vmem:[%s0 + $0x1a4] sm:$0xff]
  %v82 = vld [vmem:[%s0 + $0x1ac] sm:$0xff]
  %v83 = vld [vmem:[%s0 + $0x1b4] sm:$0xf]
  %v84 = vld [vmem:[%s0 + $0x1b8] sm:$0xff]
  %v85 = vld [vmem:[%s0 + $0x1c0] sm:$0xff]
  %v86 = vld [vmem:[%s0 + $0x1c8] sm:$0xf]
  %v87 = vld [vmem:[%s0 + $0x1cc] sm:$0xff]
  %v88 = vld [vmem:[%s0 + $0x1d4] sm:$0xff]
  %v89 = vld [vmem:[%s0 + $0x1dc] sm:$0xf]
  %v90 = vld [vmem:[%s0 + $0x1e0] sm:$0xff]
  %v91 = vld [vmem:[%s0 + $0x1e8] sm:$0xff]
  %v92 = vld [vmem:[%s0 + $0x1f0] sm:$0xf]
  %v93 = vld [vmem:[%s0 + $0x1f4] sm:$0xff]
  %v94 = vld [vmem:[%s0 + $0x1fc] sm:$0xff]
  %v95 = vld [vmem:[%s0 + $0x204] sm:$0xf]
  %v96 = vld [vmem:[%s0 + $0x208] sm:$0xff]
  %v97 = vld [vmem:[%s0 + $0x210] sm:$0xff]
  %v98 = vld [vmem:[%s0 + $0x218] sm:$0xf]
  %v99 = vld [vmem:[%s0 + $0x21c] sm:$0xff]
  %v100 = vld [vmem:[%s0 + $0x224] sm:$0xff]
  %v101 = vld [vmem:[%s0 + $0x22c] sm:$0xf]
  %v102 = vld [vmem:[%s0 + $0x230] sm:$0xff]
  %v103 = vld [vmem:[%s0 + $0x238] sm:$0xff]
  %v104 = vld [vmem:[%s0 + $0x240] sm:$0xf]
  %v105 = vld [vmem:[%s0 + $0x244] sm:$0xff]
  %v106 = vld [vmem:[%s0 + $0x24c] sm:$0xff]
  %v107 = vld [vmem:[%s0 + $0x254] sm:$0xf]
  %v108 = vld [vmem:[%s0 + $0x258] sm:$0xff]
  %v109 = vld [vmem:[%s0 + $0x260] sm:$0xff]
  %v110 = vld [vmem:[%s0 + $0x268] sm:$0xf]
  %v111 = vld [vmem:[%s0 + $0x26c] sm:$0xff]
  %v112 = vld [vmem:[%s0 + $0x274] sm:$0xff]
  %v113 = vld [vmem:[%s0 + $0x27c] sm:$0xf]
  %v114 = vld [vmem:[%s0 + $0x280] sm:$0xff]
  %v115 = vld [vmem:[%s0 + $0x288] sm:$0xff]
  %v116 = vld [vmem:[%s0 + $0x290] sm:$0xf]
  %v117 = vld [vmem:[%s0 + $0x294] sm:$0xff]
  %v118 = vld [vmem:[%s0 + $0x29c] sm:$0xff]
  %v119 = vld [vmem:[%s0 + $0x2a4] sm:$0xf]
  %v120 = vld [vmem:[%s0 + $0x2a8] sm:$0xff]
  %v121 = vld [vmem:[%s0 + $0x2b0] sm:$0xff]
  %v122 = vld [vmem:[%s0 + $0x2b8] sm:$0xf]
  %v123 = vld [vmem:[%s0 + $0x2bc] sm:$0xff]
  %v124 = vld [vmem:[%s0 + $0x2c4] sm:$0xff]
  %v125 = vld [vmem:[%s0 + $0x2cc] sm:$0xf]
  %v126 = vld [vmem:[%s0 + $0x2d0] sm:$0xff]
  %v127 = vld [vmem:[%s0 + $0x2d8] sm:$0xff]
  %v128 = vld [vmem:[%s0 + $0x2e0] sm:$0xf]
  %v129 = vld [vmem:[%s0 + $0x2e4] sm:$0xff]
  %v130 = vld [vmem:[%s0 + $0x2ec] sm:$0xff]
  %v131 = vld [vmem:[%s0 + $0x2f4] sm:$0xf]
  %v132 = vld [vmem:[%s0 + $0x2f8] sm:$0xff]
  %v133 = vld [vmem:[%s0 + $0x300] sm:$0xff]
  %v134 = vld [vmem:[%s0 + $0x308] sm:$0xf]
  %v135 = vld [vmem:[%s0 + $0x30c] sm:$0xff]
  %v136 = vld [vmem:[%s0 + $0x314] sm:$0xff]
  %v137 = vld [vmem:[%s0 + $0x31c] sm:$0xf]
  %v138 = vld [vmem:[%s0 + $0x320] sm:$0xff]
  %v139 = vld [vmem:[%s0 + $0x328] sm:$0xff]
  %v140 = vld [vmem:[%s0 + $0x330] sm:$0xf]
  %v141 = vld [vmem:[%s0 + $0x334] sm:$0xff]
  %v142 = vld [vmem:[%s0 + $0x33c] sm:$0xff]
  %v143 = vld [vmem:[%s0 + $0x344] sm:$0xf]
  %v144 = vld [vmem:[%s0 + $0x348] sm:$0xff]
  %v145 = vld [vmem:[%s0 + $0x350] sm:$0xff]
  %v146 = vld [vmem:[%s0 + $0x358] sm:$0xf]
  %v147 = vld [vmem:[%s0 + $0x35c] sm:$0xff]
  %v148 = vld [vmem:[%s0 + $0x364] sm:$0xff]
  %v149 = vld [vmem:[%s0 + $0x36c] sm:$0xf]
  %v150 = vld [vmem:[%s0 + $0x370] sm:$0xff]
  %v151 = vld [vmem:[%s0 + $0x378] sm:$0xff]
  %v152 = vld [vmem:[%s0 + $0x380] sm:$0xf]
  %v153 = vld [vmem:[%s0 + $0x384] sm:$0xff]
  %v154 = vld [vmem:[%s0 + $0x38c] sm:$0xff]
  %v155 = vld [vmem:[%s0 + $0x394] sm:$0xf]
  %v156 = vld [vmem:[%s0 + $0x398] sm:$0xff]
  %v157 = vld [vmem:[%s0 + $0x3a0] sm:$0xff]
  %v158 = vld [vmem:[%s0 + $0x3a8] sm:$0xf]
  %v159 = vld [vmem:[%s0 + $0x3ac] sm:$0xff]
  %v160 = vld [vmem:[%s0 + $0x3b4] sm:$0xff]
  %v161 = vld [vmem:[%s0 + $0x3bc] sm:$0xf]
  %v162 = vld [vmem:[%s0 + $0x3c0] sm:$0xff]
  %v163 = vld [vmem:[%s0 + $0x3c8] sm:$0xff]
  %v164 = vld [vmem:[%s0 + $0x3d0] sm:$0xf]
  %v165 = vld [vmem:[%s0 + $0x3d4] sm:$0xff]
  %v166 = vld [vmem:[%s0 + $0x3dc] sm:$0xff]
  %v167 = vld [vmem:[%s0 + $0x3e4] sm:$0xf]
  %v168 = vld [vmem:[%s0 + $0x3e8] sm:$0xff]
  %v169 = vld [vmem:[%s0 + $0x3f0] sm:$0xff]
  %v170 = vld [vmem:[%s0 + $0x3f8] sm:$0xf]
  %v171 = vld [vmem:[%s0 + $0x3fc] sm:$0xff]
  %v172 = vld [vmem:[%s0 + $0x404] sm:$0xff]
  %v173 = vld [vmem:[%s0 + $0x40c] sm:$0xf]
  %v174 = vld [vmem:[%s0 + $0x410] sm:$0xff]
  %v175 = vld [vmem:[%s0 + $0x418] sm:$0xff]
  %v176 = vld [vmem:[%s0 + $0x420] sm:$0xf]
  %v177 = vld [vmem:[%s0 + $0x424] sm:$0xff]
  %v178 = vld [vmem:[%s0 + $0x42c] sm:$0xff]
  %v179 = vld [vmem:[%s0 + $0x434] sm:$0xf]
  %v180 = vld [vmem:[%s0 + $0x438] sm:$0xff]
  %v181 = vld [vmem:[%s0 + $0x440] sm:$0xff]
  %v182 = vld [vmem:[%s0 + $0x448] sm:$0xf]
  %v183 = vld [vmem:[%s0 + $0x44c] sm:$0xff]
  %v184 = vld [vmem:[%s0 + $0x454] sm:$0xff]
  %v185 = vld [vmem:[%s0 + $0x45c] sm:$0xf]
  %v186 = vld [vmem:[%s0 + $0x460] sm:$0xff]
  %v187 = vld [vmem:[%s0 + $0x468] sm:$0xff]
  %v188 = vld [vmem:[%s0 + $0x470] sm:$0xf]
  %v189 = vld [vmem:[%s0 + $0x474] sm:$0xff]
  %v190 = vld [vmem:[%s0 + $0x47c] sm:$0xff]
  %v191 = vld [vmem:[%s0 + $0x484] sm:$0xf]
  %v192 = vld [vmem:[%s0 + $0x488] sm:$0xff]
  %v193 = vld [vmem:[%s0 + $0x490] sm:$0xff]
  %v194 = vld [vmem:[%s0 + $0x498] sm:$0xf]
  %v195 = vld [vmem:[%s0 + $0x49c] sm:$0xff]
  %v196 = vld [vmem:[%s0 + $0x4a4] sm:$0xff]
  %v197 = vld [vmem:[%s0 + $0x4ac] sm:$0xf]
  %v198 = vld [vmem:[%s0 + $0x4b0] sm:$0xff]
  %v199 = vld [vmem:[%s0 + $0x4b8] sm:$0xff]
  %v200 = vld [vmem:[%s0 + $0x4c0] sm:$0xf]
  %v201 = vld [vmem:[%s0 + $0x4c4] sm:$0xff]
  %v202 = vld [vmem:[%s0 + $0x4cc] sm:$0xff]
  %v203 = vld [vmem:[%s0 + $0x4d4] sm:$0xf]
  %v204 = vld [vmem:[%s0 + $0x4d8] sm:$0xff]
  %v205 = vld [vmem:[%s0 + $0x4e0] sm:$0xff]
  %v206 = vld [vmem:[%s0 + $0x4e8] sm:$0xf]
  %v207 = vld [vmem:[%s0 + $0x4ec] sm:$0xff]
  %v208 = vld [vmem:[%s0 + $0x4f4] sm:$0xff]
  %v209 = vld [vmem:[%s0 + $0x4fc] sm:$0xf]
  %v210 = vld [vmem:[%s1] sm:$0xf]
  %v211 = vld [vmem:[%s1 + $0x4] sm:$0xf]
  %v212 = vld [vmem:[%s1 + $0x8] sm:$0xf]
  %v213 = vld [vmem:[%s1 + $0xc] sm:$0xf]
  %v214 = vld [vmem:[%s1 + $0x10] sm:$0xf]
  %v215 = vld [vmem:[%s1 + $0x14] sm:$0xf]
  %v216 = vld [vmem:[%s1 + $0x18] sm:$0xf]
  %v217 = vld [vmem:[%s1 + $0x1c] sm:$0xf]
  %v218 = vld [vmem:[%s1 + $0x20] sm:$0xf]
  %v219 = vld [vmem:[%s1 + $0x24] sm:$0xf]
  %v220 = vld [vmem:[%s1 + $0x28] sm:$0xf]
  %v221 = vld [vmem:[%s1 + $0x2c] sm:$0xf]
  %v222 = vld [vmem:[%s1 + $0x30] sm:$0xf]
  %v223 = vld [vmem:[%s1 + $0x34] sm:$0xf]
  %v224 = vld [vmem:[%s1 + $0x38] sm:$0xf]
  %v225 = vld [vmem:[%s1 + $0x3c] sm:$0xf]
  %v226 = vld [vmem:[%s1 + $0x40] sm:$0xf]
  %v227 = vld [vmem:[%s1 + $0x44] sm:$0xf]
  %v228 = vld [vmem:[%s1 + $0x48] sm:$0xf]
  %v229 = vld [vmem:[%s1 + $0x4c] sm:$0xf]
  %v230 = vld [vmem:[%s1 + $0x50] sm:$0xf]
  %v231 = vld [vmem:[%s1 + $0x54] sm:$0xf]
  %v232 = vld [vmem:[%s1 + $0x58] sm:$0xf]
  %v233 = vld [vmem:[%s1 + $0x5c] sm:$0xf]
  %v234 = vld [vmem:[%s1 + $0x60] sm:$0xf]
  %v235 = vld [vmem:[%s1 + $0x64] sm:$0xf]
  %v236 = vld [vmem:[%s1 + $0x68] sm:$0xf]
  %v237 = vld [vmem:[%s1 + $0x6c] sm:$0xf]
  %v238 = vld [vmem:[%s1 + $0x70] sm:$0xf]
  %v239 = vld [vmem:[%s1 + $0x74] sm:$0xf]
  %v240 = vld [vmem:[%s1 + $0x78] sm:$0xf]
  %v241 = vld [vmem:[%s1 + $0x7c] sm:$0xf]
  %v242 = vld [vmem:[%s1 + $0x80] sm:$0xf]
  %v243 = vld [vmem:[%s1 + $0x84] sm:$0xf]
  %v244 = vld [vmem:[%s1 + $0x88] sm:$0xf]
  %v245 = vld [vmem:[%s1 + $0x8c] sm:$0xf]
  %v246 = vld [vmem:[%s1 + $0x90] sm:$0xf]
  %v247 = vld [vmem:[%s1 + $0x94] sm:$0xf]
  %v248 = vld [vmem:[%s1 + $0x98] sm:$0xf]
  %v249 = vld [vmem:[%s1 + $0x9c] sm:$0xf]
  %v250 = vld [vmem:[%s1 + $0xa0] sm:$0xf]
  %v251 = vld [vmem:[%s1 + $0xa4] sm:$0xf]
  %v252 = vld [vmem:[%s1 + $0xa8] sm:$0xf]
  %v253 = vld [vmem:[%s1 + $0xac] sm:$0xf]
  %v254 = vld [vmem:[%s1 + $0xb0] sm:$0xf]
  %v255 = vld [vmem:[%s1 + $0xb4] sm:$0xf]
  %v256 = vld [vmem:[%s1 + $0xb8] sm:$0xf]
  %v257 = vld [vmem:[%s1 + $0xbc] sm:$0xf]
  %v258 = vld [vmem:[%s1 + $0xc0] sm:$0xf]
  %v259 = vld [vmem:[%s1 + $0xc4] sm:$0xf]
  %v260 = vld [vmem:[%s1 + $0xc8] sm:$0xf]
  %v261 = vld [vmem:[%s1 + $0xcc] sm:$0xf]
  %v262 = vld [vmem:[%s1 + $0xd0] sm:$0xf]
  %v263 = vld [vmem:[%s1 + $0xd4] sm:$0xf]
  %v264 = vld [vmem:[%s1 + $0xd8] sm:$0xf]
  %v265 = vld [vmem:[%s1 + $0xdc] sm:$0xf]
  %v266 = vld [vmem:[%s1 + $0xe0] sm:$0xf]
  %v267 = vld [vmem:[%s1 + $0xe4] sm:$0xf]
  %v268 = vld [vmem:[%s1 + $0xe8] sm:$0xf]
  %v269 = vld [vmem:[%s1 + $0xec] sm:$0xf]
  %v270 = vld [vmem:[%s1 + $0xf0] sm:$0xf]
  %v271 = vld [vmem:[%s1 + $0xf4] sm:$0xf]
  %v272 = vld [vmem:[%s1 + $0xf8] sm:$0xf]
  %v273 = vld [vmem:[%s1 + $0xfc] sm:$0xf]
  %v274 = vld [vmem:[%s1 + $0x100] sm:$0xf]
  %v275 = vld [vmem:[%s1 + $0x104] sm:$0xf]
  %v276 = vld [vmem:[%s1 + $0x108] sm:$0xf]
  %v277 = vld [vmem:[%s1 + $0x10c] sm:$0xf]
  %v278 = vld [vmem:[%s1 + $0x110] sm:$0xf]
  %v279 = vld [vmem:[%s1 + $0x114] sm:$0xf]
  %v280 = vld [vmem:[%s1 + $0x118] sm:$0xf]
  %v281 = vld [vmem:[%s1 + $0x11c] sm:$0xf]
  %v282 = vld [vmem:[%s2] sm:$0x1]
  %v283 = vlaneseq
  %v284 = vshrl.u32 %v283, 7
  %v285 = vsub.s32 0, %v284
  %v286 = vrot.slane %v282, %v285
  %v479 = vunpack.c.l.b16 %v18
  %v480 = vunpack.c.h.b16 %v18
  %v481 = vunpack.c.l.b16 %v19
  %v482 = vunpack.c.h.b16 %v19
  %v483 = vunpack.c.l.b16 %v20
  %v484 = vunpack.c.l.b16 %v21
  %v485 = vunpack.c.h.b16 %v21
  %v486 = vunpack.c.l.b16 %v22
  %v487 = vunpack.c.h.b16 %v22
  %v488 = vunpack.c.l.b16 %v23
  %v489 = vunpack.c.l.b16 %v24
  %v490 = vunpack.c.h.b16 %v24
  %v491 = vunpack.c.l.b16 %v25
  %v492 = vunpack.c.h.b16 %v25
  %v493 = vunpack.c.l.b16 %v26
  %v494 = vunpack.c.l.b16 %v27
  %v495 = vunpack.c.h.b16 %v27
  %v496 = vunpack.c.l.b16 %v28
  %v497 = vunpack.c.h.b16 %v28
  %v498 = vunpack.c.l.b16 %v29
  %v499 = vunpack.c.l.b16 %v30
  %v500 = vunpack.c.h.b16 %v30
  %v501 = vunpack.c.l.b16 %v31
  %v502 = vunpack.c.h.b16 %v31
  %v503 = vunpack.c.l.b16 %v32
  %v504 = vunpack.c.l.b16 %v33
  %v505 = vunpack.c.h.b16 %v33
  %v506 = vunpack.c.l.b16 %v34
  %v507 = vunpack.c.h.b16 %v34
  %v508 = vunpack.c.l.b16 %v35
  %v509 = vunpack.c.l.b16 %v36
  %v510 = vunpack.c.h.b16 %v36
  %v511 = vunpack.c.l.b16 %v37
  %v512 = vunpack.c.h.b16 %v37
  %v513 = vunpack.c.l.b16 %v38
  %v514 = vunpack.c.l.b16 %v39
  %v515 = vunpack.c.h.b16 %v39
  %v516 = vunpack.c.l.b16 %v40
  %v517 = vunpack.c.h.b16 %v40
  %v518 = vunpack.c.l.b16 %v41
  %v519 = vunpack.c.l.b16 %v42
  %v520 = vunpack.c.h.b16 %v42
  %v521 = vunpack.c.l.b16 %v43
  %v522 = vunpack.c.h.b16 %v43
  %v523 = vunpack.c.l.b16 %v44
  %v524 = vunpack.c.l.b16 %v45
  %v525 = vunpack.c.h.b16 %v45
  %v526 = vunpack.c.l.b16 %v46
  %v527 = vunpack.c.h.b16 %v46
  %v528 = vunpack.c.l.b16 %v47
  %v529 = vunpack.c.l.b16 %v48
  %v530 = vunpack.c.h.b16 %v48
  %v531 = vunpack.c.l.b16 %v49
  %v532 = vunpack.c.h.b16 %v49
  %v533 = vunpack.c.l.b16 %v50
  %v534 = vunpack.c.l.b16 %v51
  %v535 = vunpack.c.h.b16 %v51
  %v536 = vunpack.c.l.b16 %v52
  %v537 = vunpack.c.h.b16 %v52
  %v538 = vunpack.c.l.b16 %v53
  %v539 = vunpack.c.l.b16 %v54
  %v540 = vunpack.c.h.b16 %v54
  %v541 = vunpack.c.l.b16 %v55
  %v542 = vunpack.c.h.b16 %v55
  %v543 = vunpack.c.l.b16 %v56
  %v544 = vunpack.c.l.b16 %v57
  %v545 = vunpack.c.h.b16 %v57
  %v546 = vunpack.c.l.b16 %v58
  %v547 = vunpack.c.h.b16 %v58
  %v548 = vunpack.c.l.b16 %v59
  %v549 = vunpack.c.l.b16 %v60
  %v550 = vunpack.c.h.b16 %v60
  %v551 = vunpack.c.l.b16 %v61
  %v552 = vunpack.c.h.b16 %v61
  %v553 = vunpack.c.l.b16 %v62
  %v554 = vunpack.c.l.b16 %v63
  %v555 = vunpack.c.h.b16 %v63
  %v556 = vunpack.c.l.b16 %v64
  %v557 = vunpack.c.h.b16 %v64
  %v558 = vunpack.c.l.b16 %v65
  %v559 = vunpack.c.l.b16 %v66
  %v560 = vunpack.c.h.b16 %v66
  %v561 = vunpack.c.l.b16 %v67
  %v562 = vunpack.c.h.b16 %v67
  %v563 = vunpack.c.l.b16 %v68
  %v564 = vunpack.c.l.b16 %v69
  %v565 = vunpack.c.h.b16 %v69
  %v566 = vunpack.c.l.b16 %v70
  %v567 = vunpack.c.h.b16 %v70
  %v568 = vunpack.c.l.b16 %v71
  %v569 = vunpack.c.l.b16 %v72
  %v570 = vunpack.c.h.b16 %v72
  %v571 = vunpack.c.l.b16 %v73
  %v572 = vunpack.c.h.b16 %v73
  %v573 = vunpack.c.l.b16 %v74
  %v574 = vunpack.c.l.b16 %v75
  %v575 = vunpack.c.h.b16 %v75
  %v576 = vunpack.c.l.b16 %v76
  %v577 = vunpack.c.h.b16 %v76
  %v578 = vunpack.c.l.b16 %v77
  %v579 = vunpack.c.l.b16 %v78
  %v580 = vunpack.c.h.b16 %v78
  %v581 = vunpack.c.l.b16 %v79
  %v582 = vunpack.c.h.b16 %v79
  %v583 = vunpack.c.l.b16 %v80
  %v584 = vunpack.c.l.b16 %v81
  %v585 = vunpack.c.h.b16 %v81
  %v586 = vunpack.c.l.b16 %v82
  %v587 = vunpack.c.h.b16 %v82
  %v588 = vunpack.c.l.b16 %v83
  %v589 = vunpack.c.l.b16 %v84
  %v590 = vunpack.c.h.b16 %v84
  %v591 = vunpack.c.l.b16 %v85
  %v592 = vunpack.c.h.b16 %v85
  %v593 = vunpack.c.l.b16 %v86
  %v594 = vunpack.c.l.b16 %v87
  %v595 = vunpack.c.h.b16 %v87
  %v596 = vunpack.c.l.b16 %v88
  %v597 = vunpack.c.h.b16 %v88
  %v598 = vunpack.c.l.b16 %v89
  %v599 = vunpack.c.l.b16 %v90
  %v600 = vunpack.c.h.b16 %v90
  %v601 = vunpack.c.l.b16 %v91
  %v602 = vunpack.c.h.b16 %v91
  %v603 = vunpack.c.l.b16 %v92
  %v604 = vunpack.c.l.b16 %v93
  %v605 = vunpack.c.h.b16 %v93
  %v606 = vunpack.c.l.b16 %v94
  %v607 = vunpack.c.h.b16 %v94
  %v608 = vunpack.c.l.b16 %v95
  %v609 = vunpack.c.l.b16 %v96
  %v610 = vunpack.c.h.b16 %v96
  %v611 = vunpack.c.l.b16 %v97
  %v612 = vunpack.c.h.b16 %v97
  %v613 = vunpack.c.l.b16 %v98
  %v614 = vunpack.c.l.b16 %v99
  %v615 = vunpack.c.h.b16 %v99
  %v616 = vunpack.c.l.b16 %v100
  %v617 = vunpack.c.h.b16 %v100
  %v618 = vunpack.c.l.b16 %v101
  %v619 = vunpack.c.l.b16 %v102
  %v620 = vunpack.c.h.b16 %v102
  %v621 = vunpack.c.l.b16 %v103
  %v622 = vunpack.c.h.b16 %v103
  %v623 = vunpack.c.l.b16 %v104
  %v624 = vunpack.c.l.b16 %v105
  %v625 = vunpack.c.h.b16 %v105
  %v626 = vunpack.c.l.b16 %v106
  %v627 = vunpack.c.h.b16 %v106
  %v628 = vunpack.c.l.b16 %v107
  %v629 = vunpack.c.l.b16 %v108
  %v630 = vunpack.c.h.b16 %v108
  %v631 = vunpack.c.l.b16 %v109
  %v632 = vunpack.c.h.b16 %v109
  %v633 = vunpack.c.l.b16 %v110
  %v634 = vunpack.c.l.b16 %v111
  %v635 = vunpack.c.h.b16 %v111
  %v636 = vunpack.c.l.b16 %v112
  %v637 = vunpack.c.h.b16 %v112
  %v638 = vunpack.c.l.b16 %v113
  %v639 = vunpack.c.l.b16 %v114
  %v640 = vunpack.c.h.b16 %v114
  %v641 = vunpack.c.l.b16 %v115
  %v642 = vunpack.c.h.b16 %v115
  %v643 = vunpack.c.l.b16 %v116
  %v644 = vunpack.c.l.b16 %v117
  %v645 = vunpack.c.h.b16 %v117
  %v646 = vunpack.c.l.b16 %v118
  %v647 = vunpack.c.h.b16 %v118
  %v648 = vunpack.c.l.b16 %v119
  %v649 = vunpack.c.l.b16 %v120
  %v650 = vunpack.c.h.b16 %v120
  %v651 = vunpack.c.l.b16 %v121
  %v652 = vunpack.c.h.b16 %v121
  %v653 = vunpack.c.l.b16 %v122
  %v654 = vunpack.c.l.b16 %v123
  %v655 = vunpack.c.h.b16 %v123
  %v656 = vunpack.c.l.b16 %v124
  %v657 = vunpack.c.h.b16 %v124
  %v658 = vunpack.c.l.b16 %v125
  %v659 = vunpack.c.l.b16 %v126
  %v660 = vunpack.c.h.b16 %v126
  %v661 = vunpack.c.l.b16 %v127
  %v662 = vunpack.c.h.b16 %v127
  %v663 = vunpack.c.l.b16 %v128
  %v664 = vunpack.c.l.b16 %v129
  %v665 = vunpack.c.h.b16 %v129
  %v666 = vunpack.c.l.b16 %v130
  %v667 = vunpack.c.h.b16 %v130
  %v668 = vunpack.c.l.b16 %v131
  %v669 = vunpack.c.l.b16 %v132
  %v670 = vunpack.c.h.b16 %v132
  %v671 = vunpack.c.l.b16 %v133
  %v672 = vunpack.c.h.b16 %v133
  %v673 = vunpack.c.l.b16 %v134
  %v674 = vunpack.c.l.b16 %v135
  %v675 = vunpack.c.h.b16 %v135
  %v676 = vunpack.c.l.b16 %v136
  %v677 = vunpack.c.h.b16 %v136
  %v678 = vunpack.c.l.b16 %v137
  %v679 = vunpack.c.l.b16 %v138
  %v680 = vunpack.c.h.b16 %v138
  %v681 = vunpack.c.l.b16 %v139
  %v682 = vunpack.c.h.b16 %v139
  %v683 = vunpack.c.l.b16 %v140
  %v684 = vunpack.c.l.b16 %v141
  %v685 = vunpack.c.h.b16 %v141
  %v686 = vunpack.c.l.b16 %v142
  %v687 = vunpack.c.h.b16 %v142
  %v688 = vunpack.c.l.b16 %v143
  %v689 = vunpack.c.l.b16 %v144
  %v690 = vunpack.c.h.b16 %v144
  %v691 = vunpack.c.l.b16 %v145
  %v692 = vunpack.c.h.b16 %v145
  %v693 = vunpack.c.l.b16 %v146
  %v694 = vunpack.c.l.b16 %v147
  %v695 = vunpack.c.h.b16 %v147
  %v696 = vunpack.c.l.b16 %v148
  %v697 = vunpack.c.h.b16 %v148
  %v698 = vunpack.c.l.b16 %v149
  %v699 = vunpack.c.l.b16 %v150
  %v700 = vunpack.c.h.b16 %v150
  %v701 = vunpack.c.l.b16 %v151
  %v702 = vunpack.c.h.b16 %v151
  %v703 = vunpack.c.l.b16 %v152
  %v704 = vunpack.c.l.b16 %v153
  %v705 = vunpack.c.h.b16 %v153
  %v706 = vunpack.c.l.b16 %v154
  %v707 = vunpack.c.h.b16 %v154
  %v708 = vunpack.c.l.b16 %v155
  %v709 = vunpack.c.l.b16 %v156
  %v710 = vunpack.c.h.b16 %v156
  %v711 = vunpack.c.l.b16 %v157
  %v712 = vunpack.c.h.b16 %v157
  %v713 = vunpack.c.l.b16 %v158
  %v714 = vunpack.c.l.b16 %v159
  %v715 = vunpack.c.h.b16 %v159
  %v716 = vunpack.c.l.b16 %v160
  %v717 = vunpack.c.h.b16 %v160
  %v718 = vunpack.c.l.b16 %v161
  %v719 = vunpack.c.l.b16 %v162
  %v720 = vunpack.c.h.b16 %v162
  %v721 = vunpack.c.l.b16 %v163
  %v722 = vunpack.c.h.b16 %v163
  %v723 = vunpack.c.l.b16 %v164
  %v724 = vunpack.c.l.b16 %v165
  %v725 = vunpack.c.h.b16 %v165
  %v726 = vunpack.c.l.b16 %v166
  %v727 = vunpack.c.h.b16 %v166
  %v728 = vunpack.c.l.b16 %v167
  %v729 = vunpack.c.l.b16 %v168
  %v730 = vunpack.c.h.b16 %v168
  %v731 = vunpack.c.l.b16 %v169
  %v732 = vunpack.c.h.b16 %v169
  %v733 = vunpack.c.l.b16 %v170
  %v734 = vunpack.c.l.b16 %v171
  %v735 = vunpack.c.h.b16 %v171
  %v736 = vunpack.c.l.b16 %v172
  %v737 = vunpack.c.h.b16 %v172
  %v738 = vunpack.c.l.b16 %v173
  %v739 = vunpack.c.l.b16 %v174
  %v740 = vunpack.c.h.b16 %v174
  %v741 = vunpack.c.l.b16 %v175
  %v742 = vunpack.c.h.b16 %v175
  %v743 = vunpack.c.l.b16 %v176
  %v744 = vunpack.c.l.b16 %v177
  %v745 = vunpack.c.h.b16 %v177
  %v746 = vunpack.c.l.b16 %v178
  %v747 = vunpack.c.h.b16 %v178
  %v748 = vunpack.c.l.b16 %v179
  %v749 = vunpack.c.l.b16 %v180
  %v750 = vunpack.c.h.b16 %v180
  %v751 = vunpack.c.l.b16 %v181
  %v752 = vunpack.c.h.b16 %v181
  %v753 = vunpack.c.l.b16 %v182
  %v754 = vunpack.c.l.b16 %v183
  %v755 = vunpack.c.h.b16 %v183
  %v756 = vunpack.c.l.b16 %v184
  %v757 = vunpack.c.h.b16 %v184
  %v758 = vunpack.c.l.b16 %v185
  %v759 = vunpack.c.l.b16 %v186
  %v760 = vunpack.c.h.b16 %v186
  %v761 = vunpack.c.l.b16 %v187
  %v762 = vunpack.c.h.b16 %v187
  %v763 = vunpack.c.l.b16 %v188
  %v764 = vunpack.c.l.b16 %v189
  %v765 = vunpack.c.h.b16 %v189
  %v766 = vunpack.c.l.b16 %v190
  %v767 = vunpack.c.h.b16 %v190
  %v768 = vunpack.c.l.b16 %v191
  %v769 = vunpack.c.l.b16 %v192
  %v770 = vunpack.c.h.b16 %v192
  %v771 = vunpack.c.l.b16 %v193
  %v772 = vunpack.c.h.b16 %v193
  %v773 = vunpack.c.l.b16 %v194
  %v774 = vunpack.c.l.b16 %v195
  %v775 = vunpack.c.h.b16 %v195
  %v776 = vunpack.c.l.b16 %v196
  %v777 = vunpack.c.h.b16 %v196
  %v778 = vunpack.c.l.b16 %v197
  %v779 = vunpack.c.l.b16 %v198
  %v780 = vunpack.c.h.b16 %v198
  %v781 = vunpack.c.l.b16 %v199
  %v782 = vunpack.c.h.b16 %v199
  %v783 = vunpack.c.l.b16 %v200
  %v784 = vunpack.c.l.b16 %v201
  %v785 = vunpack.c.h.b16 %v201
  %v786 = vunpack.c.l.b16 %v202
  %v787 = vunpack.c.h.b16 %v202
  %v788 = vunpack.c.l.b16 %v203
  %v789 = vunpack.c.l.b16 %v204
  %v790 = vunpack.c.h.b16 %v204
  %v791 = vunpack.c.l.b16 %v205
  %v792 = vunpack.c.h.b16 %v205
  %v793 = vunpack.c.l.b16 %v206
  %v794 = vunpack.c.l.b16 %v207
  %v795 = vunpack.c.h.b16 %v207
  %v796 = vunpack.c.l.b16 %v208
  %v797 = vunpack.c.h.b16 %v208
  %v798 = vunpack.c.l.b16 %v209
  %v799 = vpack.c.b16 %v484, %v479
  %v800 = vpack.c.b16 %v485, %v480
  %v801 = vpack.c.b16 %v486, %v481
  %v802 = vpack.c.b16 %v487, %v482
  %v803 = vpack.c.b16 %v488, %v483
  %v804 = vpack.c.b16 %v494, %v489
  %v805 = vpack.c.b16 %v495, %v490
  %v806 = vpack.c.b16 %v496, %v491
  %v807 = vpack.c.b16 %v497, %v492
  %v808 = vpack.c.b16 %v498, %v493
  %v809 = vpack.c.b16 %v504, %v499
  %v810 = vpack.c.b16 %v505, %v500
  %v811 = vpack.c.b16 %v506, %v501
  %v812 = vpack.c.b16 %v507, %v502
  %v813 = vpack.c.b16 %v508, %v503
  %v814 = vpack.c.b16 %v514, %v509
  %v815 = vpack.c.b16 %v515, %v510
  %v816 = vpack.c.b16 %v516, %v511
  %v817 = vpack.c.b16 %v517, %v512
  %v818 = vpack.c.b16 %v518, %v513
  %v819 = vpack.c.b16 %v524, %v519
  %v820 = vpack.c.b16 %v525, %v520
  %v821 = vpack.c.b16 %v526, %v521
  %v822 = vpack.c.b16 %v527, %v522
  %v823 = vpack.c.b16 %v528, %v523
  %v824 = vpack.c.b16 %v534, %v529
  %v825 = vpack.c.b16 %v535, %v530
  %v826 = vpack.c.b16 %v536, %v531
  %v827 = vpack.c.b16 %v537, %v532
  %v828 = vpack.c.b16 %v538, %v533
  %v829 = vpack.c.b16 %v544, %v539
  %v830 = vpack.c.b16 %v545, %v540
  %v831 = vpack.c.b16 %v546, %v541
  %v832 = vpack.c.b16 %v547, %v542
  %v833 = vpack.c.b16 %v548, %v543
  %v834 = vpack.c.b16 %v554, %v549
  %v835 = vpack.c.b16 %v555, %v550
  %v836 = vpack.c.b16 %v556, %v551
  %v837 = vpack.c.b16 %v557, %v552
  %v838 = vpack.c.b16 %v558, %v553
  %v839 = vpack.c.b16 %v564, %v559
  %v840 = vpack.c.b16 %v565, %v560
  %v841 = vpack.c.b16 %v566, %v561
  %v842 = vpack.c.b16 %v567, %v562
  %v843 = vpack.c.b16 %v568, %v563
  %v844 = vpack.c.b16 %v574, %v569
  %v845 = vpack.c.b16 %v575, %v570
  %v846 = vpack.c.b16 %v576, %v571
  %v847 = vpack.c.b16 %v577, %v572
  %v848 = vpack.c.b16 %v578, %v573
  %v849 = vpack.c.b16 %v584, %v579
  %v850 = vpack.c.b16 %v585, %v580
  %v851 = vpack.c.b16 %v586, %v581
  %v852 = vpack.c.b16 %v587, %v582
  %v853 = vpack.c.b16 %v588, %v583
  %v854 = vpack.c.b16 %v594, %v589
  %v855 = vpack.c.b16 %v595, %v590
  %v856 = vpack.c.b16 %v596, %v591
  %v857 = vpack.c.b16 %v597, %v592
  %v858 = vpack.c.b16 %v598, %v593
  %v859 = vpack.c.b16 %v604, %v599
  %v860 = vpack.c.b16 %v605, %v600
  %v861 = vpack.c.b16 %v606, %v601
  %v862 = vpack.c.b16 %v607, %v602
  %v863 = vpack.c.b16 %v608, %v603
  %v864 = vpack.c.b16 %v614, %v609
  %v865 = vpack.c.b16 %v615, %v610
  %v866 = vpack.c.b16 %v616, %v611
  %v867 = vpack.c.b16 %v617, %v612
  %v868 = vpack.c.b16 %v618, %v613
  %v869 = vpack.c.b16 %v624, %v619
  %v870 = vpack.c.b16 %v625, %v620
  %v871 = vpack.c.b16 %v626, %v621
  %v872 = vpack.c.b16 %v627, %v622
  %v873 = vpack.c.b16 %v628, %v623
  %v874 = vpack.c.b16 %v634, %v629
  %v875 = vpack.c.b16 %v635, %v630
  %v876 = vpack.c.b16 %v636, %v631
  %v877 = vpack.c.b16 %v637, %v632
  %v878 = vpack.c.b16 %v638, %v633
  %v879 = vpack.c.b16 %v644, %v639
  %v880 = vpack.c.b16 %v645, %v640
  %v881 = vpack.c.b16 %v646, %v641
  %v882 = vpack.c.b16 %v647, %v642
  %v883 = vpack.c.b16 %v648, %v643
  %v884 = vpack.c.b16 %v654, %v649
  %v885 = vpack.c.b16 %v655, %v650
  %v886 = vpack.c.b16 %v656, %v651
  %v887 = vpack.c.b16 %v657, %v652
  %v888 = vpack.c.b16 %v658, %v653
  %v889 = vpack.c.b16 %v664, %v659
  %v890 = vpack.c.b16 %v665, %v660
  %v891 = vpack.c.b16 %v666, %v661
  %v892 = vpack.c.b16 %v667, %v662
  %v893 = vpack.c.b16 %v668, %v663
  %v894 = vpack.c.b16 %v674, %v669
  %v895 = vpack.c.b16 %v675, %v670
  %v896 = vpack.c.b16 %v676, %v671
  %v897 = vpack.c.b16 %v677, %v672
  %v898 = vpack.c.b16 %v678, %v673
  %v899 = vpack.c.b16 %v684, %v679
  %v900 = vpack.c.b16 %v685, %v680
  %v901 = vpack.c.b16 %v686, %v681
  %v902 = vpack.c.b16 %v687, %v682
  %v903 = vpack.c.b16 %v688, %v683
  %v904 = vpack.c.b16 %v694, %v689
  %v905 = vpack.c.b16 %v695, %v690
  %v906 = vpack.c.b16 %v696, %v691
  %v907 = vpack.c.b16 %v697, %v692
  %v908 = vpack.c.b16 %v698, %v693
  %v909 = vpack.c.b16 %v704, %v699
  %v910 = vpack.c.b16 %v705, %v700
  %v911 = vpack.c.b16 %v706, %v701
  %v912 = vpack.c.b16 %v707, %v702
  %v913 = vpack.c.b16 %v708, %v703
  %v914 = vpack.c.b16 %v714, %v709
  %v915 = vpack.c.b16 %v715, %v710
  %v916 = vpack.c.b16 %v716, %v711
  %v917 = vpack.c.b16 %v717, %v712
  %v918 = vpack.c.b16 %v718, %v713
  %v919 = vpack.c.b16 %v724, %v719
  %v920 = vpack.c.b16 %v725, %v720
  %v921 = vpack.c.b16 %v726, %v721
  %v922 = vpack.c.b16 %v727, %v722
  %v923 = vpack.c.b16 %v728, %v723
  %v924 = vpack.c.b16 %v734, %v729
  %v925 = vpack.c.b16 %v735, %v730
  %v926 = vpack.c.b16 %v736, %v731
  %v927 = vpack.c.b16 %v737, %v732
  %v928 = vpack.c.b16 %v738, %v733
  %v929 = vpack.c.b16 %v744, %v739
  %v930 = vpack.c.b16 %v745, %v740
  %v931 = vpack.c.b16 %v746, %v741
  %v932 = vpack.c.b16 %v747, %v742
  %v933 = vpack.c.b16 %v748, %v743
  %v934 = vpack.c.b16 %v754, %v749
  %v935 = vpack.c.b16 %v755, %v750
  %v936 = vpack.c.b16 %v756, %v751
  %v937 = vpack.c.b16 %v757, %v752
  %v938 = vpack.c.b16 %v758, %v753
  %v939 = vpack.c.b16 %v764, %v759
  %v940 = vpack.c.b16 %v765, %v760
  %v941 = vpack.c.b16 %v766, %v761
  %v942 = vpack.c.b16 %v767, %v762
  %v943 = vpack.c.b16 %v768, %v763
  %v944 = vpack.c.b16 %v774, %v769
  %v945 = vpack.c.b16 %v775, %v770
  %v946 = vpack.c.b16 %v776, %v771
  %v947 = vpack.c.b16 %v777, %v772
  %v948 = vpack.c.b16 %v778, %v773
  %v949 = vpack.c.b16 %v784, %v779
  %v950 = vpack.c.b16 %v785, %v780
  %v951 = vpack.c.b16 %v786, %v781
  %v952 = vpack.c.b16 %v787, %v782
  %v953 = vpack.c.b16 %v788, %v783
  %v954 = vpack.c.b16 %v794, %v789
  %v955 = vpack.c.b16 %v795, %v790
  %v956 = vpack.c.b16 %v796, %v791
  %v957 = vpack.c.b16 %v797, %v792
  %v958 = vpack.c.b16 %v798, %v793
  %v1159 = vunpack.c.l.b16 %v210
  %v1160 = vunpack.c.l.b16 %v211
  %v1161 = vunpack.c.l.b16 %v212
  %v1162 = vunpack.c.l.b16 %v213
  %v1163 = vunpack.c.l.b16 %v214
  %v1164 = vunpack.c.l.b16 %v215
  %v1165 = vunpack.c.l.b16 %v216
  %v1166 = vunpack.c.l.b16 %v217
  %v1167 = vunpack.c.l.b16 %v218
  %v1168 = vunpack.c.l.b16 %v219
  %v1169 = vunpack.c.l.b16 %v220
  %v1170 = vunpack.c.l.b16 %v221
  %v1171 = vunpack.c.l.b16 %v222
  %v1172 = vunpack.c.l.b16 %v223
  %v1173 = vunpack.c.l.b16 %v224
  %v1174 = vunpack.c.l.b16 %v225
  %v1175 = vunpack.c.l.b16 %v226
  %v1176 = vunpack.c.l.b16 %v227
  %v1177 = vunpack.c.l.b16 %v228
  %v1178 = vunpack.c.l.b16 %v229
  %v1179 = vunpack.c.l.b16 %v230
  %v1180 = vunpack.c.l.b16 %v231
  %v1181 = vunpack.c.l.b16 %v232
  %v1182 = vunpack.c.l.b16 %v233
  %v1183 = vunpack.c.l.b16 %v234
  %v1184 = vunpack.c.l.b16 %v235
  %v1185 = vunpack.c.l.b16 %v236
  %v1186 = vunpack.c.l.b16 %v237
  %v1187 = vunpack.c.l.b16 %v238
  %v1188 = vunpack.c.l.b16 %v239
  %v1189 = vunpack.c.l.b16 %v240
  %v1190 = vunpack.c.l.b16 %v241
  %v1191 = vunpack.c.l.b16 %v242
  %v1192 = vunpack.c.l.b16 %v243
  %v1193 = vunpack.c.l.b16 %v244
  %v1194 = vunpack.c.l.b16 %v245
  %v1195 = vunpack.c.l.b16 %v246
  %v1196 = vunpack.c.l.b16 %v247
  %v1197 = vunpack.c.l.b16 %v248
  %v1198 = vunpack.c.l.b16 %v249
  %v1199 = vunpack.c.l.b16 %v250
  %v1200 = vunpack.c.l.b16 %v251
  %v1201 = vunpack.c.l.b16 %v252
  %v1202 = vunpack.c.l.b16 %v253
  %v1203 = vunpack.c.l.b16 %v254
  %v1204 = vunpack.c.l.b16 %v255
  %v1205 = vunpack.c.l.b16 %v256
  %v1206 = vunpack.c.l.b16 %v257
  %v1207 = vunpack.c.l.b16 %v258
  %v1208 = vunpack.c.l.b16 %v259
  %v1209 = vunpack.c.l.b16 %v260
  %v1210 = vunpack.c.l.b16 %v261
  %v1211 = vunpack.c.l.b16 %v262
  %v1212 = vunpack.c.l.b16 %v263
  %v1213 = vunpack.c.l.b16 %v264
  %v1214 = vunpack.c.l.b16 %v265
  %v1215 = vunpack.c.l.b16 %v266
  %v1216 = vunpack.c.l.b16 %v267
  %v1217 = vunpack.c.l.b16 %v268
  %v1218 = vunpack.c.l.b16 %v269
  %v1219 = vunpack.c.l.b16 %v270
  %v1220 = vunpack.c.l.b16 %v271
  %v1221 = vunpack.c.l.b16 %v272
  %v1222 = vunpack.c.l.b16 %v273
  %v1223 = vunpack.c.l.b16 %v274
  %v1224 = vunpack.c.l.b16 %v275
  %v1225 = vunpack.c.l.b16 %v276
  %v1226 = vunpack.c.l.b16 %v277
  %v1227 = vunpack.c.l.b16 %v278
  %v1228 = vunpack.c.l.b16 %v279
  %v1229 = vunpack.c.l.b16 %v280
  %v1230 = vunpack.c.l.b16 %v281
  %v1231 = vpack.c.b16 %v1160, %v1159
  %v1232 = vpack.c.b16 %v1162, %v1161
  %v1233 = vpack.c.b16 %v1164, %v1163
  %v1234 = vpack.c.b16 %v1166, %v1165
  %v1235 = vpack.c.b16 %v1168, %v1167
  %v1236 = vpack.c.b16 %v1170, %v1169
  %v1237 = vpack.c.b16 %v1172, %v1171
  %v1238 = vpack.c.b16 %v1174, %v1173
  %v1239 = vpack.c.b16 %v1176, %v1175
  %v1240 = vpack.c.b16 %v1178, %v1177
  %v1241 = vpack.c.b16 %v1180, %v1179
  %v1242 = vpack.c.b16 %v1182, %v1181
  %v1243 = vpack.c.b16 %v1184, %v1183
  %v1244 = vpack.c.b16 %v1186, %v1185
  %v1245 = vpack.c.b16 %v1188, %v1187
  %v1246 = vpack.c.b16 %v1190, %v1189
  %v1247 = vpack.c.b16 %v1192, %v1191
  %v1248 = vpack.c.b16 %v1194, %v1193
  %v1249 = vpack.c.b16 %v1196, %v1195
  %v1250 = vpack.c.b16 %v1198, %v1197
  %v1251 = vpack.c.b16 %v1200, %v1199
  %v1252 = vpack.c.b16 %v1202, %v1201
  %v1253 = vpack.c.b16 %v1204, %v1203
  %v1254 = vpack.c.b16 %v1206, %v1205
  %v1255 = vpack.c.b16 %v1208, %v1207
  %v1256 = vpack.c.b16 %v1210, %v1209
  %v1257 = vpack.c.b16 %v1212, %v1211
  %v1258 = vpack.c.b16 %v1214, %v1213
  %v1259 = vpack.c.b16 %v1216, %v1215
  %v1260 = vpack.c.b16 %v1218, %v1217
  %v1261 = vpack.c.b16 %v1220, %v1219
  %v1262 = vpack.c.b16 %v1222, %v1221
  %v1263 = vpack.c.b16 %v1224, %v1223
  %v1264 = vpack.c.b16 %v1226, %v1225
  %v1265 = vpack.c.b16 %v1228, %v1227
  %v1266 = vpack.c.b16 %v1230, %v1229
  %vm1303 = vcmask 523264
  %v1305 = vsel %vm1303, %v803, 0
  %v1308 = vsel %vm1303, %v808, 0
  %v1311 = vsel %vm1303, %v813, 0
  %v1314 = vsel %vm1303, %v818, 0
  %v1317 = vsel %vm1303, %v823, 0
  %v1320 = vsel %vm1303, %v828, 0
  %v1323 = vsel %vm1303, %v833, 0
  %v1326 = vsel %vm1303, %v838, 0
  %v1329 = vsel %vm1303, %v843, 0
  %v1332 = vsel %vm1303, %v848, 0
  %v1335 = vsel %vm1303, %v853, 0
  %v1338 = vsel %vm1303, %v858, 0
  %v1341 = vsel %vm1303, %v863, 0
  %v1344 = vsel %vm1303, %v868, 0
  %v1347 = vsel %vm1303, %v873, 0
  %v1350 = vsel %vm1303, %v878, 0
  %v1353 = vsel %vm1303, %v883, 0
  %v1356 = vsel %vm1303, %v888, 0
  %v1359 = vsel %vm1303, %v893, 0
  %v1362 = vsel %vm1303, %v898, 0
  %v1365 = vsel %vm1303, %v903, 0
  %v1368 = vsel %vm1303, %v908, 0
  %v1371 = vsel %vm1303, %v913, 0
  %v1374 = vsel %vm1303, %v918, 0
  %v1377 = vsel %vm1303, %v923, 0
  %v1380 = vsel %vm1303, %v928, 0
  %v1383 = vsel %vm1303, %v933, 0
  %v1386 = vsel %vm1303, %v938, 0
  %v1389 = vsel %vm1303, %v943, 0
  %v1392 = vsel %vm1303, %v948, 0
  %v1395 = vsel %vm1303, %v953, 0
  %v1398 = vsel %vm1303, %v958, 0
  %1400 = vmatprep.subr.bf16.mxu0 0
  %1401 = vmatpush1.bf16.msra.mxu0 %v1238
  %1402 = vmatprep.subr.bf16.mxu0 0
  %1403 = vmatpush1.bf16.msra.mxu0 %v1237
  %1404 = vmatprep.subr.bf16.mxu0 0
  %1405 = vmatpush1.bf16.msra.mxu0 %v1236
  %1406 = vmatprep.subr.bf16.mxu0 0
  %1407 = vmatpush1.bf16.msra.mxu0 %v1235
  %1408 = vmatprep.subr.bf16.mxu0 0
  %1409 = vmatpush1.bf16.msra.mxu0 %v1234
  %1410 = vmatprep.subr.bf16.mxu0 0
  %1411 = vmatpush1.bf16.msra.mxu0 %v1233
  %1412 = vmatprep.subr.bf16.mxu0 0
  %1413 = vmatpush1.bf16.msra.mxu0 %v1232
  %1414 = vmatprep.subr.bf16.mxu0 0
  %1415 = vmatpush1.bf16.msra.mxu0 %v1231
  %1416 = vmatprep.subr.bf16.mxu0 0
  %1417 = vmatpush2.bf16.msra.mxu0 %v1246
  %1418 = vmatprep.subr.bf16.mxu0 0
  %1419 = vmatpush2.bf16.msra.mxu0 %v1245
  %1420 = vmatprep.subr.bf16.mxu0 0
  %1421 = vmatpush2.bf16.msra.mxu0 %v1244
  %1422 = vmatprep.subr.bf16.mxu0 0
  %1423 = vmatpush2.bf16.msra.mxu0 %v1243
  %1424 = vmatprep.subr.bf16.mxu0 0
  %1425 = vmatpush2.bf16.msra.mxu0 %v1242
  %1426 = vmatprep.subr.bf16.mxu0 0
  %1427 = vmatpush2.bf16.msra.mxu0 %v1241
  %1428 = vmatprep.subr.bf16.mxu0 0
  %1429 = vmatpush2.bf16.msra.mxu0 %v1240
  %1430 = vmatprep.subr.bf16.mxu0 0
  %1431 = vmatpush2.bf16.msra.mxu0 %v1239
  %1432 = vmatprep.mubr.bf16.mxu0 %v800
  %1433 = vmatmul.mubr.bf16.gmra.mxu0 %v799
  %v1434 = vpop.f32.mrf.mxu0
  %v1435 = vadd.f32 %v286, %v1434
  %v1436 = vpop.f32.mrf.mxu0
  %v1437 = vpop.f32.mrf.mxu0
  %v1438 = vadd.f32 %v286, %v1437
  %v1439 = vpop.f32.mrf.mxu0
  %1440 = vmatprep.mubr.bf16.mxu0 %v805
  %1441 = vmatmul.mubr.bf16.gmra.mxu0 %v804
  %v1442 = vpop.f32.mrf.mxu0
  %v1443 = vadd.f32 %v286, %v1442
  %v1444 = vpop.f32.mrf.mxu0
  %v1445 = vpop.f32.mrf.mxu0
  %v1446 = vadd.f32 %v286, %v1445
  %v1447 = vpop.f32.mrf.mxu0
  %1448 = vmatprep.mubr.bf16.mxu0 %v810
  %1449 = vmatmul.mubr.bf16.gmra.mxu0 %v809
  %v1450 = vpop.f32.mrf.mxu0
  %v1451 = vadd.f32 %v286, %v1450
  %v1452 = vpop.f32.mrf.mxu0
  %v1453 = vpop.f32.mrf.mxu0
  %v1454 = vadd.f32 %v286, %v1453
  %v1455 = vpop.f32.mrf.mxu0
  %1456 = vmatprep.mubr.bf16.mxu0 %v815
  %1457 = vmatmul.mubr.bf16.gmra.mxu0 %v814
  %v1458 = vpop.f32.mrf.mxu0
  %v1459 = vadd.f32 %v286, %v1458
  %v1460 = vpop.f32.mrf.mxu0
  %v1461 = vpop.f32.mrf.mxu0
  %v1462 = vadd.f32 %v286, %v1461
  %v1463 = vpop.f32.mrf.mxu0
  %1464 = vmatprep.mubr.bf16.mxu0 %v820
  %1465 = vmatmul.mubr.bf16.gmra.mxu0 %v819
  %v1466 = vpop.f32.mrf.mxu0
  %v1467 = vadd.f32 %v286, %v1466
  %v1468 = vpop.f32.mrf.mxu0
  %v1469 = vpop.f32.mrf.mxu0
  %v1470 = vadd.f32 %v286, %v1469
  %v1471 = vpop.f32.mrf.mxu0
  %1472 = vmatprep.mubr.bf16.mxu0 %v825
  %1473 = vmatmul.mubr.bf16.gmra.mxu0 %v824
  %v1474 = vpop.f32.mrf.mxu0
  %v1475 = vadd.f32 %v286, %v1474
  %v1476 = vpop.f32.mrf.mxu0
  %v1477 = vpop.f32.mrf.mxu0
  %v1478 = vadd.f32 %v286, %v1477
  %v1479 = vpop.f32.mrf.mxu0
  %1480 = vmatprep.mubr.bf16.mxu0 %v830
  %1481 = vmatmul.mubr.bf16.gmra.mxu0 %v829
  %v1482 = vpop.f32.mrf.mxu0
  %v1483 = vadd.f32 %v286, %v1482
  %v1484 = vpop.f32.mrf.mxu0
  %v1485 = vpop.f32.mrf.mxu0
  %v1486 = vadd.f32 %v286, %v1485
  %v1487 = vpop.f32.mrf.mxu0
  %1488 = vmatprep.mubr.bf16.mxu0 %v835
  %1489 = vmatmul.mubr.bf16.gmra.mxu0 %v834
  %v1490 = vpop.f32.mrf.mxu0
  %v1491 = vadd.f32 %v286, %v1490
  %v1492 = vpop.f32.mrf.mxu0
  %v1493 = vpop.f32.mrf.mxu0
  %v1494 = vadd.f32 %v286, %v1493
  %v1495 = vpop.f32.mrf.mxu0
  %1496 = vmatprep.mubr.bf16.mxu0 %v840
  %1497 = vmatmul.mubr.bf16.gmra.mxu0 %v839
  %v1498 = vpop.f32.mrf.mxu0
  %v1499 = vadd.f32 %v286, %v1498
  %v1500 = vpop.f32.mrf.mxu0
  %v1501 = vpop.f32.mrf.mxu0
  %v1502 = vadd.f32 %v286, %v1501
  %v1503 = vpop.f32.mrf.mxu0
  %1504 = vmatprep.mubr.bf16.mxu0 %v845
  %1505 = vmatmul.mubr.bf16.gmra.mxu0 %v844
  %v1506 = vpop.f32.mrf.mxu0
  %v1507 = vadd.f32 %v286, %v1506
  %v1508 = vpop.f32.mrf.mxu0
  %v1509 = vpop.f32.mrf.mxu0
  %v1510 = vadd.f32 %v286, %v1509
  %v1511 = vpop.f32.mrf.mxu0
  %1512 = vmatprep.mubr.bf16.mxu0 %v850
  %1513 = vmatmul.mubr.bf16.gmra.mxu0 %v849
  %v1514 = vpop.f32.mrf.mxu0
  %v1515 = vadd.f32 %v286, %v1514
  %v1516 = vpop.f32.mrf.mxu0
  %v1517 = vpop.f32.mrf.mxu0
  %v1518 = vadd.f32 %v286, %v1517
  %v1519 = vpop.f32.mrf.mxu0
  %1520 = vmatprep.mubr.bf16.mxu0 %v855
  %1521 = vmatmul.mubr.bf16.gmra.mxu0 %v854
  %v1522 = vpop.f32.mrf.mxu0
  %v1523 = vadd.f32 %v286, %v1522
  %v1524 = vpop.f32.mrf.mxu0
  %v1525 = vpop.f32.mrf.mxu0
  %v1526 = vadd.f32 %v286, %v1525
  %v1527 = vpop.f32.mrf.mxu0
  %1528 = vmatprep.mubr.bf16.mxu0 %v860
  %1529 = vmatmul.mubr.bf16.gmra.mxu0 %v859
  %v1530 = vpop.f32.mrf.mxu0
  %v1531 = vadd.f32 %v286, %v1530
  %v1532 = vpop.f32.mrf.mxu0
  %v1533 = vpop.f32.mrf.mxu0
  %v1534 = vadd.f32 %v286, %v1533
  %v1535 = vpop.f32.mrf.mxu0
  %1536 = vmatprep.mubr.bf16.mxu0 %v865
  %1537 = vmatmul.mubr.bf16.gmra.mxu0 %v864
  %v1538 = vpop.f32.mrf.mxu0
  %v1539 = vadd.f32 %v286, %v1538
  %v1540 = vpop.f32.mrf.mxu0
  %v1541 = vpop.f32.mrf.mxu0
  %v1542 = vadd.f32 %v286, %v1541
  %v1543 = vpop.f32.mrf.mxu0
  %1544 = vmatprep.mubr.bf16.mxu0 %v870
  %1545 = vmatmul.mubr.bf16.gmra.mxu0 %v869
  %v1546 = vpop.f32.mrf.mxu0
  %v1547 = vadd.f32 %v286, %v1546
  %v1548 = vpop.f32.mrf.mxu0
  %v1549 = vpop.f32.mrf.mxu0
  %v1550 = vadd.f32 %v286, %v1549
  %v1551 = vpop.f32.mrf.mxu0
  %1552 = vmatprep.mubr.bf16.mxu0 %v875
  %1553 = vmatmul.mubr.bf16.gmra.mxu0 %v874
  %v1554 = vpop.f32.mrf.mxu0
  %v1555 = vadd.f32 %v286, %v1554
  %v1556 = vpop.f32.mrf.mxu0
  %v1557 = vpop.f32.mrf.mxu0
  %v1558 = vadd.f32 %v286, %v1557
  %v1559 = vpop.f32.mrf.mxu0
  %1560 = vmatprep.mubr.bf16.mxu0 %v880
  %1561 = vmatmul.mubr.bf16.gmra.mxu0 %v879
  %v1562 = vpop.f32.mrf.mxu0
  %v1563 = vadd.f32 %v286, %v1562
  %v1564 = vpop.f32.mrf.mxu0
  %v1565 = vpop.f32.mrf.mxu0
  %v1566 = vadd.f32 %v286, %v1565
  %v1567 = vpop.f32.mrf.mxu0
  %1568 = vmatprep.mubr.bf16.mxu0 %v885
  %1569 = vmatmul.mubr.bf16.gmra.mxu0 %v884
  %v1570 = vpop.f32.mrf.mxu0
  %v1571 = vadd.f32 %v286, %v1570
  %v1572 = vpop.f32.mrf.mxu0
  %v1573 = vpop.f32.mrf.mxu0
  %v1574 = vadd.f32 %v286, %v1573
  %v1575 = vpop.f32.mrf.mxu0
  %1576 = vmatprep.mubr.bf16.mxu0 %v890
  %1577 = vmatmul.mubr.bf16.gmra.mxu0 %v889
  %v1578 = vpop.f32.mrf.mxu0
  %v1579 = vadd.f32 %v286, %v1578
  %v1580 = vpop.f32.mrf.mxu0
  %v1581 = vpop.f32.mrf.mxu0
  %v1582 = vadd.f32 %v286, %v1581
  %v1583 = vpop.f32.mrf.mxu0
  %1584 = vmatprep.mubr.bf16.mxu0 %v895
  %1585 = vmatmul.mubr.bf16.gmra.mxu0 %v894
  %v1586 = vpop.f32.mrf.mxu0
  %v1587 = vadd.f32 %v286, %v1586
  %v1588 = vpop.f32.mrf.mxu0
  %v1589 = vpop.f32.mrf.mxu0
  %v1590 = vadd.f32 %v286, %v1589
  %v1591 = vpop.f32.mrf.mxu0
  %1592 = vmatprep.mubr.bf16.mxu0 %v900
  %1593 = vmatmul.mubr.bf16.gmra.mxu0 %v899
  %v1594 = vpop.f32.mrf.mxu0
  %v1595 = vadd.f32 %v286, %v1594
  %v1596 = vpop.f32.mrf.mxu0
  %v1597 = vpop.f32.mrf.mxu0
  %v1598 = vadd.f32 %v286, %v1597
  %v1599 = vpop.f32.mrf.mxu0
  %1600 = vmatprep.mubr.bf16.mxu0 %v905
  %1601 = vmatmul.mubr.bf16.gmra.mxu0 %v904
  %v1602 = vpop.f32.mrf.mxu0
  %v1603 = vadd.f32 %v286, %v1602
  %v1604 = vpop.f32.mrf.mxu0
  %v1605 = vpop.f32.mrf.mxu0
  %v1606 = vadd.f32 %v286, %v1605
  %v1607 = vpop.f32.mrf.mxu0
  %1608 = vmatprep.mubr.bf16.mxu0 %v910
  %1609 = vmatmul.mubr.bf16.gmra.mxu0 %v909
  %v1610 = vpop.f32.mrf.mxu0
  %v1611 = vadd.f32 %v286, %v1610
  %v1612 = vpop.f32.mrf.mxu0
  %v1613 = vpop.f32.mrf.mxu0
  %v1614 = vadd.f32 %v286, %v1613
  %v1615 = vpop.f32.mrf.mxu0
  %1616 = vmatprep.mubr.bf16.mxu0 %v915
  %1617 = vmatmul.mubr.bf16.gmra.mxu0 %v914
  %v1618 = vpop.f32.mrf.mxu0
  %v1619 = vadd.f32 %v286, %v1618
  %v1620 = vpop.f32.mrf.mxu0
  %v1621 = vpop.f32.mrf.mxu0
  %v1622 = vadd.f32 %v286, %v1621
  %v1623 = vpop.f32.mrf.mxu0
  %1624 = vmatprep.mubr.bf16.mxu0 %v920
  %1625 = vmatmul.mubr.bf16.gmra.mxu0 %v919
  %v1626 = vpop.f32.mrf.mxu0
  %v1627 = vadd.f32 %v286, %v1626
  %v1628 = vpop.f32.mrf.mxu0
  %v1629 = vpop.f32.mrf.mxu0
  %v1630 = vadd.f32 %v286, %v1629
  %v1631 = vpop.f32.mrf.mxu0
  %1632 = vmatprep.mubr.bf16.mxu0 %v925
  %1633 = vmatmul.mubr.bf16.gmra.mxu0 %v924
  %v1634 = vpop.f32.mrf.mxu0
  %v1635 = vadd.f32 %v286, %v1634
  %v1636 = vpop.f32.mrf.mxu0
  %v1637 = vpop.f32.mrf.mxu0
  %v1638 = vadd.f32 %v286, %v1637
  %v1639 = vpop.f32.mrf.mxu0
  %1640 = vmatprep.mubr.bf16.mxu0 %v930
  %1641 = vmatmul.mubr.bf16.gmra.mxu0 %v929
  %v1642 = vpop.f32.mrf.mxu0
  %v1643 = vadd.f32 %v286, %v1642
  %v1644 = vpop.f32.mrf.mxu0
  %v1645 = vpop.f32.mrf.mxu0
  %v1646 = vadd.f32 %v286, %v1645
  %v1647 = vpop.f32.mrf.mxu0
  %1648 = vmatprep.mubr.bf16.mxu0 %v935
  %1649 = vmatmul.mubr.bf16.gmra.mxu0 %v934
  %v1650 = vpop.f32.mrf.mxu0
  %v1651 = vadd.f32 %v286, %v1650
  %v1652 = vpop.f32.mrf.mxu0
  %v1653 = vpop.f32.mrf.mxu0
  %v1654 = vadd.f32 %v286, %v1653
  %v1655 = vpop.f32.mrf.mxu0
  %1656 = vmatprep.mubr.bf16.mxu0 %v940
  %1657 = vmatmul.mubr.bf16.gmra.mxu0 %v939
  %v1658 = vpop.f32.mrf.mxu0
  %v1659 = vadd.f32 %v286, %v1658
  %v1660 = vpop.f32.mrf.mxu0
  %v1661 = vpop.f32.mrf.mxu0
  %v1662 = vadd.f32 %v286, %v1661
  %v1663 = vpop.f32.mrf.mxu0
  %1664 = vmatprep.mubr.bf16.mxu0 %v945
  %1665 = vmatmul.mubr.bf16.gmra.mxu0 %v944
  %v1666 = vpop.f32.mrf.mxu0
  %v1667 = vadd.f32 %v286, %v1666
  %v1668 = vpop.f32.mrf.mxu0
  %v1669 = vpop.f32.mrf.mxu0
  %v1670 = vadd.f32 %v286, %v1669
  %v1671 = vpop.f32.mrf.mxu0
  %1672 = vmatprep.mubr.bf16.mxu0 %v950
  %1673 = vmatmul.mubr.bf16.gmra.mxu0 %v949
  %v1674 = vpop.f32.mrf.mxu0
  %v1675 = vadd.f32 %v286, %v1674
  %v1676 = vpop.f32.mrf.mxu0
  %v1677 = vpop.f32.mrf.mxu0
  %v1678 = vadd.f32 %v286, %v1677
  %v1679 = vpop.f32.mrf.mxu0
  %1680 = vmatprep.mubr.bf16.mxu0 %v955
  %1681 = vmatmul.mubr.bf16.gmra.mxu0 %v954
  %v1682 = vpop.f32.mrf.mxu0
  %v1683 = vadd.f32 %v286, %v1682
  %v1684 = vpop.f32.mrf.mxu0
  %v1685 = vpop.f32.mrf.mxu0
  %v1686 = vadd.f32 %v286, %v1685
  %v1687 = vpop.f32.mrf.mxu0
  %1688 = vdwg.mxu0
  %1689 = vmatprep.subr.bf16.mxu0 0
  %1690 = vmatpush1.bf16.msra.mxu0 %v1254
  %1691 = vmatprep.subr.bf16.mxu0 0
  %1692 = vmatpush1.bf16.msra.mxu0 %v1253
  %1693 = vmatprep.subr.bf16.mxu0 0
  %1694 = vmatpush1.bf16.msra.mxu0 %v1252
  %1695 = vmatprep.subr.bf16.mxu0 0
  %1696 = vmatpush1.bf16.msra.mxu0 %v1251
  %1697 = vmatprep.subr.bf16.mxu0 0
  %1698 = vmatpush1.bf16.msra.mxu0 %v1250
  %1699 = vmatprep.subr.bf16.mxu0 0
  %1700 = vmatpush1.bf16.msra.mxu0 %v1249
  %1701 = vmatprep.subr.bf16.mxu0 0
  %1702 = vmatpush1.bf16.msra.mxu0 %v1248
  %1703 = vmatprep.subr.bf16.mxu0 0
  %1704 = vmatpush1.bf16.msra.mxu0 %v1247
  %1705 = vmatprep.subr.bf16.mxu0 0
  %1706 = vmatpush2.bf16.msra.mxu0 %v1262
  %1707 = vmatprep.subr.bf16.mxu0 0
  %1708 = vmatpush2.bf16.msra.mxu0 %v1261
  %1709 = vmatprep.subr.bf16.mxu0 0
  %1710 = vmatpush2.bf16.msra.mxu0 %v1260
  %1711 = vmatprep.subr.bf16.mxu0 0
  %1712 = vmatpush2.bf16.msra.mxu0 %v1259
  %1713 = vmatprep.subr.bf16.mxu0 0
  %1714 = vmatpush2.bf16.msra.mxu0 %v1258
  %1715 = vmatprep.subr.bf16.mxu0 0
  %1716 = vmatpush2.bf16.msra.mxu0 %v1257
  %1717 = vmatprep.subr.bf16.mxu0 0
  %1718 = vmatpush2.bf16.msra.mxu0 %v1256
  %1719 = vmatprep.subr.bf16.mxu0 0
  %1720 = vmatpush2.bf16.msra.mxu0 %v1255
  %1721 = vmatprep.mubr.bf16.mxu0 %v802
  %1722 = vmatmul.mubr.bf16.gmra.mxu0 %v801
  %v1723 = vpop.f32.mrf.mxu0
  %v1724 = vadd.f32 %v1435, %v1723
  %v1725 = vpop.f32.mrf.mxu0
  %v1726 = vpop.f32.mrf.mxu0
  %v1727 = vadd.f32 %v1438, %v1726
  %v1728 = vpop.f32.mrf.mxu0
  %1729 = vmatprep.mubr.bf16.mxu0 %v807
  %1730 = vmatmul.mubr.bf16.gmra.mxu0 %v806
  %v1731 = vpop.f32.mrf.mxu0
  %v1732 = vadd.f32 %v1443, %v1731
  %v1733 = vpop.f32.mrf.mxu0
  %v1734 = vpop.f32.mrf.mxu0
  %v1735 = vadd.f32 %v1446, %v1734
  %v1736 = vpop.f32.mrf.mxu0
  %1737 = vmatprep.mubr.bf16.mxu0 %v812
  %1738 = vmatmul.mubr.bf16.gmra.mxu0 %v811
  %v1739 = vpop.f32.mrf.mxu0
  %v1740 = vadd.f32 %v1451, %v1739
  %v1741 = vpop.f32.mrf.mxu0
  %v1742 = vpop.f32.mrf.mxu0
  %v1743 = vadd.f32 %v1454, %v1742
  %v1744 = vpop.f32.mrf.mxu0
  %1745 = vmatprep.mubr.bf16.mxu0 %v817
  %1746 = vmatmul.mubr.bf16.gmra.mxu0 %v816
  %v1747 = vpop.f32.mrf.mxu0
  %v1748 = vadd.f32 %v1459, %v1747
  %v1749 = vpop.f32.mrf.mxu0
  %v1750 = vpop.f32.mrf.mxu0
  %v1751 = vadd.f32 %v1462, %v1750
  %v1752 = vpop.f32.mrf.mxu0
  %1753 = vmatprep.mubr.bf16.mxu0 %v822
  %1754 = vmatmul.mubr.bf16.gmra.mxu0 %v821
  %v1755 = vpop.f32.mrf.mxu0
  %v1756 = vadd.f32 %v1467, %v1755
  %v1757 = vpop.f32.mrf.mxu0
  %v1758 = vpop.f32.mrf.mxu0
  %v1759 = vadd.f32 %v1470, %v1758
  %v1760 = vpop.f32.mrf.mxu0
  %1761 = vmatprep.mubr.bf16.mxu0 %v827
  %1762 = vmatmul.mubr.bf16.gmra.mxu0 %v826
  %v1763 = vpop.f32.mrf.mxu0
  %v1764 = vadd.f32 %v1475, %v1763
  %v1765 = vpop.f32.mrf.mxu0
  %v1766 = vpop.f32.mrf.mxu0
  %v1767 = vadd.f32 %v1478, %v1766
  %v1768 = vpop.f32.mrf.mxu0
  %1769 = vmatprep.mubr.bf16.mxu0 %v832
  %1770 = vmatmul.mubr.bf16.gmra.mxu0 %v831
  %v1771 = vpop.f32.mrf.mxu0
  %v1772 = vadd.f32 %v1483, %v1771
  %v1773 = vpop.f32.mrf.mxu0
  %v1774 = vpop.f32.mrf.mxu0
  %v1775 = vadd.f32 %v1486, %v1774
  %v1776 = vpop.f32.mrf.mxu0
  %1777 = vmatprep.mubr.bf16.mxu0 %v837
  %1778 = vmatmul.mubr.bf16.gmra.mxu0 %v836
  %v1779 = vpop.f32.mrf.mxu0
  %v1780 = vadd.f32 %v1491, %v1779
  %v1781 = vpop.f32.mrf.mxu0
  %v1782 = vpop.f32.mrf.mxu0
  %v1783 = vadd.f32 %v1494, %v1782
  %v1784 = vpop.f32.mrf.mxu0
  %1785 = vmatprep.mubr.bf16.mxu0 %v842
  %1786 = vmatmul.mubr.bf16.gmra.mxu0 %v841
  %v1787 = vpop.f32.mrf.mxu0
  %v1788 = vadd.f32 %v1499, %v1787
  %v1789 = vpop.f32.mrf.mxu0
  %v1790 = vpop.f32.mrf.mxu0
  %v1791 = vadd.f32 %v1502, %v1790
  %v1792 = vpop.f32.mrf.mxu0
  %1793 = vmatprep.mubr.bf16.mxu0 %v847
  %1794 = vmatmul.mubr.bf16.gmra.mxu0 %v846
  %v1795 = vpop.f32.mrf.mxu0
  %v1796 = vadd.f32 %v1507, %v1795
  %v1797 = vpop.f32.mrf.mxu0
  %v1798 = vpop.f32.mrf.mxu0
  %v1799 = vadd.f32 %v1510, %v1798
  %v1800 = vpop.f32.mrf.mxu0
  %1801 = vmatprep.mubr.bf16.mxu0 %v852
  %1802 = vmatmul.mubr.bf16.gmra.mxu0 %v851
  %v1803 = vpop.f32.mrf.mxu0
  %v1804 = vadd.f32 %v1515, %v1803
  %v1805 = vpop.f32.mrf.mxu0
  %v1806 = vpop.f32.mrf.mxu0
  %v1807 = vadd.f32 %v1518, %v1806
  %v1808 = vpop.f32.mrf.mxu0
  %1809 = vmatprep.mubr.bf16.mxu0 %v857
  %1810 = vmatmul.mubr.bf16.gmra.mxu0 %v856
  %v1811 = vpop.f32.mrf.mxu0
  %v1812 = vadd.f32 %v1523, %v1811
  %v1813 = vpop.f32.mrf.mxu0
  %v1814 = vpop.f32.mrf.mxu0
  %v1815 = vadd.f32 %v1526, %v1814
  %v1816 = vpop.f32.mrf.mxu0
  %1817 = vmatprep.mubr.bf16.mxu0 %v862
  %1818 = vmatmul.mubr.bf16.gmra.mxu0 %v861
  %v1819 = vpop.f32.mrf.mxu0
  %v1820 = vadd.f32 %v1531, %v1819
  %v1821 = vpop.f32.mrf.mxu0
  %v1822 = vpop.f32.mrf.mxu0
  %v1823 = vadd.f32 %v1534, %v1822
  %v1824 = vpop.f32.mrf.mxu0
  %1825 = vmatprep.mubr.bf16.mxu0 %v867
  %1826 = vmatmul.mubr.bf16.gmra.mxu0 %v866
  %v1827 = vpop.f32.mrf.mxu0
  %v1828 = vadd.f32 %v1539, %v1827
  %v1829 = vpop.f32.mrf.mxu0
  %v1830 = vpop.f32.mrf.mxu0
  %v1831 = vadd.f32 %v1542, %v1830
  %v1832 = vpop.f32.mrf.mxu0
  %1833 = vmatprep.mubr.bf16.mxu0 %v872
  %1834 = vmatmul.mubr.bf16.gmra.mxu0 %v871
  %v1835 = vpop.f32.mrf.mxu0
  %v1836 = vadd.f32 %v1547, %v1835
  %v1837 = vpop.f32.mrf.mxu0
  %v1838 = vpop.f32.mrf.mxu0
  %v1839 = vadd.f32 %v1550, %v1838
  %v1840 = vpop.f32.mrf.mxu0
  %1841 = vmatprep.mubr.bf16.mxu0 %v877
  %1842 = vmatmul.mubr.bf16.gmra.mxu0 %v876
  %v1843 = vpop.f32.mrf.mxu0
  %v1844 = vadd.f32 %v1555, %v1843
  %v1845 = vpop.f32.mrf.mxu0
  %v1846 = vpop.f32.mrf.mxu0
  %v1847 = vadd.f32 %v1558, %v1846
  %v1848 = vpop.f32.mrf.mxu0
  %1849 = vmatprep.mubr.bf16.mxu0 %v882
  %1850 = vmatmul.mubr.bf16.gmra.mxu0 %v881
  %v1851 = vpop.f32.mrf.mxu0
  %v1852 = vadd.f32 %v1563, %v1851
  %v1853 = vpop.f32.mrf.mxu0
  %v1854 = vpop.f32.mrf.mxu0
  %v1855 = vadd.f32 %v1566, %v1854
  %v1856 = vpop.f32.mrf.mxu0
  %1857 = vmatprep.mubr.bf16.mxu0 %v887
  %1858 = vmatmul.mubr.bf16.gmra.mxu0 %v886
  %v1859 = vpop.f32.mrf.mxu0
  %v1860 = vadd.f32 %v1571, %v1859
  %v1861 = vpop.f32.mrf.mxu0
  %v1862 = vpop.f32.mrf.mxu0
  %v1863 = vadd.f32 %v1574, %v1862
  %v1864 = vpop.f32.mrf.mxu0
  %1865 = vmatprep.mubr.bf16.mxu0 %v892
  %1866 = vmatmul.mubr.bf16.gmra.mxu0 %v891
  %v1867 = vpop.f32.mrf.mxu0
  %v1868 = vadd.f32 %v1579, %v1867
  %v1869 = vpop.f32.mrf.mxu0
  %v1870 = vpop.f32.mrf.mxu0
  %v1871 = vadd.f32 %v1582, %v1870
  %v1872 = vpop.f32.mrf.mxu0
  %1873 = vmatprep.mubr.bf16.mxu0 %v897
  %1874 = vmatmul.mubr.bf16.gmra.mxu0 %v896
  %v1875 = vpop.f32.mrf.mxu0
  %v1876 = vadd.f32 %v1587, %v1875
  %v1877 = vpop.f32.mrf.mxu0
  %v1878 = vpop.f32.mrf.mxu0
  %v1879 = vadd.f32 %v1590, %v1878
  %v1880 = vpop.f32.mrf.mxu0
  %1881 = vmatprep.mubr.bf16.mxu0 %v902
  %1882 = vmatmul.mubr.bf16.gmra.mxu0 %v901
  %v1883 = vpop.f32.mrf.mxu0
  %v1884 = vadd.f32 %v1595, %v1883
  %v1885 = vpop.f32.mrf.mxu0
  %v1886 = vpop.f32.mrf.mxu0
  %v1887 = vadd.f32 %v1598, %v1886
  %v1888 = vpop.f32.mrf.mxu0
  %1889 = vmatprep.mubr.bf16.mxu0 %v907
  %1890 = vmatmul.mubr.bf16.gmra.mxu0 %v906
  %v1891 = vpop.f32.mrf.mxu0
  %v1892 = vadd.f32 %v1603, %v1891
  %v1893 = vpop.f32.mrf.mxu0
  %v1894 = vpop.f32.mrf.mxu0
  %v1895 = vadd.f32 %v1606, %v1894
  %v1896 = vpop.f32.mrf.mxu0
  %1897 = vmatprep.mubr.bf16.mxu0 %v912
  %1898 = vmatmul.mubr.bf16.gmra.mxu0 %v911
  %v1899 = vpop.f32.mrf.mxu0
  %v1900 = vadd.f32 %v1611, %v1899
  %v1901 = vpop.f32.mrf.mxu0
  %v1902 = vpop.f32.mrf.mxu0
  %v1903 = vadd.f32 %v1614, %v1902
  %v1904 = vpop.f32.mrf.mxu0
  %1905 = vmatprep.mubr.bf16.mxu0 %v917
  %1906 = vmatmul.mubr.bf16.gmra.mxu0 %v916
  %v1907 = vpop.f32.mrf.mxu0
  %v1908 = vadd.f32 %v1619, %v1907
  %v1909 = vpop.f32.mrf.mxu0
  %v1910 = vpop.f32.mrf.mxu0
  %v1911 = vadd.f32 %v1622, %v1910
  %v1912 = vpop.f32.mrf.mxu0
  %1913 = vmatprep.mubr.bf16.mxu0 %v922
  %1914 = vmatmul.mubr.bf16.gmra.mxu0 %v921
  %v1915 = vpop.f32.mrf.mxu0
  %v1916 = vadd.f32 %v1627, %v1915
  %v1917 = vpop.f32.mrf.mxu0
  %v1918 = vpop.f32.mrf.mxu0
  %v1919 = vadd.f32 %v1630, %v1918
  %v1920 = vpop.f32.mrf.mxu0
  %1921 = vmatprep.mubr.bf16.mxu0 %v927
  %1922 = vmatmul.mubr.bf16.gmra.mxu0 %v926
  %v1923 = vpop.f32.mrf.mxu0
  %v1924 = vadd.f32 %v1635, %v1923
  %v1925 = vpop.f32.mrf.mxu0
  %v1926 = vpop.f32.mrf.mxu0
  %v1927 = vadd.f32 %v1638, %v1926
  %v1928 = vpop.f32.mrf.mxu0
  %1929 = vmatprep.mubr.bf16.mxu0 %v932
  %1930 = vmatmul.mubr.bf16.gmra.mxu0 %v931
  %v1931 = vpop.f32.mrf.mxu0
  %v1932 = vadd.f32 %v1643, %v1931
  %v1933 = vpop.f32.mrf.mxu0
  %v1934 = vpop.f32.mrf.mxu0
  %v1935 = vadd.f32 %v1646, %v1934
  %v1936 = vpop.f32.mrf.mxu0
  %1937 = vmatprep.mubr.bf16.mxu0 %v937
  %1938 = vmatmul.mubr.bf16.gmra.mxu0 %v936
  %v1939 = vpop.f32.mrf.mxu0
  %v1940 = vadd.f32 %v1651, %v1939
  %v1941 = vpop.f32.mrf.mxu0
  %v1942 = vpop.f32.mrf.mxu0
  %v1943 = vadd.f32 %v1654, %v1942
  %v1944 = vpop.f32.mrf.mxu0
  %1945 = vmatprep.mubr.bf16.mxu0 %v942
  %1946 = vmatmul.mubr.bf16.gmra.mxu0 %v941
  %v1947 = vpop.f32.mrf.mxu0
  %v1948 = vadd.f32 %v1659, %v1947
  %v1949 = vpop.f32.mrf.mxu0
  %v1950 = vpop.f32.mrf.mxu0
  %v1951 = vadd.f32 %v1662, %v1950
  %v1952 = vpop.f32.mrf.mxu0
  %1953 = vmatprep.mubr.bf16.mxu0 %v947
  %1954 = vmatmul.mubr.bf16.gmra.mxu0 %v946
  %v1955 = vpop.f32.mrf.mxu0
  %v1956 = vadd.f32 %v1667, %v1955
  %v1957 = vpop.f32.mrf.mxu0
  %v1958 = vpop.f32.mrf.mxu0
  %v1959 = vadd.f32 %v1670, %v1958
  %v1960 = vpop.f32.mrf.mxu0
  %1961 = vmatprep.mubr.bf16.mxu0 %v952
  %1962 = vmatmul.mubr.bf16.gmra.mxu0 %v951
  %v1963 = vpop.f32.mrf.mxu0
  %v1964 = vadd.f32 %v1675, %v1963
  %v1965 = vpop.f32.mrf.mxu0
  %v1966 = vpop.f32.mrf.mxu0
  %v1967 = vadd.f32 %v1678, %v1966
  %v1968 = vpop.f32.mrf.mxu0
  %1969 = vmatprep.mubr.bf16.mxu0 %v957
  %1970 = vmatmul.mubr.bf16.gmra.mxu0 %v956
  %v1971 = vpop.f32.mrf.mxu0
  %v1972 = vadd.f32 %v1683, %v1971
  %v1973 = vpop.f32.mrf.mxu0
  %v1974 = vpop.f32.mrf.mxu0
  %v1975 = vadd.f32 %v1686, %v1974
  %v1976 = vpop.f32.mrf.mxu0
  %1977 = vdwg.mxu0
  %1978 = vmatprep.subr.bf16.mxu0 0
  %1979 = vmatpush1.bf16.msra.mxu0 0
  %1980 = vmatprep.subr.bf16.mxu0 0
  %1981 = vmatpush1.bf16.msra.mxu0 0
  %1982 = vmatprep.subr.bf16.mxu0 0
  %1983 = vmatpush1.bf16.msra.mxu0 0
  %1984 = vmatprep.subr.bf16.mxu0 0
  %1985 = vmatpush1.bf16.msra.mxu0 0
  %1986 = vmatprep.subr.bf16.mxu0 0
  %1987 = vmatpush1.bf16.msra.mxu0 %v1266
  %1988 = vmatprep.subr.bf16.mxu0 0
  %1989 = vmatpush1.bf16.msra.mxu0 %v1265
  %1990 = vmatprep.subr.bf16.mxu0 0
  %1991 = vmatpush1.bf16.msra.mxu0 %v1264
  %1992 = vmatprep.subr.bf16.mxu0 0
  %1993 = vmatpush1.bf16.msra.mxu0 %v1263
  %1994 = vmatprep.subr.bf16.mxu0 0
  %1995 = vmatpush2.bf16.msra.mxu0 0
  %1996 = vmatprep.subr.bf16.mxu0 0
  %1997 = vmatpush2.bf16.msra.mxu0 0
  %1998 = vmatprep.subr.bf16.mxu0 0
  %1999 = vmatpush2.bf16.msra.mxu0 0
  %2000 = vmatprep.subr.bf16.mxu0 0
  %2001 = vmatpush2.bf16.msra.mxu0 0
  %2002 = vmatprep.subr.bf16.mxu0 0
  %2003 = vmatpush2.bf16.msra.mxu0 0
  %2004 = vmatprep.subr.bf16.mxu0 0
  %2005 = vmatpush2.bf16.msra.mxu0 0
  %2006 = vmatprep.subr.bf16.mxu0 0
  %2007 = vmatpush2.bf16.msra.mxu0 0
  %2008 = vmatprep.subr.bf16.mxu0 0
  %2009 = vmatpush2.bf16.msra.mxu0 0
  %2010 = vmatprep.mubr.bf16.mxu0 0
  %2011 = vmatmul.mubr.bf16.gmra.mxu0 %v1305
  %v2012 = vpop.f32.mrf.mxu0
  %v2013 = vadd.f32 %v1724, %v2012
  %v2014 = vpop.f32.mrf.mxu0
  %v2015 = vpop.f32.mrf.mxu0
  %v2016 = vadd.f32 %v1727, %v2015
  %v2017 = vpop.f32.mrf.mxu0
  %2018 = vmatprep.mubr.bf16.mxu0 0
  %2019 = vmatmul.mubr.bf16.gmra.mxu0 %v1308
  %v2020 = vpop.f32.mrf.mxu0
  %v2021 = vadd.f32 %v1732, %v2020
  %v2022 = vpop.f32.mrf.mxu0
  %v2023 = vpop.f32.mrf.mxu0
  %v2024 = vadd.f32 %v1735, %v2023
  %v2025 = vpop.f32.mrf.mxu0
  %2026 = vmatprep.mubr.bf16.mxu0 0
  %2027 = vmatmul.mubr.bf16.gmra.mxu0 %v1311
  %v2028 = vpop.f32.mrf.mxu0
  %v2029 = vadd.f32 %v1740, %v2028
  %v2030 = vpop.f32.mrf.mxu0
  %v2031 = vpop.f32.mrf.mxu0
  %v2032 = vadd.f32 %v1743, %v2031
  %v2033 = vpop.f32.mrf.mxu0
  %2034 = vmatprep.mubr.bf16.mxu0 0
  %2035 = vmatmul.mubr.bf16.gmra.mxu0 %v1314
  %v2036 = vpop.f32.mrf.mxu0
  %v2037 = vadd.f32 %v1748, %v2036
  %v2038 = vpop.f32.mrf.mxu0
  %v2039 = vpop.f32.mrf.mxu0
  %v2040 = vadd.f32 %v1751, %v2039
  %v2041 = vpop.f32.mrf.mxu0
  %2042 = vmatprep.mubr.bf16.mxu0 0
  %2043 = vmatmul.mubr.bf16.gmra.mxu0 %v1317
  %v2044 = vpop.f32.mrf.mxu0
  %v2045 = vadd.f32 %v1756, %v2044
  %v2046 = vpop.f32.mrf.mxu0
  %v2047 = vpop.f32.mrf.mxu0
  %v2048 = vadd.f32 %v1759, %v2047
  %v2049 = vpop.f32.mrf.mxu0
  %2050 = vmatprep.mubr.bf16.mxu0 0
  %2051 = vmatmul.mubr.bf16.gmra.mxu0 %v1320
  %v2052 = vpop.f32.mrf.mxu0
  %v2053 = vadd.f32 %v1764, %v2052
  %v2054 = vpop.f32.mrf.mxu0
  %v2055 = vpop.f32.mrf.mxu0
  %v2056 = vadd.f32 %v1767, %v2055
  %v2057 = vpop.f32.mrf.mxu0
  %2058 = vmatprep.mubr.bf16.mxu0 0
  %2059 = vmatmul.mubr.bf16.gmra.mxu0 %v1323
  %v2060 = vpop.f32.mrf.mxu0
  %v2061 = vadd.f32 %v1772, %v2060
  %v2062 = vpop.f32.mrf.mxu0
  %v2063 = vpop.f32.mrf.mxu0
  %v2064 = vadd.f32 %v1775, %v2063
  %v2065 = vpop.f32.mrf.mxu0
  %2066 = vmatprep.mubr.bf16.mxu0 0
  %2067 = vmatmul.mubr.bf16.gmra.mxu0 %v1326
  %v2068 = vpop.f32.mrf.mxu0
  %v2069 = vadd.f32 %v1780, %v2068
  %v2070 = vpop.f32.mrf.mxu0
  %v2071 = vpop.f32.mrf.mxu0
  %v2072 = vadd.f32 %v1783, %v2071
  %v2073 = vpop.f32.mrf.mxu0
  %2074 = vmatprep.mubr.bf16.mxu0 0
  %2075 = vmatmul.mubr.bf16.gmra.mxu0 %v1329
  %v2076 = vpop.f32.mrf.mxu0
  %v2077 = vadd.f32 %v1788, %v2076
  %v2078 = vpop.f32.mrf.mxu0
  %v2079 = vpop.f32.mrf.mxu0
  %v2080 = vadd.f32 %v1791, %v2079
  %v2081 = vpop.f32.mrf.mxu0
  %2082 = vmatprep.mubr.bf16.mxu0 0
  %2083 = vmatmul.mubr.bf16.gmra.mxu0 %v1332
  %v2084 = vpop.f32.mrf.mxu0
  %v2085 = vadd.f32 %v1796, %v2084
  %v2086 = vpop.f32.mrf.mxu0
  %v2087 = vpop.f32.mrf.mxu0
  %v2088 = vadd.f32 %v1799, %v2087
  %v2089 = vpop.f32.mrf.mxu0
  %2090 = vmatprep.mubr.bf16.mxu0 0
  %2091 = vmatmul.mubr.bf16.gmra.mxu0 %v1335
  %v2092 = vpop.f32.mrf.mxu0
  %v2093 = vadd.f32 %v1804, %v2092
  %v2094 = vpop.f32.mrf.mxu0
  %v2095 = vpop.f32.mrf.mxu0
  %v2096 = vadd.f32 %v1807, %v2095
  %v2097 = vpop.f32.mrf.mxu0
  %2098 = vmatprep.mubr.bf16.mxu0 0
  %2099 = vmatmul.mubr.bf16.gmra.mxu0 %v1338
  %v2100 = vpop.f32.mrf.mxu0
  %v2101 = vadd.f32 %v1812, %v2100
  %v2102 = vpop.f32.mrf.mxu0
  %v2103 = vpop.f32.mrf.mxu0
  %v2104 = vadd.f32 %v1815, %v2103
  %v2105 = vpop.f32.mrf.mxu0
  %2106 = vmatprep.mubr.bf16.mxu0 0
  %2107 = vmatmul.mubr.bf16.gmra.mxu0 %v1341
  %v2108 = vpop.f32.mrf.mxu0
  %v2109 = vadd.f32 %v1820, %v2108
  %v2110 = vpop.f32.mrf.mxu0
  %v2111 = vpop.f32.mrf.mxu0
  %v2112 = vadd.f32 %v1823, %v2111
  %v2113 = vpop.f32.mrf.mxu0
  %2114 = vmatprep.mubr.bf16.mxu0 0
  %2115 = vmatmul.mubr.bf16.gmra.mxu0 %v1344
  %v2116 = vpop.f32.mrf.mxu0
  %v2117 = vadd.f32 %v1828, %v2116
  %v2118 = vpop.f32.mrf.mxu0
  %v2119 = vpop.f32.mrf.mxu0
  %v2120 = vadd.f32 %v1831, %v2119
  %v2121 = vpop.f32.mrf.mxu0
  %2122 = vmatprep.mubr.bf16.mxu0 0
  %2123 = vmatmul.mubr.bf16.gmra.mxu0 %v1347
  %v2124 = vpop.f32.mrf.mxu0
  %v2125 = vadd.f32 %v1836, %v2124
  %v2126 = vpop.f32.mrf.mxu0
  %v2127 = vpop.f32.mrf.mxu0
  %v2128 = vadd.f32 %v1839, %v2127
  %v2129 = vpop.f32.mrf.mxu0
  %2130 = vmatprep.mubr.bf16.mxu0 0
  %2131 = vmatmul.mubr.bf16.gmra.mxu0 %v1350
  %v2132 = vpop.f32.mrf.mxu0
  %v2133 = vadd.f32 %v1844, %v2132
  %v2134 = vpop.f32.mrf.mxu0
  %v2135 = vpop.f32.mrf.mxu0
  %v2136 = vadd.f32 %v1847, %v2135
  %v2137 = vpop.f32.mrf.mxu0
  %2138 = vmatprep.mubr.bf16.mxu0 0
  %2139 = vmatmul.mubr.bf16.gmra.mxu0 %v1353
  %v2140 = vpop.f32.mrf.mxu0
  %v2141 = vadd.f32 %v1852, %v2140
  %v2142 = vpop.f32.mrf.mxu0
  %v2143 = vpop.f32.mrf.mxu0
  %v2144 = vadd.f32 %v1855, %v2143
  %v2145 = vpop.f32.mrf.mxu0
  %2146 = vmatprep.mubr.bf16.mxu0 0
  %2147 = vmatmul.mubr.bf16.gmra.mxu0 %v1356
  %v2148 = vpop.f32.mrf.mxu0
  %v2149 = vadd.f32 %v1860, %v2148
  %v2150 = vpop.f32.mrf.mxu0
  %v2151 = vpop.f32.mrf.mxu0
  %v2152 = vadd.f32 %v1863, %v2151
  %v2153 = vpop.f32.mrf.mxu0
  %2154 = vmatprep.mubr.bf16.mxu0 0
  %2155 = vmatmul.mubr.bf16.gmra.mxu0 %v1359
  %v2156 = vpop.f32.mrf.mxu0
  %v2157 = vadd.f32 %v1868, %v2156
  %v2158 = vpop.f32.mrf.mxu0
  %v2159 = vpop.f32.mrf.mxu0
  %v2160 = vadd.f32 %v1871, %v2159
  %v2161 = vpop.f32.mrf.mxu0
  %2162 = vmatprep.mubr.bf16.mxu0 0
  %2163 = vmatmul.mubr.bf16.gmra.mxu0 %v1362
  %v2164 = vpop.f32.mrf.mxu0
  %v2165 = vadd.f32 %v1876, %v2164
  %v2166 = vpop.f32.mrf.mxu0
  %v2167 = vpop.f32.mrf.mxu0
  %v2168 = vadd.f32 %v1879, %v2167
  %v2169 = vpop.f32.mrf.mxu0
  %2170 = vmatprep.mubr.bf16.mxu0 0
  %2171 = vmatmul.mubr.bf16.gmra.mxu0 %v1365
  %v2172 = vpop.f32.mrf.mxu0
  %v2173 = vadd.f32 %v1884, %v2172
  %v2174 = vpop.f32.mrf.mxu0
  %v2175 = vpop.f32.mrf.mxu0
  %v2176 = vadd.f32 %v1887, %v2175
  %v2177 = vpop.f32.mrf.mxu0
  %2178 = vmatprep.mubr.bf16.mxu0 0
  %2179 = vmatmul.mubr.bf16.gmra.mxu0 %v1368
  %v2180 = vpop.f32.mrf.mxu0
  %v2181 = vadd.f32 %v1892, %v2180
  %v2182 = vpop.f32.mrf.mxu0
  %v2183 = vpop.f32.mrf.mxu0
  %v2184 = vadd.f32 %v1895, %v2183
  %v2185 = vpop.f32.mrf.mxu0
  %2186 = vmatprep.mubr.bf16.mxu0 0
  %2187 = vmatmul.mubr.bf16.gmra.mxu0 %v1371
  %v2188 = vpop.f32.mrf.mxu0
  %v2189 = vadd.f32 %v1900, %v2188
  %v2190 = vpop.f32.mrf.mxu0
  %v2191 = vpop.f32.mrf.mxu0
  %v2192 = vadd.f32 %v1903, %v2191
  %v2193 = vpop.f32.mrf.mxu0
  %2194 = vmatprep.mubr.bf16.mxu0 0
  %2195 = vmatmul.mubr.bf16.gmra.mxu0 %v1374
  %v2196 = vpop.f32.mrf.mxu0
  %v2197 = vadd.f32 %v1908, %v2196
  %v2198 = vpop.f32.mrf.mxu0
  %v2199 = vpop.f32.mrf.mxu0
  %v2200 = vadd.f32 %v1911, %v2199
  %v2201 = vpop.f32.mrf.mxu0
  %2202 = vmatprep.mubr.bf16.mxu0 0
  %2203 = vmatmul.mubr.bf16.gmra.mxu0 %v1377
  %v2204 = vpop.f32.mrf.mxu0
  %v2205 = vadd.f32 %v1916, %v2204
  %v2206 = vpop.f32.mrf.mxu0
  %v2207 = vpop.f32.mrf.mxu0
  %v2208 = vadd.f32 %v1919, %v2207
  %v2209 = vpop.f32.mrf.mxu0
  %2210 = vmatprep.mubr.bf16.mxu0 0
  %2211 = vmatmul.mubr.bf16.gmra.mxu0 %v1380
  %v2212 = vpop.f32.mrf.mxu0
  %v2213 = vadd.f32 %v1924, %v2212
  %v2214 = vpop.f32.mrf.mxu0
  %v2215 = vpop.f32.mrf.mxu0
  %v2216 = vadd.f32 %v1927, %v2215
  %v2217 = vpop.f32.mrf.mxu0
  %2218 = vmatprep.mubr.bf16.mxu0 0
  %2219 = vmatmul.mubr.bf16.gmra.mxu0 %v1383
  %v2220 = vpop.f32.mrf.mxu0
  %v2221 = vadd.f32 %v1932, %v2220
  %v2222 = vpop.f32.mrf.mxu0
  %v2223 = vpop.f32.mrf.mxu0
  %v2224 = vadd.f32 %v1935, %v2223
  %v2225 = vpop.f32.mrf.mxu0
  %2226 = vmatprep.mubr.bf16.mxu0 0
  %2227 = vmatmul.mubr.bf16.gmra.mxu0 %v1386
  %v2228 = vpop.f32.mrf.mxu0
  %v2229 = vadd.f32 %v1940, %v2228
  %v2230 = vpop.f32.mrf.mxu0
  %v2231 = vpop.f32.mrf.mxu0
  %v2232 = vadd.f32 %v1943, %v2231
  %v2233 = vpop.f32.mrf.mxu0
  %2234 = vmatprep.mubr.bf16.mxu0 0
  %2235 = vmatmul.mubr.bf16.gmra.mxu0 %v1389
  %v2236 = vpop.f32.mrf.mxu0
  %v2237 = vadd.f32 %v1948, %v2236
  %v2238 = vpop.f32.mrf.mxu0
  %v2239 = vpop.f32.mrf.mxu0
  %v2240 = vadd.f32 %v1951, %v2239
  %v2241 = vpop.f32.mrf.mxu0
  %2242 = vmatprep.mubr.bf16.mxu0 0
  %2243 = vmatmul.mubr.bf16.gmra.mxu0 %v1392
  %v2244 = vpop.f32.mrf.mxu0
  %v2245 = vadd.f32 %v1956, %v2244
  %v2246 = vpop.f32.mrf.mxu0
  %v2247 = vpop.f32.mrf.mxu0
  %v2248 = vadd.f32 %v1959, %v2247
  %v2249 = vpop.f32.mrf.mxu0
  %2250 = vmatprep.mubr.bf16.mxu0 0
  %2251 = vmatmul.mubr.bf16.gmra.mxu0 %v1395
  %v2252 = vpop.f32.mrf.mxu0
  %v2253 = vadd.f32 %v1964, %v2252
  %v2254 = vpop.f32.mrf.mxu0
  %v2255 = vpop.f32.mrf.mxu0
  %v2256 = vadd.f32 %v1967, %v2255
  %v2257 = vpop.f32.mrf.mxu0
  %2258 = vmatprep.mubr.bf16.mxu0 0
  %2259 = vmatmul.mubr.bf16.gmra.mxu0 %v1398
  %v2260 = vpop.f32.mrf.mxu0
  %v2261 = vadd.f32 %v1972, %v2260
  %v2262 = vpop.f32.mrf.mxu0
  %v2263 = vpop.f32.mrf.mxu0
  %v2264 = vadd.f32 %v1975, %v2263
  %v2265 = vpop.f32.mrf.mxu0
  %2266 = vdwg.mxu0
  %v2267 = vld [vmem:[%s3] sm:$0xff]
  %v2268 = vld [vmem:[%s3 + $0x8] sm:$0xff]
  %v2269 = vld [vmem:[%s3 + $0x10] sm:$0xff]
  %v2270 = vld [vmem:[%s3 + $0x18] sm:$0xff]
  %v2271 = vld [vmem:[%s3 + $0x20] sm:$0xff]
  %v2272 = vld [vmem:[%s3 + $0x28] sm:$0xff]
  %v2273 = vld [vmem:[%s3 + $0x30] sm:$0xff]
  %v2274 = vld [vmem:[%s3 + $0x38] sm:$0xff]
  %v2275 = vld [vmem:[%s3 + $0x40] sm:$0xff]
  %v2276 = vld [vmem:[%s3 + $0x48] sm:$0xff]
  %v2277 = vld [vmem:[%s3 + $0x50] sm:$0xff]
  %v2278 = vld [vmem:[%s3 + $0x58] sm:$0xff]
  %v2279 = vld [vmem:[%s3 + $0x60] sm:$0xff]
  %v2280 = vld [vmem:[%s3 + $0x68] sm:$0xff]
  %v2281 = vld [vmem:[%s3 + $0x70] sm:$0xff]
  %v2282 = vld [vmem:[%s3 + $0x78] sm:$0xff]
  %v2283 = vld [vmem:[%s3 + $0x80] sm:$0xff]
  %v2284 = vld [vmem:[%s3 + $0x88] sm:$0xff]
  %v2285 = vld [vmem:[%s3 + $0x90] sm:$0xff]
  %v2286 = vld [vmem:[%s3 + $0x98] sm:$0xff]
  %v2287 = vld [vmem:[%s3 + $0xa0] sm:$0xff]
  %v2288 = vld [vmem:[%s3 + $0xa8] sm:$0xff]
  %v2289 = vld [vmem:[%s3 + $0xb0] sm:$0xff]
  %v2290 = vld [vmem:[%s3 + $0xb8] sm:$0xff]
  %v2291 = vld [vmem:[%s3 + $0xc0] sm:$0xff]
  %v2292 = vld [vmem:[%s3 + $0xc8] sm:$0xff]
  %v2293 = vld [vmem:[%s3 + $0xd0] sm:$0xff]
  %v2294 = vld [vmem:[%s3 + $0xd8] sm:$0xff]
  %v2295 = vld [vmem:[%s3 + $0xe0] sm:$0xff]
  %v2296 = vld [vmem:[%s3 + $0xe8] sm:$0xff]
  %v2297 = vld [vmem:[%s3 + $0xf0] sm:$0xff]
  %v2298 = vld [vmem:[%s3 + $0xf8] sm:$0xff]
  %v2299 = vld [vmem:[%s3 + $0x100] sm:$0xff]
  %v2300 = vld [vmem:[%s3 + $0x108] sm:$0xff]
  %v2301 = vld [vmem:[%s3 + $0x110] sm:$0xff]
  %v2302 = vld [vmem:[%s3 + $0x118] sm:$0xff]
  %v2303 = vld [vmem:[%s3 + $0x120] sm:$0xff]
  %v2304 = vld [vmem:[%s3 + $0x128] sm:$0xff]
  %v2305 = vld [vmem:[%s3 + $0x130] sm:$0xff]
  %v2306 = vld [vmem:[%s3 + $0x138] sm:$0xff]
  %v2307 = vld [vmem:[%s3 + $0x140] sm:$0xff]
  %v2308 = vld [vmem:[%s3 + $0x148] sm:$0xff]
  %v2309 = vld [vmem:[%s3 + $0x150] sm:$0xff]
  %v2310 = vld [vmem:[%s3 + $0x158] sm:$0xff]
  %v2311 = vld [vmem:[%s3 + $0x160] sm:$0xff]
  %v2312 = vld [vmem:[%s3 + $0x168] sm:$0xff]
  %v2313 = vld [vmem:[%s3 + $0x170] sm:$0xff]
  %v2314 = vld [vmem:[%s3 + $0x178] sm:$0xff]
  %v2315 = vld [vmem:[%s3 + $0x180] sm:$0xff]
  %v2316 = vld [vmem:[%s3 + $0x188] sm:$0xff]
  %v2317 = vld [vmem:[%s3 + $0x190] sm:$0xff]
  %v2318 = vld [vmem:[%s3 + $0x198] sm:$0xff]
  %v2319 = vld [vmem:[%s3 + $0x1a0] sm:$0xff]
  %v2320 = vld [vmem:[%s3 + $0x1a8] sm:$0xff]
  %v2321 = vld [vmem:[%s3 + $0x1b0] sm:$0xff]
  %v2322 = vld [vmem:[%s3 + $0x1b8] sm:$0xff]
  %v2323 = vld [vmem:[%s3 + $0x1c0] sm:$0xff]
  %v2324 = vld [vmem:[%s3 + $0x1c8] sm:$0xff]
  %v2325 = vld [vmem:[%s3 + $0x1d0] sm:$0xff]
  %v2326 = vld [vmem:[%s3 + $0x1d8] sm:$0xff]
  %v2327 = vld [vmem:[%s3 + $0x1e0] sm:$0xff]
  %v2328 = vld [vmem:[%s3 + $0x1e8] sm:$0xff]
  %v2329 = vld [vmem:[%s3 + $0x1f0] sm:$0xff]
  %v2330 = vld [vmem:[%s3 + $0x1f8] sm:$0xff]
  %v2331 = vadd.f32 %v2013, %v2267
  %v2332 = vadd.f32 %v2016, %v2268
  %v2333 = vadd.f32 %v2021, %v2269
  %v2334 = vadd.f32 %v2024, %v2270
  %v2335 = vadd.f32 %v2029, %v2271
  %v2336 = vadd.f32 %v2032, %v2272
  %v2337 = vadd.f32 %v2037, %v2273
  %v2338 = vadd.f32 %v2040, %v2274
  %v2339 = vadd.f32 %v2045, %v2275
  %v2340 = vadd.f32 %v2048, %v2276
  %v2341 = vadd.f32 %v2053, %v2277
  %v2342 = vadd.f32 %v2056, %v2278
  %v2343 = vadd.f32 %v2061, %v2279
  %v2344 = vadd.f32 %v2064, %v2280
  %v2345 = vadd.f32 %v2069, %v2281
  %v2346 = vadd.f32 %v2072, %v2282
  %v2347 = vadd.f32 %v2077, %v2283
  %v2348 = vadd.f32 %v2080, %v2284
  %v2349 = vadd.f32 %v2085, %v2285
  %v2350 = vadd.f32 %v2088, %v2286
  %v2351 = vadd.f32 %v2093, %v2287
  %v2352 = vadd.f32 %v2096, %v2288
  %v2353 = vadd.f32 %v2101, %v2289
  %v2354 = vadd.f32 %v2104, %v2290
  %v2355 = vadd.f32 %v2109, %v2291
  %v2356 = vadd.f32 %v2112, %v2292
  %v2357 = vadd.f32 %v2117, %v2293
  %v2358 = vadd.f32 %v2120, %v2294
  %v2359 = vadd.f32 %v2125, %v2295
  %v2360 = vadd.f32 %v2128, %v2296
  %v2361 = vadd.f32 %v2133, %v2297
  %v2362 = vadd.f32 %v2136, %v2298
  %v2363 = vadd.f32 %v2141, %v2299
  %v2364 = vadd.f32 %v2144, %v2300
  %v2365 = vadd.f32 %v2149, %v2301
  %v2366 = vadd.f32 %v2152, %v2302
  %v2367 = vadd.f32 %v2157, %v2303
  %v2368 = vadd.f32 %v2160, %v2304
  %v2369 = vadd.f32 %v2165, %v2305
  %v2370 = vadd.f32 %v2168, %v2306
  %v2371 = vadd.f32 %v2173, %v2307
  %v2372 = vadd.f32 %v2176, %v2308
  %v2373 = vadd.f32 %v2181, %v2309
  %v2374 = vadd.f32 %v2184, %v2310
  %v2375 = vadd.f32 %v2189, %v2311
  %v2376 = vadd.f32 %v2192, %v2312
  %v2377 = vadd.f32 %v2197, %v2313
  %v2378 = vadd.f32 %v2200, %v2314
  %v2379 = vadd.f32 %v2205, %v2315
  %v2380 = vadd.f32 %v2208, %v2316
  %v2381 = vadd.f32 %v2213, %v2317
  %v2382 = vadd.f32 %v2216, %v2318
  %v2383 = vadd.f32 %v2221, %v2319
  %v2384 = vadd.f32 %v2224, %v2320
  %v2385 = vadd.f32 %v2229, %v2321
  %v2386 = vadd.f32 %v2232, %v2322
  %v2387 = vadd.f32 %v2237, %v2323
  %v2388 = vadd.f32 %v2240, %v2324
  %v2389 = vadd.f32 %v2245, %v2325
  %v2390 = vadd.f32 %v2248, %v2326
  %v2391 = vadd.f32 %v2253, %v2327
  %v2392 = vadd.f32 %v2256, %v2328
  %v2393 = vadd.f32 %v2261, %v2329
  %v2394 = vadd.f32 %v2264, %v2330
  %v2395 = vmax.f32 %v2331, 0.0
  %v2396 = vmax.f32 %v2332, 0.0
  %v2397 = vmax.f32 %v2333, 0.0
  %v2398 = vmax.f32 %v2334, 0.0
  %v2399 = vmax.f32 %v2335, 0.0
  %v2400 = vmax.f32 %v2336, 0.0
  %v2401 = vmax.f32 %v2337, 0.0
  %v2402 = vmax.f32 %v2338, 0.0
  %v2403 = vmax.f32 %v2339, 0.0
  %v2404 = vmax.f32 %v2340, 0.0
  %v2405 = vmax.f32 %v2341, 0.0
  %v2406 = vmax.f32 %v2342, 0.0
  %v2407 = vmax.f32 %v2343, 0.0
  %v2408 = vmax.f32 %v2344, 0.0
  %v2409 = vmax.f32 %v2345, 0.0
  %v2410 = vmax.f32 %v2346, 0.0
  %v2411 = vmax.f32 %v2347, 0.0
  %v2412 = vmax.f32 %v2348, 0.0
  %v2413 = vmax.f32 %v2349, 0.0
  %v2414 = vmax.f32 %v2350, 0.0
  %v2415 = vmax.f32 %v2351, 0.0
  %v2416 = vmax.f32 %v2352, 0.0
  %v2417 = vmax.f32 %v2353, 0.0
  %v2418 = vmax.f32 %v2354, 0.0
  %v2419 = vmax.f32 %v2355, 0.0
  %v2420 = vmax.f32 %v2356, 0.0
  %v2421 = vmax.f32 %v2357, 0.0
  %v2422 = vmax.f32 %v2358, 0.0
  %v2423 = vmax.f32 %v2359, 0.0
  %v2424 = vmax.f32 %v2360, 0.0
  %v2425 = vmax.f32 %v2361, 0.0
  %v2426 = vmax.f32 %v2362, 0.0
  %v2427 = vmax.f32 %v2363, 0.0
  %v2428 = vmax.f32 %v2364, 0.0
  %v2429 = vmax.f32 %v2365, 0.0
  %v2430 = vmax.f32 %v2366, 0.0
  %v2431 = vmax.f32 %v2367, 0.0
  %v2432 = vmax.f32 %v2368, 0.0
  %v2433 = vmax.f32 %v2369, 0.0
  %v2434 = vmax.f32 %v2370, 0.0
  %v2435 = vmax.f32 %v2371, 0.0
  %v2436 = vmax.f32 %v2372, 0.0
  %v2437 = vmax.f32 %v2373, 0.0
  %v2438 = vmax.f32 %v2374, 0.0
  %v2439 = vmax.f32 %v2375, 0.0
  %v2440 = vmax.f32 %v2376, 0.0
  %v2441 = vmax.f32 %v2377, 0.0
  %v2442 = vmax.f32 %v2378, 0.0
  %v2443 = vmax.f32 %v2379, 0.0
  %v2444 = vmax.f32 %v2380, 0.0
  %v2445 = vmax.f32 %v2381, 0.0
  %v2446 = vmax.f32 %v2382, 0.0
  %v2447 = vmax.f32 %v2383, 0.0
  %v2448 = vmax.f32 %v2384, 0.0
  %v2449 = vmax.f32 %v2385, 0.0
  %v2450 = vmax.f32 %v2386, 0.0
  %v2451 = vmax.f32 %v2387, 0.0
  %v2452 = vmax.f32 %v2388, 0.0
  %v2453 = vmax.f32 %v2389, 0.0
  %v2454 = vmax.f32 %v2390, 0.0
  %v2455 = vmax.f32 %v2391, 0.0
  %v2456 = vmax.f32 %v2392, 0.0
  %v2457 = vmax.f32 %v2393, 0.0
  %v2458 = vmax.f32 %v2394, 0.0
  %2459 = vst [vmem:[%s4] sm:$0xff] %v2395
  %2460 = vst [vmem:[%s4 + $0x8] sm:$0xff] %v2396
  %2461 = vst [vmem:[%s4 + $0x10] sm:$0xff] %v2397
  %2462 = vst [vmem:[%s4 + $0x18] sm:$0xff] %v2398
  %2463 = vst [vmem:[%s4 + $0x20] sm:$0xff] %v2399
  %2464 = vst [vmem:[%s4 + $0x28] sm:$0xff] %v2400
  %2465 = vst [vmem:[%s4 + $0x30] sm:$0xff] %v2401
  %2466 = vst [vmem:[%s4 + $0x38] sm:$0xff] %v2402
  %2467 = vst [vmem:[%s4 + $0x40] sm:$0xff] %v2403
  %2468 = vst [vmem:[%s4 + $0x48] sm:$0xff] %v2404
  %2469 = vst [vmem:[%s4 + $0x50] sm:$0xff] %v2405
  %2470 = vst [vmem:[%s4 + $0x58] sm:$0xff] %v2406
  %2471 = vst [vmem:[%s4 + $0x60] sm:$0xff] %v2407
  %2472 = vst [vmem:[%s4 + $0x68] sm:$0xff] %v2408
  %2473 = vst [vmem:[%s4 + $0x70] sm:$0xff] %v2409
  %2474 = vst [vmem:[%s4 + $0x78] sm:$0xff] %v2410
  %2475 = vst [vmem:[%s4 + $0x80] sm:$0xff] %v2411
  %2476 = vst [vmem:[%s4 + $0x88] sm:$0xff] %v2412
  %2477 = vst [vmem:[%s4 + $0x90] sm:$0xff] %v2413
  %2478 = vst [vmem:[%s4 + $0x98] sm:$0xff] %v2414
  %2479 = vst [vmem:[%s4 + $0xa0] sm:$0xff] %v2415
  %2480 = vst [vmem:[%s4 + $0xa8] sm:$0xff] %v2416
  %2481 = vst [vmem:[%s4 + $0xb0] sm:$0xff] %v2417
  %2482 = vst [vmem:[%s4 + $0xb8] sm:$0xff] %v2418
  %2483 = vst [vmem:[%s4 + $0xc0] sm:$0xff] %v2419
  %2484 = vst [vmem:[%s4 + $0xc8] sm:$0xff] %v2420
  %2485 = vst [vmem:[%s4 + $0xd0] sm:$0xff] %v2421
  %2486 = vst [vmem:[%s4 + $0xd8] sm:$0xff] %v2422
  %2487 = vst [vmem:[%s4 + $0xe0] sm:$0xff] %v2423
  %2488 = vst [vmem:[%s4 + $0xe8] sm:$0xff] %v2424
  %2489 = vst [vmem:[%s4 + $0xf0] sm:$0xff] %v2425
  %2490 = vst [vmem:[%s4 + $0xf8] sm:$0xff] %v2426
  %2491 = vst [vmem:[%s4 + $0x100] sm:$0xff] %v2427
  %2492 = vst [vmem:[%s4 + $0x108] sm:$0xff] %v2428
  %2493 = vst [vmem:[%s4 + $0x110] sm:$0xff] %v2429
  %2494 = vst [vmem:[%s4 + $0x118] sm:$0xff] %v2430
  %2495 = vst [vmem:[%s4 + $0x120] sm:$0xff] %v2431
  %2496 = vst [vmem:[%s4 + $0x128] sm:$0xff] %v2432
  %2497 = vst [vmem:[%s4 + $0x130] sm:$0xff] %v2433
  %2498 = vst [vmem:[%s4 + $0x138] sm:$0xff] %v2434
  %2499 = vst [vmem:[%s4 + $0x140] sm:$0xff] %v2435
  %2500 = vst [vmem:[%s4 + $0x148] sm:$0xff] %v2436
  %2501 = vst [vmem:[%s4 + $0x150] sm:$0xff] %v2437
  %2502 = vst [vmem:[%s4 + $0x158] sm:$0xff] %v2438
  %2503 = vst [vmem:[%s4 + $0x160] sm:$0xff] %v2439
  %2504 = vst [vmem:[%s4 + $0x168] sm:$0xff] %v2440
  %2505 = vst [vmem:[%s4 + $0x170] sm:$0xff] %v2441
  %2506 = vst [vmem:[%s4 + $0x178] sm:$0xff] %v2442
  %2507 = vst [vmem:[%s4 + $0x180] sm:$0xff] %v2443
  %2508 = vst [vmem:[%s4 + $0x188] sm:$0xff] %v2444
  %2509 = vst [vmem:[%s4 + $0x190] sm:$0xff] %v2445
  %2510 = vst [vmem:[%s4 + $0x198] sm:$0xff] %v2446
  %2511 = vst [vmem:[%s4 + $0x1a0] sm:$0xff] %v2447
  %2512 = vst [vmem:[%s4 + $0x1a8] sm:$0xff] %v2448
  %2513 = vst [vmem:[%s4 + $0x1b0] sm:$0xff] %v2449
  %2514 = vst [vmem:[%s4 + $0x1b8] sm:$0xff] %v2450
  %2515 = vst [vmem:[%s4 + $0x1c0] sm:$0xff] %v2451
  %2516 = vst [vmem:[%s4 + $0x1c8] sm:$0xff] %v2452
  %2517 = vst [vmem:[%s4 + $0x1d0] sm:$0xff] %v2453
  %2518 = vst [vmem:[%s4 + $0x1d8] sm:$0xff] %v2454
  %2519 = vst [vmem:[%s4 + $0x1e0] sm:$0xff] %v2455
  %2520 = vst [vmem:[%s4 + $0x1e8] sm:$0xff] %v2456
  %2521 = vst [vmem:[%s4 + $0x1f0] sm:$0xff] %v2457
  %2522 = vst [vmem:[%s4 + $0x1f8] sm:$0xff] %v2458
  // Predicated region
  $region18: #{forward.11} parent=0 // pred_check
    _
  $region19: #{forward.11} parent=0 // pred_check_branch
    %2524 = sbr.rel (0) target = $region21
  $region20: #{forward.11} parent=0 // pred_region
    _
  $region21: #{forward.11} parent=0 // pred_fallthru
    _
  // Predicated region
  $region22: #{forward.11} parent=0 // pred_check
    _
  $region23: #{forward.11} parent=0 // pred_check_branch
    %2526 = sbr.rel (0) target = $region25
  $region24: #{forward.11} parent=0 // pred_region
    _
  $region25: #{forward.11} parent=0 // pred_fallthru
    _

// kernel: forward.14
$region0: #{forward.14}
  #allocation0 [shape = 'u32[]', space=smem, size = 0x4, offset = 0x4, fixed_abs, tag = 'smem constant byte address 0x4 - core index']
  #allocation1 [shape = 'u32[144,128]{1,0:T(1,128)}', space=vmem, size = 0x12000, scoped, tag = 'internal scratch']
  %s0 = inlined_call_operand.vmem [shape: bf16[512,576], index: 0, kind: input, shape index: {}]
  %s1 = inlined_call_operand.vmem [shape: bf16[576,128], index: 1, kind: input, shape index: {}]
  %s2 = inlined_call_operand.vmem [shape: f32[8,128], index: 2, kind: input, shape index: {}]
  %s3 = inlined_call_operand.vmem [shape: bf16[512,128], index: 3, kind: output, shape index: {}]
  %s4 = sld [smem:[#allocation0]]
  $region22: #{forward.14} parent=0
    _
  %s6 = ssub.s32 1, %s4
  %s7 = scalar_select 0, %s6, %s4
  // Predicated region
  $region2: #{forward.14} parent=0 // pred_check
    _
  $region3: #{forward.14} parent=0 // pred_check_branch
    %9 = sbr.rel (0) target = $region5
  $region4: #{forward.14} parent=0 // pred_region
    _
  $region5: #{forward.14} parent=0 // pred_fallthru
    _
  // Predicated region
  $region6: #{forward.14} parent=0 // pred_check
    _
  $region7: #{forward.14} parent=0 // pred_check_branch
    %11 = sbr.rel (0) target = $region9
  $region8: #{forward.14} parent=0 // pred_region
    _
  $region9: #{forward.14} parent=0 // pred_fallthru
    _
  // Predicated region
  $region10: #{forward.14} parent=0 // pred_check
    _
  $region11: #{forward.14} parent=0 // pred_check_branch
    %13 = sbr.rel (0) target = $region13
  $region12: #{forward.14} parent=0 // pred_region
    _
  $region13: #{forward.14} parent=0 // pred_fallthru
    _
  %v15 = vld [vmem:[%s0] sm:$0xff]
  %v16 = vld [vmem:[%s0 + $0x8] sm:$0xff]
  %v17 = vld [vmem:[%s0 + $0x10] sm:$0xf]
  %v18 = vld [vmem:[%s0 + $0x14] sm:$0xff]
  %v19 = vld [vmem:[%s0 + $0x1c] sm:$0xff]
  %v20 = vld [vmem:[%s0 + $0x24] sm:$0xf]
  %v21 = vld [vmem:[%s0 + $0x28] sm:$0xff]
  %v22 = vld [vmem:[%s0 + $0x30] sm:$0xff]
  %v23 = vld [vmem:[%s0 + $0x38] sm:$0xf]
  %v24 = vld [vmem:[%s0 + $0x3c] sm:$0xff]
  %v25 = vld [vmem:[%s0 + $0x44] sm:$0xff]
  %v26 = vld [vmem:[%s0 + $0x4c] sm:$0xf]
  %v27 = vld [vmem:[%s0 + $0x50] sm:$0xff]
  %v28 = vld [vmem:[%s0 + $0x58] sm:$0xff]
  %v29 = vld [vmem:[%s0 + $0x60] sm:$0xf]
  %v30 = vld [vmem:[%s0 + $0x64] sm:$0xff]
  %v31 = vld [vmem:[%s0 + $0x6c] sm:$0xff]
  %v32 = vld [vmem:[%s0 + $0x74] sm:$0xf]
  %v33 = vld [vmem:[%s0 + $0x78] sm:$0xff]
  %v34 = vld [vmem:[%s0 + $0x80] sm:$0xff]
  %v35 = vld [vmem:[%s0 + $0x88] sm:$0xf]
  %v36 = vld [vmem:[%s0 + $0x8c] sm:$0xff]
  %v37 = vld [vmem:[%s0 + $0x94] sm:$0xff]
  %v38 = vld [vmem:[%s0 + $0x9c] sm:$0xf]
  %v39 = vld [vmem:[%s0 + $0xa0] sm:$0xff]
  %v40 = vld [vmem:[%s0 + $0xa8] sm:$0xff]
  %v41 = vld [vmem:[%s0 + $0xb0] sm:$0xf]
  %v42 = vld [vmem:[%s0 + $0xb4] sm:$0xff]
  %v43 = vld [vmem:[%s0 + $0xbc] sm:$0xff]
  %v44 = vld [vmem:[%s0 + $0xc4] sm:$0xf]
  %v45 = vld [vmem:[%s0 + $0xc8] sm:$0xff]
  %v46 = vld [vmem:[%s0 + $0xd0] sm:$0xff]
  %v47 = vld [vmem:[%s0 + $0xd8] sm:$0xf]
  %v48 = vld [vmem:[%s0 + $0xdc] sm:$0xff]
  %v49 = vld [vmem:[%s0 + $0xe4] sm:$0xff]
  %v50 = vld [vmem:[%s0 + $0xec] sm:$0xf]
  %v51 = vld [vmem:[%s0 + $0xf0] sm:$0xff]
  %v52 = vld [vmem:[%s0 + $0xf8] sm:$0xff]
  %v53 = vld [vmem:[%s0 + $0x100] sm:$0xf]
  %v54 = vld [vmem:[%s0 + $0x104] sm:$0xff]
  %v55 = vld [vmem:[%s0 + $0x10c] sm:$0xff]
  %v56 = vld [vmem:[%s0 + $0x114] sm:$0xf]
  %v57 = vld [vmem:[%s0 + $0x118] sm:$0xff]
  %v58 = vld [vmem:[%s0 + $0x120] sm:$0xff]
  %v59 = vld [vmem:[%s0 + $0x128] sm:$0xf]
  %v60 = vld [vmem:[%s0 + $0x12c] sm:$0xff]
  %v61 = vld [vmem:[%s0 + $0x134] sm:$0xff]
  %v62 = vld [vmem:[%s0 + $0x13c] sm:$0xf]
  %v63 = vld [vmem:[%s0 + $0x140] sm:$0xff]
  %v64 = vld [vmem:[%s0 + $0x148] sm:$0xff]
  %v65 = vld [vmem:[%s0 + $0x150] sm:$0xf]
  %v66 = vld [vmem:[%s0 + $0x154] sm:$0xff]
  %v67 = vld [vmem:[%s0 + $0x15c] sm:$0xff]
  %v68 = vld [vmem:[%s0 + $0x164] sm:$0xf]
  %v69 = vld [vmem:[%s0 + $0x168] sm:$0xff]
  %v70 = vld [vmem:[%s0 + $0x170] sm:$0xff]
  %v71 = vld [vmem:[%s0 + $0x178] sm:$0xf]
  %v72 = vld [vmem:[%s0 + $0x17c] sm:$0xff]
  %v73 = vld [vmem:[%s0 + $0x184] sm:$0xff]
  %v74 = vld [vmem:[%s0 + $0x18c] sm:$0xf]
  %v75 = vld [vmem:[%s0 + $0x190] sm:$0xff]
  %v76 = vld [vmem:[%s0 + $0x198] sm:$0xff]
  %v77 = vld [vmem:[%s0 + $0x1a0] sm:$0xf]
  %v78 = vld [vmem:[%s0 + $0x1a4] sm:$0xff]
  %v79 = vld [vmem:[%s0 + $0x1ac] sm:$0xff]
  %v80 = vld [vmem:[%s0 + $0x1b4] sm:$0xf]
  %v81 = vld [vmem:[%s0 + $0x1b8] sm:$0xff]
  %v82 = vld [vmem:[%s0 + $0x1c0] sm:$0xff]
  %v83 = vld [vmem:[%s0 + $0x1c8] sm:$0xf]
  %v84 = vld [vmem:[%s0 + $0x1cc] sm:$0xff]
  %v85 = vld [vmem:[%s0 + $0x1d4] sm:$0xff]
  %v86 = vld [vmem:[%s0 + $0x1dc] sm:$0xf]
  %v87 = vld [vmem:[%s0 + $0x1e0] sm:$0xff]
  %v88 = vld [vmem:[%s0 + $0x1e8] sm:$0xff]
  %v89 = vld [vmem:[%s0 + $0x1f0] sm:$0xf]
  %v90 = vld [vmem:[%s0 + $0x1f4] sm:$0xff]
  %v91 = vld [vmem:[%s0 + $0x1fc] sm:$0xff]
  %v92 = vld [vmem:[%s0 + $0x204] sm:$0xf]
  %v93 = vld [vmem:[%s0 + $0x208] sm:$0xff]
  %v94 = vld [vmem:[%s0 + $0x210] sm:$0xff]
  %v95 = vld [vmem:[%s0 + $0x218] sm:$0xf]
  %v96 = vld [vmem:[%s0 + $0x21c] sm:$0xff]
  %v97 = vld [vmem:[%s0 + $0x224] sm:$0xff]
  %v98 = vld [vmem:[%s0 + $0x22c] sm:$0xf]
  %v99 = vld [vmem:[%s0 + $0x230] sm:$0xff]
  %v100 = vld [vmem:[%s0 + $0x238] sm:$0xff]
  %v101 = vld [vmem:[%s0 + $0x240] sm:$0xf]
  %v102 = vld [vmem:[%s0 + $0x244] sm:$0xff]
  %v103 = vld [vmem:[%s0 + $0x24c] sm:$0xff]
  %v104 = vld [vmem:[%s0 + $0x254] sm:$0xf]
  %v105 = vld [vmem:[%s0 + $0x258] sm:$0xff]
  %v106 = vld [vmem:[%s0 + $0x260] sm:$0xff]
  %v107 = vld [vmem:[%s0 + $0x268] sm:$0xf]
  %v108 = vld [vmem:[%s0 + $0x26c] sm:$0xff]
  %v109 = vld [vmem:[%s0 + $0x274] sm:$0xff]
  %v110 = vld [vmem:[%s0 + $0x27c] sm:$0xf]
  %v111 = vld [vmem:[%s0 + $0x280] sm:$0xff]
  %v112 = vld [vmem:[%s0 + $0x288] sm:$0xff]
  %v113 = vld [vmem:[%s0 + $0x290] sm:$0xf]
  %v114 = vld [vmem:[%s0 + $0x294] sm:$0xff]
  %v115 = vld [vmem:[%s0 + $0x29c] sm:$0xff]
  %v116 = vld [vmem:[%s0 + $0x2a4] sm:$0xf]
  %v117 = vld [vmem:[%s0 + $0x2a8] sm:$0xff]
  %v118 = vld [vmem:[%s0 + $0x2b0] sm:$0xff]
  %v119 = vld [vmem:[%s0 + $0x2b8] sm:$0xf]
  %v120 = vld [vmem:[%s0 + $0x2bc] sm:$0xff]
  %v121 = vld [vmem:[%s0 + $0x2c4] sm:$0xff]
  %v122 = vld [vmem:[%s0 + $0x2cc] sm:$0xf]
  %v123 = vld [vmem:[%s0 + $0x2d0] sm:$0xff]
  %v124 = vld [vmem:[%s0 + $0x2d8] sm:$0xff]
  %v125 = vld [vmem:[%s0 + $0x2e0] sm:$0xf]
  %v126 = vld [vmem:[%s0 + $0x2e4] sm:$0xff]
  %v127 = vld [vmem:[%s0 + $0x2ec] sm:$0xff]
  %v128 = vld [vmem:[%s0 + $0x2f4] sm:$0xf]
  %v129 = vld [vmem:[%s0 + $0x2f8] sm:$0xff]
  %v130 = vld [vmem:[%s0 + $0x300] sm:$0xff]
  %v131 = vld [vmem:[%s0 + $0x308] sm:$0xf]
  %v132 = vld [vmem:[%s0 + $0x30c] sm:$0xff]
  %v133 = vld [vmem:[%s0 + $0x314] sm:$0xff]
  %v134 = vld [vmem:[%s0 + $0x31c] sm:$0xf]
  %v135 = vld [vmem:[%s0 + $0x320] sm:$0xff]
  %v136 = vld [vmem:[%s0 + $0x328] sm:$0xff]
  %v137 = vld [vmem:[%s0 + $0x330] sm:$0xf]
  %v138 = vld [vmem:[%s0 + $0x334] sm:$0xff]
  %v139 = vld [vmem:[%s0 + $0x33c] sm:$0xff]
  %v140 = vld [vmem:[%s0 + $0x344] sm:$0xf]
  %v141 = vld [vmem:[%s0 + $0x348] sm:$0xff]
  %v142 = vld [vmem:[%s0 + $0x350] sm:$0xff]
  %v143 = vld [vmem:[%s0 + $0x358] sm:$0xf]
  %v144 = vld [vmem:[%s0 + $0x35c] sm:$0xff]
  %v145 = vld [vmem:[%s0 + $0x364] sm:$0xff]
  %v146 = vld [vmem:[%s0 + $0x36c] sm:$0xf]
  %v147 = vld [vmem:[%s0 + $0x370] sm:$0xff]
  %v148 = vld [vmem:[%s0 + $0x378] sm:$0xff]
  %v149 = vld [vmem:[%s0 + $0x380] sm:$0xf]
  %v150 = vld [vmem:[%s0 + $0x384] sm:$0xff]
  %v151 = vld [vmem:[%s0 + $0x38c] sm:$0xff]
  %v152 = vld [vmem:[%s0 + $0x394] sm:$0xf]
  %v153 = vld [vmem:[%s0 + $0x398] sm:$0xff]
  %v154 = vld [vmem:[%s0 + $0x3a0] sm:$0xff]
  %v155 = vld [vmem:[%s0 + $0x3a8] sm:$0xf]
  %v156 = vld [vmem:[%s0 + $0x3ac] sm:$0xff]
  %v157 = vld [vmem:[%s0 + $0x3b4] sm:$0xff]
  %v158 = vld [vmem:[%s0 + $0x3bc] sm:$0xf]
  %v159 = vld [vmem:[%s0 + $0x3c0] sm:$0xff]
  %v160 = vld [vmem:[%s0 + $0x3c8] sm:$0xff]
  %v161 = vld [vmem:[%s0 + $0x3d0] sm:$0xf]
  %v162 = vld [vmem:[%s0 + $0x3d4] sm:$0xff]
  %v163 = vld [vmem:[%s0 + $0x3dc] sm:$0xff]
  %v164 = vld [vmem:[%s0 + $0x3e4] sm:$0xf]
  %v165 = vld [vmem:[%s0 + $0x3e8] sm:$0xff]
  %v166 = vld [vmem:[%s0 + $0x3f0] sm:$0xff]
  %v167 = vld [vmem:[%s0 + $0x3f8] sm:$0xf]
  %v168 = vld [vmem:[%s0 + $0x3fc] sm:$0xff]
  %v169 = vld [vmem:[%s0 + $0x404] sm:$0xff]
  %v170 = vld [vmem:[%s0 + $0x40c] sm:$0xf]
  %v171 = vld [vmem:[%s0 + $0x410] sm:$0xff]
  %v172 = vld [vmem:[%s0 + $0x418] sm:$0xff]
  %v173 = vld [vmem:[%s0 + $0x420] sm:$0xf]
  %v174 = vld [vmem:[%s0 + $0x424] sm:$0xff]
  %v175 = vld [vmem:[%s0 + $0x42c] sm:$0xff]
  %v176 = vld [vmem:[%s0 + $0x434] sm:$0xf]
  %v177 = vld [vmem:[%s0 + $0x438] sm:$0xff]
  %v178 = vld [vmem:[%s0 + $0x440] sm:$0xff]
  %v179 = vld [vmem:[%s0 + $0x448] sm:$0xf]
  %v180 = vld [vmem:[%s0 + $0x44c] sm:$0xff]
  %v181 = vld [vmem:[%s0 + $0x454] sm:$0xff]
  %v182 = vld [vmem:[%s0 + $0x45c] sm:$0xf]
  %v183 = vld [vmem:[%s0 + $0x460] sm:$0xff]
  %v184 = vld [vmem:[%s0 + $0x468] sm:$0xff]
  %v185 = vld [vmem:[%s0 + $0x470] sm:$0xf]
  %v186 = vld [vmem:[%s0 + $0x474] sm:$0xff]
  %v187 = vld [vmem:[%s0 + $0x47c] sm:$0xff]
  %v188 = vld [vmem:[%s0 + $0x484] sm:$0xf]
  %v189 = vld [vmem:[%s0 + $0x488] sm:$0xff]
  %v190 = vld [vmem:[%s0 + $0x490] sm:$0xff]
  %v191 = vld [vmem:[%s0 + $0x498] sm:$0xf]
  %v192 = vld [vmem:[%s0 + $0x49c] sm:$0xff]
  %v193 = vld [vmem:[%s0 + $0x4a4] sm:$0xff]
  %v194 = vld [vmem:[%s0 + $0x4ac] sm:$0xf]
  %v195 = vld [vmem:[%s0 + $0x4b0] sm:$0xff]
  %v196 = vld [vmem:[%s0 + $0x4b8] sm:$0xff]
  %v197 = vld [vmem:[%s0 + $0x4c0] sm:$0xf]
  %v198 = vld [vmem:[%s0 + $0x4c4] sm:$0xff]
  %v199 = vld [vmem:[%s0 + $0x4cc] sm:$0xff]
  %v200 = vld [vmem:[%s0 + $0x4d4] sm:$0xf]
  %v201 = vld [vmem:[%s0 + $0x4d8] sm:$0xff]
  %v202 = vld [vmem:[%s0 + $0x4e0] sm:$0xff]
  %v203 = vld [vmem:[%s0 + $0x4e8] sm:$0xf]
  %v204 = vld [vmem:[%s0 + $0x4ec] sm:$0xff]
  %v205 = vld [vmem:[%s0 + $0x4f4] sm:$0xff]
  %v206 = vld [vmem:[%s0 + $0x4fc] sm:$0xf]
  %v207 = vld [vmem:[%s1] sm:$0xf]
  %v208 = vld [vmem:[%s1 + $0x4] sm:$0xf]
  %v209 = vld [vmem:[%s1 + $0x8] sm:$0xf]
  %v210 = vld [vmem:[%s1 + $0xc] sm:$0xf]
  %v211 = vld [vmem:[%s1 + $0x10] sm:$0xf]
  %v212 = vld [vmem:[%s1 + $0x14] sm:$0xf]
  %v213 = vld [vmem:[%s1 + $0x18] sm:$0xf]
  %v214 = vld [vmem:[%s1 + $0x1c] sm:$0xf]
  %v215 = vld [vmem:[%s1 + $0x20] sm:$0xf]
  %v216 = vld [vmem:[%s1 + $0x24] sm:$0xf]
  %v217 = vld [vmem:[%s1 + $0x28] sm:$0xf]
  %v218 = vld [vmem:[%s1 + $0x2c] sm:$0xf]
  %v219 = vld [vmem:[%s1 + $0x30] sm:$0xf]
  %v220 = vld [vmem:[%s1 + $0x34] sm:$0xf]
  %v221 = vld [vmem:[%s1 + $0x38] sm:$0xf]
  %v222 = vld [vmem:[%s1 + $0x3c] sm:$0xf]
  %v223 = vld [vmem:[%s1 + $0x40] sm:$0xf]
  %v224 = vld [vmem:[%s1 + $0x44] sm:$0xf]
  %v225 = vld [vmem:[%s1 + $0x48] sm:$0xf]
  %v226 = vld [vmem:[%s1 + $0x4c] sm:$0xf]
  %v227 = vld [vmem:[%s1 + $0x50] sm:$0xf]
  %v228 = vld [vmem:[%s1 + $0x54] sm:$0xf]
  %v229 = vld [vmem:[%s1 + $0x58] sm:$0xf]
  %v230 = vld [vmem:[%s1 + $0x5c] sm:$0xf]
  %v231 = vld [vmem:[%s1 + $0x60] sm:$0xf]
  %v232 = vld [vmem:[%s1 + $0x64] sm:$0xf]
  %v233 = vld [vmem:[%s1 + $0x68] sm:$0xf]
  %v234 = vld [vmem:[%s1 + $0x6c] sm:$0xf]
  %v235 = vld [vmem:[%s1 + $0x70] sm:$0xf]
  %v236 = vld [vmem:[%s1 + $0x74] sm:$0xf]
  %v237 = vld [vmem:[%s1 + $0x78] sm:$0xf]
  %v238 = vld [vmem:[%s1 + $0x7c] sm:$0xf]
  %v239 = vld [vmem:[%s1 + $0x80] sm:$0xf]
  %v240 = vld [vmem:[%s1 + $0x84] sm:$0xf]
  %v241 = vld [vmem:[%s1 + $0x88] sm:$0xf]
  %v242 = vld [vmem:[%s1 + $0x8c] sm:$0xf]
  %v243 = vld [vmem:[%s1 + $0x90] sm:$0xf]
  %v244 = vld [vmem:[%s1 + $0x94] sm:$0xf]
  %v245 = vld [vmem:[%s1 + $0x98] sm:$0xf]
  %v246 = vld [vmem:[%s1 + $0x9c] sm:$0xf]
  %v247 = vld [vmem:[%s1 + $0xa0] sm:$0xf]
  %v248 = vld [vmem:[%s1 + $0xa4] sm:$0xf]
  %v249 = vld [vmem:[%s1 + $0xa8] sm:$0xf]
  %v250 = vld [vmem:[%s1 + $0xac] sm:$0xf]
  %v251 = vld [vmem:[%s1 + $0xb0] sm:$0xf]
  %v252 = vld [vmem:[%s1 + $0xb4] sm:$0xf]
  %v253 = vld [vmem:[%s1 + $0xb8] sm:$0xf]
  %v254 = vld [vmem:[%s1 + $0xbc] sm:$0xf]
  %v255 = vld [vmem:[%s1 + $0xc0] sm:$0xf]
  %v256 = vld [vmem:[%s1 + $0xc4] sm:$0xf]
  %v257 = vld [vmem:[%s1 + $0xc8] sm:$0xf]
  %v258 = vld [vmem:[%s1 + $0xcc] sm:$0xf]
  %v259 = vld [vmem:[%s1 + $0xd0] sm:$0xf]
  %v260 = vld [vmem:[%s1 + $0xd4] sm:$0xf]
  %v261 = vld [vmem:[%s1 + $0xd8] sm:$0xf]
  %v262 = vld [vmem:[%s1 + $0xdc] sm:$0xf]
  %v263 = vld [vmem:[%s1 + $0xe0] sm:$0xf]
  %v264 = vld [vmem:[%s1 + $0xe4] sm:$0xf]
  %v265 = vld [vmem:[%s1 + $0xe8] sm:$0xf]
  %v266 = vld [vmem:[%s1 + $0xec] sm:$0xf]
  %v267 = vld [vmem:[%s1 + $0xf0] sm:$0xf]
  %v268 = vld [vmem:[%s1 + $0xf4] sm:$0xf]
  %v269 = vld [vmem:[%s1 + $0xf8] sm:$0xf]
  %v270 = vld [vmem:[%s1 + $0xfc] sm:$0xf]
  %v271 = vld [vmem:[%s1 + $0x100] sm:$0xf]
  %v272 = vld [vmem:[%s1 + $0x104] sm:$0xf]
  %v273 = vld [vmem:[%s1 + $0x108] sm:$0xf]
  %v274 = vld [vmem:[%s1 + $0x10c] sm:$0xf]
  %v275 = vld [vmem:[%s1 + $0x110] sm:$0xf]
  %v276 = vld [vmem:[%s1 + $0x114] sm:$0xf]
  %v277 = vld [vmem:[%s1 + $0x118] sm:$0xf]
  %v278 = vld [vmem:[%s1 + $0x11c] sm:$0xf]
  %v279 = vld [vmem:[%s2] sm:$0x1]
  %v280 = vlaneseq
  %v281 = vshrl.u32 %v280, 7
  %v282 = vsub.s32 0, %v281
  %v283 = vrot.slane %v279, %v282
  %v476 = vunpack.c.l.b16 %v15
  %v477 = vunpack.c.h.b16 %v15
  %v478 = vunpack.c.l.b16 %v16
  %v479 = vunpack.c.h.b16 %v16
  %v480 = vunpack.c.l.b16 %v17
  %v481 = vunpack.c.l.b16 %v18
  %v482 = vunpack.c.h.b16 %v18
  %v483 = vunpack.c.l.b16 %v19
  %v484 = vunpack.c.h.b16 %v19
  %v485 = vunpack.c.l.b16 %v20
  %v486 = vunpack.c.l.b16 %v21
  %v487 = vunpack.c.h.b16 %v21
  %v488 = vunpack.c.l.b16 %v22
  %v489 = vunpack.c.h.b16 %v22
  %v490 = vunpack.c.l.b16 %v23
  %v491 = vunpack.c.l.b16 %v24
  %v492 = vunpack.c.h.b16 %v24
  %v493 = vunpack.c.l.b16 %v25
  %v494 = vunpack.c.h.b16 %v25
  %v495 = vunpack.c.l.b16 %v26
  %v496 = vunpack.c.l.b16 %v27
  %v497 = vunpack.c.h.b16 %v27
  %v498 = vunpack.c.l.b16 %v28
  %v499 = vunpack.c.h.b16 %v28
  %v500 = vunpack.c.l.b16 %v29
  %v501 = vunpack.c.l.b16 %v30
  %v502 = vunpack.c.h.b16 %v30
  %v503 = vunpack.c.l.b16 %v31
  %v504 = vunpack.c.h.b16 %v31
  %v505 = vunpack.c.l.b16 %v32
  %v506 = vunpack.c.l.b16 %v33
  %v507 = vunpack.c.h.b16 %v33
  %v508 = vunpack.c.l.b16 %v34
  %v509 = vunpack.c.h.b16 %v34
  %v510 = vunpack.c.l.b16 %v35
  %v511 = vunpack.c.l.b16 %v36
  %v512 = vunpack.c.h.b16 %v36
  %v513 = vunpack.c.l.b16 %v37
  %v514 = vunpack.c.h.b16 %v37
  %v515 = vunpack.c.l.b16 %v38
  %v516 = vunpack.c.l.b16 %v39
  %v517 = vunpack.c.h.b16 %v39
  %v518 = vunpack.c.l.b16 %v40
  %v519 = vunpack.c.h.b16 %v40
  %v520 = vunpack.c.l.b16 %v41
  %v521 = vunpack.c.l.b16 %v42
  %v522 = vunpack.c.h.b16 %v42
  %v523 = vunpack.c.l.b16 %v43
  %v524 = vunpack.c.h.b16 %v43
  %v525 = vunpack.c.l.b16 %v44
  %v526 = vunpack.c.l.b16 %v45
  %v527 = vunpack.c.h.b16 %v45
  %v528 = vunpack.c.l.b16 %v46
  %v529 = vunpack.c.h.b16 %v46
  %v530 = vunpack.c.l.b16 %v47
  %v531 = vunpack.c.l.b16 %v48
  %v532 = vunpack.c.h.b16 %v48
  %v533 = vunpack.c.l.b16 %v49
  %v534 = vunpack.c.h.b16 %v49
  %v535 = vunpack.c.l.b16 %v50
  %v536 = vunpack.c.l.b16 %v51
  %v537 = vunpack.c.h.b16 %v51
  %v538 = vunpack.c.l.b16 %v52
  %v539 = vunpack.c.h.b16 %v52
  %v540 = vunpack.c.l.b16 %v53
  %v541 = vunpack.c.l.b16 %v54
  %v542 = vunpack.c.h.b16 %v54
  %v543 = vunpack.c.l.b16 %v55
  %v544 = vunpack.c.h.b16 %v55
  %v545 = vunpack.c.l.b16 %v56
  %v546 = vunpack.c.l.b16 %v57
  %v547 = vunpack.c.h.b16 %v57
  %v548 = vunpack.c.l.b16 %v58
  %v549 = vunpack.c.h.b16 %v58
  %v550 = vunpack.c.l.b16 %v59
  %v551 = vunpack.c.l.b16 %v60
  %v552 = vunpack.c.h.b16 %v60
  %v553 = vunpack.c.l.b16 %v61
  %v554 = vunpack.c.h.b16 %v61
  %v555 = vunpack.c.l.b16 %v62
  %v556 = vunpack.c.l.b16 %v63
  %v557 = vunpack.c.h.b16 %v63
  %v558 = vunpack.c.l.b16 %v64
  %v559 = vunpack.c.h.b16 %v64
  %v560 = vunpack.c.l.b16 %v65
  %v561 = vunpack.c.l.b16 %v66
  %v562 = vunpack.c.h.b16 %v66
  %v563 = vunpack.c.l.b16 %v67
  %v564 = vunpack.c.h.b16 %v67
  %v565 = vunpack.c.l.b16 %v68
  %v566 = vunpack.c.l.b16 %v69
  %v567 = vunpack.c.h.b16 %v69
  %v568 = vunpack.c.l.b16 %v70
  %v569 = vunpack.c.h.b16 %v70
  %v570 = vunpack.c.l.b16 %v71
  %v571 = vunpack.c.l.b16 %v72
  %v572 = vunpack.c.h.b16 %v72
  %v573 = vunpack.c.l.b16 %v73
  %v574 = vunpack.c.h.b16 %v73
  %v575 = vunpack.c.l.b16 %v74
  %v576 = vunpack.c.l.b16 %v75
  %v577 = vunpack.c.h.b16 %v75
  %v578 = vunpack.c.l.b16 %v76
  %v579 = vunpack.c.h.b16 %v76
  %v580 = vunpack.c.l.b16 %v77
  %v581 = vunpack.c.l.b16 %v78
  %v582 = vunpack.c.h.b16 %v78
  %v583 = vunpack.c.l.b16 %v79
  %v584 = vunpack.c.h.b16 %v79
  %v585 = vunpack.c.l.b16 %v80
  %v586 = vunpack.c.l.b16 %v81
  %v587 = vunpack.c.h.b16 %v81
  %v588 = vunpack.c.l.b16 %v82
  %v589 = vunpack.c.h.b16 %v82
  %v590 = vunpack.c.l.b16 %v83
  %v591 = vunpack.c.l.b16 %v84
  %v592 = vunpack.c.h.b16 %v84
  %v593 = vunpack.c.l.b16 %v85
  %v594 = vunpack.c.h.b16 %v85
  %v595 = vunpack.c.l.b16 %v86
  %v596 = vunpack.c.l.b16 %v87
  %v597 = vunpack.c.h.b16 %v87
  %v598 = vunpack.c.l.b16 %v88
  %v599 = vunpack.c.h.b16 %v88
  %v600 = vunpack.c.l.b16 %v89
  %v601 = vunpack.c.l.b16 %v90
  %v602 = vunpack.c.h.b16 %v90
  %v603 = vunpack.c.l.b16 %v91
  %v604 = vunpack.c.h.b16 %v91
  %v605 = vunpack.c.l.b16 %v92
  %v606 = vunpack.c.l.b16 %v93
  %v607 = vunpack.c.h.b16 %v93
  %v608 = vunpack.c.l.b16 %v94
  %v609 = vunpack.c.h.b16 %v94
  %v610 = vunpack.c.l.b16 %v95
  %v611 = vunpack.c.l.b16 %v96
  %v612 = vunpack.c.h.b16 %v96
  %v613 = vunpack.c.l.b16 %v97
  %v614 = vunpack.c.h.b16 %v97
  %v615 = vunpack.c.l.b16 %v98
  %v616 = vunpack.c.l.b16 %v99
  %v617 = vunpack.c.h.b16 %v99
  %v618 = vunpack.c.l.b16 %v100
  %v619 = vunpack.c.h.b16 %v100
  %v620 = vunpack.c.l.b16 %v101
  %v621 = vunpack.c.l.b16 %v102
  %v622 = vunpack.c.h.b16 %v102
  %v623 = vunpack.c.l.b16 %v103
  %v624 = vunpack.c.h.b16 %v103
  %v625 = vunpack.c.l.b16 %v104
  %v626 = vunpack.c.l.b16 %v105
  %v627 = vunpack.c.h.b16 %v105
  %v628 = vunpack.c.l.b16 %v106
  %v629 = vunpack.c.h.b16 %v106
  %v630 = vunpack.c.l.b16 %v107
  %v631 = vunpack.c.l.b16 %v108
  %v632 = vunpack.c.h.b16 %v108
  %v633 = vunpack.c.l.b16 %v109
  %v634 = vunpack.c.h.b16 %v109
  %v635 = vunpack.c.l.b16 %v110
  %v636 = vunpack.c.l.b16 %v111
  %v637 = vunpack.c.h.b16 %v111
  %v638 = vunpack.c.l.b16 %v112
  %v639 = vunpack.c.h.b16 %v112
  %v640 = vunpack.c.l.b16 %v113
  %v641 = vunpack.c.l.b16 %v114
  %v642 = vunpack.c.h.b16 %v114
  %v643 = vunpack.c.l.b16 %v115
  %v644 = vunpack.c.h.b16 %v115
  %v645 = vunpack.c.l.b16 %v116
  %v646 = vunpack.c.l.b16 %v117
  %v647 = vunpack.c.h.b16 %v117
  %v648 = vunpack.c.l.b16 %v118
  %v649 = vunpack.c.h.b16 %v118
  %v650 = vunpack.c.l.b16 %v119
  %v651 = vunpack.c.l.b16 %v120
  %v652 = vunpack.c.h.b16 %v120
  %v653 = vunpack.c.l.b16 %v121
  %v654 = vunpack.c.h.b16 %v121
  %v655 = vunpack.c.l.b16 %v122
  %v656 = vunpack.c.l.b16 %v123
  %v657 = vunpack.c.h.b16 %v123
  %v658 = vunpack.c.l.b16 %v124
  %v659 = vunpack.c.h.b16 %v124
  %v660 = vunpack.c.l.b16 %v125
  %v661 = vunpack.c.l.b16 %v126
  %v662 = vunpack.c.h.b16 %v126
  %v663 = vunpack.c.l.b16 %v127
  %v664 = vunpack.c.h.b16 %v127
  %v665 = vunpack.c.l.b16 %v128
  %v666 = vunpack.c.l.b16 %v129
  %v667 = vunpack.c.h.b16 %v129
  %v668 = vunpack.c.l.b16 %v130
  %v669 = vunpack.c.h.b16 %v130
  %v670 = vunpack.c.l.b16 %v131
  %v671 = vunpack.c.l.b16 %v132
  %v672 = vunpack.c.h.b16 %v132
  %v673 = vunpack.c.l.b16 %v133
  %v674 = vunpack.c.h.b16 %v133
  %v675 = vunpack.c.l.b16 %v134
  %v676 = vunpack.c.l.b16 %v135
  %v677 = vunpack.c.h.b16 %v135
  %v678 = vunpack.c.l.b16 %v136
  %v679 = vunpack.c.h.b16 %v136
  %v680 = vunpack.c.l.b16 %v137
  %v681 = vunpack.c.l.b16 %v138
  %v682 = vunpack.c.h.b16 %v138
  %v683 = vunpack.c.l.b16 %v139
  %v684 = vunpack.c.h.b16 %v139
  %v685 = vunpack.c.l.b16 %v140
  %v686 = vunpack.c.l.b16 %v141
  %v687 = vunpack.c.h.b16 %v141
  %v688 = vunpack.c.l.b16 %v142
  %v689 = vunpack.c.h.b16 %v142
  %v690 = vunpack.c.l.b16 %v143
  %v691 = vunpack.c.l.b16 %v144
  %v692 = vunpack.c.h.b16 %v144
  %v693 = vunpack.c.l.b16 %v145
  %v694 = vunpack.c.h.b16 %v145
  %v695 = vunpack.c.l.b16 %v146
  %v696 = vunpack.c.l.b16 %v147
  %v697 = vunpack.c.h.b16 %v147
  %v698 = vunpack.c.l.b16 %v148
  %v699 = vunpack.c.h.b16 %v148
  %v700 = vunpack.c.l.b16 %v149
  %v701 = vunpack.c.l.b16 %v150
  %v702 = vunpack.c.h.b16 %v150
  %v703 = vunpack.c.l.b16 %v151
  %v704 = vunpack.c.h.b16 %v151
  %v705 = vunpack.c.l.b16 %v152
  %v706 = vunpack.c.l.b16 %v153
  %v707 = vunpack.c.h.b16 %v153
  %v708 = vunpack.c.l.b16 %v154
  %v709 = vunpack.c.h.b16 %v154
  %v710 = vunpack.c.l.b16 %v155
  %v711 = vunpack.c.l.b16 %v156
  %v712 = vunpack.c.h.b16 %v156
  %v713 = vunpack.c.l.b16 %v157
  %v714 = vunpack.c.h.b16 %v157
  %v715 = vunpack.c.l.b16 %v158
  %v716 = vunpack.c.l.b16 %v159
  %v717 = vunpack.c.h.b16 %v159
  %v718 = vunpack.c.l.b16 %v160
  %v719 = vunpack.c.h.b16 %v160
  %v720 = vunpack.c.l.b16 %v161
  %v721 = vunpack.c.l.b16 %v162
  %v722 = vunpack.c.h.b16 %v162
  %v723 = vunpack.c.l.b16 %v163
  %v724 = vunpack.c.h.b16 %v163
  %v725 = vunpack.c.l.b16 %v164
  %v726 = vunpack.c.l.b16 %v165
  %v727 = vunpack.c.h.b16 %v165
  %v728 = vunpack.c.l.b16 %v166
  %v729 = vunpack.c.h.b16 %v166
  %v730 = vunpack.c.l.b16 %v167
  %v731 = vunpack.c.l.b16 %v168
  %v732 = vunpack.c.h.b16 %v168
  %v733 = vunpack.c.l.b16 %v169
  %v734 = vunpack.c.h.b16 %v169
  %v735 = vunpack.c.l.b16 %v170
  %v736 = vunpack.c.l.b16 %v171
  %v737 = vunpack.c.h.b16 %v171
  %v738 = vunpack.c.l.b16 %v172
  %v739 = vunpack.c.h.b16 %v172
  %v740 = vunpack.c.l.b16 %v173
  %v741 = vunpack.c.l.b16 %v174
  %v742 = vunpack.c.h.b16 %v174
  %v743 = vunpack.c.l.b16 %v175
  %v744 = vunpack.c.h.b16 %v175
  %v745 = vunpack.c.l.b16 %v176
  %v746 = vunpack.c.l.b16 %v177
  %v747 = vunpack.c.h.b16 %v177
  %v748 = vunpack.c.l.b16 %v178
  %v749 = vunpack.c.h.b16 %v178
  %v750 = vunpack.c.l.b16 %v179
  %v751 = vunpack.c.l.b16 %v180
  %v752 = vunpack.c.h.b16 %v180
  %v753 = vunpack.c.l.b16 %v181
  %v754 = vunpack.c.h.b16 %v181
  %v755 = vunpack.c.l.b16 %v182
  %v756 = vunpack.c.l.b16 %v183
  %v757 = vunpack.c.h.b16 %v183
  %v758 = vunpack.c.l.b16 %v184
  %v759 = vunpack.c.h.b16 %v184
  %v760 = vunpack.c.l.b16 %v185
  %v761 = vunpack.c.l.b16 %v186
  %v762 = vunpack.c.h.b16 %v186
  %v763 = vunpack.c.l.b16 %v187
  %v764 = vunpack.c.h.b16 %v187
  %v765 = vunpack.c.l.b16 %v188
  %v766 = vunpack.c.l.b16 %v189
  %v767 = vunpack.c.h.b16 %v189
  %v768 = vunpack.c.l.b16 %v190
  %v769 = vunpack.c.h.b16 %v190
  %v770 = vunpack.c.l.b16 %v191
  %v771 = vunpack.c.l.b16 %v192
  %v772 = vunpack.c.h.b16 %v192
  %v773 = vunpack.c.l.b16 %v193
  %v774 = vunpack.c.h.b16 %v193
  %v775 = vunpack.c.l.b16 %v194
  %v776 = vunpack.c.l.b16 %v195
  %v777 = vunpack.c.h.b16 %v195
  %v778 = vunpack.c.l.b16 %v196
  %v779 = vunpack.c.h.b16 %v196
  %v780 = vunpack.c.l.b16 %v197
  %v781 = vunpack.c.l.b16 %v198
  %v782 = vunpack.c.h.b16 %v198
  %v783 = vunpack.c.l.b16 %v199
  %v784 = vunpack.c.h.b16 %v199
  %v785 = vunpack.c.l.b16 %v200
  %v786 = vunpack.c.l.b16 %v201
  %v787 = vunpack.c.h.b16 %v201
  %v788 = vunpack.c.l.b16 %v202
  %v789 = vunpack.c.h.b16 %v202
  %v790 = vunpack.c.l.b16 %v203
  %v791 = vunpack.c.l.b16 %v204
  %v792 = vunpack.c.h.b16 %v204
  %v793 = vunpack.c.l.b16 %v205
  %v794 = vunpack.c.h.b16 %v205
  %v795 = vunpack.c.l.b16 %v206
  %v796 = vpack.c.b16 %v481, %v476
  %v797 = vpack.c.b16 %v482, %v477
  %v798 = vpack.c.b16 %v483, %v478
  %v799 = vpack.c.b16 %v484, %v479
  %v800 = vpack.c.b16 %v485, %v480
  %v801 = vpack.c.b16 %v491, %v486
  %v802 = vpack.c.b16 %v492, %v487
  %v803 = vpack.c.b16 %v493, %v488
  %v804 = vpack.c.b16 %v494, %v489
  %v805 = vpack.c.b16 %v495, %v490
  %v806 = vpack.c.b16 %v501, %v496
  %v807 = vpack.c.b16 %v502, %v497
  %v808 = vpack.c.b16 %v503, %v498
  %v809 = vpack.c.b16 %v504, %v499
  %v810 = vpack.c.b16 %v505, %v500
  %v811 = vpack.c.b16 %v511, %v506
  %v812 = vpack.c.b16 %v512, %v507
  %v813 = vpack.c.b16 %v513, %v508
  %v814 = vpack.c.b16 %v514, %v509
  %v815 = vpack.c.b16 %v515, %v510
  %v816 = vpack.c.b16 %v521, %v516
  %v817 = vpack.c.b16 %v522, %v517
  %v818 = vpack.c.b16 %v523, %v518
  %v819 = vpack.c.b16 %v524, %v519
  %v820 = vpack.c.b16 %v525, %v520
  %v821 = vpack.c.b16 %v531, %v526
  %v822 = vpack.c.b16 %v532, %v527
  %v823 = vpack.c.b16 %v533, %v528
  %v824 = vpack.c.b16 %v534, %v529
  %v825 = vpack.c.b16 %v535, %v530
  %v826 = vpack.c.b16 %v541, %v536
  %v827 = vpack.c.b16 %v542, %v537
  %v828 = vpack.c.b16 %v543, %v538
  %v829 = vpack.c.b16 %v544, %v539
  %v830 = vpack.c.b16 %v545, %v540
  %v831 = vpack.c.b16 %v551, %v546
  %v832 = vpack.c.b16 %v552, %v547
  %v833 = vpack.c.b16 %v553, %v548
  %v834 = vpack.c.b16 %v554, %v549
  %v835 = vpack.c.b16 %v555, %v550
  %v836 = vpack.c.b16 %v561, %v556
  %v837 = vpack.c.b16 %v562, %v557
  %v838 = vpack.c.b16 %v563, %v558
  %v839 = vpack.c.b16 %v564, %v559
  %v840 = vpack.c.b16 %v565, %v560
  %v841 = vpack.c.b16 %v571, %v566
  %v842 = vpack.c.b16 %v572, %v567
  %v843 = vpack.c.b16 %v573, %v568
  %v844 = vpack.c.b16 %v574, %v569
  %v845 = vpack.c.b16 %v575, %v570
  %v846 = vpack.c.b16 %v581, %v576
  %v847 = vpack.c.b16 %v582, %v577
  %v848 = vpack.c.b16 %v583, %v578
  %v849 = vpack.c.b16 %v584, %v579
  %v850 = vpack.c.b16 %v585, %v580
  %v851 = vpack.c.b16 %v591, %v586
  %v852 = vpack.c.b16 %v592, %v587
  %v853 = vpack.c.b16 %v593, %v588
  %v854 = vpack.c.b16 %v594, %v589
  %v855 = vpack.c.b16 %v595, %v590
  %v856 = vpack.c.b16 %v601, %v596
  %v857 = vpack.c.b16 %v602, %v597
  %v858 = vpack.c.b16 %v603, %v598
  %v859 = vpack.c.b16 %v604, %v599
  %v860 = vpack.c.b16 %v605, %v600
  %v861 = vpack.c.b16 %v611, %v606
  %v862 = vpack.c.b16 %v612, %v607
  %v863 = vpack.c.b16 %v613, %v608
  %v864 = vpack.c.b16 %v614, %v609
  %v865 = vpack.c.b16 %v615, %v610
  %v866 = vpack.c.b16 %v621, %v616
  %v867 = vpack.c.b16 %v622, %v617
  %v868 = vpack.c.b16 %v623, %v618
  %v869 = vpack.c.b16 %v624, %v619
  %v870 = vpack.c.b16 %v625, %v620
  %v871 = vpack.c.b16 %v631, %v626
  %v872 = vpack.c.b16 %v632, %v627
  %v873 = vpack.c.b16 %v633, %v628
  %v874 = vpack.c.b16 %v634, %v629
  %v875 = vpack.c.b16 %v635, %v630
  %v876 = vpack.c.b16 %v641, %v636
  %v877 = vpack.c.b16 %v642, %v637
  %v878 = vpack.c.b16 %v643, %v638
  %v879 = vpack.c.b16 %v644, %v639
  %v880 = vpack.c.b16 %v645, %v640
  %v881 = vpack.c.b16 %v651, %v646
  %v882 = vpack.c.b16 %v652, %v647
  %v883 = vpack.c.b16 %v653, %v648
  %v884 = vpack.c.b16 %v654, %v649
  %v885 = vpack.c.b16 %v655, %v650
  %v886 = vpack.c.b16 %v661, %v656
  %v887 = vpack.c.b16 %v662, %v657
  %v888 = vpack.c.b16 %v663, %v658
  %v889 = vpack.c.b16 %v664, %v659
  %v890 = vpack.c.b16 %v665, %v660
  %v891 = vpack.c.b16 %v671, %v666
  %v892 = vpack.c.b16 %v672, %v667
  %v893 = vpack.c.b16 %v673, %v668
  %v894 = vpack.c.b16 %v674, %v669
  %v895 = vpack.c.b16 %v675, %v670
  %v896 = vpack.c.b16 %v681, %v676
  %v897 = vpack.c.b16 %v682, %v677
  %v898 = vpack.c.b16 %v683, %v678
  %v899 = vpack.c.b16 %v684, %v679
  %v900 = vpack.c.b16 %v685, %v680
  %v901 = vpack.c.b16 %v691, %v686
  %v902 = vpack.c.b16 %v692, %v687
  %v903 = vpack.c.b16 %v693, %v688
  %v904 = vpack.c.b16 %v694, %v689
  %v905 = vpack.c.b16 %v695, %v690
  %v906 = vpack.c.b16 %v701, %v696
  %v907 = vpack.c.b16 %v702, %v697
  %v908 = vpack.c.b16 %v703, %v698
  %v909 = vpack.c.b16 %v704, %v699
  %v910 = vpack.c.b16 %v705, %v700
  %v911 = vpack.c.b16 %v711, %v706
  %v912 = vpack.c.b16 %v712, %v707
  %v913 = vpack.c.b16 %v713, %v708
  %v914 = vpack.c.b16 %v714, %v709
  %v915 = vpack.c.b16 %v715, %v710
  %v916 = vpack.c.b16 %v721, %v716
  %v917 = vpack.c.b16 %v722, %v717
  %v918 = vpack.c.b16 %v723, %v718
  %v919 = vpack.c.b16 %v724, %v719
  %v920 = vpack.c.b16 %v725, %v720
  %v921 = vpack.c.b16 %v731, %v726
  %v922 = vpack.c.b16 %v732, %v727
  %v923 = vpack.c.b16 %v733, %v728
  %v924 = vpack.c.b16 %v734, %v729
  %v925 = vpack.c.b16 %v735, %v730
  %v926 = vpack.c.b16 %v741, %v736
  %v927 = vpack.c.b16 %v742, %v737
  %v928 = vpack.c.b16 %v743, %v738
  %v929 = vpack.c.b16 %v744, %v739
  %v930 = vpack.c.b16 %v745, %v740
  %v931 = vpack.c.b16 %v751, %v746
  %v932 = vpack.c.b16 %v752, %v747
  %v933 = vpack.c.b16 %v753, %v748
  %v934 = vpack.c.b16 %v754, %v749
  %v935 = vpack.c.b16 %v755, %v750
  %v936 = vpack.c.b16 %v761, %v756
  %v937 = vpack.c.b16 %v762, %v757
  %v938 = vpack.c.b16 %v763, %v758
  %v939 = vpack.c.b16 %v764, %v759
  %v940 = vpack.c.b16 %v765, %v760
  %v941 = vpack.c.b16 %v771, %v766
  %v942 = vpack.c.b16 %v772, %v767
  %v943 = vpack.c.b16 %v773, %v768
  %v944 = vpack.c.b16 %v774, %v769
  %v945 = vpack.c.b16 %v775, %v770
  %v946 = vpack.c.b16 %v781, %v776
  %v947 = vpack.c.b16 %v782, %v777
  %v948 = vpack.c.b16 %v783, %v778
  %v949 = vpack.c.b16 %v784, %v779
  %v950 = vpack.c.b16 %v785, %v780
  %v951 = vpack.c.b16 %v791, %v786
  %v952 = vpack.c.b16 %v792, %v787
  %v953 = vpack.c.b16 %v793, %v788
  %v954 = vpack.c.b16 %v794, %v789
  %v955 = vpack.c.b16 %v795, %v790
  %v1156 = vunpack.c.l.b16 %v207
  %v1157 = vunpack.c.l.b16 %v208
  %v1158 = vunpack.c.l.b16 %v209
  %v1159 = vunpack.c.l.b16 %v210
  %v1160 = vunpack.c.l.b16 %v211
  %v1161 = vunpack.c.l.b16 %v212
  %v1162 = vunpack.c.l.b16 %v213
  %v1163 = vunpack.c.l.b16 %v214
  %v1164 = vunpack.c.l.b16 %v215
  %v1165 = vunpack.c.l.b16 %v216
  %v1166 = vunpack.c.l.b16 %v217
  %v1167 = vunpack.c.l.b16 %v218
  %v1168 = vunpack.c.l.b16 %v219
  %v1169 = vunpack.c.l.b16 %v220
  %v1170 = vunpack.c.l.b16 %v221
  %v1171 = vunpack.c.l.b16 %v222
  %v1172 = vunpack.c.l.b16 %v223
  %v1173 = vunpack.c.l.b16 %v224
  %v1174 = vunpack.c.l.b16 %v225
  %v1175 = vunpack.c.l.b16 %v226
  %v1176 = vunpack.c.l.b16 %v227
  %v1177 = vunpack.c.l.b16 %v228
  %v1178 = vunpack.c.l.b16 %v229
  %v1179 = vunpack.c.l.b16 %v230
  %v1180 = vunpack.c.l.b16 %v231
  %v1181 = vunpack.c.l.b16 %v232
  %v1182 = vunpack.c.l.b16 %v233
  %v1183 = vunpack.c.l.b16 %v234
  %v1184 = vunpack.c.l.b16 %v235
  %v1185 = vunpack.c.l.b16 %v236
  %v1186 = vunpack.c.l.b16 %v237
  %v1187 = vunpack.c.l.b16 %v238
  %v1188 = vunpack.c.l.b16 %v239
  %v1189 = vunpack.c.l.b16 %v240
  %v1190 = vunpack.c.l.b16 %v241
  %v1191 = vunpack.c.l.b16 %v242
  %v1192 = vunpack.c.l.b16 %v243
  %v1193 = vunpack.c.l.b16 %v244
  %v1194 = vunpack.c.l.b16 %v245
  %v1195 = vunpack.c.l.b16 %v246
  %v1196 = vunpack.c.l.b16 %v247
  %v1197 = vunpack.c.l.b16 %v248
  %v1198 = vunpack.c.l.b16 %v249
  %v1199 = vunpack.c.l.b16 %v250
  %v1200 = vunpack.c.l.b16 %v251
  %v1201 = vunpack.c.l.b16 %v252
  %v1202 = vunpack.c.l.b16 %v253
  %v1203 = vunpack.c.l.b16 %v254
  %v1204 = vunpack.c.l.b16 %v255
  %v1205 = vunpack.c.l.b16 %v256
  %v1206 = vunpack.c.l.b16 %v257
  %v1207 = vunpack.c.l.b16 %v258
  %v1208 = vunpack.c.l.b16 %v259
  %v1209 = vunpack.c.l.b16 %v260
  %v1210 = vunpack.c.l.b16 %v261
  %v1211 = vunpack.c.l.b16 %v262
  %v1212 = vunpack.c.l.b16 %v263
  %v1213 = vunpack.c.l.b16 %v264
  %v1214 = vunpack.c.l.b16 %v265
  %v1215 = vunpack.c.l.b16 %v266
  %v1216 = vunpack.c.l.b16 %v267
  %v1217 = vunpack.c.l.b16 %v268
  %v1218 = vunpack.c.l.b16 %v269
  %v1219 = vunpack.c.l.b16 %v270
  %v1220 = vunpack.c.l.b16 %v271
  %v1221 = vunpack.c.l.b16 %v272
  %v1222 = vunpack.c.l.b16 %v273
  %v1223 = vunpack.c.l.b16 %v274
  %v1224 = vunpack.c.l.b16 %v275
  %v1225 = vunpack.c.l.b16 %v276
  %v1226 = vunpack.c.l.b16 %v277
  %v1227 = vunpack.c.l.b16 %v278
  %v1228 = vpack.c.b16 %v1157, %v1156
  %v1229 = vpack.c.b16 %v1159, %v1158
  %v1230 = vpack.c.b16 %v1161, %v1160
  %v1231 = vpack.c.b16 %v1163, %v1162
  %v1232 = vpack.c.b16 %v1165, %v1164
  %v1233 = vpack.c.b16 %v1167, %v1166
  %v1234 = vpack.c.b16 %v1169, %v1168
  %v1235 = vpack.c.b16 %v1171, %v1170
  %v1236 = vpack.c.b16 %v1173, %v1172
  %v1237 = vpack.c.b16 %v1175, %v1174
  %v1238 = vpack.c.b16 %v1177, %v1176
  %v1239 = vpack.c.b16 %v1179, %v1178
  %v1240 = vpack.c.b16 %v1181, %v1180
  %v1241 = vpack.c.b16 %v1183, %v1182
  %v1242 = vpack.c.b16 %v1185, %v1184
  %v1243 = vpack.c.b16 %v1187, %v1186
  %v1244 = vpack.c.b16 %v1189, %v1188
  %v1245 = vpack.c.b16 %v1191, %v1190
  %v1246 = vpack.c.b16 %v1193, %v1192
  %v1247 = vpack.c.b16 %v1195, %v1194
  %v1248 = vpack.c.b16 %v1197, %v1196
  %v1249 = vpack.c.b16 %v1199, %v1198
  %v1250 = vpack.c.b16 %v1201, %v1200
  %v1251 = vpack.c.b16 %v1203, %v1202
  %v1252 = vpack.c.b16 %v1205, %v1204
  %v1253 = vpack.c.b16 %v1207, %v1206
  %v1254 = vpack.c.b16 %v1209, %v1208
  %v1255 = vpack.c.b16 %v1211, %v1210
  %v1256 = vpack.c.b16 %v1213, %v1212
  %v1257 = vpack.c.b16 %v1215, %v1214
  %v1258 = vpack.c.b16 %v1217, %v1216
  %v1259 = vpack.c.b16 %v1219, %v1218
  %v1260 = vpack.c.b16 %v1221, %v1220
  %v1261 = vpack.c.b16 %v1223, %v1222
  %v1262 = vpack.c.b16 %v1225, %v1224
  %v1263 = vpack.c.b16 %v1227, %v1226
  %vm1300 = vcmask 523264
  %v1302 = vsel %vm1300, %v800, 0
  %v1305 = vsel %vm1300, %v805, 0
  %v1308 = vsel %vm1300, %v810, 0
  %v1311 = vsel %vm1300, %v815, 0
  %v1314 = vsel %vm1300, %v820, 0
  %v1317 = vsel %vm1300, %v825, 0
  %v1320 = vsel %vm1300, %v830, 0
  %v1323 = vsel %vm1300, %v835, 0
  %v1326 = vsel %vm1300, %v840, 0
  %v1329 = vsel %vm1300, %v845, 0
  %v1332 = vsel %vm1300, %v850, 0
  %v1335 = vsel %vm1300, %v855, 0
  %v1338 = vsel %vm1300, %v860, 0
  %v1341 = vsel %vm1300, %v865, 0
  %v1344 = vsel %vm1300, %v870, 0
  %v1347 = vsel %vm1300, %v875, 0
  %v1350 = vsel %vm1300, %v880, 0
  %v1353 = vsel %vm1300, %v885, 0
  %v1356 = vsel %vm1300, %v890, 0
  %v1359 = vsel %vm1300, %v895, 0
  %v1362 = vsel %vm1300, %v900, 0
  %v1365 = vsel %vm1300, %v905, 0
  %v1368 = vsel %vm1300, %v910, 0
  %v1371 = vsel %vm1300, %v915, 0
  %v1374 = vsel %vm1300, %v920, 0
  %v1377 = vsel %vm1300, %v925, 0
  %v1380 = vsel %vm1300, %v930, 0
  %v1383 = vsel %vm1300, %v935, 0
  %v1386 = vsel %vm1300, %v940, 0
  %v1389 = vsel %vm1300, %v945, 0
  %v1392 = vsel %vm1300, %v950, 0
  %v1395 = vsel %vm1300, %v955, 0
  %1397 = vmatprep.subr.bf16.mxu0 0
  %1398 = vmatpush1.bf16.msra.mxu0 %v1235
  %1399 = vmatprep.subr.bf16.mxu0 0
  %1400 = vmatpush1.bf16.msra.mxu0 %v1234
  %1401 = vmatprep.subr.bf16.mxu0 0
  %1402 = vmatpush1.bf16.msra.mxu0 %v1233
  %1403 = vmatprep.subr.bf16.mxu0 0
  %1404 = vmatpush1.bf16.msra.mxu0 %v1232
  %1405 = vmatprep.subr.bf16.mxu0 0
  %1406 = vmatpush1.bf16.msra.mxu0 %v1231
  %1407 = vmatprep.subr.bf16.mxu0 0
  %1408 = vmatpush1.bf16.msra.mxu0 %v1230
  %1409 = vmatprep.subr.bf16.mxu0 0
  %1410 = vmatpush1.bf16.msra.mxu0 %v1229
  %1411 = vmatprep.subr.bf16.mxu0 0
  %1412 = vmatpush1.bf16.msra.mxu0 %v1228
  %1413 = vmatprep.subr.bf16.mxu0 0
  %1414 = vmatpush2.bf16.msra.mxu0 %v1243
  %1415 = vmatprep.subr.bf16.mxu0 0
  %1416 = vmatpush2.bf16.msra.mxu0 %v1242
  %1417 = vmatprep.subr.bf16.mxu0 0
  %1418 = vmatpush2.bf16.msra.mxu0 %v1241
  %1419 = vmatprep.subr.bf16.mxu0 0
  %1420 = vmatpush2.bf16.msra.mxu0 %v1240
  %1421 = vmatprep.subr.bf16.mxu0 0
  %1422 = vmatpush2.bf16.msra.mxu0 %v1239
  %1423 = vmatprep.subr.bf16.mxu0 0
  %1424 = vmatpush2.bf16.msra.mxu0 %v1238
  %1425 = vmatprep.subr.bf16.mxu0 0
  %1426 = vmatpush2.bf16.msra.mxu0 %v1237
  %1427 = vmatprep.subr.bf16.mxu0 0
  %1428 = vmatpush2.bf16.msra.mxu0 %v1236
  %1429 = vmatprep.mubr.bf16.mxu0 %v797
  %1430 = vmatmul.mubr.bf16.gmra.mxu0 %v796
  %v1431 = vpop.f32.mrf.mxu0
  %v1432 = vadd.f32 %v283, %v1431
  %v1433 = vpop.f32.mrf.mxu0
  %v1434 = vpop.f32.mrf.mxu0
  %v1435 = vadd.f32 %v283, %v1434
  %v1436 = vpop.f32.mrf.mxu0
  %1437 = vmatprep.mubr.bf16.mxu0 %v802
  %1438 = vmatmul.mubr.bf16.gmra.mxu0 %v801
  %v1439 = vpop.f32.mrf.mxu0
  %v1440 = vadd.f32 %v283, %v1439
  %v1441 = vpop.f32.mrf.mxu0
  %v1442 = vpop.f32.mrf.mxu0
  %v1443 = vadd.f32 %v283, %v1442
  %v1444 = vpop.f32.mrf.mxu0
  %1445 = vmatprep.mubr.bf16.mxu0 %v807
  %1446 = vmatmul.mubr.bf16.gmra.mxu0 %v806
  %v1447 = vpop.f32.mrf.mxu0
  %v1448 = vadd.f32 %v283, %v1447
  %v1449 = vpop.f32.mrf.mxu0
  %v1450 = vpop.f32.mrf.mxu0
  %v1451 = vadd.f32 %v283, %v1450
  %v1452 = vpop.f32.mrf.mxu0
  %1453 = vmatprep.mubr.bf16.mxu0 %v812
  %1454 = vmatmul.mubr.bf16.gmra.mxu0 %v811
  %v1455 = vpop.f32.mrf.mxu0
  %v1456 = vadd.f32 %v283, %v1455
  %v1457 = vpop.f32.mrf.mxu0
  %v1458 = vpop.f32.mrf.mxu0
  %v1459 = vadd.f32 %v283, %v1458
  %v1460 = vpop.f32.mrf.mxu0
  %1461 = vmatprep.mubr.bf16.mxu0 %v817
  %1462 = vmatmul.mubr.bf16.gmra.mxu0 %v816
  %v1463 = vpop.f32.mrf.mxu0
  %v1464 = vadd.f32 %v283, %v1463
  %v1465 = vpop.f32.mrf.mxu0
  %v1466 = vpop.f32.mrf.mxu0
  %v1467 = vadd.f32 %v283, %v1466
  %v1468 = vpop.f32.mrf.mxu0
  %1469 = vmatprep.mubr.bf16.mxu0 %v822
  %1470 = vmatmul.mubr.bf16.gmra.mxu0 %v821
  %v1471 = vpop.f32.mrf.mxu0
  %v1472 = vadd.f32 %v283, %v1471
  %v1473 = vpop.f32.mrf.mxu0
  %v1474 = vpop.f32.mrf.mxu0
  %v1475 = vadd.f32 %v283, %v1474
  %v1476 = vpop.f32.mrf.mxu0
  %1477 = vmatprep.mubr.bf16.mxu0 %v827
  %1478 = vmatmul.mubr.bf16.gmra.mxu0 %v826
  %v1479 = vpop.f32.mrf.mxu0
  %v1480 = vadd.f32 %v283, %v1479
  %v1481 = vpop.f32.mrf.mxu0
  %v1482 = vpop.f32.mrf.mxu0
  %v1483 = vadd.f32 %v283, %v1482
  %v1484 = vpop.f32.mrf.mxu0
  %1485 = vmatprep.mubr.bf16.mxu0 %v832
  %1486 = vmatmul.mubr.bf16.gmra.mxu0 %v831
  %v1487 = vpop.f32.mrf.mxu0
  %v1488 = vadd.f32 %v283, %v1487
  %v1489 = vpop.f32.mrf.mxu0
  %v1490 = vpop.f32.mrf.mxu0
  %v1491 = vadd.f32 %v283, %v1490
  %v1492 = vpop.f32.mrf.mxu0
  %1493 = vmatprep.mubr.bf16.mxu0 %v837
  %1494 = vmatmul.mubr.bf16.gmra.mxu0 %v836
  %v1495 = vpop.f32.mrf.mxu0
  %v1496 = vadd.f32 %v283, %v1495
  %v1497 = vpop.f32.mrf.mxu0
  %v1498 = vpop.f32.mrf.mxu0
  %v1499 = vadd.f32 %v283, %v1498
  %v1500 = vpop.f32.mrf.mxu0
  %1501 = vmatprep.mubr.bf16.mxu0 %v842
  %1502 = vmatmul.mubr.bf16.gmra.mxu0 %v841
  %v1503 = vpop.f32.mrf.mxu0
  %v1504 = vadd.f32 %v283, %v1503
  %v1505 = vpop.f32.mrf.mxu0
  %v1506 = vpop.f32.mrf.mxu0
  %v1507 = vadd.f32 %v283, %v1506
  %v1508 = vpop.f32.mrf.mxu0
  %1509 = vmatprep.mubr.bf16.mxu0 %v847
  %1510 = vmatmul.mubr.bf16.gmra.mxu0 %v846
  %v1511 = vpop.f32.mrf.mxu0
  %v1512 = vadd.f32 %v283, %v1511
  %v1513 = vpop.f32.mrf.mxu0
  %v1514 = vpop.f32.mrf.mxu0
  %v1515 = vadd.f32 %v283, %v1514
  %v1516 = vpop.f32.mrf.mxu0
  %1517 = vmatprep.mubr.bf16.mxu0 %v852
  %1518 = vmatmul.mubr.bf16.gmra.mxu0 %v851
  %v1519 = vpop.f32.mrf.mxu0
  %v1520 = vadd.f32 %v283, %v1519
  %v1521 = vpop.f32.mrf.mxu0
  %v1522 = vpop.f32.mrf.mxu0
  %v1523 = vadd.f32 %v283, %v1522
  %v1524 = vpop.f32.mrf.mxu0
  %1525 = vmatprep.mubr.bf16.mxu0 %v857
  %1526 = vmatmul.mubr.bf16.gmra.mxu0 %v856
  %v1527 = vpop.f32.mrf.mxu0
  %v1528 = vadd.f32 %v283, %v1527
  %v1529 = vpop.f32.mrf.mxu0
  %v1530 = vpop.f32.mrf.mxu0
  %v1531 = vadd.f32 %v283, %v1530
  %v1532 = vpop.f32.mrf.mxu0
  %1533 = vmatprep.mubr.bf16.mxu0 %v862
  %1534 = vmatmul.mubr.bf16.gmra.mxu0 %v861
  %v1535 = vpop.f32.mrf.mxu0
  %v1536 = vadd.f32 %v283, %v1535
  %v1537 = vpop.f32.mrf.mxu0
  %v1538 = vpop.f32.mrf.mxu0
  %v1539 = vadd.f32 %v283, %v1538
  %v1540 = vpop.f32.mrf.mxu0
  %1541 = vmatprep.mubr.bf16.mxu0 %v867
  %1542 = vmatmul.mubr.bf16.gmra.mxu0 %v866
  %v1543 = vpop.f32.mrf.mxu0
  %v1544 = vadd.f32 %v283, %v1543
  %v1545 = vpop.f32.mrf.mxu0
  %v1546 = vpop.f32.mrf.mxu0
  %v1547 = vadd.f32 %v283, %v1546
  %v1548 = vpop.f32.mrf.mxu0
  %1549 = vmatprep.mubr.bf16.mxu0 %v872
  %1550 = vmatmul.mubr.bf16.gmra.mxu0 %v871
  %v1551 = vpop.f32.mrf.mxu0
  %v1552 = vadd.f32 %v283, %v1551
  %v1553 = vpop.f32.mrf.mxu0
  %v1554 = vpop.f32.mrf.mxu0
  %v1555 = vadd.f32 %v283, %v1554
  %v1556 = vpop.f32.mrf.mxu0
  %1557 = vmatprep.mubr.bf16.mxu0 %v877
  %1558 = vmatmul.mubr.bf16.gmra.mxu0 %v876
  %v1559 = vpop.f32.mrf.mxu0
  %v1560 = vadd.f32 %v283, %v1559
  %v1561 = vpop.f32.mrf.mxu0
  %v1562 = vpop.f32.mrf.mxu0
  %v1563 = vadd.f32 %v283, %v1562
  %v1564 = vpop.f32.mrf.mxu0
  %1565 = vmatprep.mubr.bf16.mxu0 %v882
  %1566 = vmatmul.mubr.bf16.gmra.mxu0 %v881
  %v1567 = vpop.f32.mrf.mxu0
  %v1568 = vadd.f32 %v283, %v1567
  %v1569 = vpop.f32.mrf.mxu0
  %v1570 = vpop.f32.mrf.mxu0
  %v1571 = vadd.f32 %v283, %v1570
  %v1572 = vpop.f32.mrf.mxu0
  %1573 = vmatprep.mubr.bf16.mxu0 %v887
  %1574 = vmatmul.mubr.bf16.gmra.mxu0 %v886
  %v1575 = vpop.f32.mrf.mxu0
  %v1576 = vadd.f32 %v283, %v1575
  %v1577 = vpop.f32.mrf.mxu0
  %v1578 = vpop.f32.mrf.mxu0
  %v1579 = vadd.f32 %v283, %v1578
  %v1580 = vpop.f32.mrf.mxu0
  %1581 = vmatprep.mubr.bf16.mxu0 %v892
  %1582 = vmatmul.mubr.bf16.gmra.mxu0 %v891
  %v1583 = vpop.f32.mrf.mxu0
  %v1584 = vadd.f32 %v283, %v1583
  %v1585 = vpop.f32.mrf.mxu0
  %v1586 = vpop.f32.mrf.mxu0
  %v1587 = vadd.f32 %v283, %v1586
  %v1588 = vpop.f32.mrf.mxu0
  %1589 = vmatprep.mubr.bf16.mxu0 %v897
  %1590 = vmatmul.mubr.bf16.gmra.mxu0 %v896
  %v1591 = vpop.f32.mrf.mxu0
  %v1592 = vadd.f32 %v283, %v1591
  %v1593 = vpop.f32.mrf.mxu0
  %v1594 = vpop.f32.mrf.mxu0
  %v1595 = vadd.f32 %v283, %v1594
  %v1596 = vpop.f32.mrf.mxu0
  %1597 = vmatprep.mubr.bf16.mxu0 %v902
  %1598 = vmatmul.mubr.bf16.gmra.mxu0 %v901
  %v1599 = vpop.f32.mrf.mxu0
  %v1600 = vadd.f32 %v283, %v1599
  %v1601 = vpop.f32.mrf.mxu0
  %v1602 = vpop.f32.mrf.mxu0
  %v1603 = vadd.f32 %v283, %v1602
  %v1604 = vpop.f32.mrf.mxu0
  %1605 = vmatprep.mubr.bf16.mxu0 %v907
  %1606 = vmatmul.mubr.bf16.gmra.mxu0 %v906
  %v1607 = vpop.f32.mrf.mxu0
  %v1608 = vadd.f32 %v283, %v1607
  %v1609 = vpop.f32.mrf.mxu0
  %v1610 = vpop.f32.mrf.mxu0
  %v1611 = vadd.f32 %v283, %v1610
  %v1612 = vpop.f32.mrf.mxu0
  %1613 = vmatprep.mubr.bf16.mxu0 %v912
  %1614 = vmatmul.mubr.bf16.gmra.mxu0 %v911
  %v1615 = vpop.f32.mrf.mxu0
  %v1616 = vadd.f32 %v283, %v1615
  %v1617 = vpop.f32.mrf.mxu0
  %v1618 = vpop.f32.mrf.mxu0
  %v1619 = vadd.f32 %v283, %v1618
  %v1620 = vpop.f32.mrf.mxu0
  %1621 = vmatprep.mubr.bf16.mxu0 %v917
  %1622 = vmatmul.mubr.bf16.gmra.mxu0 %v916
  %v1623 = vpop.f32.mrf.mxu0
  %v1624 = vadd.f32 %v283, %v1623
  %v1625 = vpop.f32.mrf.mxu0
  %v1626 = vpop.f32.mrf.mxu0
  %v1627 = vadd.f32 %v283, %v1626
  %v1628 = vpop.f32.mrf.mxu0
  %1629 = vmatprep.mubr.bf16.mxu0 %v922
  %1630 = vmatmul.mubr.bf16.gmra.mxu0 %v921
  %v1631 = vpop.f32.mrf.mxu0
  %v1632 = vadd.f32 %v283, %v1631
  %v1633 = vpop.f32.mrf.mxu0
  %v1634 = vpop.f32.mrf.mxu0
  %v1635 = vadd.f32 %v283, %v1634
  %v1636 = vpop.f32.mrf.mxu0
  %1637 = vmatprep.mubr.bf16.mxu0 %v927
  %1638 = vmatmul.mubr.bf16.gmra.mxu0 %v926
  %v1639 = vpop.f32.mrf.mxu0
  %v1640 = vadd.f32 %v283, %v1639
  %v1641 = vpop.f32.mrf.mxu0
  %v1642 = vpop.f32.mrf.mxu0
  %v1643 = vadd.f32 %v283, %v1642
  %v1644 = vpop.f32.mrf.mxu0
  %1645 = vmatprep.mubr.bf16.mxu0 %v932
  %1646 = vmatmul.mubr.bf16.gmra.mxu0 %v931
  %v1647 = vpop.f32.mrf.mxu0
  %v1648 = vadd.f32 %v283, %v1647
  %v1649 = vpop.f32.mrf.mxu0
  %v1650 = vpop.f32.mrf.mxu0
  %v1651 = vadd.f32 %v283, %v1650
  %v1652 = vpop.f32.mrf.mxu0
  %1653 = vmatprep.mubr.bf16.mxu0 %v937
  %1654 = vmatmul.mubr.bf16.gmra.mxu0 %v936
  %v1655 = vpop.f32.mrf.mxu0
  %v1656 = vadd.f32 %v283, %v1655
  %v1657 = vpop.f32.mrf.mxu0
  %v1658 = vpop.f32.mrf.mxu0
  %v1659 = vadd.f32 %v283, %v1658
  %v1660 = vpop.f32.mrf.mxu0
  %1661 = vmatprep.mubr.bf16.mxu0 %v942
  %1662 = vmatmul.mubr.bf16.gmra.mxu0 %v941
  %v1663 = vpop.f32.mrf.mxu0
  %v1664 = vadd.f32 %v283, %v1663
  %v1665 = vpop.f32.mrf.mxu0
  %v1666 = vpop.f32.mrf.mxu0
  %v1667 = vadd.f32 %v283, %v1666
  %v1668 = vpop.f32.mrf.mxu0
  %1669 = vmatprep.mubr.bf16.mxu0 %v947
  %1670 = vmatmul.mubr.bf16.gmra.mxu0 %v946
  %v1671 = vpop.f32.mrf.mxu0
  %v1672 = vadd.f32 %v283, %v1671
  %v1673 = vpop.f32.mrf.mxu0
  %v1674 = vpop.f32.mrf.mxu0
  %v1675 = vadd.f32 %v283, %v1674
  %v1676 = vpop.f32.mrf.mxu0
  %1677 = vmatprep.mubr.bf16.mxu0 %v952
  %1678 = vmatmul.mubr.bf16.gmra.mxu0 %v951
  %v1679 = vpop.f32.mrf.mxu0
  %v1680 = vadd.f32 %v283, %v1679
  %v1681 = vpop.f32.mrf.mxu0
  %v1682 = vpop.f32.mrf.mxu0
  %v1683 = vadd.f32 %v283, %v1682
  %v1684 = vpop.f32.mrf.mxu0
  %1685 = vdwg.mxu0
  %1686 = vmatprep.subr.bf16.mxu0 0
  %1687 = vmatpush1.bf16.msra.mxu0 %v1251
  %1688 = vmatprep.subr.bf16.mxu0 0
  %1689 = vmatpush1.bf16.msra.mxu0 %v1250
  %1690 = vmatprep.subr.bf16.mxu0 0
  %1691 = vmatpush1.bf16.msra.mxu0 %v1249
  %1692 = vmatprep.subr.bf16.mxu0 0
  %1693 = vmatpush1.bf16.msra.mxu0 %v1248
  %1694 = vmatprep.subr.bf16.mxu0 0
  %1695 = vmatpush1.bf16.msra.mxu0 %v1247
  %1696 = vmatprep.subr.bf16.mxu0 0
  %1697 = vmatpush1.bf16.msra.mxu0 %v1246
  %1698 = vmatprep.subr.bf16.mxu0 0
  %1699 = vmatpush1.bf16.msra.mxu0 %v1245
  %1700 = vmatprep.subr.bf16.mxu0 0
  %1701 = vmatpush1.bf16.msra.mxu0 %v1244
  %1702 = vmatprep.subr.bf16.mxu0 0
  %1703 = vmatpush2.bf16.msra.mxu0 %v1259
  %1704 = vmatprep.subr.bf16.mxu0 0
  %1705 = vmatpush2.bf16.msra.mxu0 %v1258
  %1706 = vmatprep.subr.bf16.mxu0 0
  %1707 = vmatpush2.bf16.msra.mxu0 %v1257
  %1708 = vmatprep.subr.bf16.mxu0 0
  %1709 = vmatpush2.bf16.msra.mxu0 %v1256
  %1710 = vmatprep.subr.bf16.mxu0 0
  %1711 = vmatpush2.bf16.msra.mxu0 %v1255
  %1712 = vmatprep.subr.bf16.mxu0 0
  %1713 = vmatpush2.bf16.msra.mxu0 %v1254
  %1714 = vmatprep.subr.bf16.mxu0 0
  %1715 = vmatpush2.bf16.msra.mxu0 %v1253
  %1716 = vmatprep.subr.bf16.mxu0 0
  %1717 = vmatpush2.bf16.msra.mxu0 %v1252
  %1718 = vmatprep.mubr.bf16.mxu0 %v799
  %1719 = vmatmul.mubr.bf16.gmra.mxu0 %v798
  %v1720 = vpop.f32.mrf.mxu0
  %v1721 = vadd.f32 %v1432, %v1720
  %v1722 = vpop.f32.mrf.mxu0
  %v1723 = vpop.f32.mrf.mxu0
  %v1724 = vadd.f32 %v1435, %v1723
  %v1725 = vpop.f32.mrf.mxu0
  %1726 = vmatprep.mubr.bf16.mxu0 %v804
  %1727 = vmatmul.mubr.bf16.gmra.mxu0 %v803
  %v1728 = vpop.f32.mrf.mxu0
  %v1729 = vadd.f32 %v1440, %v1728
  %v1730 = vpop.f32.mrf.mxu0
  %v1731 = vpop.f32.mrf.mxu0
  %v1732 = vadd.f32 %v1443, %v1731
  %v1733 = vpop.f32.mrf.mxu0
  %1734 = vmatprep.mubr.bf16.mxu0 %v809
  %1735 = vmatmul.mubr.bf16.gmra.mxu0 %v808
  %v1736 = vpop.f32.mrf.mxu0
  %v1737 = vadd.f32 %v1448, %v1736
  %v1738 = vpop.f32.mrf.mxu0
  %v1739 = vpop.f32.mrf.mxu0
  %v1740 = vadd.f32 %v1451, %v1739
  %v1741 = vpop.f32.mrf.mxu0
  %1742 = vmatprep.mubr.bf16.mxu0 %v814
  %1743 = vmatmul.mubr.bf16.gmra.mxu0 %v813
  %v1744 = vpop.f32.mrf.mxu0
  %v1745 = vadd.f32 %v1456, %v1744
  %v1746 = vpop.f32.mrf.mxu0
  %v1747 = vpop.f32.mrf.mxu0
  %v1748 = vadd.f32 %v1459, %v1747
  %v1749 = vpop.f32.mrf.mxu0
  %1750 = vmatprep.mubr.bf16.mxu0 %v819
  %1751 = vmatmul.mubr.bf16.gmra.mxu0 %v818
  %v1752 = vpop.f32.mrf.mxu0
  %v1753 = vadd.f32 %v1464, %v1752
  %v1754 = vpop.f32.mrf.mxu0
  %v1755 = vpop.f32.mrf.mxu0
  %v1756 = vadd.f32 %v1467, %v1755
  %v1757 = vpop.f32.mrf.mxu0
  %1758 = vmatprep.mubr.bf16.mxu0 %v824
  %1759 = vmatmul.mubr.bf16.gmra.mxu0 %v823
  %v1760 = vpop.f32.mrf.mxu0
  %v1761 = vadd.f32 %v1472, %v1760
  %v1762 = vpop.f32.mrf.mxu0
  %v1763 = vpop.f32.mrf.mxu0
  %v1764 = vadd.f32 %v1475, %v1763
  %v1765 = vpop.f32.mrf.mxu0
  %1766 = vmatprep.mubr.bf16.mxu0 %v829
  %1767 = vmatmul.mubr.bf16.gmra.mxu0 %v828
  %v1768 = vpop.f32.mrf.mxu0
  %v1769 = vadd.f32 %v1480, %v1768
  %v1770 = vpop.f32.mrf.mxu0
  %v1771 = vpop.f32.mrf.mxu0
  %v1772 = vadd.f32 %v1483, %v1771
  %v1773 = vpop.f32.mrf.mxu0
  %1774 = vmatprep.mubr.bf16.mxu0 %v834
  %1775 = vmatmul.mubr.bf16.gmra.mxu0 %v833
  %v1776 = vpop.f32.mrf.mxu0
  %v1777 = vadd.f32 %v1488, %v1776
  %v1778 = vpop.f32.mrf.mxu0
  %v1779 = vpop.f32.mrf.mxu0
  %v1780 = vadd.f32 %v1491, %v1779
  %v1781 = vpop.f32.mrf.mxu0
  %1782 = vmatprep.mubr.bf16.mxu0 %v839
  %1783 = vmatmul.mubr.bf16.gmra.mxu0 %v838
  %v1784 = vpop.f32.mrf.mxu0
  %v1785 = vadd.f32 %v1496, %v1784
  %v1786 = vpop.f32.mrf.mxu0
  %v1787 = vpop.f32.mrf.mxu0
  %v1788 = vadd.f32 %v1499, %v1787
  %v1789 = vpop.f32.mrf.mxu0
  %1790 = vmatprep.mubr.bf16.mxu0 %v844
  %1791 = vmatmul.mubr.bf16.gmra.mxu0 %v843
  %v1792 = vpop.f32.mrf.mxu0
  %v1793 = vadd.f32 %v1504, %v1792
  %v1794 = vpop.f32.mrf.mxu0
  %v1795 = vpop.f32.mrf.mxu0
  %v1796 = vadd.f32 %v1507, %v1795
  %v1797 = vpop.f32.mrf.mxu0
  %1798 = vmatprep.mubr.bf16.mxu0 %v849
  %1799 = vmatmul.mubr.bf16.gmra.mxu0 %v848
  %v1800 = vpop.f32.mrf.mxu0
  %v1801 = vadd.f32 %v1512, %v1800
  %v1802 = vpop.f32.mrf.mxu0
  %v1803 = vpop.f32.mrf.mxu0
  %v1804 = vadd.f32 %v1515, %v1803
  %v1805 = vpop.f32.mrf.mxu0
  %1806 = vmatprep.mubr.bf16.mxu0 %v854
  %1807 = vmatmul.mubr.bf16.gmra.mxu0 %v853
  %v1808 = vpop.f32.mrf.mxu0
  %v1809 = vadd.f32 %v1520, %v1808
  %v1810 = vpop.f32.mrf.mxu0
  %v1811 = vpop.f32.mrf.mxu0
  %v1812 = vadd.f32 %v1523, %v1811
  %v1813 = vpop.f32.mrf.mxu0
  %1814 = vmatprep.mubr.bf16.mxu0 %v859
  %1815 = vmatmul.mubr.bf16.gmra.mxu0 %v858
  %v1816 = vpop.f32.mrf.mxu0
  %v1817 = vadd.f32 %v1528, %v1816
  %v1818 = vpop.f32.mrf.mxu0
  %v1819 = vpop.f32.mrf.mxu0
  %v1820 = vadd.f32 %v1531, %v1819
  %v1821 = vpop.f32.mrf.mxu0
  %1822 = vmatprep.mubr.bf16.mxu0 %v864
  %1823 = vmatmul.mubr.bf16.gmra.mxu0 %v863
  %v1824 = vpop.f32.mrf.mxu0
  %v1825 = vadd.f32 %v1536, %v1824
  %v1826 = vpop.f32.mrf.mxu0
  %v1827 = vpop.f32.mrf.mxu0
  %v1828 = vadd.f32 %v1539, %v1827
  %v1829 = vpop.f32.mrf.mxu0
  %1830 = vmatprep.mubr.bf16.mxu0 %v869
  %1831 = vmatmul.mubr.bf16.gmra.mxu0 %v868
  %v1832 = vpop.f32.mrf.mxu0
  %v1833 = vadd.f32 %v1544, %v1832
  %v1834 = vpop.f32.mrf.mxu0
  %v1835 = vpop.f32.mrf.mxu0
  %v1836 = vadd.f32 %v1547, %v1835
  %v1837 = vpop.f32.mrf.mxu0
  %1838 = vmatprep.mubr.bf16.mxu0 %v874
  %1839 = vmatmul.mubr.bf16.gmra.mxu0 %v873
  %v1840 = vpop.f32.mrf.mxu0
  %v1841 = vadd.f32 %v1552, %v1840
  %v1842 = vpop.f32.mrf.mxu0
  %v1843 = vpop.f32.mrf.mxu0
  %v1844 = vadd.f32 %v1555, %v1843
  %v1845 = vpop.f32.mrf.mxu0
  %1846 = vmatprep.mubr.bf16.mxu0 %v879
  %1847 = vmatmul.mubr.bf16.gmra.mxu0 %v878
  %v1848 = vpop.f32.mrf.mxu0
  %v1849 = vadd.f32 %v1560, %v1848
  %v1850 = vpop.f32.mrf.mxu0
  %v1851 = vpop.f32.mrf.mxu0
  %v1852 = vadd.f32 %v1563, %v1851
  %v1853 = vpop.f32.mrf.mxu0
  %1854 = vmatprep.mubr.bf16.mxu0 %v884
  %1855 = vmatmul.mubr.bf16.gmra.mxu0 %v883
  %v1856 = vpop.f32.mrf.mxu0
  %v1857 = vadd.f32 %v1568, %v1856
  %v1858 = vpop.f32.mrf.mxu0
  %v1859 = vpop.f32.mrf.mxu0
  %v1860 = vadd.f32 %v1571, %v1859
  %v1861 = vpop.f32.mrf.mxu0
  %1862 = vmatprep.mubr.bf16.mxu0 %v889
  %1863 = vmatmul.mubr.bf16.gmra.mxu0 %v888
  %v1864 = vpop.f32.mrf.mxu0
  %v1865 = vadd.f32 %v1576, %v1864
  %v1866 = vpop.f32.mrf.mxu0
  %v1867 = vpop.f32.mrf.mxu0
  %v1868 = vadd.f32 %v1579, %v1867
  %v1869 = vpop.f32.mrf.mxu0
  %1870 = vmatprep.mubr.bf16.mxu0 %v894
  %1871 = vmatmul.mubr.bf16.gmra.mxu0 %v893
  %v1872 = vpop.f32.mrf.mxu0
  %v1873 = vadd.f32 %v1584, %v1872
  %v1874 = vpop.f32.mrf.mxu0
  %v1875 = vpop.f32.mrf.mxu0
  %v1876 = vadd.f32 %v1587, %v1875
  %v1877 = vpop.f32.mrf.mxu0
  %1878 = vmatprep.mubr.bf16.mxu0 %v899
  %1879 = vmatmul.mubr.bf16.gmra.mxu0 %v898
  %v1880 = vpop.f32.mrf.mxu0
  %v1881 = vadd.f32 %v1592, %v1880
  %v1882 = vpop.f32.mrf.mxu0
  %v1883 = vpop.f32.mrf.mxu0
  %v1884 = vadd.f32 %v1595, %v1883
  %v1885 = vpop.f32.mrf.mxu0
  %1886 = vmatprep.mubr.bf16.mxu0 %v904
  %1887 = vmatmul.mubr.bf16.gmra.mxu0 %v903
  %v1888 = vpop.f32.mrf.mxu0
  %v1889 = vadd.f32 %v1600, %v1888
  %v1890 = vpop.f32.mrf.mxu0
  %v1891 = vpop.f32.mrf.mxu0
  %v1892 = vadd.f32 %v1603, %v1891
  %v1893 = vpop.f32.mrf.mxu0
  %1894 = vmatprep.mubr.bf16.mxu0 %v909
  %1895 = vmatmul.mubr.bf16.gmra.mxu0 %v908
  %v1896 = vpop.f32.mrf.mxu0
  %v1897 = vadd.f32 %v1608, %v1896
  %v1898 = vpop.f32.mrf.mxu0
  %v1899 = vpop.f32.mrf.mxu0
  %v1900 = vadd.f32 %v1611, %v1899
  %v1901 = vpop.f32.mrf.mxu0
  %1902 = vmatprep.mubr.bf16.mxu0 %v914
  %1903 = vmatmul.mubr.bf16.gmra.mxu0 %v913
  %v1904 = vpop.f32.mrf.mxu0
  %v1905 = vadd.f32 %v1616, %v1904
  %v1906 = vpop.f32.mrf.mxu0
  %v1907 = vpop.f32.mrf.mxu0
  %v1908 = vadd.f32 %v1619, %v1907
  %v1909 = vpop.f32.mrf.mxu0
  %1910 = vmatprep.mubr.bf16.mxu0 %v919
  %1911 = vmatmul.mubr.bf16.gmra.mxu0 %v918
  %v1912 = vpop.f32.mrf.mxu0
  %v1913 = vadd.f32 %v1624, %v1912
  %v1914 = vpop.f32.mrf.mxu0
  %v1915 = vpop.f32.mrf.mxu0
  %v1916 = vadd.f32 %v1627, %v1915
  %v1917 = vpop.f32.mrf.mxu0
  %1918 = vmatprep.mubr.bf16.mxu0 %v924
  %1919 = vmatmul.mubr.bf16.gmra.mxu0 %v923
  %v1920 = vpop.f32.mrf.mxu0
  %v1921 = vadd.f32 %v1632, %v1920
  %v1922 = vpop.f32.mrf.mxu0
  %v1923 = vpop.f32.mrf.mxu0
  %v1924 = vadd.f32 %v1635, %v1923
  %v1925 = vpop.f32.mrf.mxu0
  %1926 = vmatprep.mubr.bf16.mxu0 %v929
  %1927 = vmatmul.mubr.bf16.gmra.mxu0 %v928
  %v1928 = vpop.f32.mrf.mxu0
  %v1929 = vadd.f32 %v1640, %v1928
  %v1930 = vpop.f32.mrf.mxu0
  %v1931 = vpop.f32.mrf.mxu0
  %v1932 = vadd.f32 %v1643, %v1931
  %v1933 = vpop.f32.mrf.mxu0
  %1934 = vmatprep.mubr.bf16.mxu0 %v934
  %1935 = vmatmul.mubr.bf16.gmra.mxu0 %v933
  %v1936 = vpop.f32.mrf.mxu0
  %v1937 = vadd.f32 %v1648, %v1936
  %v1938 = vpop.f32.mrf.mxu0
  %v1939 = vpop.f32.mrf.mxu0
  %v1940 = vadd.f32 %v1651, %v1939
  %v1941 = vpop.f32.mrf.mxu0
  %1942 = vmatprep.mubr.bf16.mxu0 %v939
  %1943 = vmatmul.mubr.bf16.gmra.mxu0 %v938
  %v1944 = vpop.f32.mrf.mxu0
  %v1945 = vadd.f32 %v1656, %v1944
  %v1946 = vpop.f32.mrf.mxu0
  %v1947 = vpop.f32.mrf.mxu0
  %v1948 = vadd.f32 %v1659, %v1947
  %v1949 = vpop.f32.mrf.mxu0
  %1950 = vmatprep.mubr.bf16.mxu0 %v944
  %1951 = vmatmul.mubr.bf16.gmra.mxu0 %v943
  %v1952 = vpop.f32.mrf.mxu0
  %v1953 = vadd.f32 %v1664, %v1952
  %v1954 = vpop.f32.mrf.mxu0
  %v1955 = vpop.f32.mrf.mxu0
  %v1956 = vadd.f32 %v1667, %v1955
  %v1957 = vpop.f32.mrf.mxu0
  %1958 = vmatprep.mubr.bf16.mxu0 %v949
  %1959 = vmatmul.mubr.bf16.gmra.mxu0 %v948
  %v1960 = vpop.f32.mrf.mxu0
  %v1961 = vadd.f32 %v1672, %v1960
  %v1962 = vpop.f32.mrf.mxu0
  %v1963 = vpop.f32.mrf.mxu0
  %v1964 = vadd.f32 %v1675, %v1963
  %v1965 = vpop.f32.mrf.mxu0
  %1966 = vmatprep.mubr.bf16.mxu0 %v954
  %1967 = vmatmul.mubr.bf16.gmra.mxu0 %v953
  %v1968 = vpop.f32.mrf.mxu0
  %v1969 = vadd.f32 %v1680, %v1968
  %v1970 = vpop.f32.mrf.mxu0
  %v1971 = vpop.f32.mrf.mxu0
  %v1972 = vadd.f32 %v1683, %v1971
  %v1973 = vpop.f32.mrf.mxu0
  %1974 = vdwg.mxu0
  %1975 = vmatprep.subr.bf16.mxu0 0
  %1976 = vmatpush1.bf16.msra.mxu0 0
  %1977 = vmatprep.subr.bf16.mxu0 0
  %1978 = vmatpush1.bf16.msra.mxu0 0
  %1979 = vmatprep.subr.bf16.mxu0 0
  %1980 = vmatpush1.bf16.msra.mxu0 0
  %1981 = vmatprep.subr.bf16.mxu0 0
  %1982 = vmatpush1.bf16.msra.mxu0 0
  %1983 = vmatprep.subr.bf16.mxu0 0
  %1984 = vmatpush1.bf16.msra.mxu0 %v1263
  %1985 = vmatprep.subr.bf16.mxu0 0
  %1986 = vmatpush1.bf16.msra.mxu0 %v1262
  %1987 = vmatprep.subr.bf16.mxu0 0
  %1988 = vmatpush1.bf16.msra.mxu0 %v1261
  %1989 = vmatprep.subr.bf16.mxu0 0
  %1990 = vmatpush1.bf16.msra.mxu0 %v1260
  %1991 = vmatprep.subr.bf16.mxu0 0
  %1992 = vmatpush2.bf16.msra.mxu0 0
  %1993 = vmatprep.subr.bf16.mxu0 0
  %1994 = vmatpush2.bf16.msra.mxu0 0
  %1995 = vmatprep.subr.bf16.mxu0 0
  %1996 = vmatpush2.bf16.msra.mxu0 0
  %1997 = vmatprep.subr.bf16.mxu0 0
  %1998 = vmatpush2.bf16.msra.mxu0 0
  %1999 = vmatprep.subr.bf16.mxu0 0
  %2000 = vmatpush2.bf16.msra.mxu0 0
  %2001 = vmatprep.subr.bf16.mxu0 0
  %2002 = vmatpush2.bf16.msra.mxu0 0
  %2003 = vmatprep.subr.bf16.mxu0 0
  %2004 = vmatpush2.bf16.msra.mxu0 0
  %2005 = vmatprep.subr.bf16.mxu0 0
  %2006 = vmatpush2.bf16.msra.mxu0 0
  %2007 = vmatprep.mubr.bf16.mxu0 0
  %2008 = vmatmul.mubr.bf16.gmra.mxu0 %v1302
  %v2009 = vpop.f32.mrf.mxu0
  %v2010 = vadd.f32 %v1721, %v2009
  %v2011 = vpop.f32.mrf.mxu0
  %v2012 = vpop.f32.mrf.mxu0
  %v2013 = vadd.f32 %v1724, %v2012
  %v2014 = vpop.f32.mrf.mxu0
  %2015 = vmatprep.mubr.bf16.mxu0 0
  %2016 = vmatmul.mubr.bf16.gmra.mxu0 %v1305
  %v2017 = vpop.f32.mrf.mxu0
  %v2018 = vadd.f32 %v1729, %v2017
  %v2019 = vpop.f32.mrf.mxu0
  %v2020 = vpop.f32.mrf.mxu0
  %v2021 = vadd.f32 %v1732, %v2020
  %v2022 = vpop.f32.mrf.mxu0
  %2023 = vmatprep.mubr.bf16.mxu0 0
  %2024 = vmatmul.mubr.bf16.gmra.mxu0 %v1308
  %v2025 = vpop.f32.mrf.mxu0
  %v2026 = vadd.f32 %v1737, %v2025
  %v2027 = vpop.f32.mrf.mxu0
  %v2028 = vpop.f32.mrf.mxu0
  %v2029 = vadd.f32 %v1740, %v2028
  %v2030 = vpop.f32.mrf.mxu0
  %2031 = vmatprep.mubr.bf16.mxu0 0
  %2032 = vmatmul.mubr.bf16.gmra.mxu0 %v1311
  %v2033 = vpop.f32.mrf.mxu0
  %v2034 = vadd.f32 %v1745, %v2033
  %v2035 = vpop.f32.mrf.mxu0
  %v2036 = vpop.f32.mrf.mxu0
  %v2037 = vadd.f32 %v1748, %v2036
  %v2038 = vpop.f32.mrf.mxu0
  %2039 = vmatprep.mubr.bf16.mxu0 0
  %2040 = vmatmul.mubr.bf16.gmra.mxu0 %v1314
  %v2041 = vpop.f32.mrf.mxu0
  %v2042 = vadd.f32 %v1753, %v2041
  %v2043 = vpop.f32.mrf.mxu0
  %v2044 = vpop.f32.mrf.mxu0
  %v2045 = vadd.f32 %v1756, %v2044
  %v2046 = vpop.f32.mrf.mxu0
  %2047 = vmatprep.mubr.bf16.mxu0 0
  %2048 = vmatmul.mubr.bf16.gmra.mxu0 %v1317
  %v2049 = vpop.f32.mrf.mxu0
  %v2050 = vadd.f32 %v1761, %v2049
  %v2051 = vpop.f32.mrf.mxu0
  %v2052 = vpop.f32.mrf.mxu0
  %v2053 = vadd.f32 %v1764, %v2052
  %v2054 = vpop.f32.mrf.mxu0
  %2055 = vmatprep.mubr.bf16.mxu0 0
  %2056 = vmatmul.mubr.bf16.gmra.mxu0 %v1320
  %v2057 = vpop.f32.mrf.mxu0
  %v2058 = vadd.f32 %v1769, %v2057
  %v2059 = vpop.f32.mrf.mxu0
  %v2060 = vpop.f32.mrf.mxu0
  %v2061 = vadd.f32 %v1772, %v2060
  %v2062 = vpop.f32.mrf.mxu0
  %2063 = vmatprep.mubr.bf16.mxu0 0
  %2064 = vmatmul.mubr.bf16.gmra.mxu0 %v1323
  %v2065 = vpop.f32.mrf.mxu0
  %v2066 = vadd.f32 %v1777, %v2065
  %v2067 = vpop.f32.mrf.mxu0
  %v2068 = vpop.f32.mrf.mxu0
  %v2069 = vadd.f32 %v1780, %v2068
  %v2070 = vpop.f32.mrf.mxu0
  %2071 = vmatprep.mubr.bf16.mxu0 0
  %2072 = vmatmul.mubr.bf16.gmra.mxu0 %v1326
  %v2073 = vpop.f32.mrf.mxu0
  %v2074 = vadd.f32 %v1785, %v2073
  %v2075 = vpop.f32.mrf.mxu0
  %v2076 = vpop.f32.mrf.mxu0
  %v2077 = vadd.f32 %v1788, %v2076
  %v2078 = vpop.f32.mrf.mxu0
  %2079 = vmatprep.mubr.bf16.mxu0 0
  %2080 = vmatmul.mubr.bf16.gmra.mxu0 %v1329
  %v2081 = vpop.f32.mrf.mxu0
  %v2082 = vadd.f32 %v1793, %v2081
  %v2083 = vpop.f32.mrf.mxu0
  %v2084 = vpop.f32.mrf.mxu0
  %v2085 = vadd.f32 %v1796, %v2084
  %v2086 = vpop.f32.mrf.mxu0
  %2087 = vmatprep.mubr.bf16.mxu0 0
  %2088 = vmatmul.mubr.bf16.gmra.mxu0 %v1332
  %v2089 = vpop.f32.mrf.mxu0
  %v2090 = vadd.f32 %v1801, %v2089
  %v2091 = vpop.f32.mrf.mxu0
  %v2092 = vpop.f32.mrf.mxu0
  %v2093 = vadd.f32 %v1804, %v2092
  %v2094 = vpop.f32.mrf.mxu0
  %2095 = vmatprep.mubr.bf16.mxu0 0
  %2096 = vmatmul.mubr.bf16.gmra.mxu0 %v1335
  %v2097 = vpop.f32.mrf.mxu0
  %v2098 = vadd.f32 %v1809, %v2097
  %v2099 = vpop.f32.mrf.mxu0
  %v2100 = vpop.f32.mrf.mxu0
  %v2101 = vadd.f32 %v1812, %v2100
  %v2102 = vpop.f32.mrf.mxu0
  %2103 = vmatprep.mubr.bf16.mxu0 0
  %2104 = vmatmul.mubr.bf16.gmra.mxu0 %v1338
  %v2105 = vpop.f32.mrf.mxu0
  %v2106 = vadd.f32 %v1817, %v2105
  %v2107 = vpop.f32.mrf.mxu0
  %v2108 = vpop.f32.mrf.mxu0
  %v2109 = vadd.f32 %v1820, %v2108
  %v2110 = vpop.f32.mrf.mxu0
  %2111 = vmatprep.mubr.bf16.mxu0 0
  %2112 = vmatmul.mubr.bf16.gmra.mxu0 %v1341
  %v2113 = vpop.f32.mrf.mxu0
  %v2114 = vadd.f32 %v1825, %v2113
  %v2115 = vpop.f32.mrf.mxu0
  %v2116 = vpop.f32.mrf.mxu0
  %v2117 = vadd.f32 %v1828, %v2116
  %v2118 = vpop.f32.mrf.mxu0
  %2119 = vmatprep.mubr.bf16.mxu0 0
  %2120 = vmatmul.mubr.bf16.gmra.mxu0 %v1344
  %v2121 = vpop.f32.mrf.mxu0
  %v2122 = vadd.f32 %v1833, %v2121
  %v2123 = vpop.f32.mrf.mxu0
  %v2124 = vpop.f32.mrf.mxu0
  %v2125 = vadd.f32 %v1836, %v2124
  %v2126 = vpop.f32.mrf.mxu0
  %2127 = vmatprep.mubr.bf16.mxu0 0
  %2128 = vmatmul.mubr.bf16.gmra.mxu0 %v1347
  %v2129 = vpop.f32.mrf.mxu0
  %v2130 = vadd.f32 %v1841, %v2129
  %v2131 = vpop.f32.mrf.mxu0
  %v2132 = vpop.f32.mrf.mxu0
  %v2133 = vadd.f32 %v1844, %v2132
  %v2134 = vpop.f32.mrf.mxu0
  %2135 = vmatprep.mubr.bf16.mxu0 0
  %2136 = vmatmul.mubr.bf16.gmra.mxu0 %v1350
  %v2137 = vpop.f32.mrf.mxu0
  %v2138 = vadd.f32 %v1849, %v2137
  %v2139 = vpop.f32.mrf.mxu0
  %v2140 = vpop.f32.mrf.mxu0
  %v2141 = vadd.f32 %v1852, %v2140
  %v2142 = vpop.f32.mrf.mxu0
  %2143 = vmatprep.mubr.bf16.mxu0 0
  %2144 = vmatmul.mubr.bf16.gmra.mxu0 %v1353
  %v2145 = vpop.f32.mrf.mxu0
  %v2146 = vadd.f32 %v1857, %v2145
  %v2147 = vpop.f32.mrf.mxu0
  %v2148 = vpop.f32.mrf.mxu0
  %v2149 = vadd.f32 %v1860, %v2148
  %v2150 = vpop.f32.mrf.mxu0
  %2151 = vmatprep.mubr.bf16.mxu0 0
  %2152 = vmatmul.mubr.bf16.gmra.mxu0 %v1356
  %v2153 = vpop.f32.mrf.mxu0
  %v2154 = vadd.f32 %v1865, %v2153
  %v2155 = vpop.f32.mrf.mxu0
  %v2156 = vpop.f32.mrf.mxu0
  %v2157 = vadd.f32 %v1868, %v2156
  %v2158 = vpop.f32.mrf.mxu0
  %2159 = vmatprep.mubr.bf16.mxu0 0
  %2160 = vmatmul.mubr.bf16.gmra.mxu0 %v1359
  %v2161 = vpop.f32.mrf.mxu0
  %v2162 = vadd.f32 %v1873, %v2161
  %v2163 = vpop.f32.mrf.mxu0
  %v2164 = vpop.f32.mrf.mxu0
  %v2165 = vadd.f32 %v1876, %v2164
  %v2166 = vpop.f32.mrf.mxu0
  %2167 = vmatprep.mubr.bf16.mxu0 0
  %2168 = vmatmul.mubr.bf16.gmra.mxu0 %v1362
  %v2169 = vpop.f32.mrf.mxu0
  %v2170 = vadd.f32 %v1881, %v2169
  %v2171 = vpop.f32.mrf.mxu0
  %v2172 = vpop.f32.mrf.mxu0
  %v2173 = vadd.f32 %v1884, %v2172
  %v2174 = vpop.f32.mrf.mxu0
  %2175 = vmatprep.mubr.bf16.mxu0 0
  %2176 = vmatmul.mubr.bf16.gmra.mxu0 %v1365
  %v2177 = vpop.f32.mrf.mxu0
  %v2178 = vadd.f32 %v1889, %v2177
  %v2179 = vpop.f32.mrf.mxu0
  %v2180 = vpop.f32.mrf.mxu0
  %v2181 = vadd.f32 %v1892, %v2180
  %v2182 = vpop.f32.mrf.mxu0
  %2183 = vmatprep.mubr.bf16.mxu0 0
  %2184 = vmatmul.mubr.bf16.gmra.mxu0 %v1368
  %v2185 = vpop.f32.mrf.mxu0
  %v2186 = vadd.f32 %v1897, %v2185
  %v2187 = vpop.f32.mrf.mxu0
  %v2188 = vpop.f32.mrf.mxu0
  %v2189 = vadd.f32 %v1900, %v2188
  %v2190 = vpop.f32.mrf.mxu0
  %2191 = vmatprep.mubr.bf16.mxu0 0
  %2192 = vmatmul.mubr.bf16.gmra.mxu0 %v1371
  %v2193 = vpop.f32.mrf.mxu0
  %v2194 = vadd.f32 %v1905, %v2193
  %v2195 = vpop.f32.mrf.mxu0
  %v2196 = vpop.f32.mrf.mxu0
  %v2197 = vadd.f32 %v1908, %v2196
  %v2198 = vpop.f32.mrf.mxu0
  %2199 = vmatprep.mubr.bf16.mxu0 0
  %2200 = vmatmul.mubr.bf16.gmra.mxu0 %v1374
  %v2201 = vpop.f32.mrf.mxu0
  %v2202 = vadd.f32 %v1913, %v2201
  %v2203 = vpop.f32.mrf.mxu0
  %v2204 = vpop.f32.mrf.mxu0
  %v2205 = vadd.f32 %v1916, %v2204
  %v2206 = vpop.f32.mrf.mxu0
  %2207 = vmatprep.mubr.bf16.mxu0 0
  %2208 = vmatmul.mubr.bf16.gmra.mxu0 %v1377
  %v2209 = vpop.f32.mrf.mxu0
  %v2210 = vadd.f32 %v1921, %v2209
  %v2211 = vpop.f32.mrf.mxu0
  %v2212 = vpop.f32.mrf.mxu0
  %v2213 = vadd.f32 %v1924, %v2212
  %v2214 = vpop.f32.mrf.mxu0
  %2215 = vmatprep.mubr.bf16.mxu0 0
  %2216 = vmatmul.mubr.bf16.gmra.mxu0 %v1380
  %v2217 = vpop.f32.mrf.mxu0
  %v2218 = vadd.f32 %v1929, %v2217
  %v2219 = vpop.f32.mrf.mxu0
  %v2220 = vpop.f32.mrf.mxu0
  %v2221 = vadd.f32 %v1932, %v2220
  %v2222 = vpop.f32.mrf.mxu0
  %2223 = vmatprep.mubr.bf16.mxu0 0
  %2224 = vmatmul.mubr.bf16.gmra.mxu0 %v1383
  %v2225 = vpop.f32.mrf.mxu0
  %v2226 = vadd.f32 %v1937, %v2225
  %v2227 = vpop.f32.mrf.mxu0
  %v2228 = vpop.f32.mrf.mxu0
  %v2229 = vadd.f32 %v1940, %v2228
  %v2230 = vpop.f32.mrf.mxu0
  %2231 = vmatprep.mubr.bf16.mxu0 0
  %2232 = vmatmul.mubr.bf16.gmra.mxu0 %v1386
  %v2233 = vpop.f32.mrf.mxu0
  %v2234 = vadd.f32 %v1945, %v2233
  %v2235 = vpop.f32.mrf.mxu0
  %v2236 = vpop.f32.mrf.mxu0
  %v2237 = vadd.f32 %v1948, %v2236
  %v2238 = vpop.f32.mrf.mxu0
  %2239 = vmatprep.mubr.bf16.mxu0 0
  %2240 = vmatmul.mubr.bf16.gmra.mxu0 %v1389
  %v2241 = vpop.f32.mrf.mxu0
  %v2242 = vadd.f32 %v1953, %v2241
  %v2243 = vpop.f32.mrf.mxu0
  %v2244 = vpop.f32.mrf.mxu0
  %v2245 = vadd.f32 %v1956, %v2244
  %v2246 = vpop.f32.mrf.mxu0
  %2247 = vmatprep.mubr.bf16.mxu0 0
  %2248 = vmatmul.mubr.bf16.gmra.mxu0 %v1392
  %v2249 = vpop.f32.mrf.mxu0
  %v2250 = vadd.f32 %v1961, %v2249
  %v2251 = vpop.f32.mrf.mxu0
  %v2252 = vpop.f32.mrf.mxu0
  %v2253 = vadd.f32 %v1964, %v2252
  %v2254 = vpop.f32.mrf.mxu0
  %2255 = vmatprep.mubr.bf16.mxu0 0
  %2256 = vmatmul.mubr.bf16.gmra.mxu0 %v1395
  %v2257 = vpop.f32.mrf.mxu0
  %v2258 = vadd.f32 %v1969, %v2257
  %v2259 = vpop.f32.mrf.mxu0
  %v2260 = vpop.f32.mrf.mxu0
  %v2261 = vadd.f32 %v1972, %v2260
  %v2262 = vpop.f32.mrf.mxu0
  %2263 = vdwg.mxu0
  %v2264 = vmax.f32 %v2010, -1.0
  %v2265 = vmax.f32 %v2013, -1.0
  %v2266 = vmax.f32 %v2018, -1.0
  %v2267 = vmax.f32 %v2021, -1.0
  %v2268 = vmax.f32 %v2026, -1.0
  %v2269 = vmax.f32 %v2029, -1.0
  %v2270 = vmax.f32 %v2034, -1.0
  %v2271 = vmax.f32 %v2037, -1.0
  %v2272 = vmax.f32 %v2042, -1.0
  %v2273 = vmax.f32 %v2045, -1.0
  %v2274 = vmax.f32 %v2050, -1.0
  %v2275 = vmax.f32 %v2053, -1.0
  %v2276 = vmax.f32 %v2058, -1.0
  %v2277 = vmax.f32 %v2061, -1.0
  %v2278 = vmax.f32 %v2066, -1.0
  %v2279 = vmax.f32 %v2069, -1.0
  %v2280 = vmax.f32 %v2074, -1.0
  %v2281 = vmax.f32 %v2077, -1.0
  %v2282 = vmax.f32 %v2082, -1.0
  %v2283 = vmax.f32 %v2085, -1.0
  %v2284 = vmax.f32 %v2090, -1.0
  %v2285 = vmax.f32 %v2093, -1.0
  %v2286 = vmax.f32 %v2098, -1.0
  %v2287 = vmax.f32 %v2101, -1.0
  %v2288 = vmax.f32 %v2106, -1.0
  %v2289 = vmax.f32 %v2109, -1.0
  %v2290 = vmax.f32 %v2114, -1.0
  %v2291 = vmax.f32 %v2117, -1.0
  %v2292 = vmax.f32 %v2122, -1.0
  %v2293 = vmax.f32 %v2125, -1.0
  %v2294 = vmax.f32 %v2130, -1.0
  %v2295 = vmax.f32 %v2133, -1.0
  %v2296 = vmax.f32 %v2138, -1.0
  %v2297 = vmax.f32 %v2141, -1.0
  %v2298 = vmax.f32 %v2146, -1.0
  %v2299 = vmax.f32 %v2149, -1.0
  %v2300 = vmax.f32 %v2154, -1.0
  %v2301 = vmax.f32 %v2157, -1.0
  %v2302 = vmax.f32 %v2162, -1.0
  %v2303 = vmax.f32 %v2165, -1.0
  %v2304 = vmax.f32 %v2170, -1.0
  %v2305 = vmax.f32 %v2173, -1.0
  %v2306 = vmax.f32 %v2178, -1.0
  %v2307 = vmax.f32 %v2181, -1.0
  %v2308 = vmax.f32 %v2186, -1.0
  %v2309 = vmax.f32 %v2189, -1.0
  %v2310 = vmax.f32 %v2194, -1.0
  %v2311 = vmax.f32 %v2197, -1.0
  %v2312 = vmax.f32 %v2202, -1.0
  %v2313 = vmax.f32 %v2205, -1.0
  %v2314 = vmax.f32 %v2210, -1.0
  %v2315 = vmax.f32 %v2213, -1.0
  %v2316 = vmax.f32 %v2218, -1.0
  %v2317 = vmax.f32 %v2221, -1.0
  %v2318 = vmax.f32 %v2226, -1.0
  %v2319 = vmax.f32 %v2229, -1.0
  %v2320 = vmax.f32 %v2234, -1.0
  %v2321 = vmax.f32 %v2237, -1.0
  %v2322 = vmax.f32 %v2242, -1.0
  %v2323 = vmax.f32 %v2245, -1.0
  %v2324 = vmax.f32 %v2250, -1.0
  %v2325 = vmax.f32 %v2253, -1.0
  %v2326 = vmax.f32 %v2258, -1.0
  %v2327 = vmax.f32 %v2261, -1.0
  %v2328 = vmin.f32 %v2264, 1.0
  %v2329 = vmin.f32 %v2265, 1.0
  %v2330 = vmin.f32 %v2266, 1.0
  %v2331 = vmin.f32 %v2267, 1.0
  %v2332 = vmin.f32 %v2268, 1.0
  %v2333 = vmin.f32 %v2269, 1.0
  %v2334 = vmin.f32 %v2270, 1.0
  %v2335 = vmin.f32 %v2271, 1.0
  %v2336 = vmin.f32 %v2272, 1.0
  %v2337 = vmin.f32 %v2273, 1.0
  %v2338 = vmin.f32 %v2274, 1.0
  %v2339 = vmin.f32 %v2275, 1.0
  %v2340 = vmin.f32 %v2276, 1.0
  %v2341 = vmin.f32 %v2277, 1.0
  %v2342 = vmin.f32 %v2278, 1.0
  %v2343 = vmin.f32 %v2279, 1.0
  %v2344 = vmin.f32 %v2280, 1.0
  %v2345 = vmin.f32 %v2281, 1.0
  %v2346 = vmin.f32 %v2282, 1.0
  %v2347 = vmin.f32 %v2283, 1.0
  %v2348 = vmin.f32 %v2284, 1.0
  %v2349 = vmin.f32 %v2285, 1.0
  %v2350 = vmin.f32 %v2286, 1.0
  %v2351 = vmin.f32 %v2287, 1.0
  %v2352 = vmin.f32 %v2288, 1.0
  %v2353 = vmin.f32 %v2289, 1.0
  %v2354 = vmin.f32 %v2290, 1.0
  %v2355 = vmin.f32 %v2291, 1.0
  %v2356 = vmin.f32 %v2292, 1.0
  %v2357 = vmin.f32 %v2293, 1.0
  %v2358 = vmin.f32 %v2294, 1.0
  %v2359 = vmin.f32 %v2295, 1.0
  %v2360 = vmin.f32 %v2296, 1.0
  %v2361 = vmin.f32 %v2297, 1.0
  %v2362 = vmin.f32 %v2298, 1.0
  %v2363 = vmin.f32 %v2299, 1.0
  %v2364 = vmin.f32 %v2300, 1.0
  %v2365 = vmin.f32 %v2301, 1.0
  %v2366 = vmin.f32 %v2302, 1.0
  %v2367 = vmin.f32 %v2303, 1.0
  %v2368 = vmin.f32 %v2304, 1.0
  %v2369 = vmin.f32 %v2305, 1.0
  %v2370 = vmin.f32 %v2306, 1.0
  %v2371 = vmin.f32 %v2307, 1.0
  %v2372 = vmin.f32 %v2308, 1.0
  %v2373 = vmin.f32 %v2309, 1.0
  %v2374 = vmin.f32 %v2310, 1.0
  %v2375 = vmin.f32 %v2311, 1.0
  %v2376 = vmin.f32 %v2312, 1.0
  %v2377 = vmin.f32 %v2313, 1.0
  %v2378 = vmin.f32 %v2314, 1.0
  %v2379 = vmin.f32 %v2315, 1.0
  %v2380 = vmin.f32 %v2316, 1.0
  %v2381 = vmin.f32 %v2317, 1.0
  %v2382 = vmin.f32 %v2318, 1.0
  %v2383 = vmin.f32 %v2319, 1.0
  %v2384 = vmin.f32 %v2320, 1.0
  %v2385 = vmin.f32 %v2321, 1.0
  %v2386 = vmin.f32 %v2322, 1.0
  %v2387 = vmin.f32 %v2323, 1.0
  %v2388 = vmin.f32 %v2324, 1.0
  %v2389 = vmin.f32 %v2325, 1.0
  %v2390 = vmin.f32 %v2326, 1.0
  %v2391 = vmin.f32 %v2327, 1.0
  %v2392 = vpack.c.bf16 %v2329, %v2328
  %v2393 = vpack.c.bf16 %v2331, %v2330
  %v2394 = vpack.c.bf16 %v2333, %v2332
  %v2395 = vpack.c.bf16 %v2335, %v2334
  %v2396 = vpack.c.bf16 %v2337, %v2336
  %v2397 = vpack.c.bf16 %v2339, %v2338
  %v2398 = vpack.c.bf16 %v2341, %v2340
  %v2399 = vpack.c.bf16 %v2343, %v2342
  %v2400 = vpack.c.bf16 %v2345, %v2344
  %v2401 = vpack.c.bf16 %v2347, %v2346
  %v2402 = vpack.c.bf16 %v2349, %v2348
  %v2403 = vpack.c.bf16 %v2351, %v2350
  %v2404 = vpack.c.bf16 %v2353, %v2352
  %v2405 = vpack.c.bf16 %v2355, %v2354
  %v2406 = vpack.c.bf16 %v2357, %v2356
  %v2407 = vpack.c.bf16 %v2359, %v2358
  %v2408 = vpack.c.bf16 %v2361, %v2360
  %v2409 = vpack.c.bf16 %v2363, %v2362
  %v2410 = vpack.c.bf16 %v2365, %v2364
  %v2411 = vpack.c.bf16 %v2367, %v2366
  %v2412 = vpack.c.bf16 %v2369, %v2368
  %v2413 = vpack.c.bf16 %v2371, %v2370
  %v2414 = vpack.c.bf16 %v2373, %v2372
  %v2415 = vpack.c.bf16 %v2375, %v2374
  %v2416 = vpack.c.bf16 %v2377, %v2376
  %v2417 = vpack.c.bf16 %v2379, %v2378
  %v2418 = vpack.c.bf16 %v2381, %v2380
  %v2419 = vpack.c.bf16 %v2383, %v2382
  %v2420 = vpack.c.bf16 %v2385, %v2384
  %v2421 = vpack.c.bf16 %v2387, %v2386
  %v2422 = vpack.c.bf16 %v2389, %v2388
  %v2423 = vpack.c.bf16 %v2391, %v2390
  %v2456 = vunpack.c.l.b16 %v2392
  %v2457 = vunpack.c.h.b16 %v2392
  %v2458 = vunpack.c.l.b16 %v2393
  %v2459 = vunpack.c.h.b16 %v2393
  %v2460 = vunpack.c.l.b16 %v2394
  %v2461 = vunpack.c.h.b16 %v2394
  %v2462 = vunpack.c.l.b16 %v2395
  %v2463 = vunpack.c.h.b16 %v2395
  %v2464 = vunpack.c.l.b16 %v2396
  %v2465 = vunpack.c.h.b16 %v2396
  %v2466 = vunpack.c.l.b16 %v2397
  %v2467 = vunpack.c.h.b16 %v2397
  %v2468 = vunpack.c.l.b16 %v2398
  %v2469 = vunpack.c.h.b16 %v2398
  %v2470 = vunpack.c.l.b16 %v2399
  %v2471 = vunpack.c.h.b16 %v2399
  %v2472 = vunpack.c.l.b16 %v2400
  %v2473 = vunpack.c.h.b16 %v2400
  %v2474 = vunpack.c.l.b16 %v2401
  %v2475 = vunpack.c.h.b16 %v2401
  %v2476 = vunpack.c.l.b16 %v2402
  %v2477 = vunpack.c.h.b16 %v2402
  %v2478 = vunpack.c.l.b16 %v2403
  %v2479 = vunpack.c.h.b16 %v2403
  %v2480 = vunpack.c.l.b16 %v2404
  %v2481 = vunpack.c.h.b16 %v2404
  %v2482 = vunpack.c.l.b16 %v2405
  %v2483 = vunpack.c.h.b16 %v2405
  %v2484 = vunpack.c.l.b16 %v2406
  %v2485 = vunpack.c.h.b16 %v2406
  %v2486 = vunpack.c.l.b16 %v2407
  %v2487 = vunpack.c.h.b16 %v2407
  %v2488 = vunpack.c.l.b16 %v2408
  %v2489 = vunpack.c.h.b16 %v2408
  %v2490 = vunpack.c.l.b16 %v2409
  %v2491 = vunpack.c.h.b16 %v2409
  %v2492 = vunpack.c.l.b16 %v2410
  %v2493 = vunpack.c.h.b16 %v2410
  %v2494 = vunpack.c.l.b16 %v2411
  %v2495 = vunpack.c.h.b16 %v2411
  %v2496 = vunpack.c.l.b16 %v2412
  %v2497 = vunpack.c.h.b16 %v2412
  %v2498 = vunpack.c.l.b16 %v2413
  %v2499 = vunpack.c.h.b16 %v2413
  %v2500 = vunpack.c.l.b16 %v2414
  %v2501 = vunpack.c.h.b16 %v2414
  %v2502 = vunpack.c.l.b16 %v2415
  %v2503 = vunpack.c.h.b16 %v2415
  %v2504 = vunpack.c.l.b16 %v2416
  %v2505 = vunpack.c.h.b16 %v2416
  %v2506 = vunpack.c.l.b16 %v2417
  %v2507 = vunpack.c.h.b16 %v2417
  %v2508 = vunpack.c.l.b16 %v2418
  %v2509 = vunpack.c.h.b16 %v2418
  %v2510 = vunpack.c.l.b16 %v2419
  %v2511 = vunpack.c.h.b16 %v2419
  %v2512 = vunpack.c.l.b16 %v2420
  %v2513 = vunpack.c.h.b16 %v2420
  %v2514 = vunpack.c.l.b16 %v2421
  %v2515 = vunpack.c.h.b16 %v2421
  %v2516 = vunpack.c.l.b16 %v2422
  %v2517 = vunpack.c.h.b16 %v2422
  %v2518 = vunpack.c.l.b16 %v2423
  %v2519 = vunpack.c.h.b16 %v2423
  %v2520 = vpack.c.b16 %v2456, %v2456
  %v2521 = vpack.c.b16 %v2457, %v2457
  %v2522 = vpack.c.b16 %v2458, %v2458
  %v2523 = vpack.c.b16 %v2459, %v2459
  %v2524 = vpack.c.b16 %v2460, %v2460
  %v2525 = vpack.c.b16 %v2461, %v2461
  %v2526 = vpack.c.b16 %v2462, %v2462
  %v2527 = vpack.c.b16 %v2463, %v2463
  %v2528 = vpack.c.b16 %v2464, %v2464
  %v2529 = vpack.c.b16 %v2465, %v2465
  %v2530 = vpack.c.b16 %v2466, %v2466
  %v2531 = vpack.c.b16 %v2467, %v2467
  %v2532 = vpack.c.b16 %v2468, %v2468
  %v2533 = vpack.c.b16 %v2469, %v2469
  %v2534 = vpack.c.b16 %v2470, %v2470
  %v2535 = vpack.c.b16 %v2471, %v2471
  %v2536 = vpack.c.b16 %v2472, %v2472
  %v2537 = vpack.c.b16 %v2473, %v2473
  %v2538 = vpack.c.b16 %v2474, %v2474
  %v2539 = vpack.c.b16 %v2475, %v2475
  %v2540 = vpack.c.b16 %v2476, %v2476
  %v2541 = vpack.c.b16 %v2477, %v2477
  %v2542 = vpack.c.b16 %v2478, %v2478
  %v2543 = vpack.c.b16 %v2479, %v2479
  %v2544 = vpack.c.b16 %v2480, %v2480
  %v2545 = vpack.c.b16 %v2481, %v2481
  %v2546 = vpack.c.b16 %v2482, %v2482
  %v2547 = vpack.c.b16 %v2483, %v2483
  %v2548 = vpack.c.b16 %v2484, %v2484
  %v2549 = vpack.c.b16 %v2485, %v2485
  %v2550 = vpack.c.b16 %v2486, %v2486
  %v2551 = vpack.c.b16 %v2487, %v2487
  %v2552 = vpack.c.b16 %v2488, %v2488
  %v2553 = vpack.c.b16 %v2489, %v2489
  %v2554 = vpack.c.b16 %v2490, %v2490
  %v2555 = vpack.c.b16 %v2491, %v2491
  %v2556 = vpack.c.b16 %v2492, %v2492
  %v2557 = vpack.c.b16 %v2493, %v2493
  %v2558 = vpack.c.b16 %v2494, %v2494
  %v2559 = vpack.c.b16 %v2495, %v2495
  %v2560 = vpack.c.b16 %v2496, %v2496
  %v2561 = vpack.c.b16 %v2497, %v2497
  %v2562 = vpack.c.b16 %v2498, %v2498
  %v2563 = vpack.c.b16 %v2499, %v2499
  %v2564 = vpack.c.b16 %v2500, %v2500
  %v2565 = vpack.c.b16 %v2501, %v2501
  %v2566 = vpack.c.b16 %v2502, %v2502
  %v2567 = vpack.c.b16 %v2503, %v2503
  %v2568 = vpack.c.b16 %v2504, %v2504
  %v2569 = vpack.c.b16 %v2505, %v2505
  %v2570 = vpack.c.b16 %v2506, %v2506
  %v2571 = vpack.c.b16 %v2507, %v2507
  %v2572 = vpack.c.b16 %v2508, %v2508
  %v2573 = vpack.c.b16 %v2509, %v2509
  %v2574 = vpack.c.b16 %v2510, %v2510
  %v2575 = vpack.c.b16 %v2511, %v2511
  %v2576 = vpack.c.b16 %v2512, %v2512
  %v2577 = vpack.c.b16 %v2513, %v2513
  %v2578 = vpack.c.b16 %v2514, %v2514
  %v2579 = vpack.c.b16 %v2515, %v2515
  %v2580 = vpack.c.b16 %v2516, %v2516
  %v2581 = vpack.c.b16 %v2517, %v2517
  %v2582 = vpack.c.b16 %v2518, %v2518
  %v2583 = vpack.c.b16 %v2519, %v2519
  %2648 = vst [vmem:[%s3] sm:$0xf] %v2520
  %2649 = vst [vmem:[%s3 + $0x4] sm:$0xf] %v2521
  %2650 = vst [vmem:[%s3 + $0x8] sm:$0xf] %v2522
  %2651 = vst [vmem:[%s3 + $0xc] sm:$0xf] %v2523
  %2652 = vst [vmem:[%s3 + $0x10] sm:$0xf] %v2524
  %2653 = vst [vmem:[%s3 + $0x14] sm:$0xf] %v2525
  %2654 = vst [vmem:[%s3 + $0x18] sm:$0xf] %v2526
  %2655 = vst [vmem:[%s3 + $0x1c] sm:$0xf] %v2527
  %2656 = vst [vmem:[%s3 + $0x20] sm:$0xf] %v2528
  %2657 = vst [vmem:[%s3 + $0x24] sm:$0xf] %v2529
  %2658 = vst [vmem:[%s3 + $0x28] sm:$0xf] %v2530
  %2659 = vst [vmem:[%s3 + $0x2c] sm:$0xf] %v2531
  %2660 = vst [vmem:[%s3 + $0x30] sm:$0xf] %v2532
  %2661 = vst [vmem:[%s3 + $0x34] sm:$0xf] %v2533
  %2662 = vst [vmem:[%s3 + $0x38] sm:$0xf] %v2534
  %2663 = vst [vmem:[%s3 + $0x3c] sm:$0xf] %v2535
  %2664 = vst [vmem:[%s3 + $0x40] sm:$0xf] %v2536
  %2665 = vst [vmem:[%s3 + $0x44] sm:$0xf] %v2537
  %2666 = vst [vmem:[%s3 + $0x48] sm:$0xf] %v2538
  %2667 = vst [vmem:[%s3 + $0x4c] sm:$0xf] %v2539
  %2668 = vst [vmem:[%s3 + $0x50] sm:$0xf] %v2540
  %2669 = vst [vmem:[%s3 + $0x54] sm:$0xf] %v2541
  %2670 = vst [vmem:[%s3 + $0x58] sm:$0xf] %v2542
  %2671 = vst [vmem:[%s3 + $0x5c] sm:$0xf] %v2543
  %2672 = vst [vmem:[%s3 + $0x60] sm:$0xf] %v2544
  %2673 = vst [vmem:[%s3 + $0x64] sm:$0xf] %v2545
  %2674 = vst [vmem:[%s3 + $0x68] sm:$0xf] %v2546
  %2675 = vst [vmem:[%s3 + $0x6c] sm:$0xf] %v2547
  %2676 = vst [vmem:[%s3 + $0x70] sm:$0xf] %v2548
  %2677 = vst [vmem:[%s3 + $0x74] sm:$0xf] %v2549
  %2678 = vst [vmem:[%s3 + $0x78] sm:$0xf] %v2550
  %2679 = vst [vmem:[%s3 + $0x7c] sm:$0xf] %v2551
  %2680 = vst [vmem:[%s3 + $0x80] sm:$0xf] %v2552
  %2681 = vst [vmem:[%s3 + $0x84] sm:$0xf] %v2553
  %2682 = vst [vmem:[%s3 + $0x88] sm:$0xf] %v2554
  %2683 = vst [vmem:[%s3 + $0x8c] sm:$0xf] %v2555
  %2684 = vst [vmem:[%s3 + $0x90] sm:$0xf] %v2556
  %2685 = vst [vmem:[%s3 + $0x94] sm:$0xf] %v2557
  %2686 = vst [vmem:[%s3 + $0x98] sm:$0xf] %v2558
  %2687 = vst [vmem:[%s3 + $0x9c] sm:$0xf] %v2559
  %2688 = vst [vmem:[%s3 + $0xa0] sm:$0xf] %v2560
  %2689 = vst [vmem:[%s3 + $0xa4] sm:$0xf] %v2561
  %2690 = vst [vmem:[%s3 + $0xa8] sm:$0xf] %v2562
  %2691 = vst [vmem:[%s3 + $0xac] sm:$0xf] %v2563
  %2692 = vst [vmem:[%s3 + $0xb0] sm:$0xf] %v2564
  %2693 = vst [vmem:[%s3 + $0xb4] sm:$0xf] %v2565
  %2694 = vst [vmem:[%s3 + $0xb8] sm:$0xf] %v2566
  %2695 = vst [vmem:[%s3 + $0xbc] sm:$0xf] %v2567
  %2696 = vst [vmem:[%s3 + $0xc0] sm:$0xf] %v2568
  %2697 = vst [vmem:[%s3 + $0xc4] sm:$0xf] %v2569
  %2698 = vst [vmem:[%s3 + $0xc8] sm:$0xf] %v2570
  %2699 = vst [vmem:[%s3 + $0xcc] sm:$0xf] %v2571
  %2700 = vst [vmem:[%s3 + $0xd0] sm:$0xf] %v2572
  %2701 = vst [vmem:[%s3 + $0xd4] sm:$0xf] %v2573
  %2702 = vst [vmem:[%s3 + $0xd8] sm:$0xf] %v2574
  %2703 = vst [vmem:[%s3 + $0xdc] sm:$0xf] %v2575
  %2704 = vst [vmem:[%s3 + $0xe0] sm:$0xf] %v2576
  %2705 = vst [vmem:[%s3 + $0xe4] sm:$0xf] %v2577
  %2706 = vst [vmem:[%s3 + $0xe8] sm:$0xf] %v2578
  %2707 = vst [vmem:[%s3 + $0xec] sm:$0xf] %v2579
  %2708 = vst [vmem:[%s3 + $0xf0] sm:$0xf] %v2580
  %2709 = vst [vmem:[%s3 + $0xf4] sm:$0xf] %v2581
  %2710 = vst [vmem:[%s3 + $0xf8] sm:$0xf] %v2582
  %2711 = vst [vmem:[%s3 + $0xfc] sm:$0xf] %v2583
  // Predicated region
  $region14: #{forward.14} parent=0 // pred_check
    _
  $region15: #{forward.14} parent=0 // pred_check_branch
    %2713 = sbr.rel (0) target = $region17
  $region16: #{forward.14} parent=0 // pred_region
    _
  $region17: #{forward.14} parent=0 // pred_fallthru
    _
  // Predicated region
  $region18: #{forward.14} parent=0 // pred_check
    _
  $region19: #{forward.14} parent=0 // pred_check_branch
    %2715 = sbr.rel (0) target = $region21
  $region20: #{forward.14} parent=0 // pred_region
    _
  $region21: #{forward.14} parent=0 // pred_fallthru
    _

// kernel: forward.15
$region0: #{forward.15}
  #allocation0 [shape = 'u32[]', space=smem, size = 0x4, offset = 0x4, fixed_abs, tag = 'smem constant byte address 0x4 - core index']
  #allocation1 [shape = 'u32[144,128]{1,0:T(1,128)}', space=vmem, size = 0x12000, scoped, tag = 'internal scratch']
  %s0 = inlined_call_operand.vmem [shape: bf16[128,144], index: 0, kind: input, shape index: {}]
  %s1 = inlined_call_operand.vmem [shape: bf16[144,128], index: 1, kind: input, shape index: {}]
  %s2 = inlined_call_operand.vmem [shape: f32[8,128], index: 2, kind: input, shape index: {}]
  %s3 = inlined_call_operand.vmem [shape: bf16[128,128], index: 3, kind: output, shape index: {}]
  %s4 = sld [smem:[#allocation0]]
  $region22: #{forward.15} parent=0
    _
  %s6 = ssub.s32 1, %s4
  %s7 = scalar_select 0, %s6, %s4
  // Predicated region
  $region2: #{forward.15} parent=0 // pred_check
    _
  $region3: #{forward.15} parent=0 // pred_check_branch
    %9 = sbr.rel (0) target = $region5
  $region4: #{forward.15} parent=0 // pred_region
    _
  $region5: #{forward.15} parent=0 // pred_fallthru
    _
  // Predicated region
  $region6: #{forward.15} parent=0 // pred_check
    _
  $region7: #{forward.15} parent=0 // pred_check_branch
    %11 = sbr.rel (0) target = $region9
  $region8: #{forward.15} parent=0 // pred_region
    _
  $region9: #{forward.15} parent=0 // pred_fallthru
    _
  // Predicated region
  $region10: #{forward.15} parent=0 // pred_check
    _
  $region11: #{forward.15} parent=0 // pred_check_branch
    %13 = sbr.rel (0) target = $region13
  $region12: #{forward.15} parent=0 // pred_region
    _
  $region13: #{forward.15} parent=0 // pred_fallthru
    _
  %v15 = vld [vmem:[%s0] sm:$0xff]
  %v16 = vld [vmem:[%s0 + $0x8] sm:$0xff]
  %v17 = vld [vmem:[%s0 + $0x10] sm:$0xff]
  %v18 = vld [vmem:[%s0 + $0x18] sm:$0xff]
  %v19 = vld [vmem:[%s0 + $0x20] sm:$0xff]
  %v20 = vld [vmem:[%s0 + $0x28] sm:$0xff]
  %v21 = vld [vmem:[%s0 + $0x30] sm:$0xff]
  %v22 = vld [vmem:[%s0 + $0x38] sm:$0xff]
  %v23 = vld [vmem:[%s0 + $0x40] sm:$0xff]
  %v24 = vld [vmem:[%s0 + $0x48] sm:$0xff]
  %v25 = vld [vmem:[%s0 + $0x50] sm:$0xff]
  %v26 = vld [vmem:[%s0 + $0x58] sm:$0xff]
  %v27 = vld [vmem:[%s0 + $0x60] sm:$0xff]
  %v28 = vld [vmem:[%s0 + $0x68] sm:$0xff]
  %v29 = vld [vmem:[%s0 + $0x70] sm:$0xff]
  %v30 = vld [vmem:[%s0 + $0x78] sm:$0xff]
  %v31 = vld [vmem:[%s1] sm:$0xf]
  %v32 = vld [vmem:[%s1 + $0x4] sm:$0xf]
  %v33 = vld [vmem:[%s1 + $0x8] sm:$0xf]
  %v34 = vld [vmem:[%s1 + $0xc] sm:$0xf]
  %v35 = vld [vmem:[%s1 + $0x10] sm:$0xf]
  %v36 = vld [vmem:[%s1 + $0x14] sm:$0xf]
  %v37 = vld [vmem:[%s1 + $0x18] sm:$0xf]
  %v38 = vld [vmem:[%s1 + $0x1c] sm:$0xf]
  %v39 = vld [vmem:[%s1 + $0x20] sm:$0xf]
  %v40 = vld [vmem:[%s1 + $0x24] sm:$0xf]
  %v41 = vld [vmem:[%s1 + $0x28] sm:$0xf]
  %v42 = vld [vmem:[%s1 + $0x2c] sm:$0xf]
  %v43 = vld [vmem:[%s1 + $0x30] sm:$0xf]
  %v44 = vld [vmem:[%s1 + $0x34] sm:$0xf]
  %v45 = vld [vmem:[%s1 + $0x38] sm:$0xf]
  %v46 = vld [vmem:[%s1 + $0x3c] sm:$0xf]
  %v47 = vld [vmem:[%s1 + $0x40] sm:$0xf]
  %v48 = vld [vmem:[%s1 + $0x44] sm:$0xf]
  %v49 = vld [vmem:[%s2] sm:$0x1]
  %v50 = vlaneseq
  %v51 = vshrl.u32 %v50, 7
  %v52 = vsub.s32 0, %v51
  %v53 = vrot.slane %v49, %v52
  %v70 = vunpack.c.l.b16 %v15
  %v71 = vunpack.c.h.b16 %v15
  %v72 = vunpack.c.l.b16 %v16
  %v73 = vunpack.c.h.b16 %v16
  %v74 = vunpack.c.l.b16 %v17
  %v75 = vunpack.c.h.b16 %v17
  %v76 = vunpack.c.l.b16 %v18
  %v77 = vunpack.c.h.b16 %v18
  %v78 = vunpack.c.l.b16 %v19
  %v79 = vunpack.c.h.b16 %v19
  %v80 = vunpack.c.l.b16 %v20
  %v81 = vunpack.c.h.b16 %v20
  %v82 = vunpack.c.l.b16 %v21
  %v83 = vunpack.c.h.b16 %v21
  %v84 = vunpack.c.l.b16 %v22
  %v85 = vunpack.c.h.b16 %v22
  %v86 = vunpack.c.l.b16 %v23
  %v87 = vunpack.c.h.b16 %v23
  %v88 = vunpack.c.l.b16 %v24
  %v89 = vunpack.c.h.b16 %v24
  %v90 = vunpack.c.l.b16 %v25
  %v91 = vunpack.c.h.b16 %v25
  %v92 = vunpack.c.l.b16 %v26
  %v93 = vunpack.c.h.b16 %v26
  %v94 = vunpack.c.l.b16 %v27
  %v95 = vunpack.c.h.b16 %v27
  %v96 = vunpack.c.l.b16 %v28
  %v97 = vunpack.c.h.b16 %v28
  %v98 = vunpack.c.l.b16 %v29
  %v99 = vunpack.c.h.b16 %v29
  %v100 = vunpack.c.l.b16 %v30
  %v101 = vunpack.c.h.b16 %v30
  %v102 = vpack.c.b16 %v72, %v70
  %v103 = vpack.c.b16 %v73, %v71
  %v104 = vpack.c.b16 %v76, %v74
  %v105 = vpack.c.b16 %v77, %v75
  %v106 = vpack.c.b16 %v80, %v78
  %v107 = vpack.c.b16 %v81, %v79
  %v108 = vpack.c.b16 %v84, %v82
  %v109 = vpack.c.b16 %v85, %v83
  %v110 = vpack.c.b16 %v88, %v86
  %v111 = vpack.c.b16 %v89, %v87
  %v112 = vpack.c.b16 %v92, %v90
  %v113 = vpack.c.b16 %v93, %v91
  %v114 = vpack.c.b16 %v96, %v94
  %v115 = vpack.c.b16 %v97, %v95
  %v116 = vpack.c.b16 %v100, %v98
  %v117 = vpack.c.b16 %v101, %v99
  %v144 = vunpack.c.l.b16 %v31
  %v145 = vunpack.c.l.b16 %v32
  %v146 = vunpack.c.l.b16 %v33
  %v147 = vunpack.c.l.b16 %v34
  %v148 = vunpack.c.l.b16 %v35
  %v149 = vunpack.c.l.b16 %v36
  %v150 = vunpack.c.l.b16 %v37
  %v151 = vunpack.c.l.b16 %v38
  %v152 = vunpack.c.l.b16 %v39
  %v153 = vunpack.c.l.b16 %v40
  %v154 = vunpack.c.l.b16 %v41
  %v155 = vunpack.c.l.b16 %v42
  %v156 = vunpack.c.l.b16 %v43
  %v157 = vunpack.c.l.b16 %v44
  %v158 = vunpack.c.l.b16 %v45
  %v159 = vunpack.c.l.b16 %v46
  %v160 = vunpack.c.l.b16 %v47
  %v161 = vunpack.c.l.b16 %v48
  %v162 = vpack.c.b16 %v145, %v144
  %v163 = vpack.c.b16 %v147, %v146
  %v164 = vpack.c.b16 %v149, %v148
  %v165 = vpack.c.b16 %v151, %v150
  %v166 = vpack.c.b16 %v153, %v152
  %v167 = vpack.c.b16 %v155, %v154
  %v168 = vpack.c.b16 %v157, %v156
  %v169 = vpack.c.b16 %v159, %v158
  %v170 = vpack.c.b16 %v161, %v160
  %vm180 = vcmask 130048
  %v182 = vsel %vm180, %v103, 0
  %v185 = vsel %vm180, %v105, 0
  %v188 = vsel %vm180, %v107, 0
  %v191 = vsel %vm180, %v109, 0
  %v194 = vsel %vm180, %v111, 0
  %v197 = vsel %vm180, %v113, 0
  %v200 = vsel %vm180, %v115, 0
  %v203 = vsel %vm180, %v117, 0
  %205 = vmatprep.subr.bf16.mxu0 0
  %206 = vmatpush1.bf16.msra.mxu0 %v169
  %207 = vmatprep.subr.bf16.mxu0 0
  %208 = vmatpush1.bf16.msra.mxu0 %v168
  %209 = vmatprep.subr.bf16.mxu0 0
  %210 = vmatpush1.bf16.msra.mxu0 %v167
  %211 = vmatprep.subr.bf16.mxu0 0
  %212 = vmatpush1.bf16.msra.mxu0 %v166
  %213 = vmatprep.subr.bf16.mxu0 0
  %214 = vmatpush1.bf16.msra.mxu0 %v165
  %215 = vmatprep.subr.bf16.mxu0 0
  %216 = vmatpush1.bf16.msra.mxu0 %v164
  %217 = vmatprep.subr.bf16.mxu0 0
  %218 = vmatpush1.bf16.msra.mxu0 %v163
  %219 = vmatprep.subr.bf16.mxu0 0
  %220 = vmatpush1.bf16.msra.mxu0 %v162
  %221 = vmatprep.subr.bf16.mxu0 0
  %222 = vmatpush2.bf16.msra.mxu0 0
  %223 = vmatprep.subr.bf16.mxu0 0
  %224 = vmatpush2.bf16.msra.mxu0 0
  %225 = vmatprep.subr.bf16.mxu0 0
  %226 = vmatpush2.bf16.msra.mxu0 0
  %227 = vmatprep.subr.bf16.mxu0 0
  %228 = vmatpush2.bf16.msra.mxu0 0
  %229 = vmatprep.subr.bf16.mxu0 0
  %230 = vmatpush2.bf16.msra.mxu0 0
  %231 = vmatprep.subr.bf16.mxu0 0
  %232 = vmatpush2.bf16.msra.mxu0 0
  %233 = vmatprep.subr.bf16.mxu0 0
  %234 = vmatpush2.bf16.msra.mxu0 0
  %235 = vmatprep.subr.bf16.mxu0 0
  %236 = vmatpush2.bf16.msra.mxu0 %v170
  %237 = vmatprep.mubr.bf16.mxu0 %v182
  %238 = vmatmul.mubr.bf16.gmra.mxu0 %v102
  %v239 = vpop.f32.mrf.mxu0
  %v240 = vadd.f32 %v53, %v239
  %v241 = vpop.f32.mrf.mxu0
  %v242 = vpop.f32.mrf.mxu0
  %v243 = vadd.f32 %v53, %v242
  %v244 = vpop.f32.mrf.mxu0
  %245 = vmatprep.mubr.bf16.mxu0 %v185
  %246 = vmatmul.mubr.bf16.gmra.mxu0 %v104
  %v247 = vpop.f32.mrf.mxu0
  %v248 = vadd.f32 %v53, %v247
  %v249 = vpop.f32.mrf.mxu0
  %v250 = vpop.f32.mrf.mxu0
  %v251 = vadd.f32 %v53, %v250
  %v252 = vpop.f32.mrf.mxu0
  %253 = vmatprep.mubr.bf16.mxu0 %v188
  %254 = vmatmul.mubr.bf16.gmra.mxu0 %v106
  %v255 = vpop.f32.mrf.mxu0
  %v256 = vadd.f32 %v53, %v255
  %v257 = vpop.f32.mrf.mxu0
  %v258 = vpop.f32.mrf.mxu0
  %v259 = vadd.f32 %v53, %v258
  %v260 = vpop.f32.mrf.mxu0
  %261 = vmatprep.mubr.bf16.mxu0 %v191
  %262 = vmatmul.mubr.bf16.gmra.mxu0 %v108
  %v263 = vpop.f32.mrf.mxu0
  %v264 = vadd.f32 %v53, %v263
  %v265 = vpop.f32.mrf.mxu0
  %v266 = vpop.f32.mrf.mxu0
  %v267 = vadd.f32 %v53, %v266
  %v268 = vpop.f32.mrf.mxu0
  %269 = vmatprep.mubr.bf16.mxu0 %v194
  %270 = vmatmul.mubr.bf16.gmra.mxu0 %v110
  %v271 = vpop.f32.mrf.mxu0
  %v272 = vadd.f32 %v53, %v271
  %v273 = vpop.f32.mrf.mxu0
  %v274 = vpop.f32.mrf.mxu0
  %v275 = vadd.f32 %v53, %v274
  %v276 = vpop.f32.mrf.mxu0
  %277 = vmatprep.mubr.bf16.mxu0 %v197
  %278 = vmatmul.mubr.bf16.gmra.mxu0 %v112
  %v279 = vpop.f32.mrf.mxu0
  %v280 = vadd.f32 %v53, %v279
  %v281 = vpop.f32.mrf.mxu0
  %v282 = vpop.f32.mrf.mxu0
  %v283 = vadd.f32 %v53, %v282
  %v284 = vpop.f32.mrf.mxu0
  %285 = vmatprep.mubr.bf16.mxu0 %v200
  %286 = vmatmul.mubr.bf16.gmra.mxu0 %v114
  %v287 = vpop.f32.mrf.mxu0
  %v288 = vadd.f32 %v53, %v287
  %v289 = vpop.f32.mrf.mxu0
  %v290 = vpop.f32.mrf.mxu0
  %v291 = vadd.f32 %v53, %v290
  %v292 = vpop.f32.mrf.mxu0
  %293 = vmatprep.mubr.bf16.mxu0 %v203
  %294 = vmatmul.mubr.bf16.gmra.mxu0 %v116
  %v295 = vpop.f32.mrf.mxu0
  %v296 = vadd.f32 %v53, %v295
  %v297 = vpop.f32.mrf.mxu0
  %v298 = vpop.f32.mrf.mxu0
  %v299 = vadd.f32 %v53, %v298
  %v300 = vpop.f32.mrf.mxu0
  %301 = vdwg.mxu0
  %v302 = vmax.f32 %v240, -1.0
  %v303 = vmax.f32 %v243, -1.0
  %v304 = vmax.f32 %v248, -1.0
  %v305 = vmax.f32 %v251, -1.0
  %v306 = vmax.f32 %v256, -1.0
  %v307 = vmax.f32 %v259, -1.0
  %v308 = vmax.f32 %v264, -1.0
  %v309 = vmax.f32 %v267, -1.0
  %v310 = vmax.f32 %v272, -1.0
  %v311 = vmax.f32 %v275, -1.0
  %v312 = vmax.f32 %v280, -1.0
  %v313 = vmax.f32 %v283, -1.0
  %v314 = vmax.f32 %v288, -1.0
  %v315 = vmax.f32 %v291, -1.0
  %v316 = vmax.f32 %v296, -1.0
  %v317 = vmax.f32 %v299, -1.0
  %v318 = vmin.f32 %v302, 1.0
  %v319 = vmin.f32 %v303, 1.0
  %v320 = vmin.f32 %v304, 1.0
  %v321 = vmin.f32 %v305, 1.0
  %v322 = vmin.f32 %v306, 1.0
  %v323 = vmin.f32 %v307, 1.0
  %v324 = vmin.f32 %v308, 1.0
  %v325 = vmin.f32 %v309, 1.0
  %v326 = vmin.f32 %v310, 1.0
  %v327 = vmin.f32 %v311, 1.0
  %v328 = vmin.f32 %v312, 1.0
  %v329 = vmin.f32 %v313, 1.0
  %v330 = vmin.f32 %v314, 1.0
  %v331 = vmin.f32 %v315, 1.0
  %v332 = vmin.f32 %v316, 1.0
  %v333 = vmin.f32 %v317, 1.0
  %v334 = vpack.c.bf16 %v319, %v318
  %v335 = vpack.c.bf16 %v321, %v320
  %v336 = vpack.c.bf16 %v323, %v322
  %v337 = vpack.c.bf16 %v325, %v324
  %v338 = vpack.c.bf16 %v327, %v326
  %v339 = vpack.c.bf16 %v329, %v328
  %v340 = vpack.c.bf16 %v331, %v330
  %v341 = vpack.c.bf16 %v333, %v332
  %v350 = vunpack.c.l.b16 %v334
  %v351 = vunpack.c.h.b16 %v334
  %v352 = vunpack.c.l.b16 %v335
  %v353 = vunpack.c.h.b16 %v335
  %v354 = vunpack.c.l.b16 %v336
  %v355 = vunpack.c.h.b16 %v336
  %v356 = vunpack.c.l.b16 %v337
  %v357 = vunpack.c.h.b16 %v337
  %v358 = vunpack.c.l.b16 %v338
  %v359 = vunpack.c.h.b16 %v338
  %v360 = vunpack.c.l.b16 %v339
  %v361 = vunpack.c.h.b16 %v339
  %v362 = vunpack.c.l.b16 %v340
  %v363 = vunpack.c.h.b16 %v340
  %v364 = vunpack.c.l.b16 %v341
  %v365 = vunpack.c.h.b16 %v341
  %v366 = vpack.c.b16 %v350, %v350
  %v367 = vpack.c.b16 %v351, %v351
  %v368 = vpack.c.b16 %v352, %v352
  %v369 = vpack.c.b16 %v353, %v353
  %v370 = vpack.c.b16 %v354, %v354
  %v371 = vpack.c.b16 %v355, %v355
  %v372 = vpack.c.b16 %v356, %v356
  %v373 = vpack.c.b16 %v357, %v357
  %v374 = vpack.c.b16 %v358, %v358
  %v375 = vpack.c.b16 %v359, %v359
  %v376 = vpack.c.b16 %v360, %v360
  %v377 = vpack.c.b16 %v361, %v361
  %v378 = vpack.c.b16 %v362, %v362
  %v379 = vpack.c.b16 %v363, %v363
  %v380 = vpack.c.b16 %v364, %v364
  %v381 = vpack.c.b16 %v365, %v365
  %398 = vst [vmem:[%s3] sm:$0xf] %v366
  %399 = vst [vmem:[%s3 + $0x4] sm:$0xf] %v367
  %400 = vst [vmem:[%s3 + $0x8] sm:$0xf] %v368
  %401 = vst [vmem:[%s3 + $0xc] sm:$0xf] %v369
  %402 = vst [vmem:[%s3 + $0x10] sm:$0xf] %v370
  %403 = vst [vmem:[%s3 + $0x14] sm:$0xf] %v371
  %404 = vst [vmem:[%s3 + $0x18] sm:$0xf] %v372
  %405 = vst [vmem:[%s3 + $0x1c] sm:$0xf] %v373
  %406 = vst [vmem:[%s3 + $0x20] sm:$0xf] %v374
  %407 = vst [vmem:[%s3 + $0x24] sm:$0xf] %v375
  %408 = vst [vmem:[%s3 + $0x28] sm:$0xf] %v376
  %409 = vst [vmem:[%s3 + $0x2c] sm:$0xf] %v377
  %410 = vst [vmem:[%s3 + $0x30] sm:$0xf] %v378
  %411 = vst [vmem:[%s3 + $0x34] sm:$0xf] %v379
  %412 = vst [vmem:[%s3 + $0x38] sm:$0xf] %v380
  %413 = vst [vmem:[%s3 + $0x3c] sm:$0xf] %v381
  // Predicated region
  $region14: #{forward.15} parent=0 // pred_check
    _
  $region15: #{forward.15} parent=0 // pred_check_branch
    %415 = sbr.rel (0) target = $region17
  $region16: #{forward.15} parent=0 // pred_region
    _
  $region17: #{forward.15} parent=0 // pred_fallthru
    _
  // Predicated region
  $region18: #{forward.15} parent=0 // pred_check
    _
  $region19: #{forward.15} parent=0 // pred_check_branch
    %417 = sbr.rel (0) target = $region21
  $region20: #{forward.15} parent=0 // pred_region
    _
  $region21: #{forward.15} parent=0 // pred_fallthru
    _

// kernel: forward.16
$region0: #{forward.16}
  #allocation0 [shape = 'u32[]', space=smem, size = 0x4, offset = 0x4, fixed_abs, tag = 'smem constant byte address 0x4 - core index']
  #allocation1 [shape = 'u32[144,128]{1,0:T(1,128)}', space=vmem, size = 0x12000, scoped, tag = 'internal scratch']
  %s0 = inlined_call_operand.vmem [shape: bf16[32,288], index: 0, kind: input, shape index: {}]
  %s1 = inlined_call_operand.vmem [shape: bf16[288,128], index: 1, kind: input, shape index: {}]
  %s2 = inlined_call_operand.vmem [shape: f32[8,128], index: 2, kind: input, shape index: {}]
  %s3 = inlined_call_operand.vmem [shape: bf16[32,128], index: 3, kind: output, shape index: {}]
  %s4 = sld [smem:[#allocation0]]
  $region22: #{forward.16} parent=0
    _
  %s6 = ssub.s32 1, %s4
  %s7 = scalar_select 0, %s6, %s4
  // Predicated region
  $region2: #{forward.16} parent=0 // pred_check
    _
  $region3: #{forward.16} parent=0 // pred_check_branch
    %9 = sbr.rel (0) target = $region5
  $region4: #{forward.16} parent=0 // pred_region
    _
  $region5: #{forward.16} parent=0 // pred_fallthru
    _
  // Predicated region
  $region6: #{forward.16} parent=0 // pred_check
    _
  $region7: #{forward.16} parent=0 // pred_check_branch
    %11 = sbr.rel (0) target = $region9
  $region8: #{forward.16} parent=0 // pred_region
    _
  $region9: #{forward.16} parent=0 // pred_fallthru
    _
  // Predicated region
  $region10: #{forward.16} parent=0 // pred_check
    _
  $region11: #{forward.16} parent=0 // pred_check_branch
    %13 = sbr.rel (0) target = $region13
  $region12: #{forward.16} parent=0 // pred_region
    _
  $region13: #{forward.16} parent=0 // pred_fallthru
    _
  %v15 = vld [vmem:[%s0] sm:$0xff]
  %v16 = vld [vmem:[%s0 + $0x8] sm:$0xf]
  %v17 = vld [vmem:[%s0 + $0xc] sm:$0xff]
  %v18 = vld [vmem:[%s0 + $0x14] sm:$0xf]
  %v19 = vld [vmem:[%s0 + $0x18] sm:$0xff]
  %v20 = vld [vmem:[%s0 + $0x20] sm:$0xf]
  %v21 = vld [vmem:[%s0 + $0x24] sm:$0xff]
  %v22 = vld [vmem:[%s0 + $0x2c] sm:$0xf]
  %v23 = vld [vmem:[%s1] sm:$0xf]
  %v24 = vld [vmem:[%s1 + $0x4] sm:$0xf]
  %v25 = vld [vmem:[%s1 + $0x8] sm:$0xf]
  %v26 = vld [vmem:[%s1 + $0xc] sm:$0xf]
  %v27 = vld [vmem:[%s1 + $0x10] sm:$0xf]
  %v28 = vld [vmem:[%s1 + $0x14] sm:$0xf]
  %v29 = vld [vmem:[%s1 + $0x18] sm:$0xf]
  %v30 = vld [vmem:[%s1 + $0x1c] sm:$0xf]
  %v31 = vld [vmem:[%s1 + $0x20] sm:$0xf]
  %v32 = vld [vmem:[%s1 + $0x24] sm:$0xf]
  %v33 = vld [vmem:[%s1 + $0x28] sm:$0xf]
  %v34 = vld [vmem:[%s1 + $0x2c] sm:$0xf]
  %v35 = vld [vmem:[%s1 + $0x30] sm:$0xf]
  %v36 = vld [vmem:[%s1 + $0x34] sm:$0xf]
  %v37 = vld [vmem:[%s1 + $0x38] sm:$0xf]
  %v38 = vld [vmem:[%s1 + $0x3c] sm:$0xf]
  %v39 = vld [vmem:[%s1 + $0x40] sm:$0xf]
  %v40 = vld [vmem:[%s1 + $0x44] sm:$0xf]
  %v41 = vld [vmem:[%s1 + $0x48] sm:$0xf]
  %v42 = vld [vmem:[%s1 + $0x4c] sm:$0xf]
  %v43 = vld [vmem:[%s1 + $0x50] sm:$0xf]
  %v44 = vld [vmem:[%s1 + $0x54] sm:$0xf]
  %v45 = vld [vmem:[%s1 + $0x58] sm:$0xf]
  %v46 = vld [vmem:[%s1 + $0x5c] sm:$0xf]
  %v47 = vld [vmem:[%s1 + $0x60] sm:$0xf]
  %v48 = vld [vmem:[%s1 + $0x64] sm:$0xf]
  %v49 = vld [vmem:[%s1 + $0x68] sm:$0xf]
  %v50 = vld [vmem:[%s1 + $0x6c] sm:$0xf]
  %v51 = vld [vmem:[%s1 + $0x70] sm:$0xf]
  %v52 = vld [vmem:[%s1 + $0x74] sm:$0xf]
  %v53 = vld [vmem:[%s1 + $0x78] sm:$0xf]
  %v54 = vld [vmem:[%s1 + $0x7c] sm:$0xf]
  %v55 = vld [vmem:[%s1 + $0x80] sm:$0xf]
  %v56 = vld [vmem:[%s1 + $0x84] sm:$0xf]
  %v57 = vld [vmem:[%s1 + $0x88] sm:$0xf]
  %v58 = vld [vmem:[%s1 + $0x8c] sm:$0xf]
  %v59 = vld [vmem:[%s2] sm:$0x1]
  %v60 = vlaneseq
  %v61 = vshrl.u32 %v60, 7
  %v62 = vsub.s32 0, %v61
  %v63 = vrot.slane %v59, %v62
  %v72 = vunpack.c.l.b16 %v15
  %v73 = vunpack.c.h.b16 %v15
  %v74 = vunpack.c.l.b16 %v16
  %v75 = vunpack.c.l.b16 %v17
  %v76 = vunpack.c.h.b16 %v17
  %v77 = vunpack.c.l.b16 %v18
  %v78 = vunpack.c.l.b16 %v19
  %v79 = vunpack.c.h.b16 %v19
  %v80 = vunpack.c.l.b16 %v20
  %v81 = vunpack.c.l.b16 %v21
  %v82 = vunpack.c.h.b16 %v21
  %v83 = vunpack.c.l.b16 %v22
  %v84 = vpack.c.b16 %v75, %v72
  %v85 = vpack.c.b16 %v76, %v73
  %v86 = vpack.c.b16 %v77, %v74
  %v87 = vpack.c.b16 %v81, %v78
  %v88 = vpack.c.b16 %v82, %v79
  %v89 = vpack.c.b16 %v83, %v80
  %v130 = vunpack.c.l.b16 %v23
  %v131 = vunpack.c.l.b16 %v24
  %v132 = vunpack.c.l.b16 %v25
  %v133 = vunpack.c.l.b16 %v26
  %v134 = vunpack.c.l.b16 %v27
  %v135 = vunpack.c.l.b16 %v28
  %v136 = vunpack.c.l.b16 %v29
  %v137 = vunpack.c.l.b16 %v30
  %v138 = vunpack.c.l.b16 %v31
  %v139 = vunpack.c.l.b16 %v32
  %v140 = vunpack.c.l.b16 %v33
  %v141 = vunpack.c.l.b16 %v34
  %v142 = vunpack.c.l.b16 %v35
  %v143 = vunpack.c.l.b16 %v36
  %v144 = vunpack.c.l.b16 %v37
  %v145 = vunpack.c.l.b16 %v38
  %v146 = vunpack.c.l.b16 %v39
  %v147 = vunpack.c.l.b16 %v40
  %v148 = vunpack.c.l.b16 %v41
  %v149 = vunpack.c.l.b16 %v42
  %v150 = vunpack.c.l.b16 %v43
  %v151 = vunpack.c.l.b16 %v44
  %v152 = vunpack.c.l.b16 %v45
  %v153 = vunpack.c.l.b16 %v46
  %v154 = vunpack.c.l.b16 %v47
  %v155 = vunpack.c.l.b16 %v48
  %v156 = vunpack.c.l.b16 %v49
  %v157 = vunpack.c.l.b16 %v50
  %v158 = vunpack.c.l.b16 %v51
  %v159 = vunpack.c.l.b16 %v52
  %v160 = vunpack.c.l.b16 %v53
  %v161 = vunpack.c.l.b16 %v54
  %v162 = vunpack.c.l.b16 %v55
  %v163 = vunpack.c.l.b16 %v56
  %v164 = vunpack.c.l.b16 %v57
  %v165 = vunpack.c.l.b16 %v58
  %v166 = vpack.c.b16 %v131, %v130
  %v167 = vpack.c.b16 %v133, %v132
  %v168 = vpack.c.b16 %v135, %v134
  %v169 = vpack.c.b16 %v137, %v136
  %v170 = vpack.c.b16 %v139, %v138
  %v171 = vpack.c.b16 %v141, %v140
  %v172 = vpack.c.b16 %v143, %v142
  %v173 = vpack.c.b16 %v145, %v144
  %v174 = vpack.c.b16 %v147, %v146
  %v175 = vpack.c.b16 %v149, %v148
  %v176 = vpack.c.b16 %v151, %v150
  %v177 = vpack.c.b16 %v153, %v152
  %v178 = vpack.c.b16 %v155, %v154
  %v179 = vpack.c.b16 %v157, %v156
  %v180 = vpack.c.b16 %v159, %v158
  %v181 = vpack.c.b16 %v161, %v160
  %v182 = vpack.c.b16 %v163, %v162
  %v183 = vpack.c.b16 %v165, %v164
  %vm202 = vcmask 261120
  %v204 = vsel %vm202, %v86, 0
  %v207 = vsel %vm202, %v89, 0
  %209 = vmatprep.subr.bf16.mxu0 0
  %210 = vmatpush1.bf16.msra.mxu0 %v173
  %211 = vmatprep.subr.bf16.mxu0 0
  %212 = vmatpush1.bf16.msra.mxu0 %v172
  %213 = vmatprep.subr.bf16.mxu0 0
  %214 = vmatpush1.bf16.msra.mxu0 %v171
  %215 = vmatprep.subr.bf16.mxu0 0
  %216 = vmatpush1.bf16.msra.mxu0 %v170
  %217 = vmatprep.subr.bf16.mxu0 0
  %218 = vmatpush1.bf16.msra.mxu0 %v169
  %219 = vmatprep.subr.bf16.mxu0 0
  %220 = vmatpush1.bf16.msra.mxu0 %v168
  %221 = vmatprep.subr.bf16.mxu0 0
  %222 = vmatpush1.bf16.msra.mxu0 %v167
  %223 = vmatprep.subr.bf16.mxu0 0
  %224 = vmatpush1.bf16.msra.mxu0 %v166
  %225 = vmatprep.subr.bf16.mxu0 0
  %226 = vmatpush2.bf16.msra.mxu0 %v181
  %227 = vmatprep.subr.bf16.mxu0 0
  %228 = vmatpush2.bf16.msra.mxu0 %v180
  %229 = vmatprep.subr.bf16.mxu0 0
  %230 = vmatpush2.bf16.msra.mxu0 %v179
  %231 = vmatprep.subr.bf16.mxu0 0
  %232 = vmatpush2.bf16.msra.mxu0 %v178
  %233 = vmatprep.subr.bf16.mxu0 0
  %234 = vmatpush2.bf16.msra.mxu0 %v177
  %235 = vmatprep.subr.bf16.mxu0 0
  %236 = vmatpush2.bf16.msra.mxu0 %v176
  %237 = vmatprep.subr.bf16.mxu0 0
  %238 = vmatpush2.bf16.msra.mxu0 %v175
  %239 = vmatprep.subr.bf16.mxu0 0
  %240 = vmatpush2.bf16.msra.mxu0 %v174
  %241 = vmatprep.mubr.bf16.mxu0 %v85
  %242 = vmatmul.mubr.bf16.gmra.mxu0 %v84
  %v243 = vpop.f32.mrf.mxu0
  %v244 = vadd.f32 %v63, %v243
  %v245 = vpop.f32.mrf.mxu0
  %v246 = vpop.f32.mrf.mxu0
  %v247 = vadd.f32 %v63, %v246
  %v248 = vpop.f32.mrf.mxu0
  %249 = vmatprep.mubr.bf16.mxu0 %v88
  %250 = vmatmul.mubr.bf16.gmra.mxu0 %v87
  %v251 = vpop.f32.mrf.mxu0
  %v252 = vadd.f32 %v63, %v251
  %v253 = vpop.f32.mrf.mxu0
  %v254 = vpop.f32.mrf.mxu0
  %v255 = vadd.f32 %v63, %v254
  %v256 = vpop.f32.mrf.mxu0
  %257 = vdwg.mxu0
  %258 = vmatprep.subr.bf16.mxu0 0
  %259 = vmatpush1.bf16.msra.mxu0 0
  %260 = vmatprep.subr.bf16.mxu0 0
  %261 = vmatpush1.bf16.msra.mxu0 0
  %262 = vmatprep.subr.bf16.mxu0 0
  %263 = vmatpush1.bf16.msra.mxu0 0
  %264 = vmatprep.subr.bf16.mxu0 0
  %265 = vmatpush1.bf16.msra.mxu0 0
  %266 = vmatprep.subr.bf16.mxu0 0
  %267 = vmatpush1.bf16.msra.mxu0 0
  %268 = vmatprep.subr.bf16.mxu0 0
  %269 = vmatpush1.bf16.msra.mxu0 0
  %270 = vmatprep.subr.bf16.mxu0 0
  %271 = vmatpush1.bf16.msra.mxu0 %v183
  %272 = vmatprep.subr.bf16.mxu0 0
  %273 = vmatpush1.bf16.msra.mxu0 %v182
  %274 = vmatprep.subr.bf16.mxu0 0
  %275 = vmatpush2.bf16.msra.mxu0 0
  %276 = vmatprep.subr.bf16.mxu0 0
  %277 = vmatpush2.bf16.msra.mxu0 0
  %278 = vmatprep.subr.bf16.mxu0 0
  %279 = vmatpush2.bf16.msra.mxu0 0
  %280 = vmatprep.subr.bf16.mxu0 0
  %281 = vmatpush2.bf16.msra.mxu0 0
  %282 = vmatprep.subr.bf16.mxu0 0
  %283 = vmatpush2.bf16.msra.mxu0 0
  %284 = vmatprep.subr.bf16.mxu0 0
  %285 = vmatpush2.bf16.msra.mxu0 0
  %286 = vmatprep.subr.bf16.mxu0 0
  %287 = vmatpush2.bf16.msra.mxu0 0
  %288 = vmatprep.subr.bf16.mxu0 0
  %289 = vmatpush2.bf16.msra.mxu0 0
  %290 = vmatprep.mubr.bf16.mxu0 0
  %291 = vmatmul.mubr.bf16.gmra.mxu0 %v204
  %v292 = vpop.f32.mrf.mxu0
  %v293 = vadd.f32 %v244, %v292
  %v294 = vpop.f32.mrf.mxu0
  %v295 = vpop.f32.mrf.mxu0
  %v296 = vadd.f32 %v247, %v295
  %v297 = vpop.f32.mrf.mxu0
  %298 = vmatprep.mubr.bf16.mxu0 0
  %299 = vmatmul.mubr.bf16.gmra.mxu0 %v207
  %v300 = vpop.f32.mrf.mxu0
  %v301 = vadd.f32 %v252, %v300
  %v302 = vpop.f32.mrf.mxu0
  %v303 = vpop.f32.mrf.mxu0
  %v304 = vadd.f32 %v255, %v303
  %v305 = vpop.f32.mrf.mxu0
  %306 = vdwg.mxu0
  %v307 = vmax.f32 %v293, -1.0
  %v308 = vmax.f32 %v296, -1.0
  %v309 = vmax.f32 %v301, -1.0
  %v310 = vmax.f32 %v304, -1.0
  %v311 = vmin.f32 %v307, 1.0
  %v312 = vmin.f32 %v308, 1.0
  %v313 = vmin.f32 %v309, 1.0
  %v314 = vmin.f32 %v310, 1.0
  %v315 = vpack.c.bf16 %v312, %v311
  %v316 = vpack.c.bf16 %v314, %v313
  %v319 = vunpack.c.l.b16 %v315
  %v320 = vunpack.c.h.b16 %v315
  %v321 = vunpack.c.l.b16 %v316
  %v322 = vunpack.c.h.b16 %v316
  %v323 = vpack.c.b16 %v319, %v319
  %v324 = vpack.c.b16 %v320, %v320
  %v325 = vpack.c.b16 %v321, %v321
  %v326 = vpack.c.b16 %v322, %v322
  %331 = vst [vmem:[%s3] sm:$0xf] %v323
  %332 = vst [vmem:[%s3 + $0x4] sm:$0xf] %v324
  %333 = vst [vmem:[%s3 + $0x8] sm:$0xf] %v325
  %334 = vst [vmem:[%s3 + $0xc] sm:$0xf] %v326
  // Predicated region
  $region14: #{forward.16} parent=0 // pred_check
    _
  $region15: #{forward.16} parent=0 // pred_check_branch
    %336 = sbr.rel (0) target = $region17
  $region16: #{forward.16} parent=0 // pred_region
    _
  $region17: #{forward.16} parent=0 // pred_fallthru
    _
  // Predicated region
  $region18: #{forward.16} parent=0 // pred_check
    _
  $region19: #{forward.16} parent=0 // pred_check_branch
    %338 = sbr.rel (0) target = $region21
  $region20: #{forward.16} parent=0 // pred_region
    _
  $region21: #{forward.16} parent=0 // pred_fallthru
    _

// kernel: forward.17
$region0: #{forward.17}
  #allocation0 [shape = 'u32[]', space=smem, size = 0x4, offset = 0x4, fixed_abs, tag = 'smem constant byte address 0x4 - core index']
  #allocation1 [shape = 'u32[144,128]{1,0:T(1,128)}', space=vmem, size = 0x12000, scoped, tag = 'internal scratch']
  %s0 = inlined_call_operand.vmem [shape: bf16[32,144], index: 0, kind: input, shape index: {}]
  %s1 = inlined_call_operand.vmem [shape: bf16[144,128], index: 1, kind: input, shape index: {}]
  %s2 = inlined_call_operand.vmem [shape: f32[8,128], index: 2, kind: input, shape index: {}]
  %s3 = inlined_call_operand.vmem [shape: bf16[32,128], index: 3, kind: output, shape index: {}]
  %s4 = sld [smem:[#allocation0]]
  $region22: #{forward.17} parent=0
    _
  %s6 = ssub.s32 1, %s4
  %s7 = scalar_select 0, %s6, %s4
  // Predicated region
  $region2: #{forward.17} parent=0 // pred_check
    _
  $region3: #{forward.17} parent=0 // pred_check_branch
    %9 = sbr.rel (0) target = $region5
  $region4: #{forward.17} parent=0 // pred_region
    _
  $region5: #{forward.17} parent=0 // pred_fallthru
    _
  // Predicated region
  $region6: #{forward.17} parent=0 // pred_check
    _
  $region7: #{forward.17} parent=0 // pred_check_branch
    %11 = sbr.rel (0) target = $region9
  $region8: #{forward.17} parent=0 // pred_region
    _
  $region9: #{forward.17} parent=0 // pred_fallthru
    _
  // Predicated region
  $region10: #{forward.17} parent=0 // pred_check
    _
  $region11: #{forward.17} parent=0 // pred_check_branch
    %13 = sbr.rel (0) target = $region13
  $region12: #{forward.17} parent=0 // pred_region
    _
  $region13: #{forward.17} parent=0 // pred_fallthru
    _
  %v15 = vld [vmem:[%s0] sm:$0xff]
  %v16 = vld [vmem:[%s0 + $0x8] sm:$0xff]
  %v17 = vld [vmem:[%s0 + $0x10] sm:$0xff]
  %v18 = vld [vmem:[%s0 + $0x18] sm:$0xff]
  %v19 = vld [vmem:[%s1] sm:$0xf]
  %v20 = vld [vmem:[%s1 + $0x4] sm:$0xf]
  %v21 = vld [vmem:[%s1 + $0x8] sm:$0xf]
  %v22 = vld [vmem:[%s1 + $0xc] sm:$0xf]
  %v23 = vld [vmem:[%s1 + $0x10] sm:$0xf]
  %v24 = vld [vmem:[%s1 + $0x14] sm:$0xf]
  %v25 = vld [vmem:[%s1 + $0x18] sm:$0xf]
  %v26 = vld [vmem:[%s1 + $0x1c] sm:$0xf]
  %v27 = vld [vmem:[%s1 + $0x20] sm:$0xf]
  %v28 = vld [vmem:[%s1 + $0x24] sm:$0xf]
  %v29 = vld [vmem:[%s1 + $0x28] sm:$0xf]
  %v30 = vld [vmem:[%s1 + $0x2c] sm:$0xf]
  %v31 = vld [vmem:[%s1 + $0x30] sm:$0xf]
  %v32 = vld [vmem:[%s1 + $0x34] sm:$0xf]
  %v33 = vld [vmem:[%s1 + $0x38] sm:$0xf]
  %v34 = vld [vmem:[%s1 + $0x3c] sm:$0xf]
  %v35 = vld [vmem:[%s1 + $0x40] sm:$0xf]
  %v36 = vld [vmem:[%s1 + $0x44] sm:$0xf]
  %v37 = vld [vmem:[%s2] sm:$0x1]
  %v38 = vlaneseq
  %v39 = vshrl.u32 %v38, 7
  %v40 = vsub.s32 0, %v39
  %v41 = vrot.slane %v37, %v40
  %v46 = vunpack.c.l.b16 %v15
  %v47 = vunpack.c.h.b16 %v15
  %v48 = vunpack.c.l.b16 %v16
  %v49 = vunpack.c.h.b16 %v16
  %v50 = vunpack.c.l.b16 %v17
  %v51 = vunpack.c.h.b16 %v17
  %v52 = vunpack.c.l.b16 %v18
  %v53 = vunpack.c.h.b16 %v18
  %v54 = vpack.c.b16 %v48, %v46
  %v55 = vpack.c.b16 %v49, %v47
  %v56 = vpack.c.b16 %v52, %v50
  %v57 = vpack.c.b16 %v53, %v51
  %v78 = vunpack.c.l.b16 %v19
  %v79 = vunpack.c.l.b16 %v20
  %v80 = vunpack.c.l.b16 %v21
  %v81 = vunpack.c.l.b16 %v22
  %v82 = vunpack.c.l.b16 %v23
  %v83 = vunpack.c.l.b16 %v24
  %v84 = vunpack.c.l.b16 %v25
  %v85 = vunpack.c.l.b16 %v26
  %v86 = vunpack.c.l.b16 %v27
  %v87 = vunpack.c.l.b16 %v28
  %v88 = vunpack.c.l.b16 %v29
  %v89 = vunpack.c.l.b16 %v30
  %v90 = vunpack.c.l.b16 %v31
  %v91 = vunpack.c.l.b16 %v32
  %v92 = vunpack.c.l.b16 %v33
  %v93 = vunpack.c.l.b16 %v34
  %v94 = vunpack.c.l.b16 %v35
  %v95 = vunpack.c.l.b16 %v36
  %v96 = vpack.c.b16 %v79, %v78
  %v97 = vpack.c.b16 %v81, %v80
  %v98 = vpack.c.b16 %v83, %v82
  %v99 = vpack.c.b16 %v85, %v84
  %v100 = vpack.c.b16 %v87, %v86
  %v101 = vpack.c.b16 %v89, %v88
  %v102 = vpack.c.b16 %v91, %v90
  %v103 = vpack.c.b16 %v93, %v92
  %v104 = vpack.c.b16 %v95, %v94
  %vm114 = vcmask 130048
  %v116 = vsel %vm114, %v55, 0
  %v119 = vsel %vm114, %v57, 0
  %121 = vmatprep.subr.bf16.mxu0 0
  %122 = vmatpush1.bf16.msra.mxu0 %v103
  %123 = vmatprep.subr.bf16.mxu0 0
  %124 = vmatpush1.bf16.msra.mxu0 %v102
  %125 = vmatprep.subr.bf16.mxu0 0
  %126 = vmatpush1.bf16.msra.mxu0 %v101
  %127 = vmatprep.subr.bf16.mxu0 0
  %128 = vmatpush1.bf16.msra.mxu0 %v100
  %129 = vmatprep.subr.bf16.mxu0 0
  %130 = vmatpush1.bf16.msra.mxu0 %v99
  %131 = vmatprep.subr.bf16.mxu0 0
  %132 = vmatpush1.bf16.msra.mxu0 %v98
  %133 = vmatprep.subr.bf16.mxu0 0
  %134 = vmatpush1.bf16.msra.mxu0 %v97
  %135 = vmatprep.subr.bf16.mxu0 0
  %136 = vmatpush1.bf16.msra.mxu0 %v96
  %137 = vmatprep.subr.bf16.mxu0 0
  %138 = vmatpush2.bf16.msra.mxu0 0
  %139 = vmatprep.subr.bf16.mxu0 0
  %140 = vmatpush2.bf16.msra.mxu0 0
  %141 = vmatprep.subr.bf16.mxu0 0
  %142 = vmatpush2.bf16.msra.mxu0 0
  %143 = vmatprep.subr.bf16.mxu0 0
  %144 = vmatpush2.bf16.msra.mxu0 0
  %145 = vmatprep.subr.bf16.mxu0 0
  %146 = vmatpush2.bf16.msra.mxu0 0
  %147 = vmatprep.subr.bf16.mxu0 0
  %148 = vmatpush2.bf16.msra.mxu0 0
  %149 = vmatprep.subr.bf16.mxu0 0
  %150 = vmatpush2.bf16.msra.mxu0 0
  %151 = vmatprep.subr.bf16.mxu0 0
  %152 = vmatpush2.bf16.msra.mxu0 %v104
  %153 = vmatprep.mubr.bf16.mxu0 %v116
  %154 = vmatmul.mubr.bf16.gmra.mxu0 %v54
  %v155 = vpop.f32.mrf.mxu0
  %v156 = vadd.f32 %v41, %v155
  %v157 = vpop.f32.mrf.mxu0
  %v158 = vpop.f32.mrf.mxu0
  %v159 = vadd.f32 %v41, %v158
  %v160 = vpop.f32.mrf.mxu0
  %161 = vmatprep.mubr.bf16.mxu0 %v119
  %162 = vmatmul.mubr.bf16.gmra.mxu0 %v56
  %v163 = vpop.f32.mrf.mxu0
  %v164 = vadd.f32 %v41, %v163
  %v165 = vpop.f32.mrf.mxu0
  %v166 = vpop.f32.mrf.mxu0
  %v167 = vadd.f32 %v41, %v166
  %v168 = vpop.f32.mrf.mxu0
  %169 = vdwg.mxu0
  %v170 = vmax.f32 %v156, -1.0
  %v171 = vmax.f32 %v159, -1.0
  %v172 = vmax.f32 %v164, -1.0
  %v173 = vmax.f32 %v167, -1.0
  %v174 = vmin.f32 %v170, 1.0
  %v175 = vmin.f32 %v171, 1.0
  %v176 = vmin.f32 %v172, 1.0
  %v177 = vmin.f32 %v173, 1.0
  %v178 = vpack.c.bf16 %v175, %v174
  %v179 = vpack.c.bf16 %v177, %v176
  %v182 = vunpack.c.l.b16 %v178
  %v183 = vunpack.c.h.b16 %v178
  %v184 = vunpack.c.l.b16 %v179
  %v185 = vunpack.c.h.b16 %v179
  %v186 = vpack.c.b16 %v182, %v182
  %v187 = vpack.c.b16 %v183, %v183
  %v188 = vpack.c.b16 %v184, %v184
  %v189 = vpack.c.b16 %v185, %v185
  %194 = vst [vmem:[%s3] sm:$0xf] %v186
  %195 = vst [vmem:[%s3 + $0x4] sm:$0xf] %v187
  %196 = vst [vmem:[%s3 + $0x8] sm:$0xf] %v188
  %197 = vst [vmem:[%s3 + $0xc] sm:$0xf] %v189
  // Predicated region
  $region14: #{forward.17} parent=0 // pred_check
    _
  $region15: #{forward.17} parent=0 // pred_check_branch
    %199 = sbr.rel (0) target = $region17
  $region16: #{forward.17} parent=0 // pred_region
    _
  $region17: #{forward.17} parent=0 // pred_fallthru
    _
  // Predicated region
  $region18: #{forward.17} parent=0 // pred_check
    _
  $region19: #{forward.17} parent=0 // pred_check_branch
    %201 = sbr.rel (0) target = $region21
  $region20: #{forward.17} parent=0 // pred_region
    _
  $region21: #{forward.17} parent=0 // pred_fallthru
    _

</llo_original>
